<compile_context>
chip_gen: v7x
topology: tpu7x:2x2x1
jax: 0.10.0
libtpu: 0.0.40
codegen_flags: <defaults>
</compile_context>

<pallas_src>
import functools

import jax
import jax.numpy as jnp
import numpy as np
from jax import lax
from jax.experimental import pallas as pl
from jax.experimental.pallas import tpu as pltpu

EPS = 1e-5          # nn.BatchNorm2d default eps
NEG_SLOPE = 0.2     # LeakyReLU slope
_C1_PAD = 128       # layer-1 output channels padded 64 -> 128 (lane dense)

# layer config: (stride, has_batchnorm), (Ci, Co)
_CFG = [(2, False), (2, True), (2, True), (1, True), (2, True)]
_DIMS = [(3, 64), (64, 128), (128, 128), (128, 256), (256, 512)]


# ------------------------------ kernel body -------------------------------- #
def _leaky_relu(z):
    return jnp.where(z > 0, z, NEG_SLOPE * z)


def _bn_lrelu(z, g, b, out_dtype):
    """Training-mode BatchNorm (single-pass stats, clamped var) + LeakyReLU."""
    inv_m = 1.0 / z.shape[0]
    s1 = jnp.sum(z, axis=0, keepdims=True)
    s2 = jnp.sum(z * z, axis=0, keepdims=True)
    mean = s1 * inv_m
    var = jnp.maximum(s2 * inv_m - mean * mean, 0.0)
    zn = (z - mean) * lax.rsqrt(var + EPS) * g + b
    return _leaky_relu(zn).astype(out_dtype)


def _disc_kernel(p1_ref, w1_ref,
                 w2_ref, g2_ref, b2_ref,
                 w3_ref, g3_ref, b3_ref,
                 s4_ref, w4_hbm, g4_ref, b4_ref,
                 w5_hbm, g5_ref, b5_ref,
                 o_ref,
                 w4_vmem, w5_vmem, sem, *, batch):
    f32, bf16 = jnp.float32, jnp.bfloat16

    # Overlap the two largest weight DMAs with layer 1-3 compute.
    cp4 = pltpu.make_async_copy(w4_hbm, w4_vmem, sem.at[0])
    cp5 = pltpu.make_async_copy(w5_hbm, w5_vmem, sem.at[1])
    cp4.start()
    cp5.start()

    # ---- layer 1: (N*144, 48) @ (48, 512) block-diagonal; no BN. -----------
    # Output column blocks are the 4 layer-2 taps (channels 64..127 of each
    # block stay zero).  Rows ordered (kh3, kw3, n, h3, w3).
    z1 = jnp.dot(p1_ref[...], w1_ref[...], preferred_element_type=f32)
    a1 = _leaky_relu(z1).astype(bf16)                       # (N*144, 512)

    # ---- layer 2: taps pre-fused along K -> single matmul. -----------------
    z2 = jnp.dot(a1, w2_ref[...], preferred_element_type=f32)   # (N*144, 128)
    a2 = _bn_lrelu(z2, g2_ref[...], b2_ref[...], f32)

    # ---- layer 3: taps are contiguous 8-aligned row blocks; concat into K. -
    m3 = batch * 36
    lhs3 = jnp.concatenate(
        [a2[t * m3:(t + 1) * m3, :].astype(bf16) for t in range(4)], axis=-1)
    z3 = jnp.dot(lhs3, w3_ref[...], preferred_element_type=f32)  # (N*36, 128)
    a3 = _bn_lrelu(z3, g3_ref[...], b3_ref[...], bf16)

    # ---- layer 4 (stride 1): gather-as-matmul with 0/1 selection matrices. -
    cp4.wait()
    taps4 = [jnp.dot(s4_ref[t], a3, preferred_element_type=f32).astype(bf16)
             for t in range(4)]                               # exact selects
    lhs4 = jnp.concatenate(taps4, axis=-1)                    # (N*25, 512)
    z4 = jnp.dot(lhs4, w4_vmem[...], preferred_element_type=f32)  # (N*25, 256)
    a4 = _bn_lrelu(z4, g4_ref[...], b4_ref[...], f32)
    # a4 rows: [tap5 block (4)] x (n, h5, w5) for the first 4*N*4 rows,
    # then the N*9 layer-4 positions layer 5 never reads (BN still sees them).

    # ---- layer 5: taps are contiguous 8-aligned row blocks; concat into K. -
    cp5.wait()
    m5 = batch * 4
    lhs5 = jnp.concatenate(
        [a4[t * m5:(t + 1) * m5, :].astype(bf16) for t in range(4)], axis=-1)
    z5 = jnp.dot(lhs5, w5_vmem[...], preferred_element_type=f32)  # (N*4, 512)
    o_ref[...] = _bn_lrelu(z5, g5_ref[...], b5_ref[...], o_ref.dtype)


# ------------------------------ host-side glue ------------------------------ #
def _build_p1(x_nchw):
    """Layer-1 patch matrix (N*144, 48): pure reshape + transpose (no gather).

    Row (kh3, kw3, n, h3, w3) holds the 2x2x3 input patches of the 4 layer-2
    taps of layer-2 output pixel (n, 2*h3+kh3, 2*w3+kw3), feature order
    (kh2, kw2, kh1, kw1, c).  Input H decomposes as 8*h3 + 4*kh3 + 2*kh2 + kh1.
    """
    n = x_nchw.shape[0]
    x = x_nchw.reshape(n, 3, 6, 2, 2, 2, 6, 2, 2, 2)
    # axes: n c h3 kh3 kh2 kh1 w3 kw3 kw2 kw1  ->  kh3 kw3 n h3 w3 kh2 kw2 kh1 kw1 c
    x = jnp.transpose(x, (3, 7, 0, 2, 6, 4, 8, 5, 9, 1))
    return x.reshape(n * 144, 48).astype(jnp.bfloat16)


def _make_s4(batch):
    """0/1 selection matrices (4, N*25, N*36) for layer-4's stride-1 taps.

    Output rows: first 4*N*4 rows are [kh5,kw5 tap][n][h5][w5] (so layer-5's
    taps become contiguous row blocks of layer-4's output), then the N*9
    positions with h4==4 or w4==4 (needed only for layer-4 BN statistics).
    """
    rows = []
    for kh5 in range(2):
        for kw5 in range(2):
            for n in range(batch):
                for h5 in range(2):
                    for w5 in range(2):
                        rows.append((n, 2 * h5 + kh5, 2 * w5 + kw5))
    for n in range(batch):
        for h4 in range(5):
            for w4 in range(5):
                if h4 == 4 or w4 == 4:
                    rows.append((n, h4, w4))
    m4 = batch * 25
    assert len(rows) == m4
    s4 = np.zeros((4, m4, batch * 36), np.float32)
    for t in range(4):
        kh4, kw4 = t // 2, t % 2
        for r, (n, h4, w4) in enumerate(rows):
            s4[t, r, n * 36 + (h4 + kh4) * 6 + (w4 + kw4)] = 1.0
    return jnp.asarray(s4, jnp.bfloat16)


def _pack_w1(w_oihw):
    """(64,3,2,2) -> block-diagonal (48, 512) bf16 (4 tap blocks, 64->128 pad)."""
    tap = jnp.transpose(w_oihw, (2, 3, 1, 0)).reshape(12, 64)   # (kh1,kw1,c) x o
    big = jnp.zeros((48, 4 * _C1_PAD), jnp.float32)
    for t in range(4):
        big = big.at[t * 12:(t + 1) * 12, t * _C1_PAD:t * _C1_PAD + 64].set(tap)
    return big.astype(jnp.bfloat16)


def _pack_w_stacked(w_oihw, ci_pad):
    """(Co,Ci,2,2) -> (4*ci_pad, Co) bf16: taps stacked along K, Ci zero-padded."""
    co, ci = w_oihw.shape[0], w_oihw.shape[1]
    taps = jnp.transpose(w_oihw, (2, 3, 1, 0)).reshape(4, ci, co)
    out = jnp.zeros((4, ci_pad, co), jnp.float32).at[:, :ci, :].set(taps)
    return out.reshape(4 * ci_pad, co).astype(jnp.bfloat16)


def init_params(key):
    params = []
    for (ci, co), (_, use_bn) in zip(_DIMS, _CFG):
        key, kw_, kg, kb = jax.random.split(key, 4)
        w = jax.random.normal(kw_, (co, ci, 2, 2), jnp.float32) / np.sqrt(4 * ci)
        if use_bn:
            gamma = 1.0 + 0.1 * jax.random.normal(kg, (co,), jnp.float32)
            beta = 0.1 * jax.random.normal(kb, (co,), jnp.float32)
        else:
            gamma = jnp.ones((co,), jnp.float32)
            beta = jnp.zeros((co,), jnp.float32)
        params.append((w, gamma, beta))
    return params


def pack_params(params):
    (w1, _, _), (w2, g2, b2), (w3, g3, b3), (w4, g4, b4), (w5, g5, b5) = params
    return dict(
        w1=_pack_w1(w1),
        w2=_pack_w_stacked(w2, _C1_PAD), g2=g2.reshape(1, -1), b2=b2.reshape(1, -1),
        w3=_pack_w_stacked(w3, 128), g3=g3.reshape(1, -1), b3=b3.reshape(1, -1),
        w4=_pack_w_stacked(w4, 128), g4=g4.reshape(1, -1), b4=b4.reshape(1, -1),
        w5=_pack_w_stacked(w5, 256), g5=g5.reshape(1, -1), b5=b5.reshape(1, -1),
    )


def discriminator_forward(x_nchw, packed):
    n, c, h, w = x_nchw.shape
    assert (c, h, w) == (3, 48, 48), "kernel is specialised to 3x48x48 inputs"
    p1 = _build_p1(x_nchw)
    s4 = _make_s4(n)   # trace-time constant (tiny)

    kernel = functools.partial(_disc_kernel, batch=n)
    vmem = lambda: pl.BlockSpec(memory_space=pltpu.MemorySpace.VMEM)
    hbm = lambda: pl.BlockSpec(memory_space=pl.ANY)
    out = pl.pallas_call(
        kernel,
        out_shape=jax.ShapeDtypeStruct((n * 4, 512), jnp.float32),
        in_specs=[vmem(), vmem(),                       # p1, w1
                  vmem(), vmem(), vmem(),               # w2, g2, b2
                  vmem(), vmem(), vmem(),               # w3, g3, b3
                  vmem(), hbm(), vmem(), vmem(),        # s4, w4(HBM), g4, b4
                  hbm(), vmem(), vmem()],               # w5(HBM), g5, b5
        out_specs=vmem(),
        scratch_shapes=[
            pltpu.VMEM((4 * 128, 256), jnp.bfloat16),   # w4 landing buffer
            pltpu.VMEM((4 * 256, 512), jnp.bfloat16),   # w5 landing buffer
            pltpu.SemaphoreType.DMA((2,)),
        ],
        compiler_params=pltpu.CompilerParams(
            vmem_limit_bytes=32 * 1024 * 1024),
    )(p1, packed["w1"],
      packed["w2"], packed["g2"], packed["b2"],
      packed["w3"], packed["g3"], packed["b3"],
      s4, packed["w4"], packed["g4"], packed["b4"],
      packed["w5"], packed["g5"], packed["b5"])

    # kernel rows are (n, h5, w5); PyTorch's out.view(bs, -1) flattens NCHW
    out = out.reshape(n, 2, 2, 512)
    return jnp.transpose(out, (0, 3, 1, 2)).reshape(n, 512 * 2 * 2)


# ----------------------- pure-JAX (XLA conv) reference ---------------------- #
def reference_forward(x_nchw, params):
    """Same precision policy as the kernel: bf16 conv inputs, f32 accumulate."""
    h = x_nchw
    for (stride, use_bn), (w, g, b) in zip(_CFG, params):
        z = lax.conv_general_dilated(
            h.astype(jnp.bfloat16), w.astype(jnp.bfloat16),
            (stride, stride), "VALID",
            dimension_numbers=("NCHW", "OIHW", "NCHW"),
            preferred_element_type=jnp.float32)
        if use_bn:
            mean = jnp.mean(z, axis=(0, 2, 3), keepdims=True)
            var = jnp.mean(jnp.square(z - mean), axis=(0, 2, 3), keepdims=True)
            z = ((z - mean) * lax.rsqrt(var + EPS)
                 * g.reshape(1, -1, 1, 1) + b.reshape(1, -1, 1, 1))
        h = jnp.where(z > 0, z, NEG_SLOPE * z)
    return h.reshape(h.shape[0], -1)


if __name__ == "__main__":
    key = jax.random.PRNGKey(0)
    kx, kp = jax.random.split(key)
    # 48x48 input -> 24 -> 12 -> 6 -> 5 -> 2 : final features 512*2*2 = 2048
    # (matches self.linear = Linear(feats*8*4, 1), which forward() never calls)
    x = jax.random.normal(kx, (2, 3, 48, 48), jnp.float32)
    params = init_params(kp)
    packed = pack_params(params)

    fwd = jax.jit(discriminator_forward)
    out = jax.block_until_ready(fwd(x, packed))
    assert out.shape == (2, 2048), out.shape

    ref = jax.block_until_ready(reference_forward(x, params))
    np.testing.assert_allclose(np.asarray(out), np.asarray(ref),
                               rtol=2e-3, atol=2e-3)
    print("KERNEL_OK")
</pallas_src>

<mosaic_0001>
module attributes {stable_mosaic.version = 11 : i64} {
  func.func @_disc_kernel(%arg0: memref<288x48xbf16, #tpu.memory_space<vmem>>, %arg1: memref<48x512xbf16, #tpu.memory_space<vmem>>, %arg2: memref<512x128xbf16, #tpu.memory_space<vmem>>, %arg3: memref<1x128xf32, #tpu.memory_space<vmem>>, %arg4: memref<1x128xf32, #tpu.memory_space<vmem>>, %arg5: memref<512x128xbf16, #tpu.memory_space<vmem>>, %arg6: memref<1x128xf32, #tpu.memory_space<vmem>>, %arg7: memref<1x128xf32, #tpu.memory_space<vmem>>, %arg8: memref<4x50x72xbf16, #tpu.memory_space<vmem>>, %arg9: memref<512x256xbf16, #tpu.memory_space<any>>, %arg10: memref<1x256xf32, #tpu.memory_space<vmem>>, %arg11: memref<1x256xf32, #tpu.memory_space<vmem>>, %arg12: memref<1024x512xbf16, #tpu.memory_space<any>>, %arg13: memref<1x512xf32, #tpu.memory_space<vmem>>, %arg14: memref<1x512xf32, #tpu.memory_space<vmem>>, %arg15: memref<8x512xf32, #tpu.memory_space<vmem>>, %arg16: memref<512x256xbf16, #tpu.memory_space<vmem>>, %arg17: memref<1024x512xbf16, #tpu.memory_space<vmem>>, %arg18: memref<2x!tpu.dma_semaphore, #tpu.memory_space<semaphore_mem>>) attributes {dimension_semantics = [], scalar_prefetch = 0 : i64, scratch_operands = 3 : i64, tpu.core_type = #tpu.core_type<tc>} {
    %c0_i32 = arith.constant 0 : i32
    %0 = tpu.memref_slice %arg18[%c0_i32] : memref<2x!tpu.dma_semaphore, #tpu.memory_space<semaphore_mem>> -> memref<1x!tpu.dma_semaphore, #tpu.memory_space<semaphore_mem>>
    %1 = tpu.memref_squeeze %0 : memref<1x!tpu.dma_semaphore, #tpu.memory_space<semaphore_mem>> -> memref<!tpu.dma_semaphore, #tpu.memory_space<semaphore_mem>>
    tpu.enqueue_dma source(%arg9 : memref<512x256xbf16, #tpu.memory_space<any>>) target(%arg16 : memref<512x256xbf16, #tpu.memory_space<vmem>>) target_semaphore(%1 : memref<!tpu.dma_semaphore, #tpu.memory_space<semaphore_mem>>)
    %c1_i32 = arith.constant 1 : i32
    %2 = tpu.memref_slice %arg18[%c1_i32] : memref<2x!tpu.dma_semaphore, #tpu.memory_space<semaphore_mem>> -> memref<1x!tpu.dma_semaphore, #tpu.memory_space<semaphore_mem>>
    %3 = tpu.memref_squeeze %2 : memref<1x!tpu.dma_semaphore, #tpu.memory_space<semaphore_mem>> -> memref<!tpu.dma_semaphore, #tpu.memory_space<semaphore_mem>>
    tpu.enqueue_dma source(%arg12 : memref<1024x512xbf16, #tpu.memory_space<any>>) target(%arg17 : memref<1024x512xbf16, #tpu.memory_space<vmem>>) target_semaphore(%3 : memref<!tpu.dma_semaphore, #tpu.memory_space<semaphore_mem>>)
    %c0 = arith.constant 0 : index
    %c0_0 = arith.constant 0 : index
    %4 = vector.load %arg0[%c0, %c0_0] : memref<288x48xbf16, #tpu.memory_space<vmem>>, vector<288x48xbf16>
    %c0_1 = arith.constant 0 : index
    %c0_2 = arith.constant 0 : index
    %5 = vector.load %arg1[%c0_1, %c0_2] : memref<48x512xbf16, #tpu.memory_space<vmem>>, vector<48x512xbf16>
    %cst = arith.constant dense<0.000000e+00> : vector<288x512xf32>
    %6 = tpu.matmul %4, %5, %cst {dimension_numbers = #tpu.dot_dimension_numbers<[1], [0], [0], [1], [0, 0, 1, 1], [], []>} : vector<288x48xbf16>, vector<48x512xbf16>, vector<288x512xf32> -> vector<288x512xf32>
    %cst_3 = arith.constant 0.000000e+00 : f32
    %7 = vector.broadcast %cst_3 : f32 to vector<288x512xf32>
    %8 = arith.cmpf ogt, %6, %7 : vector<288x512xf32>
    %cst_4 = arith.constant 2.000000e-01 : f32
    %9 = vector.broadcast %cst_4 : f32 to vector<288x512xf32>
    %10 = arith.mulf %9, %6 : vector<288x512xf32>
    %11 = arith.select %8, %6, %10 : vector<288x512xi1>, vector<288x512xf32>
    %12 = arith.truncf %11 : vector<288x512xf32> to vector<288x512xbf16>
    %c0_5 = arith.constant 0 : index
    %c0_6 = arith.constant 0 : index
    %13 = vector.load %arg2[%c0_5, %c0_6] : memref<512x128xbf16, #tpu.memory_space<vmem>>, vector<512x128xbf16>
    %cst_7 = arith.constant dense<0.000000e+00> : vector<288x128xf32>
    %14 = tpu.matmul %12, %13, %cst_7 {dimension_numbers = #tpu.dot_dimension_numbers<[1], [0], [0], [1], [0, 0, 1, 1], [], []>} : vector<288x512xbf16>, vector<512x128xbf16>, vector<288x128xf32> -> vector<288x128xf32>
    %c0_8 = arith.constant 0 : index
    %c0_9 = arith.constant 0 : index
    %15 = vector.load %arg3[%c0_8, %c0_9] : memref<1x128xf32, #tpu.memory_space<vmem>>, vector<1x128xf32>
    %c0_10 = arith.constant 0 : index
    %c0_11 = arith.constant 0 : index
    %16 = vector.load %arg4[%c0_10, %c0_11] : memref<1x128xf32, #tpu.memory_space<vmem>>, vector<1x128xf32>
    %cst_12 = arith.constant dense<0.000000e+00> : vector<128xf32>
    %17 = vector.multi_reduction <add>, %14, %cst_12 [0] : vector<288x128xf32> to vector<128xf32>
    %18 = vector.shape_cast %17 : vector<128xf32> to vector<1x128xf32>
    %19 = arith.mulf %14, %14 : vector<288x128xf32>
    %cst_13 = arith.constant dense<0.000000e+00> : vector<128xf32>
    %20 = vector.multi_reduction <add>, %19, %cst_13 [0] : vector<288x128xf32> to vector<128xf32>
    %21 = vector.shape_cast %20 : vector<128xf32> to vector<1x128xf32>
    %cst_14 = arith.constant 0.00347222225 : f32
    %22 = vector.broadcast %cst_14 : f32 to vector<1x128xf32>
    %23 = arith.mulf %18, %22 : vector<1x128xf32>
    %cst_15 = arith.constant 0.00347222225 : f32
    %24 = vector.broadcast %cst_15 : f32 to vector<1x128xf32>
    %25 = arith.mulf %21, %24 : vector<1x128xf32>
    %26 = arith.mulf %23, %23 : vector<1x128xf32>
    %27 = arith.subf %25, %26 : vector<1x128xf32>
    %cst_16 = arith.constant 0.000000e+00 : f32
    %28 = vector.broadcast %cst_16 : f32 to vector<1x128xf32>
    %29 = arith.maximumf %27, %28 : vector<1x128xf32>
    %30 = vector.broadcast %23 : vector<1x128xf32> to vector<288x128xf32>
    %31 = arith.subf %14, %30 : vector<288x128xf32>
    %cst_17 = arith.constant 9.99999974E-6 : f32
    %32 = vector.broadcast %cst_17 : f32 to vector<1x128xf32>
    %33 = arith.addf %29, %32 : vector<1x128xf32>
    %34 = math.rsqrt %33 : vector<1x128xf32>
    %35 = vector.broadcast %34 : vector<1x128xf32> to vector<288x128xf32>
    %36 = arith.mulf %31, %35 : vector<288x128xf32>
    %37 = vector.broadcast %15 : vector<1x128xf32> to vector<288x128xf32>
    %38 = arith.mulf %36, %37 : vector<288x128xf32>
    %39 = vector.broadcast %16 : vector<1x128xf32> to vector<288x128xf32>
    %40 = arith.addf %38, %39 : vector<288x128xf32>
    %cst_18 = arith.constant 0.000000e+00 : f32
    %41 = vector.broadcast %cst_18 : f32 to vector<288x128xf32>
    %42 = arith.cmpf ogt, %40, %41 : vector<288x128xf32>
    %cst_19 = arith.constant 2.000000e-01 : f32
    %43 = vector.broadcast %cst_19 : f32 to vector<288x128xf32>
    %44 = arith.mulf %43, %40 : vector<288x128xf32>
    %45 = arith.select %42, %40, %44 : vector<288x128xi1>, vector<288x128xf32>
    %46 = vector.extract_strided_slice %45 {offsets = [0, 0], sizes = [72, 128], strides = [1, 1]} : vector<288x128xf32> to vector<72x128xf32>
    %47 = arith.truncf %46 : vector<72x128xf32> to vector<72x128xbf16>
    %48 = vector.extract_strided_slice %45 {offsets = [72, 0], sizes = [72, 128], strides = [1, 1]} : vector<288x128xf32> to vector<72x128xf32>
    %49 = arith.truncf %48 : vector<72x128xf32> to vector<72x128xbf16>
    %50 = vector.extract_strided_slice %45 {offsets = [144, 0], sizes = [72, 128], strides = [1, 1]} : vector<288x128xf32> to vector<72x128xf32>
    %51 = arith.truncf %50 : vector<72x128xf32> to vector<72x128xbf16>
    %52 = vector.extract_strided_slice %45 {offsets = [216, 0], sizes = [72, 128], strides = [1, 1]} : vector<288x128xf32> to vector<72x128xf32>
    %53 = arith.truncf %52 : vector<72x128xf32> to vector<72x128xbf16>
    %54 = tpu.concatenate %47, %49, %51, %53 in 1 : vector<72x128xbf16>, vector<72x128xbf16>, vector<72x128xbf16>, vector<72x128xbf16> -> vector<72x512xbf16>
    %c0_20 = arith.constant 0 : index
    %c0_21 = arith.constant 0 : index
    %55 = vector.load %arg5[%c0_20, %c0_21] : memref<512x128xbf16, #tpu.memory_space<vmem>>, vector<512x128xbf16>
    %cst_22 = arith.constant dense<0.000000e+00> : vector<72x128xf32>
    %56 = tpu.matmul %54, %55, %cst_22 {dimension_numbers = #tpu.dot_dimension_numbers<[1], [0], [0], [1], [0, 0, 1, 1], [], []>} : vector<72x512xbf16>, vector<512x128xbf16>, vector<72x128xf32> -> vector<72x128xf32>
    %c0_23 = arith.constant 0 : index
    %c0_24 = arith.constant 0 : index
    %57 = vector.load %arg6[%c0_23, %c0_24] : memref<1x128xf32, #tpu.memory_space<vmem>>, vector<1x128xf32>
    %c0_25 = arith.constant 0 : index
    %c0_26 = arith.constant 0 : index
    %58 = vector.load %arg7[%c0_25, %c0_26] : memref<1x128xf32, #tpu.memory_space<vmem>>, vector<1x128xf32>
    %cst_27 = arith.constant dense<0.000000e+00> : vector<128xf32>
    %59 = vector.multi_reduction <add>, %56, %cst_27 [0] : vector<72x128xf32> to vector<128xf32>
    %60 = vector.shape_cast %59 : vector<128xf32> to vector<1x128xf32>
    %61 = arith.mulf %56, %56 : vector<72x128xf32>
    %cst_28 = arith.constant dense<0.000000e+00> : vector<128xf32>
    %62 = vector.multi_reduction <add>, %61, %cst_28 [0] : vector<72x128xf32> to vector<128xf32>
    %63 = vector.shape_cast %62 : vector<128xf32> to vector<1x128xf32>
    %cst_29 = arith.constant 0.013888889 : f32
    %64 = vector.broadcast %cst_29 : f32 to vector<1x128xf32>
    %65 = arith.mulf %60, %64 : vector<1x128xf32>
    %cst_30 = arith.constant 0.013888889 : f32
    %66 = vector.broadcast %cst_30 : f32 to vector<1x128xf32>
    %67 = arith.mulf %63, %66 : vector<1x128xf32>
    %68 = arith.mulf %65, %65 : vector<1x128xf32>
    %69 = arith.subf %67, %68 : vector<1x128xf32>
    %cst_31 = arith.constant 0.000000e+00 : f32
    %70 = vector.broadcast %cst_31 : f32 to vector<1x128xf32>
    %71 = arith.maximumf %69, %70 : vector<1x128xf32>
    %72 = vector.broadcast %65 : vector<1x128xf32> to vector<72x128xf32>
    %73 = arith.subf %56, %72 : vector<72x128xf32>
    %cst_32 = arith.constant 9.99999974E-6 : f32
    %74 = vector.broadcast %cst_32 : f32 to vector<1x128xf32>
    %75 = arith.addf %71, %74 : vector<1x128xf32>
    %76 = math.rsqrt %75 : vector<1x128xf32>
    %77 = vector.broadcast %76 : vector<1x128xf32> to vector<72x128xf32>
    %78 = arith.mulf %73, %77 : vector<72x128xf32>
    %79 = vector.broadcast %57 : vector<1x128xf32> to vector<72x128xf32>
    %80 = arith.mulf %78, %79 : vector<72x128xf32>
    %81 = vector.broadcast %58 : vector<1x128xf32> to vector<72x128xf32>
    %82 = arith.addf %80, %81 : vector<72x128xf32>
    %cst_33 = arith.constant 0.000000e+00 : f32
    %83 = vector.broadcast %cst_33 : f32 to vector<72x128xf32>
    %84 = arith.cmpf ogt, %82, %83 : vector<72x128xf32>
    %cst_34 = arith.constant 2.000000e-01 : f32
    %85 = vector.broadcast %cst_34 : f32 to vector<72x128xf32>
    %86 = arith.mulf %85, %82 : vector<72x128xf32>
    %87 = arith.select %84, %82, %86 : vector<72x128xi1>, vector<72x128xf32>
    %88 = arith.truncf %87 : vector<72x128xf32> to vector<72x128xbf16>
    %c0_i32_35 = arith.constant 0 : i32
    %89 = tpu.memref_slice %arg18[%c0_i32_35] : memref<2x!tpu.dma_semaphore, #tpu.memory_space<semaphore_mem>> -> memref<1x!tpu.dma_semaphore, #tpu.memory_space<semaphore_mem>>
    %90 = tpu.memref_squeeze %89 : memref<1x!tpu.dma_semaphore, #tpu.memory_space<semaphore_mem>> -> memref<!tpu.dma_semaphore, #tpu.memory_space<semaphore_mem>>
    tpu.wait_dma2 semaphore(%90 : memref<!tpu.dma_semaphore, #tpu.memory_space<semaphore_mem>>) src(%arg9 : memref<512x256xbf16, #tpu.memory_space<any>>) dst(%arg16 : memref<512x256xbf16, #tpu.memory_space<vmem>>)
    %c0_36 = arith.constant 0 : index
    %c0_37 = arith.constant 0 : index
    %c0_38 = arith.constant 0 : index
    %91 = vector.load %arg8[%c0_36, %c0_37, %c0_38] : memref<4x50x72xbf16, #tpu.memory_space<vmem>>, vector<1x50x72xbf16>
    %92 = vector.shape_cast %91 : vector<1x50x72xbf16> to vector<50x72xbf16>
    %cst_39 = arith.constant dense<0.000000e+00> : vector<50x128xf32>
    %93 = tpu.matmul %92, %88, %cst_39 {dimension_numbers = #tpu.dot_dimension_numbers<[1], [0], [0], [1], [0, 0, 1, 1], [], []>} : vector<50x72xbf16>, vector<72x128xbf16>, vector<50x128xf32> -> vector<50x128xf32>
    %94 = arith.truncf %93 : vector<50x128xf32> to vector<50x128xbf16>
    %c1 = arith.constant 1 : index
    %c0_40 = arith.constant 0 : index
    %c0_41 = arith.constant 0 : index
    %95 = vector.load %arg8[%c1, %c0_40, %c0_41] : memref<4x50x72xbf16, #tpu.memory_space<vmem>>, vector<1x50x72xbf16>
    %96 = vector.shape_cast %95 : vector<1x50x72xbf16> to vector<50x72xbf16>
    %cst_42 = arith.constant dense<0.000000e+00> : vector<50x128xf32>
    %97 = tpu.matmul %96, %88, %cst_42 {dimension_numbers = #tpu.dot_dimension_numbers<[1], [0], [0], [1], [0, 0, 1, 1], [], []>} : vector<50x72xbf16>, vector<72x128xbf16>, vector<50x128xf32> -> vector<50x128xf32>
    %98 = arith.truncf %97 : vector<50x128xf32> to vector<50x128xbf16>
    %c2 = arith.constant 2 : index
    %c0_43 = arith.constant 0 : index
    %c0_44 = arith.constant 0 : index
    %99 = vector.load %arg8[%c2, %c0_43, %c0_44] : memref<4x50x72xbf16, #tpu.memory_space<vmem>>, vector<1x50x72xbf16>
    %100 = vector.shape_cast %99 : vector<1x50x72xbf16> to vector<50x72xbf16>
    %cst_45 = arith.constant dense<0.000000e+00> : vector<50x128xf32>
    %101 = tpu.matmul %100, %88, %cst_45 {dimension_numbers = #tpu.dot_dimension_numbers<[1], [0], [0], [1], [0, 0, 1, 1], [], []>} : vector<50x72xbf16>, vector<72x128xbf16>, vector<50x128xf32> -> vector<50x128xf32>
    %102 = arith.truncf %101 : vector<50x128xf32> to vector<50x128xbf16>
    %c3 = arith.constant 3 : index
    %c0_46 = arith.constant 0 : index
    %c0_47 = arith.constant 0 : index
    %103 = vector.load %arg8[%c3, %c0_46, %c0_47] : memref<4x50x72xbf16, #tpu.memory_space<vmem>>, vector<1x50x72xbf16>
    %104 = vector.shape_cast %103 : vector<1x50x72xbf16> to vector<50x72xbf16>
    %cst_48 = arith.constant dense<0.000000e+00> : vector<50x128xf32>
    %105 = tpu.matmul %104, %88, %cst_48 {dimension_numbers = #tpu.dot_dimension_numbers<[1], [0], [0], [1], [0, 0, 1, 1], [], []>} : vector<50x72xbf16>, vector<72x128xbf16>, vector<50x128xf32> -> vector<50x128xf32>
    %106 = arith.truncf %105 : vector<50x128xf32> to vector<50x128xbf16>
    %107 = tpu.concatenate %94, %98, %102, %106 in 1 : vector<50x128xbf16>, vector<50x128xbf16>, vector<50x128xbf16>, vector<50x128xbf16> -> vector<50x512xbf16>
    %c0_49 = arith.constant 0 : index
    %c0_50 = arith.constant 0 : index
    %108 = vector.load %arg16[%c0_49, %c0_50] : memref<512x256xbf16, #tpu.memory_space<vmem>>, vector<512x256xbf16>
    %cst_51 = arith.constant dense<0.000000e+00> : vector<50x256xf32>
    %109 = tpu.matmul %107, %108, %cst_51 {dimension_numbers = #tpu.dot_dimension_numbers<[1], [0], [0], [1], [0, 0, 1, 1], [], []>} : vector<50x512xbf16>, vector<512x256xbf16>, vector<50x256xf32> -> vector<50x256xf32>
    %c0_52 = arith.constant 0 : index
    %c0_53 = arith.constant 0 : index
    %110 = vector.load %arg10[%c0_52, %c0_53] : memref<1x256xf32, #tpu.memory_space<vmem>>, vector<1x256xf32>
    %c0_54 = arith.constant 0 : index
    %c0_55 = arith.constant 0 : index
    %111 = vector.load %arg11[%c0_54, %c0_55] : memref<1x256xf32, #tpu.memory_space<vmem>>, vector<1x256xf32>
    %cst_56 = arith.constant dense<0.000000e+00> : vector<256xf32>
    %112 = vector.multi_reduction <add>, %109, %cst_56 [0] : vector<50x256xf32> to vector<256xf32>
    %113 = vector.shape_cast %112 : vector<256xf32> to vector<1x256xf32>
    %114 = arith.mulf %109, %109 : vector<50x256xf32>
    %cst_57 = arith.constant dense<0.000000e+00> : vector<256xf32>
    %115 = vector.multi_reduction <add>, %114, %cst_57 [0] : vector<50x256xf32> to vector<256xf32>
    %116 = vector.shape_cast %115 : vector<256xf32> to vector<1x256xf32>
    %cst_58 = arith.constant 2.000000e-02 : f32
    %117 = vector.broadcast %cst_58 : f32 to vector<1x256xf32>
    %118 = arith.mulf %113, %117 : vector<1x256xf32>
    %cst_59 = arith.constant 2.000000e-02 : f32
    %119 = vector.broadcast %cst_59 : f32 to vector<1x256xf32>
    %120 = arith.mulf %116, %119 : vector<1x256xf32>
    %121 = arith.mulf %118, %118 : vector<1x256xf32>
    %122 = arith.subf %120, %121 : vector<1x256xf32>
    %cst_60 = arith.constant 0.000000e+00 : f32
    %123 = vector.broadcast %cst_60 : f32 to vector<1x256xf32>
    %124 = arith.maximumf %122, %123 : vector<1x256xf32>
    %125 = vector.broadcast %118 : vector<1x256xf32> to vector<50x256xf32>
    %126 = arith.subf %109, %125 : vector<50x256xf32>
    %cst_61 = arith.constant 9.99999974E-6 : f32
    %127 = vector.broadcast %cst_61 : f32 to vector<1x256xf32>
    %128 = arith.addf %124, %127 : vector<1x256xf32>
    %129 = math.rsqrt %128 : vector<1x256xf32>
    %130 = vector.broadcast %129 : vector<1x256xf32> to vector<50x256xf32>
    %131 = arith.mulf %126, %130 : vector<50x256xf32>
    %132 = vector.broadcast %110 : vector<1x256xf32> to vector<50x256xf32>
    %133 = arith.mulf %131, %132 : vector<50x256xf32>
    %134 = vector.broadcast %111 : vector<1x256xf32> to vector<50x256xf32>
    %135 = arith.addf %133, %134 : vector<50x256xf32>
    %cst_62 = arith.constant 0.000000e+00 : f32
    %136 = vector.broadcast %cst_62 : f32 to vector<50x256xf32>
    %137 = arith.cmpf ogt, %135, %136 : vector<50x256xf32>
    %cst_63 = arith.constant 2.000000e-01 : f32
    %138 = vector.broadcast %cst_63 : f32 to vector<50x256xf32>
    %139 = arith.mulf %138, %135 : vector<50x256xf32>
    %140 = arith.select %137, %135, %139 : vector<50x256xi1>, vector<50x256xf32>
    %c1_i32_64 = arith.constant 1 : i32
    %141 = tpu.memref_slice %arg18[%c1_i32_64] : memref<2x!tpu.dma_semaphore, #tpu.memory_space<semaphore_mem>> -> memref<1x!tpu.dma_semaphore, #tpu.memory_space<semaphore_mem>>
    %142 = tpu.memref_squeeze %141 : memref<1x!tpu.dma_semaphore, #tpu.memory_space<semaphore_mem>> -> memref<!tpu.dma_semaphore, #tpu.memory_space<semaphore_mem>>
    tpu.wait_dma2 semaphore(%142 : memref<!tpu.dma_semaphore, #tpu.memory_space<semaphore_mem>>) src(%arg12 : memref<1024x512xbf16, #tpu.memory_space<any>>) dst(%arg17 : memref<1024x512xbf16, #tpu.memory_space<vmem>>)
    %143 = vector.extract_strided_slice %140 {offsets = [0, 0], sizes = [8, 256], strides = [1, 1]} : vector<50x256xf32> to vector<8x256xf32>
    %144 = arith.truncf %143 : vector<8x256xf32> to vector<8x256xbf16>
    %145 = vector.extract_strided_slice %140 {offsets = [8, 0], sizes = [8, 256], strides = [1, 1]} : vector<50x256xf32> to vector<8x256xf32>
    %146 = arith.truncf %145 : vector<8x256xf32> to vector<8x256xbf16>
    %147 = vector.extract_strided_slice %140 {offsets = [16, 0], sizes = [8, 256], strides = [1, 1]} : vector<50x256xf32> to vector<8x256xf32>
    %148 = arith.truncf %147 : vector<8x256xf32> to vector<8x256xbf16>
    %149 = vector.extract_strided_slice %140 {offsets = [24, 0], sizes = [8, 256], strides = [1, 1]} : vector<50x256xf32> to vector<8x256xf32>
    %150 = arith.truncf %149 : vector<8x256xf32> to vector<8x256xbf16>
    %151 = tpu.concatenate %144, %146, %148, %150 in 1 : vector<8x256xbf16>, vector<8x256xbf16>, vector<8x256xbf16>, vector<8x256xbf16> -> vector<8x1024xbf16>
    %c0_65 = arith.constant 0 : index
    %c0_66 = arith.constant 0 : index
    %152 = vector.load %arg17[%c0_65, %c0_66] : memref<1024x512xbf16, #tpu.memory_space<vmem>>, vector<1024x512xbf16>
    %cst_67 = arith.constant dense<0.000000e+00> : vector<8x512xf32>
    %153 = tpu.matmul %151, %152, %cst_67 {dimension_numbers = #tpu.dot_dimension_numbers<[1], [0], [0], [1], [0, 0, 1, 1], [], []>} : vector<8x1024xbf16>, vector<1024x512xbf16>, vector<8x512xf32> -> vector<8x512xf32>
    %c0_68 = arith.constant 0 : index
    %c0_69 = arith.constant 0 : index
    %154 = vector.load %arg13[%c0_68, %c0_69] : memref<1x512xf32, #tpu.memory_space<vmem>>, vector<1x512xf32>
    %c0_70 = arith.constant 0 : index
    %c0_71 = arith.constant 0 : index
    %155 = vector.load %arg14[%c0_70, %c0_71] : memref<1x512xf32, #tpu.memory_space<vmem>>, vector<1x512xf32>
    %cst_72 = arith.constant dense<0.000000e+00> : vector<512xf32>
    %156 = vector.multi_reduction <add>, %153, %cst_72 [0] : vector<8x512xf32> to vector<512xf32>
    %157 = vector.shape_cast %156 : vector<512xf32> to vector<1x512xf32>
    %158 = arith.mulf %153, %153 : vector<8x512xf32>
    %cst_73 = arith.constant dense<0.000000e+00> : vector<512xf32>
    %159 = vector.multi_reduction <add>, %158, %cst_73 [0] : vector<8x512xf32> to vector<512xf32>
    %160 = vector.shape_cast %159 : vector<512xf32> to vector<1x512xf32>
    %cst_74 = arith.constant 1.250000e-01 : f32
    %161 = vector.broadcast %cst_74 : f32 to vector<1x512xf32>
    %162 = arith.mulf %157, %161 : vector<1x512xf32>
    %cst_75 = arith.constant 1.250000e-01 : f32
    %163 = vector.broadcast %cst_75 : f32 to vector<1x512xf32>
    %164 = arith.mulf %160, %163 : vector<1x512xf32>
    %165 = arith.mulf %162, %162 : vector<1x512xf32>
    %166 = arith.subf %164, %165 : vector<1x512xf32>
    %cst_76 = arith.constant 0.000000e+00 : f32
    %167 = vector.broadcast %cst_76 : f32 to vector<1x512xf32>
    %168 = arith.maximumf %166, %167 : vector<1x512xf32>
    %169 = vector.broadcast %162 : vector<1x512xf32> to vector<8x512xf32>
    %170 = arith.subf %153, %169 : vector<8x512xf32>
    %cst_77 = arith.constant 9.99999974E-6 : f32
    %171 = vector.broadcast %cst_77 : f32 to vector<1x512xf32>
    %172 = arith.addf %168, %171 : vector<1x512xf32>
    %173 = math.rsqrt %172 : vector<1x512xf32>
    %174 = vector.broadcast %173 : vector<1x512xf32> to vector<8x512xf32>
    %175 = arith.mulf %170, %174 : vector<8x512xf32>
    %176 = vector.broadcast %154 : vector<1x512xf32> to vector<8x512xf32>
    %177 = arith.mulf %175, %176 : vector<8x512xf32>
    %178 = vector.broadcast %155 : vector<1x512xf32> to vector<8x512xf32>
    %179 = arith.addf %177, %178 : vector<8x512xf32>
    %cst_78 = arith.constant 0.000000e+00 : f32
    %180 = vector.broadcast %cst_78 : f32 to vector<8x512xf32>
    %181 = arith.cmpf ogt, %179, %180 : vector<8x512xf32>
    %cst_79 = arith.constant 2.000000e-01 : f32
    %182 = vector.broadcast %cst_79 : f32 to vector<8x512xf32>
    %183 = arith.mulf %182, %179 : vector<8x512xf32>
    %184 = arith.select %181, %179, %183 : vector<8x512xi1>, vector<8x512xf32>
    %c0_80 = arith.constant 0 : index
    %c0_81 = arith.constant 0 : index
    %185 = vector.load %arg15[%c0_80, %c0_81] : memref<8x512xf32, #tpu.memory_space<vmem>>, vector<8x512xf32>
    tpu.vector_store %arg15[%c0_80, %c0_81], %184 {strides = array<i32>} : memref<8x512xf32, #tpu.memory_space<vmem>>, vector<8x512xf32>,
    return
  }
}

</mosaic_0001>

<llo_original>
// kernel: discriminator_forward.1
$region0: #{discriminator_forward.1}
  #allocation0 [shape = 'u32[]', space=smem, size = 0x4, offset = 0x4, fixed_abs, tag = 'smem constant byte address 0x4 - core index']
  #allocation1 [shape = 'u32[144,128]{1,0:T(1,128)}', space=vmem, size = 0x12000, scoped, tag = 'internal scratch']
  #allocation2 [shape = 'bf16[512,256]{1,0:T(16,128)(2,1)}', space=vmem, size = 0x40000, scoped, tag = 'scratch operand']
  #allocation3 [shape = 'bf16[1024,512]{1,0:T(16,128)(2,1)}', space=vmem, size = 0x100000, scoped, tag = 'scratch operand']
  #allocation4 [shape = 's32[2]{0}', space=sflag, size = 0x8, scoped, tag = 'scratch operand']
  #allocation5 [shape = 's32[]', space=sflag, size = 0x4, offset = 0, fixed_abs, tag = 'sflag constant byte address 0x0 - dummy sync flag']
  #allocation6 [shape = 's32[]', space=sflag, size = 0x4, offset = 0, fixed_abs, tag = 'sflag constant byte address 0x0 - dummy sync flag']
  %s0 = inlined_call_operand.vmem [shape: bf16[288,48], index: 0, kind: input, shape index: {}]
  %s1 = inlined_call_operand.vmem [shape: bf16[48,512], index: 1, kind: input, shape index: {}]
  %s2 = inlined_call_operand.vmem [shape: bf16[512,128], index: 2, kind: input, shape index: {}]
  %s3 = inlined_call_operand.vmem [shape: f32[1,128], index: 3, kind: input, shape index: {}]
  %s4 = inlined_call_operand.vmem [shape: f32[1,128], index: 4, kind: input, shape index: {}]
  %s5 = inlined_call_operand.vmem [shape: bf16[512,128], index: 5, kind: input, shape index: {}]
  %s6 = inlined_call_operand.vmem [shape: f32[1,128], index: 6, kind: input, shape index: {}]
  %s7 = inlined_call_operand.vmem [shape: f32[1,128], index: 7, kind: input, shape index: {}]
  %s8 = inlined_call_operand.vmem [shape: bf16[4,50,72], index: 8, kind: input, shape index: {}]
  %s9 = inlined_call_operand.vmem [shape: bf16[512,256], index: 9, kind: input, shape index: {}]
  %s10 = inlined_call_operand.vmem [shape: f32[1,256], index: 10, kind: input, shape index: {}]
  %s11 = inlined_call_operand.vmem [shape: f32[1,256], index: 11, kind: input, shape index: {}]
  %s12 = inlined_call_operand.vmem [shape: bf16[1024,512], index: 12, kind: input, shape index: {}]
  %s13 = inlined_call_operand.vmem [shape: f32[1,512], index: 13, kind: input, shape index: {}]
  %s14 = inlined_call_operand.vmem [shape: f32[1,512], index: 14, kind: input, shape index: {}]
  %s15 = inlined_call_operand.vmem [shape: f32[8,512], index: 15, kind: output, shape index: {}]
  %s16 = sld [smem:[#allocation0]]
  $region147: #{discriminator_forward.1} parent=0
    _
  %s18 = ssub.s32 1, %s16
  %s19 = scalar_select 0, %s18, %s16
  // Predicated region
  $region2: #{discriminator_forward.1} parent=0 // pred_check
    _
  $region3: #{discriminator_forward.1} parent=0 // pred_check_branch
    %21 = sbr.rel (0) target = $region5
  $region4: #{discriminator_forward.1} parent=0 // pred_region
    _
  $region5: #{discriminator_forward.1} parent=0 // pred_fallthru
    _
  // Predicated region
  $region6: #{discriminator_forward.1} parent=0 // pred_check
    _
  $region7: #{discriminator_forward.1} parent=0 // pred_check_branch
    %23 = sbr.rel (0) target = $region9
  $region8: #{discriminator_forward.1} parent=0 // pred_region
    _
  $region9: #{discriminator_forward.1} parent=0 // pred_fallthru
    _
  // Predicated region
  $region10: #{discriminator_forward.1} parent=0 // pred_check
    _
  $region11: #{discriminator_forward.1} parent=0 // pred_check_branch
    %25 = sbr.rel (0) target = $region13
  $region12: #{discriminator_forward.1} parent=0 // pred_region
    _
  $region13: #{discriminator_forward.1} parent=0 // pred_fallthru
    _
  // Predicated region
  $region14: #{discriminator_forward.1} parent=0 // pred_check
    _
  $region15: #{discriminator_forward.1} parent=0 // pred_check_branch
    %27 = sbr.rel (0) target = $region17
  $region16: #{discriminator_forward.1} parent=0 // pred_region
    _
  $region17: #{discriminator_forward.1} parent=0 // pred_fallthru
    _
  // Predicated region
  $region18: #{discriminator_forward.1} parent=0 // pred_check
    _
  $region19: #{discriminator_forward.1} parent=0 // pred_check_branch
    %29 = sbr.rel (0) target = $region21
  $region20: #{discriminator_forward.1} parent=0 // pred_region
    _
  $region21: #{discriminator_forward.1} parent=0 // pred_fallthru
    _
  // Predicated region
  $region22: #{discriminator_forward.1} parent=0 // pred_check
    _
  $region23: #{discriminator_forward.1} parent=0 // pred_check_branch
    %31 = sbr.rel (0) target = $region25
  $region24: #{discriminator_forward.1} parent=0 // pred_region
    _
  $region25: #{discriminator_forward.1} parent=0 // pred_fallthru
    _
  // Predicated region
  $region26: #{discriminator_forward.1} parent=0 // pred_check
    _
  $region27: #{discriminator_forward.1} parent=0 // pred_check_branch
    %33 = sbr.rel (0) target = $region29
  $region28: #{discriminator_forward.1} parent=0 // pred_region
    _
  $region29: #{discriminator_forward.1} parent=0 // pred_fallthru
    _
  // Predicated region
  $region30: #{discriminator_forward.1} parent=0 // pred_check
    _
  $region31: #{discriminator_forward.1} parent=0 // pred_check_branch
    %35 = sbr.rel (0) target = $region33
  $region32: #{discriminator_forward.1} parent=0 // pred_region
    _
  $region33: #{discriminator_forward.1} parent=0 // pred_fallthru
    _
  // Predicated region
  $region34: #{discriminator_forward.1} parent=0 // pred_check
    _
  $region35: #{discriminator_forward.1} parent=0 // pred_check_branch
    %37 = sbr.rel (0) target = $region37
  $region36: #{discriminator_forward.1} parent=0 // pred_region
    _
  $region37: #{discriminator_forward.1} parent=0 // pred_fallthru
    _
  // Predicated region
  $region38: #{discriminator_forward.1} parent=0 // pred_check
    _
  $region39: #{discriminator_forward.1} parent=0 // pred_check_branch
    %39 = sbr.rel (0) target = $region41
  $region40: #{discriminator_forward.1} parent=0 // pred_region
    _
  $region41: #{discriminator_forward.1} parent=0 // pred_fallthru
    _
  // Predicated region
  $region42: #{discriminator_forward.1} parent=0 // pred_check
    _
  $region43: #{discriminator_forward.1} parent=0 // pred_check_branch
    %41 = sbr.rel (0) target = $region45
  $region44: #{discriminator_forward.1} parent=0 // pred_region
    _
  $region45: #{discriminator_forward.1} parent=0 // pred_fallthru
    _
  // Predicated region
  $region46: #{discriminator_forward.1} parent=0 // pred_check
    _
  $region47: #{discriminator_forward.1} parent=0 // pred_check_branch
    %43 = sbr.rel (0) target = $region49
  $region48: #{discriminator_forward.1} parent=0 // pred_region
    _
  $region49: #{discriminator_forward.1} parent=0 // pred_fallthru
    _
  // Predicated region
  $region50: #{discriminator_forward.1} parent=0 // pred_check
    _
  $region51: #{discriminator_forward.1} parent=0 // pred_check_branch
    %45 = sbr.rel (0) target = $region53
  $region52: #{discriminator_forward.1} parent=0 // pred_region
    _
  $region53: #{discriminator_forward.1} parent=0 // pred_fallthru
    _
  %p48 = scmp.lt.u32.totalorder 4, 8
  %p49 = pneg %p48
  // Predicated region
  $region54: #{discriminator_forward.1} parent=0 // pred_check
    _
  $region55: #{discriminator_forward.1} parent=0 // pred_check_branch
    %51 = sbr.rel (%p48) target = $region57
  $region56: #{discriminator_forward.1} parent=0 // pred_region
    %s320 = sand.u32 4, 7
    %p321 = scmp.eq.s32.totalorder %s320, 0
    %p322 = pneg %p321
    // Predicated region
    $region69: #{discriminator_forward.1} parent=56 // pred_check
      _
    $region70: #{discriminator_forward.1} parent=56 // pred_check_branch
      %324 = sbr.rel (%p321) target = $region72
    $region71: #{discriminator_forward.1} parent=56 // pred_region
      %s325 = sand.u32 4, 7
      %s326 = ssub.s32 4, %s325
      %s327 = scalar_lea.vmem %s9, %s326
      %s328 = ssub.s32 4, %s325
      %s329 = scalar_lea.vmem [#allocation2], %s328
      loop: start=0, step=1, limit=1
      $region73: #{discriminator_forward.1} parent=71 // loop_pre_header
        _
      $region74: #{discriminator_forward.1} parent=71 // loop_header
        %s331 = sphi 0, %s335
        %p332 = scmp.ge.s32.totalorder %s331, 1
        %s336 = sphi %s9, %s9
        %s337 = sphi [#allocation2], [#allocation2]
      $region75: #{discriminator_forward.1} parent=71 // loop_header_branch
        %334 = sbr.rel (%p332) target = $region79
      $region76: #{discriminator_forward.1} parent=71 // loop_body
        _
      $region77: #{discriminator_forward.1} parent=71 // loop_footer
        %s335 = sadd.s32 1, %s331
      $region78: #{discriminator_forward.1} parent=71 // loop_footer_branch
        %330 = sbr.rel target = $region74
      $region79: #{discriminator_forward.1} parent=71 // loop_exit
        _
      %s338 = sshllo.u32 0, %s325
      loop: start=0, step=1, limit=1
      $region80: #{discriminator_forward.1} parent=71 // loop_pre_header
        _
      $region81: #{discriminator_forward.1} parent=71 // loop_header
        %s340 = sphi 0, %s344
        %p341 = scmp.ge.s32.totalorder %s340, 1
        %s345 = sphi %s327, %s327
        %s346 = sphi %s329, %s329
      $region82: #{discriminator_forward.1} parent=71 // loop_header_branch
        %343 = sbr.rel (%p341) target = $region86
      $region83: #{discriminator_forward.1} parent=71 // loop_body
        %v347 = vld [vmem:[%s345] sm:%s338]
        %348 = vst [vmem:[%s346] sm:%s338] %v347
        %v349 = vld [vmem:[%s345 + $0x8] sm:%s338]
        %350 = vst [vmem:[%s346 + $0x4] sm:%s338] %v349
        %v351 = vld [vmem:[%s345 + $0x4] sm:%s338]
        %352 = vst [vmem:[%s346 + $0x8] sm:%s338] %v351
        %v353 = vld [vmem:[%s345 + $0xc] sm:%s338]
        %354 = vst [vmem:[%s346 + $0xc] sm:%s338] %v353
        %v355 = vld [vmem:[%s345 + $0x10] sm:%s338]
        %356 = vst [vmem:[%s346 + $0x10] sm:%s338] %v355
        %v357 = vld [vmem:[%s345 + $0x18] sm:%s338]
        %358 = vst [vmem:[%s346 + $0x14] sm:%s338] %v357
        %v359 = vld [vmem:[%s345 + $0x14] sm:%s338]
        %360 = vst [vmem:[%s346 + $0x18] sm:%s338] %v359
        %v361 = vld [vmem:[%s345 + $0x1c] sm:%s338]
        %362 = vst [vmem:[%s346 + $0x1c] sm:%s338] %v361
        %v363 = vld [vmem:[%s345 + $0x20] sm:%s338]
        %364 = vst [vmem:[%s346 + $0x20] sm:%s338] %v363
        %v365 = vld [vmem:[%s345 + $0x28] sm:%s338]
        %366 = vst [vmem:[%s346 + $0x24] sm:%s338] %v365
        %v367 = vld [vmem:[%s345 + $0x24] sm:%s338]
        %368 = vst [vmem:[%s346 + $0x28] sm:%s338] %v367
        %v369 = vld [vmem:[%s345 + $0x2c] sm:%s338]
        %370 = vst [vmem:[%s346 + $0x2c] sm:%s338] %v369
        %v371 = vld [vmem:[%s345 + $0x30] sm:%s338]
        %372 = vst [vmem:[%s346 + $0x30] sm:%s338] %v371
        %v373 = vld [vmem:[%s345 + $0x38] sm:%s338]
        %374 = vst [vmem:[%s346 + $0x34] sm:%s338] %v373
        %v375 = vld [vmem:[%s345 + $0x34] sm:%s338]
        %376 = vst [vmem:[%s346 + $0x38] sm:%s338] %v375
        %v377 = vld [vmem:[%s345 + $0x3c] sm:%s338]
        %378 = vst [vmem:[%s346 + $0x3c] sm:%s338] %v377
        %v379 = vld [vmem:[%s345 + $0x40] sm:%s338]
        %380 = vst [vmem:[%s346 + $0x40] sm:%s338] %v379
        %v381 = vld [vmem:[%s345 + $0x48] sm:%s338]
        %382 = vst [vmem:[%s346 + $0x44] sm:%s338] %v381
        %v383 = vld [vmem:[%s345 + $0x44] sm:%s338]
        %384 = vst [vmem:[%s346 + $0x48] sm:%s338] %v383
        %v385 = vld [vmem:[%s345 + $0x4c] sm:%s338]
        %386 = vst [vmem:[%s346 + $0x4c] sm:%s338] %v385
        %v387 = vld [vmem:[%s345 + $0x50] sm:%s338]
        %388 = vst [vmem:[%s346 + $0x50] sm:%s338] %v387
        %v389 = vld [vmem:[%s345 + $0x58] sm:%s338]
        %390 = vst [vmem:[%s346 + $0x54] sm:%s338] %v389
        %v391 = vld [vmem:[%s345 + $0x54] sm:%s338]
        %392 = vst [vmem:[%s346 + $0x58] sm:%s338] %v391
        %v393 = vld [vmem:[%s345 + $0x5c] sm:%s338]
        %394 = vst [vmem:[%s346 + $0x5c] sm:%s338] %v393
        %v395 = vld [vmem:[%s345 + $0x60] sm:%s338]
        %396 = vst [vmem:[%s346 + $0x60] sm:%s338] %v395
        %v397 = vld [vmem:[%s345 + $0x68] sm:%s338]
        %398 = vst [vmem:[%s346 + $0x64] sm:%s338] %v397
        %v399 = vld [vmem:[%s345 + $0x64] sm:%s338]
        %400 = vst [vmem:[%s346 + $0x68] sm:%s338] %v399
        %v401 = vld [vmem:[%s345 + $0x6c] sm:%s338]
        %402 = vst [vmem:[%s346 + $0x6c] sm:%s338] %v401
        %v403 = vld [vmem:[%s345 + $0x70] sm:%s338]
        %404 = vst [vmem:[%s346 + $0x70] sm:%s338] %v403
        %v405 = vld [vmem:[%s345 + $0x78] sm:%s338]
        %406 = vst [vmem:[%s346 + $0x74] sm:%s338] %v405
        %v407 = vld [vmem:[%s345 + $0x74] sm:%s338]
        %408 = vst [vmem:[%s346 + $0x78] sm:%s338] %v407
        %v409 = vld [vmem:[%s345 + $0x7c] sm:%s338]
        %410 = vst [vmem:[%s346 + $0x7c] sm:%s338] %v409
        %v411 = vld [vmem:[%s345 + $0x80] sm:%s338]
        %412 = vst [vmem:[%s346 + $0x80] sm:%s338] %v411
        %v413 = vld [vmem:[%s345 + $0x88] sm:%s338]
        %414 = vst [vmem:[%s346 + $0x84] sm:%s338] %v413
        %v415 = vld [vmem:[%s345 + $0x84] sm:%s338]
        %416 = vst [vmem:[%s346 + $0x88] sm:%s338] %v415
        %v417 = vld [vmem:[%s345 + $0x8c] sm:%s338]
        %418 = vst [vmem:[%s346 + $0x8c] sm:%s338] %v417
        %v419 = vld [vmem:[%s345 + $0x90] sm:%s338]
        %420 = vst [vmem:[%s346 + $0x90] sm:%s338] %v419
        %v421 = vld [vmem:[%s345 + $0x98] sm:%s338]
        %422 = vst [vmem:[%s346 + $0x94] sm:%s338] %v421
        %v423 = vld [vmem:[%s345 + $0x94] sm:%s338]
        %424 = vst [vmem:[%s346 + $0x98] sm:%s338] %v423
        %v425 = vld [vmem:[%s345 + $0x9c] sm:%s338]
        %426 = vst [vmem:[%s346 + $0x9c] sm:%s338] %v425
        %v427 = vld [vmem:[%s345 + $0xa0] sm:%s338]
        %428 = vst [vmem:[%s346 + $0xa0] sm:%s338] %v427
        %v429 = vld [vmem:[%s345 + $0xa8] sm:%s338]
        %430 = vst [vmem:[%s346 + $0xa4] sm:%s338] %v429
        %v431 = vld [vmem:[%s345 + $0xa4] sm:%s338]
        %432 = vst [vmem:[%s346 + $0xa8] sm:%s338] %v431
        %v433 = vld [vmem:[%s345 + $0xac] sm:%s338]
        %434 = vst [vmem:[%s346 + $0xac] sm:%s338] %v433
        %v435 = vld [vmem:[%s345 + $0xb0] sm:%s338]
        %436 = vst [vmem:[%s346 + $0xb0] sm:%s338] %v435
        %v437 = vld [vmem:[%s345 + $0xb8] sm:%s338]
        %438 = vst [vmem:[%s346 + $0xb4] sm:%s338] %v437
        %v439 = vld [vmem:[%s345 + $0xb4] sm:%s338]
        %440 = vst [vmem:[%s346 + $0xb8] sm:%s338] %v439
        %v441 = vld [vmem:[%s345 + $0xbc] sm:%s338]
        %442 = vst [vmem:[%s346 + $0xbc] sm:%s338] %v441
        %v443 = vld [vmem:[%s345 + $0xc0] sm:%s338]
        %444 = vst [vmem:[%s346 + $0xc0] sm:%s338] %v443
        %v445 = vld [vmem:[%s345 + $0xc8] sm:%s338]
        %446 = vst [vmem:[%s346 + $0xc4] sm:%s338] %v445
        %v447 = vld [vmem:[%s345 + $0xc4] sm:%s338]
        %448 = vst [vmem:[%s346 + $0xc8] sm:%s338] %v447
        %v449 = vld [vmem:[%s345 + $0xcc] sm:%s338]
        %450 = vst [vmem:[%s346 + $0xcc] sm:%s338] %v449
        %v451 = vld [vmem:[%s345 + $0xd0] sm:%s338]
        %452 = vst [vmem:[%s346 + $0xd0] sm:%s338] %v451
        %v453 = vld [vmem:[%s345 + $0xd8] sm:%s338]
        %454 = vst [vmem:[%s346 + $0xd4] sm:%s338] %v453
        %v455 = vld [vmem:[%s345 + $0xd4] sm:%s338]
        %456 = vst [vmem:[%s346 + $0xd8] sm:%s338] %v455
        %v457 = vld [vmem:[%s345 + $0xdc] sm:%s338]
        %458 = vst [vmem:[%s346 + $0xdc] sm:%s338] %v457
        %v459 = vld [vmem:[%s345 + $0xe0] sm:%s338]
        %460 = vst [vmem:[%s346 + $0xe0] sm:%s338] %v459
        %v461 = vld [vmem:[%s345 + $0xe8] sm:%s338]
        %462 = vst [vmem:[%s346 + $0xe4] sm:%s338] %v461
        %v463 = vld [vmem:[%s345 + $0xe4] sm:%s338]
        %464 = vst [vmem:[%s346 + $0xe8] sm:%s338] %v463
        %v465 = vld [vmem:[%s345 + $0xec] sm:%s338]
        %466 = vst [vmem:[%s346 + $0xec] sm:%s338] %v465
        %v467 = vld [vmem:[%s345 + $0xf0] sm:%s338]
        %468 = vst [vmem:[%s346 + $0xf0] sm:%s338] %v467
        %v469 = vld [vmem:[%s345 + $0xf8] sm:%s338]
        %470 = vst [vmem:[%s346 + $0xf4] sm:%s338] %v469
        %v471 = vld [vmem:[%s345 + $0xf4] sm:%s338]
        %472 = vst [vmem:[%s346 + $0xf8] sm:%s338] %v471
        %v473 = vld [vmem:[%s345 + $0xfc] sm:%s338]
        %474 = vst [vmem:[%s346 + $0xfc] sm:%s338] %v473
        %v475 = vld [vmem:[%s345 + $0x100] sm:%s338]
        %476 = vst [vmem:[%s346 + $0x100] sm:%s338] %v475
        %v477 = vld [vmem:[%s345 + $0x108] sm:%s338]
        %478 = vst [vmem:[%s346 + $0x104] sm:%s338] %v477
        %v479 = vld [vmem:[%s345 + $0x104] sm:%s338]
        %480 = vst [vmem:[%s346 + $0x108] sm:%s338] %v479
        %v481 = vld [vmem:[%s345 + $0x10c] sm:%s338]
        %482 = vst [vmem:[%s346 + $0x10c] sm:%s338] %v481
        %v483 = vld [vmem:[%s345 + $0x110] sm:%s338]
        %484 = vst [vmem:[%s346 + $0x110] sm:%s338] %v483
        %v485 = vld [vmem:[%s345 + $0x118] sm:%s338]
        %486 = vst [vmem:[%s346 + $0x114] sm:%s338] %v485
        %v487 = vld [vmem:[%s345 + $0x114] sm:%s338]
        %488 = vst [vmem:[%s346 + $0x118] sm:%s338] %v487
        %v489 = vld [vmem:[%s345 + $0x11c] sm:%s338]
        %490 = vst [vmem:[%s346 + $0x11c] sm:%s338] %v489
        %v491 = vld [vmem:[%s345 + $0x120] sm:%s338]
        %492 = vst [vmem:[%s346 + $0x120] sm:%s338] %v491
        %v493 = vld [vmem:[%s345 + $0x128] sm:%s338]
        %494 = vst [vmem:[%s346 + $0x124] sm:%s338] %v493
        %v495 = vld [vmem:[%s345 + $0x124] sm:%s338]
        %496 = vst [vmem:[%s346 + $0x128] sm:%s338] %v495
        %v497 = vld [vmem:[%s345 + $0x12c] sm:%s338]
        %498 = vst [vmem:[%s346 + $0x12c] sm:%s338] %v497
        %v499 = vld [vmem:[%s345 + $0x130] sm:%s338]
        %500 = vst [vmem:[%s346 + $0x130] sm:%s338] %v499
        %v501 = vld [vmem:[%s345 + $0x138] sm:%s338]
        %502 = vst [vmem:[%s346 + $0x134] sm:%s338] %v501
        %v503 = vld [vmem:[%s345 + $0x134] sm:%s338]
        %504 = vst [vmem:[%s346 + $0x138] sm:%s338] %v503
        %v505 = vld [vmem:[%s345 + $0x13c] sm:%s338]
        %506 = vst [vmem:[%s346 + $0x13c] sm:%s338] %v505
        %v507 = vld [vmem:[%s345 + $0x140] sm:%s338]
        %508 = vst [vmem:[%s346 + $0x140] sm:%s338] %v507
        %v509 = vld [vmem:[%s345 + $0x148] sm:%s338]
        %510 = vst [vmem:[%s346 + $0x144] sm:%s338] %v509
        %v511 = vld [vmem:[%s345 + $0x144] sm:%s338]
        %512 = vst [vmem:[%s346 + $0x148] sm:%s338] %v511
        %v513 = vld [vmem:[%s345 + $0x14c] sm:%s338]
        %514 = vst [vmem:[%s346 + $0x14c] sm:%s338] %v513
        %v515 = vld [vmem:[%s345 + $0x150] sm:%s338]
        %516 = vst [vmem:[%s346 + $0x150] sm:%s338] %v515
        %v517 = vld [vmem:[%s345 + $0x158] sm:%s338]
        %518 = vst [vmem:[%s346 + $0x154] sm:%s338] %v517
        %v519 = vld [vmem:[%s345 + $0x154] sm:%s338]
        %520 = vst [vmem:[%s346 + $0x158] sm:%s338] %v519
        %v521 = vld [vmem:[%s345 + $0x15c] sm:%s338]
        %522 = vst [vmem:[%s346 + $0x15c] sm:%s338] %v521
        %v523 = vld [vmem:[%s345 + $0x160] sm:%s338]
        %524 = vst [vmem:[%s346 + $0x160] sm:%s338] %v523
        %v525 = vld [vmem:[%s345 + $0x168] sm:%s338]
        %526 = vst [vmem:[%s346 + $0x164] sm:%s338] %v525
        %v527 = vld [vmem:[%s345 + $0x164] sm:%s338]
        %528 = vst [vmem:[%s346 + $0x168] sm:%s338] %v527
        %v529 = vld [vmem:[%s345 + $0x16c] sm:%s338]
        %530 = vst [vmem:[%s346 + $0x16c] sm:%s338] %v529
        %v531 = vld [vmem:[%s345 + $0x170] sm:%s338]
        %532 = vst [vmem:[%s346 + $0x170] sm:%s338] %v531
        %v533 = vld [vmem:[%s345 + $0x178] sm:%s338]
        %534 = vst [vmem:[%s346 + $0x174] sm:%s338] %v533
        %v535 = vld [vmem:[%s345 + $0x174] sm:%s338]
        %536 = vst [vmem:[%s346 + $0x178] sm:%s338] %v535
        %v537 = vld [vmem:[%s345 + $0x17c] sm:%s338]
        %538 = vst [vmem:[%s346 + $0x17c] sm:%s338] %v537
        %v539 = vld [vmem:[%s345 + $0x180] sm:%s338]
        %540 = vst [vmem:[%s346 + $0x180] sm:%s338] %v539
        %v541 = vld [vmem:[%s345 + $0x188] sm:%s338]
        %542 = vst [vmem:[%s346 + $0x184] sm:%s338] %v541
        %v543 = vld [vmem:[%s345 + $0x184] sm:%s338]
        %544 = vst [vmem:[%s346 + $0x188] sm:%s338] %v543
        %v545 = vld [vmem:[%s345 + $0x18c] sm:%s338]
        %546 = vst [vmem:[%s346 + $0x18c] sm:%s338] %v545
        %v547 = vld [vmem:[%s345 + $0x190] sm:%s338]
        %548 = vst [vmem:[%s346 + $0x190] sm:%s338] %v547
        %v549 = vld [vmem:[%s345 + $0x198] sm:%s338]
        %550 = vst [vmem:[%s346 + $0x194] sm:%s338] %v549
        %v551 = vld [vmem:[%s345 + $0x194] sm:%s338]
        %552 = vst [vmem:[%s346 + $0x198] sm:%s338] %v551
        %v553 = vld [vmem:[%s345 + $0x19c] sm:%s338]
        %554 = vst [vmem:[%s346 + $0x19c] sm:%s338] %v553
        %v555 = vld [vmem:[%s345 + $0x1a0] sm:%s338]
        %556 = vst [vmem:[%s346 + $0x1a0] sm:%s338] %v555
        %v557 = vld [vmem:[%s345 + $0x1a8] sm:%s338]
        %558 = vst [vmem:[%s346 + $0x1a4] sm:%s338] %v557
        %v559 = vld [vmem:[%s345 + $0x1a4] sm:%s338]
        %560 = vst [vmem:[%s346 + $0x1a8] sm:%s338] %v559
        %v561 = vld [vmem:[%s345 + $0x1ac] sm:%s338]
        %562 = vst [vmem:[%s346 + $0x1ac] sm:%s338] %v561
        %v563 = vld [vmem:[%s345 + $0x1b0] sm:%s338]
        %564 = vst [vmem:[%s346 + $0x1b0] sm:%s338] %v563
        %v565 = vld [vmem:[%s345 + $0x1b8] sm:%s338]
        %566 = vst [vmem:[%s346 + $0x1b4] sm:%s338] %v565
        %v567 = vld [vmem:[%s345 + $0x1b4] sm:%s338]
        %568 = vst [vmem:[%s346 + $0x1b8] sm:%s338] %v567
        %v569 = vld [vmem:[%s345 + $0x1bc] sm:%s338]
        %570 = vst [vmem:[%s346 + $0x1bc] sm:%s338] %v569
        %v571 = vld [vmem:[%s345 + $0x1c0] sm:%s338]
        %572 = vst [vmem:[%s346 + $0x1c0] sm:%s338] %v571
        %v573 = vld [vmem:[%s345 + $0x1c8] sm:%s338]
        %574 = vst [vmem:[%s346 + $0x1c4] sm:%s338] %v573
        %v575 = vld [vmem:[%s345 + $0x1c4] sm:%s338]
        %576 = vst [vmem:[%s346 + $0x1c8] sm:%s338] %v575
        %v577 = vld [vmem:[%s345 + $0x1cc] sm:%s338]
        %578 = vst [vmem:[%s346 + $0x1cc] sm:%s338] %v577
        %v579 = vld [vmem:[%s345 + $0x1d0] sm:%s338]
        %580 = vst [vmem:[%s346 + $0x1d0] sm:%s338] %v579
        %v581 = vld [vmem:[%s345 + $0x1d8] sm:%s338]
        %582 = vst [vmem:[%s346 + $0x1d4] sm:%s338] %v581
        %v583 = vld [vmem:[%s345 + $0x1d4] sm:%s338]
        %584 = vst [vmem:[%s346 + $0x1d8] sm:%s338] %v583
        %v585 = vld [vmem:[%s345 + $0x1dc] sm:%s338]
        %586 = vst [vmem:[%s346 + $0x1dc] sm:%s338] %v585
        %v587 = vld [vmem:[%s345 + $0x1e0] sm:%s338]
        %588 = vst [vmem:[%s346 + $0x1e0] sm:%s338] %v587
        %v589 = vld [vmem:[%s345 + $0x1e8] sm:%s338]
        %590 = vst [vmem:[%s346 + $0x1e4] sm:%s338] %v589
        %v591 = vld [vmem:[%s345 + $0x1e4] sm:%s338]
        %592 = vst [vmem:[%s346 + $0x1e8] sm:%s338] %v591
        %v593 = vld [vmem:[%s345 + $0x1ec] sm:%s338]
        %594 = vst [vmem:[%s346 + $0x1ec] sm:%s338] %v593
        %v595 = vld [vmem:[%s345 + $0x1f0] sm:%s338]
        %596 = vst [vmem:[%s346 + $0x1f0] sm:%s338] %v595
        %v597 = vld [vmem:[%s345 + $0x1f8] sm:%s338]
        %598 = vst [vmem:[%s346 + $0x1f4] sm:%s338] %v597
        %v599 = vld [vmem:[%s345 + $0x1f4] sm:%s338]
        %600 = vst [vmem:[%s346 + $0x1f8] sm:%s338] %v599
        %v601 = vld [vmem:[%s345 + $0x1fc] sm:%s338]
        %602 = vst [vmem:[%s346 + $0x1fc] sm:%s338] %v601
      $region84: #{discriminator_forward.1} parent=71 // loop_footer
        %s344 = sadd.s32 1, %s340
      $region85: #{discriminator_forward.1} parent=71 // loop_footer_branch
        %339 = sbr.rel target = $region81
      $region86: #{discriminator_forward.1} parent=71 // loop_exit
        _
    $region72: #{discriminator_forward.1} parent=56 // pred_fallthru
      _
  $region57: #{discriminator_forward.1} parent=0 // pred_fallthru
    _
  // Predicated region
  $region58: #{discriminator_forward.1} parent=0 // pred_check
    %p52 = pneg %p48
  $region59: #{discriminator_forward.1} parent=0 // pred_check_branch
    %54 = sbr.rel (%p52) target = $region61
  $region60: #{discriminator_forward.1} parent=0 // pred_region
    %s55 = sshllo.u32 0, 4
    loop: start=0, step=1, limit=1
    $region62: #{discriminator_forward.1} parent=60 // loop_pre_header
      _
    $region63: #{discriminator_forward.1} parent=60 // loop_header
      %s57 = sphi 0, %s61
      %p58 = scmp.ge.s32.totalorder %s57, 1
      %s62 = sphi %s9, %s9
      %s63 = sphi [#allocation2], [#allocation2]
    $region64: #{discriminator_forward.1} parent=60 // loop_header_branch
      %60 = sbr.rel (%p58) target = $region68
    $region65: #{discriminator_forward.1} parent=60 // loop_body
      %v64 = vld [vmem:[%s62] sm:%s55]
      %65 = vst [vmem:[%s63] sm:%s55] %v64
      %v66 = vld [vmem:[%s62 + $0x8] sm:%s55]
      %67 = vst [vmem:[%s63 + $0x4] sm:%s55] %v66
      %v68 = vld [vmem:[%s62 + $0x4] sm:%s55]
      %69 = vst [vmem:[%s63 + $0x8] sm:%s55] %v68
      %v70 = vld [vmem:[%s62 + $0xc] sm:%s55]
      %71 = vst [vmem:[%s63 + $0xc] sm:%s55] %v70
      %v72 = vld [vmem:[%s62 + $0x10] sm:%s55]
      %73 = vst [vmem:[%s63 + $0x10] sm:%s55] %v72
      %v74 = vld [vmem:[%s62 + $0x18] sm:%s55]
      %75 = vst [vmem:[%s63 + $0x14] sm:%s55] %v74
      %v76 = vld [vmem:[%s62 + $0x14] sm:%s55]
      %77 = vst [vmem:[%s63 + $0x18] sm:%s55] %v76
      %v78 = vld [vmem:[%s62 + $0x1c] sm:%s55]
      %79 = vst [vmem:[%s63 + $0x1c] sm:%s55] %v78
      %v80 = vld [vmem:[%s62 + $0x20] sm:%s55]
      %81 = vst [vmem:[%s63 + $0x20] sm:%s55] %v80
      %v82 = vld [vmem:[%s62 + $0x28] sm:%s55]
      %83 = vst [vmem:[%s63 + $0x24] sm:%s55] %v82
      %v84 = vld [vmem:[%s62 + $0x24] sm:%s55]
      %85 = vst [vmem:[%s63 + $0x28] sm:%s55] %v84
      %v86 = vld [vmem:[%s62 + $0x2c] sm:%s55]
      %87 = vst [vmem:[%s63 + $0x2c] sm:%s55] %v86
      %v88 = vld [vmem:[%s62 + $0x30] sm:%s55]
      %89 = vst [vmem:[%s63 + $0x30] sm:%s55] %v88
      %v90 = vld [vmem:[%s62 + $0x38] sm:%s55]
      %91 = vst [vmem:[%s63 + $0x34] sm:%s55] %v90
      %v92 = vld [vmem:[%s62 + $0x34] sm:%s55]
      %93 = vst [vmem:[%s63 + $0x38] sm:%s55] %v92
      %v94 = vld [vmem:[%s62 + $0x3c] sm:%s55]
      %95 = vst [vmem:[%s63 + $0x3c] sm:%s55] %v94
      %v96 = vld [vmem:[%s62 + $0x40] sm:%s55]
      %97 = vst [vmem:[%s63 + $0x40] sm:%s55] %v96
      %v98 = vld [vmem:[%s62 + $0x48] sm:%s55]
      %99 = vst [vmem:[%s63 + $0x44] sm:%s55] %v98
      %v100 = vld [vmem:[%s62 + $0x44] sm:%s55]
      %101 = vst [vmem:[%s63 + $0x48] sm:%s55] %v100
      %v102 = vld [vmem:[%s62 + $0x4c] sm:%s55]
      %103 = vst [vmem:[%s63 + $0x4c] sm:%s55] %v102
      %v104 = vld [vmem:[%s62 + $0x50] sm:%s55]
      %105 = vst [vmem:[%s63 + $0x50] sm:%s55] %v104
      %v106 = vld [vmem:[%s62 + $0x58] sm:%s55]
      %107 = vst [vmem:[%s63 + $0x54] sm:%s55] %v106
      %v108 = vld [vmem:[%s62 + $0x54] sm:%s55]
      %109 = vst [vmem:[%s63 + $0x58] sm:%s55] %v108
      %v110 = vld [vmem:[%s62 + $0x5c] sm:%s55]
      %111 = vst [vmem:[%s63 + $0x5c] sm:%s55] %v110
      %v112 = vld [vmem:[%s62 + $0x60] sm:%s55]
      %113 = vst [vmem:[%s63 + $0x60] sm:%s55] %v112
      %v114 = vld [vmem:[%s62 + $0x68] sm:%s55]
      %115 = vst [vmem:[%s63 + $0x64] sm:%s55] %v114
      %v116 = vld [vmem:[%s62 + $0x64] sm:%s55]
      %117 = vst [vmem:[%s63 + $0x68] sm:%s55] %v116
      %v118 = vld [vmem:[%s62 + $0x6c] sm:%s55]
      %119 = vst [vmem:[%s63 + $0x6c] sm:%s55] %v118
      %v120 = vld [vmem:[%s62 + $0x70] sm:%s55]
      %121 = vst [vmem:[%s63 + $0x70] sm:%s55] %v120
      %v122 = vld [vmem:[%s62 + $0x78] sm:%s55]
      %123 = vst [vmem:[%s63 + $0x74] sm:%s55] %v122
      %v124 = vld [vmem:[%s62 + $0x74] sm:%s55]
      %125 = vst [vmem:[%s63 + $0x78] sm:%s55] %v124
      %v126 = vld [vmem:[%s62 + $0x7c] sm:%s55]
      %127 = vst [vmem:[%s63 + $0x7c] sm:%s55] %v126
      %v128 = vld [vmem:[%s62 + $0x80] sm:%s55]
      %129 = vst [vmem:[%s63 + $0x80] sm:%s55] %v128
      %v130 = vld [vmem:[%s62 + $0x88] sm:%s55]
      %131 = vst [vmem:[%s63 + $0x84] sm:%s55] %v130
      %v132 = vld [vmem:[%s62 + $0x84] sm:%s55]
      %133 = vst [vmem:[%s63 + $0x88] sm:%s55] %v132
      %v134 = vld [vmem:[%s62 + $0x8c] sm:%s55]
      %135 = vst [vmem:[%s63 + $0x8c] sm:%s55] %v134
      %v136 = vld [vmem:[%s62 + $0x90] sm:%s55]
      %137 = vst [vmem:[%s63 + $0x90] sm:%s55] %v136
      %v138 = vld [vmem:[%s62 + $0x98] sm:%s55]
      %139 = vst [vmem:[%s63 + $0x94] sm:%s55] %v138
      %v140 = vld [vmem:[%s62 + $0x94] sm:%s55]
      %141 = vst [vmem:[%s63 + $0x98] sm:%s55] %v140
      %v142 = vld [vmem:[%s62 + $0x9c] sm:%s55]
      %143 = vst [vmem:[%s63 + $0x9c] sm:%s55] %v142
      %v144 = vld [vmem:[%s62 + $0xa0] sm:%s55]
      %145 = vst [vmem:[%s63 + $0xa0] sm:%s55] %v144
      %v146 = vld [vmem:[%s62 + $0xa8] sm:%s55]
      %147 = vst [vmem:[%s63 + $0xa4] sm:%s55] %v146
      %v148 = vld [vmem:[%s62 + $0xa4] sm:%s55]
      %149 = vst [vmem:[%s63 + $0xa8] sm:%s55] %v148
      %v150 = vld [vmem:[%s62 + $0xac] sm:%s55]
      %151 = vst [vmem:[%s63 + $0xac] sm:%s55] %v150
      %v152 = vld [vmem:[%s62 + $0xb0] sm:%s55]
      %153 = vst [vmem:[%s63 + $0xb0] sm:%s55] %v152
      %v154 = vld [vmem:[%s62 + $0xb8] sm:%s55]
      %155 = vst [vmem:[%s63 + $0xb4] sm:%s55] %v154
      %v156 = vld [vmem:[%s62 + $0xb4] sm:%s55]
      %157 = vst [vmem:[%s63 + $0xb8] sm:%s55] %v156
      %v158 = vld [vmem:[%s62 + $0xbc] sm:%s55]
      %159 = vst [vmem:[%s63 + $0xbc] sm:%s55] %v158
      %v160 = vld [vmem:[%s62 + $0xc0] sm:%s55]
      %161 = vst [vmem:[%s63 + $0xc0] sm:%s55] %v160
      %v162 = vld [vmem:[%s62 + $0xc8] sm:%s55]
      %163 = vst [vmem:[%s63 + $0xc4] sm:%s55] %v162
      %v164 = vld [vmem:[%s62 + $0xc4] sm:%s55]
      %165 = vst [vmem:[%s63 + $0xc8] sm:%s55] %v164
      %v166 = vld [vmem:[%s62 + $0xcc] sm:%s55]
      %167 = vst [vmem:[%s63 + $0xcc] sm:%s55] %v166
      %v168 = vld [vmem:[%s62 + $0xd0] sm:%s55]
      %169 = vst [vmem:[%s63 + $0xd0] sm:%s55] %v168
      %v170 = vld [vmem:[%s62 + $0xd8] sm:%s55]
      %171 = vst [vmem:[%s63 + $0xd4] sm:%s55] %v170
      %v172 = vld [vmem:[%s62 + $0xd4] sm:%s55]
      %173 = vst [vmem:[%s63 + $0xd8] sm:%s55] %v172
      %v174 = vld [vmem:[%s62 + $0xdc] sm:%s55]
      %175 = vst [vmem:[%s63 + $0xdc] sm:%s55] %v174
      %v176 = vld [vmem:[%s62 + $0xe0] sm:%s55]
      %177 = vst [vmem:[%s63 + $0xe0] sm:%s55] %v176
      %v178 = vld [vmem:[%s62 + $0xe8] sm:%s55]
      %179 = vst [vmem:[%s63 + $0xe4] sm:%s55] %v178
      %v180 = vld [vmem:[%s62 + $0xe4] sm:%s55]
      %181 = vst [vmem:[%s63 + $0xe8] sm:%s55] %v180
      %v182 = vld [vmem:[%s62 + $0xec] sm:%s55]
      %183 = vst [vmem:[%s63 + $0xec] sm:%s55] %v182
      %v184 = vld [vmem:[%s62 + $0xf0] sm:%s55]
      %185 = vst [vmem:[%s63 + $0xf0] sm:%s55] %v184
      %v186 = vld [vmem:[%s62 + $0xf8] sm:%s55]
      %187 = vst [vmem:[%s63 + $0xf4] sm:%s55] %v186
      %v188 = vld [vmem:[%s62 + $0xf4] sm:%s55]
      %189 = vst [vmem:[%s63 + $0xf8] sm:%s55] %v188
      %v190 = vld [vmem:[%s62 + $0xfc] sm:%s55]
      %191 = vst [vmem:[%s63 + $0xfc] sm:%s55] %v190
      %v192 = vld [vmem:[%s62 + $0x100] sm:%s55]
      %193 = vst [vmem:[%s63 + $0x100] sm:%s55] %v192
      %v194 = vld [vmem:[%s62 + $0x108] sm:%s55]
      %195 = vst [vmem:[%s63 + $0x104] sm:%s55] %v194
      %v196 = vld [vmem:[%s62 + $0x104] sm:%s55]
      %197 = vst [vmem:[%s63 + $0x108] sm:%s55] %v196
      %v198 = vld [vmem:[%s62 + $0x10c] sm:%s55]
      %199 = vst [vmem:[%s63 + $0x10c] sm:%s55] %v198
      %v200 = vld [vmem:[%s62 + $0x110] sm:%s55]
      %201 = vst [vmem:[%s63 + $0x110] sm:%s55] %v200
      %v202 = vld [vmem:[%s62 + $0x118] sm:%s55]
      %203 = vst [vmem:[%s63 + $0x114] sm:%s55] %v202
      %v204 = vld [vmem:[%s62 + $0x114] sm:%s55]
      %205 = vst [vmem:[%s63 + $0x118] sm:%s55] %v204
      %v206 = vld [vmem:[%s62 + $0x11c] sm:%s55]
      %207 = vst [vmem:[%s63 + $0x11c] sm:%s55] %v206
      %v208 = vld [vmem:[%s62 + $0x120] sm:%s55]
      %209 = vst [vmem:[%s63 + $0x120] sm:%s55] %v208
      %v210 = vld [vmem:[%s62 + $0x128] sm:%s55]
      %211 = vst [vmem:[%s63 + $0x124] sm:%s55] %v210
      %v212 = vld [vmem:[%s62 + $0x124] sm:%s55]
      %213 = vst [vmem:[%s63 + $0x128] sm:%s55] %v212
      %v214 = vld [vmem:[%s62 + $0x12c] sm:%s55]
      %215 = vst [vmem:[%s63 + $0x12c] sm:%s55] %v214
      %v216 = vld [vmem:[%s62 + $0x130] sm:%s55]
      %217 = vst [vmem:[%s63 + $0x130] sm:%s55] %v216
      %v218 = vld [vmem:[%s62 + $0x138] sm:%s55]
      %219 = vst [vmem:[%s63 + $0x134] sm:%s55] %v218
      %v220 = vld [vmem:[%s62 + $0x134] sm:%s55]
      %221 = vst [vmem:[%s63 + $0x138] sm:%s55] %v220
      %v222 = vld [vmem:[%s62 + $0x13c] sm:%s55]
      %223 = vst [vmem:[%s63 + $0x13c] sm:%s55] %v222
      %v224 = vld [vmem:[%s62 + $0x140] sm:%s55]
      %225 = vst [vmem:[%s63 + $0x140] sm:%s55] %v224
      %v226 = vld [vmem:[%s62 + $0x148] sm:%s55]
      %227 = vst [vmem:[%s63 + $0x144] sm:%s55] %v226
      %v228 = vld [vmem:[%s62 + $0x144] sm:%s55]
      %229 = vst [vmem:[%s63 + $0x148] sm:%s55] %v228
      %v230 = vld [vmem:[%s62 + $0x14c] sm:%s55]
      %231 = vst [vmem:[%s63 + $0x14c] sm:%s55] %v230
      %v232 = vld [vmem:[%s62 + $0x150] sm:%s55]
      %233 = vst [vmem:[%s63 + $0x150] sm:%s55] %v232
      %v234 = vld [vmem:[%s62 + $0x158] sm:%s55]
      %235 = vst [vmem:[%s63 + $0x154] sm:%s55] %v234
      %v236 = vld [vmem:[%s62 + $0x154] sm:%s55]
      %237 = vst [vmem:[%s63 + $0x158] sm:%s55] %v236
      %v238 = vld [vmem:[%s62 + $0x15c] sm:%s55]
      %239 = vst [vmem:[%s63 + $0x15c] sm:%s55] %v238
      %v240 = vld [vmem:[%s62 + $0x160] sm:%s55]
      %241 = vst [vmem:[%s63 + $0x160] sm:%s55] %v240
      %v242 = vld [vmem:[%s62 + $0x168] sm:%s55]
      %243 = vst [vmem:[%s63 + $0x164] sm:%s55] %v242
      %v244 = vld [vmem:[%s62 + $0x164] sm:%s55]
      %245 = vst [vmem:[%s63 + $0x168] sm:%s55] %v244
      %v246 = vld [vmem:[%s62 + $0x16c] sm:%s55]
      %247 = vst [vmem:[%s63 + $0x16c] sm:%s55] %v246
      %v248 = vld [vmem:[%s62 + $0x170] sm:%s55]
      %249 = vst [vmem:[%s63 + $0x170] sm:%s55] %v248
      %v250 = vld [vmem:[%s62 + $0x178] sm:%s55]
      %251 = vst [vmem:[%s63 + $0x174] sm:%s55] %v250
      %v252 = vld [vmem:[%s62 + $0x174] sm:%s55]
      %253 = vst [vmem:[%s63 + $0x178] sm:%s55] %v252
      %v254 = vld [vmem:[%s62 + $0x17c] sm:%s55]
      %255 = vst [vmem:[%s63 + $0x17c] sm:%s55] %v254
      %v256 = vld [vmem:[%s62 + $0x180] sm:%s55]
      %257 = vst [vmem:[%s63 + $0x180] sm:%s55] %v256
      %v258 = vld [vmem:[%s62 + $0x188] sm:%s55]
      %259 = vst [vmem:[%s63 + $0x184] sm:%s55] %v258
      %v260 = vld [vmem:[%s62 + $0x184] sm:%s55]
      %261 = vst [vmem:[%s63 + $0x188] sm:%s55] %v260
      %v262 = vld [vmem:[%s62 + $0x18c] sm:%s55]
      %263 = vst [vmem:[%s63 + $0x18c] sm:%s55] %v262
      %v264 = vld [vmem:[%s62 + $0x190] sm:%s55]
      %265 = vst [vmem:[%s63 + $0x190] sm:%s55] %v264
      %v266 = vld [vmem:[%s62 + $0x198] sm:%s55]
      %267 = vst [vmem:[%s63 + $0x194] sm:%s55] %v266
      %v268 = vld [vmem:[%s62 + $0x194] sm:%s55]
      %269 = vst [vmem:[%s63 + $0x198] sm:%s55] %v268
      %v270 = vld [vmem:[%s62 + $0x19c] sm:%s55]
      %271 = vst [vmem:[%s63 + $0x19c] sm:%s55] %v270
      %v272 = vld [vmem:[%s62 + $0x1a0] sm:%s55]
      %273 = vst [vmem:[%s63 + $0x1a0] sm:%s55] %v272
      %v274 = vld [vmem:[%s62 + $0x1a8] sm:%s55]
      %275 = vst [vmem:[%s63 + $0x1a4] sm:%s55] %v274
      %v276 = vld [vmem:[%s62 + $0x1a4] sm:%s55]
      %277 = vst [vmem:[%s63 + $0x1a8] sm:%s55] %v276
      %v278 = vld [vmem:[%s62 + $0x1ac] sm:%s55]
      %279 = vst [vmem:[%s63 + $0x1ac] sm:%s55] %v278
      %v280 = vld [vmem:[%s62 + $0x1b0] sm:%s55]
      %281 = vst [vmem:[%s63 + $0x1b0] sm:%s55] %v280
      %v282 = vld [vmem:[%s62 + $0x1b8] sm:%s55]
      %283 = vst [vmem:[%s63 + $0x1b4] sm:%s55] %v282
      %v284 = vld [vmem:[%s62 + $0x1b4] sm:%s55]
      %285 = vst [vmem:[%s63 + $0x1b8] sm:%s55] %v284
      %v286 = vld [vmem:[%s62 + $0x1bc] sm:%s55]
      %287 = vst [vmem:[%s63 + $0x1bc] sm:%s55] %v286
      %v288 = vld [vmem:[%s62 + $0x1c0] sm:%s55]
      %289 = vst [vmem:[%s63 + $0x1c0] sm:%s55] %v288
      %v290 = vld [vmem:[%s62 + $0x1c8] sm:%s55]
      %291 = vst [vmem:[%s63 + $0x1c4] sm:%s55] %v290
      %v292 = vld [vmem:[%s62 + $0x1c4] sm:%s55]
      %293 = vst [vmem:[%s63 + $0x1c8] sm:%s55] %v292
      %v294 = vld [vmem:[%s62 + $0x1cc] sm:%s55]
      %295 = vst [vmem:[%s63 + $0x1cc] sm:%s55] %v294
      %v296 = vld [vmem:[%s62 + $0x1d0] sm:%s55]
      %297 = vst [vmem:[%s63 + $0x1d0] sm:%s55] %v296
      %v298 = vld [vmem:[%s62 + $0x1d8] sm:%s55]
      %299 = vst [vmem:[%s63 + $0x1d4] sm:%s55] %v298
      %v300 = vld [vmem:[%s62 + $0x1d4] sm:%s55]
      %301 = vst [vmem:[%s63 + $0x1d8] sm:%s55] %v300
      %v302 = vld [vmem:[%s62 + $0x1dc] sm:%s55]
      %303 = vst [vmem:[%s63 + $0x1dc] sm:%s55] %v302
      %v304 = vld [vmem:[%s62 + $0x1e0] sm:%s55]
      %305 = vst [vmem:[%s63 + $0x1e0] sm:%s55] %v304
      %v306 = vld [vmem:[%s62 + $0x1e8] sm:%s55]
      %307 = vst [vmem:[%s63 + $0x1e4] sm:%s55] %v306
      %v308 = vld [vmem:[%s62 + $0x1e4] sm:%s55]
      %309 = vst [vmem:[%s63 + $0x1e8] sm:%s55] %v308
      %v310 = vld [vmem:[%s62 + $0x1ec] sm:%s55]
      %311 = vst [vmem:[%s63 + $0x1ec] sm:%s55] %v310
      %v312 = vld [vmem:[%s62 + $0x1f0] sm:%s55]
      %313 = vst [vmem:[%s63 + $0x1f0] sm:%s55] %v312
      %v314 = vld [vmem:[%s62 + $0x1f8] sm:%s55]
      %315 = vst [vmem:[%s63 + $0x1f4] sm:%s55] %v314
      %v316 = vld [vmem:[%s62 + $0x1f4] sm:%s55]
      %317 = vst [vmem:[%s63 + $0x1f8] sm:%s55] %v316
      %v318 = vld [vmem:[%s62 + $0x1fc] sm:%s55]
      %319 = vst [vmem:[%s63 + $0x1fc] sm:%s55] %v318
    $region66: #{discriminator_forward.1} parent=60 // loop_footer
      %s61 = sadd.s32 1, %s57
    $region67: #{discriminator_forward.1} parent=60 // loop_footer_branch
      %56 = sbr.rel target = $region63
    $region68: #{discriminator_forward.1} parent=60 // loop_exit
      _
  $region61: #{discriminator_forward.1} parent=0 // pred_fallthru
    _
  // Predicated region
  $region87: #{discriminator_forward.1} parent=0 // pred_check
    _
  $region88: #{discriminator_forward.1} parent=0 // pred_check_branch
    %605 = sbr.rel (0) target = $region90
  $region89: #{discriminator_forward.1} parent=0 // pred_region
    %606 = vsyncadd [#allocation4], 8192
  $region90: #{discriminator_forward.1} parent=0 // pred_fallthru
    _
  %s607 = scalar_lea.sflag [#allocation4], 1
  %p609 = scmp.lt.u32.totalorder 4, 8
  %p610 = pneg %p609
  // Predicated region
  $region91: #{discriminator_forward.1} parent=0 // pred_check
    _
  $region92: #{discriminator_forward.1} parent=0 // pred_check_branch
    %612 = sbr.rel (%p609) target = $region94
  $region93: #{discriminator_forward.1} parent=0 // pred_region
    %s1649 = sand.u32 4, 7
    %p1650 = scmp.eq.s32.totalorder %s1649, 0
    // Predicated region
    $region106: #{discriminator_forward.1} parent=93 // pred_check
      %p1651 = pneg %p1650
    $region107: #{discriminator_forward.1} parent=93 // pred_check_branch
      %1653 = sbr.rel (%p1651) target = $region109
    $region108: #{discriminator_forward.1} parent=93 // pred_region
      %s1654 = sshrl.u32 4, 3
      // While loop
      $region110: #{discriminator_forward.1} parent=108 // loop_pre_header
        _
      $region111: #{discriminator_forward.1} parent=108 // loop_header
        %s1658 = sphi 0, %s1660
        %p1659 = scmp.ge.s32.totalorder %s1658, %s1654
        %s1663 = sphi 0, %s2692
        %s1664 = sphi %s12, %s2695
        %s1665 = sphi [#allocation3], %s2696
      $region112: #{discriminator_forward.1} parent=108 // loop_header_branch
        %1662 = sbr.rel (%p1659) target = $region116
      $region113: #{discriminator_forward.1} parent=108 // loop_body
        %v1666 = vld [vmem:[%s1664] sm:$0xff]
        %1667 = vst [vmem:[%s1665] sm:$0xff] %v1666
        %v1668 = vld [vmem:[%s1664 + $0x10] sm:$0xff]
        %1669 = vst [vmem:[%s1665 + $0x4] sm:$0xff] %v1668
        %v1670 = vld [vmem:[%s1664 + $0x4] sm:$0xff]
        %1671 = vst [vmem:[%s1665 + $0x8] sm:$0xff] %v1670
        %v1672 = vld [vmem:[%s1664 + $0x14] sm:$0xff]
        %1673 = vst [vmem:[%s1665 + $0xc] sm:$0xff] %v1672
        %v1674 = vld [vmem:[%s1664 + $0x8] sm:$0xff]
        %1675 = vst [vmem:[%s1665 + $0x10] sm:$0xff] %v1674
        %v1676 = vld [vmem:[%s1664 + $0x18] sm:$0xff]
        %1677 = vst [vmem:[%s1665 + $0x14] sm:$0xff] %v1676
        %v1678 = vld [vmem:[%s1664 + $0xc] sm:$0xff]
        %1679 = vst [vmem:[%s1665 + $0x18] sm:$0xff] %v1678
        %v1680 = vld [vmem:[%s1664 + $0x1c] sm:$0xff]
        %1681 = vst [vmem:[%s1665 + $0x1c] sm:$0xff] %v1680
        %v1682 = vld [vmem:[%s1664 + $0x20] sm:$0xff]
        %1683 = vst [vmem:[%s1665 + $0x20] sm:$0xff] %v1682
        %v1684 = vld [vmem:[%s1664 + $0x30] sm:$0xff]
        %1685 = vst [vmem:[%s1665 + $0x24] sm:$0xff] %v1684
        %v1686 = vld [vmem:[%s1664 + $0x24] sm:$0xff]
        %1687 = vst [vmem:[%s1665 + $0x28] sm:$0xff] %v1686
        %v1688 = vld [vmem:[%s1664 + $0x34] sm:$0xff]
        %1689 = vst [vmem:[%s1665 + $0x2c] sm:$0xff] %v1688
        %v1690 = vld [vmem:[%s1664 + $0x28] sm:$0xff]
        %1691 = vst [vmem:[%s1665 + $0x30] sm:$0xff] %v1690
        %v1692 = vld [vmem:[%s1664 + $0x38] sm:$0xff]
        %1693 = vst [vmem:[%s1665 + $0x34] sm:$0xff] %v1692
        %v1694 = vld [vmem:[%s1664 + $0x2c] sm:$0xff]
        %1695 = vst [vmem:[%s1665 + $0x38] sm:$0xff] %v1694
        %v1696 = vld [vmem:[%s1664 + $0x3c] sm:$0xff]
        %1697 = vst [vmem:[%s1665 + $0x3c] sm:$0xff] %v1696
        %v1698 = vld [vmem:[%s1664 + $0x40] sm:$0xff]
        %1699 = vst [vmem:[%s1665 + $0x40] sm:$0xff] %v1698
        %v1700 = vld [vmem:[%s1664 + $0x50] sm:$0xff]
        %1701 = vst [vmem:[%s1665 + $0x44] sm:$0xff] %v1700
        %v1702 = vld [vmem:[%s1664 + $0x44] sm:$0xff]
        %1703 = vst [vmem:[%s1665 + $0x48] sm:$0xff] %v1702
        %v1704 = vld [vmem:[%s1664 + $0x54] sm:$0xff]
        %1705 = vst [vmem:[%s1665 + $0x4c] sm:$0xff] %v1704
        %v1706 = vld [vmem:[%s1664 + $0x48] sm:$0xff]
        %1707 = vst [vmem:[%s1665 + $0x50] sm:$0xff] %v1706
        %v1708 = vld [vmem:[%s1664 + $0x58] sm:$0xff]
        %1709 = vst [vmem:[%s1665 + $0x54] sm:$0xff] %v1708
        %v1710 = vld [vmem:[%s1664 + $0x4c] sm:$0xff]
        %1711 = vst [vmem:[%s1665 + $0x58] sm:$0xff] %v1710
        %v1712 = vld [vmem:[%s1664 + $0x5c] sm:$0xff]
        %1713 = vst [vmem:[%s1665 + $0x5c] sm:$0xff] %v1712
        %v1714 = vld [vmem:[%s1664 + $0x60] sm:$0xff]
        %1715 = vst [vmem:[%s1665 + $0x60] sm:$0xff] %v1714
        %v1716 = vld [vmem:[%s1664 + $0x70] sm:$0xff]
        %1717 = vst [vmem:[%s1665 + $0x64] sm:$0xff] %v1716
        %v1718 = vld [vmem:[%s1664 + $0x64] sm:$0xff]
        %1719 = vst [vmem:[%s1665 + $0x68] sm:$0xff] %v1718
        %v1720 = vld [vmem:[%s1664 + $0x74] sm:$0xff]
        %1721 = vst [vmem:[%s1665 + $0x6c] sm:$0xff] %v1720
        %v1722 = vld [vmem:[%s1664 + $0x68] sm:$0xff]
        %1723 = vst [vmem:[%s1665 + $0x70] sm:$0xff] %v1722
        %v1724 = vld [vmem:[%s1664 + $0x78] sm:$0xff]
        %1725 = vst [vmem:[%s1665 + $0x74] sm:$0xff] %v1724
        %v1726 = vld [vmem:[%s1664 + $0x6c] sm:$0xff]
        %1727 = vst [vmem:[%s1665 + $0x78] sm:$0xff] %v1726
        %v1728 = vld [vmem:[%s1664 + $0x7c] sm:$0xff]
        %1729 = vst [vmem:[%s1665 + $0x7c] sm:$0xff] %v1728
        %v1730 = vld [vmem:[%s1664 + $0x80] sm:$0xff]
        %1731 = vst [vmem:[%s1665 + $0x80] sm:$0xff] %v1730
        %v1732 = vld [vmem:[%s1664 + $0x90] sm:$0xff]
        %1733 = vst [vmem:[%s1665 + $0x84] sm:$0xff] %v1732
        %v1734 = vld [vmem:[%s1664 + $0x84] sm:$0xff]
        %1735 = vst [vmem:[%s1665 + $0x88] sm:$0xff] %v1734
        %v1736 = vld [vmem:[%s1664 + $0x94] sm:$0xff]
        %1737 = vst [vmem:[%s1665 + $0x8c] sm:$0xff] %v1736
        %v1738 = vld [vmem:[%s1664 + $0x88] sm:$0xff]
        %1739 = vst [vmem:[%s1665 + $0x90] sm:$0xff] %v1738
        %v1740 = vld [vmem:[%s1664 + $0x98] sm:$0xff]
        %1741 = vst [vmem:[%s1665 + $0x94] sm:$0xff] %v1740
        %v1742 = vld [vmem:[%s1664 + $0x8c] sm:$0xff]
        %1743 = vst [vmem:[%s1665 + $0x98] sm:$0xff] %v1742
        %v1744 = vld [vmem:[%s1664 + $0x9c] sm:$0xff]
        %1745 = vst [vmem:[%s1665 + $0x9c] sm:$0xff] %v1744
        %v1746 = vld [vmem:[%s1664 + $0xa0] sm:$0xff]
        %1747 = vst [vmem:[%s1665 + $0xa0] sm:$0xff] %v1746
        %v1748 = vld [vmem:[%s1664 + $0xb0] sm:$0xff]
        %1749 = vst [vmem:[%s1665 + $0xa4] sm:$0xff] %v1748
        %v1750 = vld [vmem:[%s1664 + $0xa4] sm:$0xff]
        %1751 = vst [vmem:[%s1665 + $0xa8] sm:$0xff] %v1750
        %v1752 = vld [vmem:[%s1664 + $0xb4] sm:$0xff]
        %1753 = vst [vmem:[%s1665 + $0xac] sm:$0xff] %v1752
        %v1754 = vld [vmem:[%s1664 + $0xa8] sm:$0xff]
        %1755 = vst [vmem:[%s1665 + $0xb0] sm:$0xff] %v1754
        %v1756 = vld [vmem:[%s1664 + $0xb8] sm:$0xff]
        %1757 = vst [vmem:[%s1665 + $0xb4] sm:$0xff] %v1756
        %v1758 = vld [vmem:[%s1664 + $0xac] sm:$0xff]
        %1759 = vst [vmem:[%s1665 + $0xb8] sm:$0xff] %v1758
        %v1760 = vld [vmem:[%s1664 + $0xbc] sm:$0xff]
        %1761 = vst [vmem:[%s1665 + $0xbc] sm:$0xff] %v1760
        %v1762 = vld [vmem:[%s1664 + $0xc0] sm:$0xff]
        %1763 = vst [vmem:[%s1665 + $0xc0] sm:$0xff] %v1762
        %v1764 = vld [vmem:[%s1664 + $0xd0] sm:$0xff]
        %1765 = vst [vmem:[%s1665 + $0xc4] sm:$0xff] %v1764
        %v1766 = vld [vmem:[%s1664 + $0xc4] sm:$0xff]
        %1767 = vst [vmem:[%s1665 + $0xc8] sm:$0xff] %v1766
        %v1768 = vld [vmem:[%s1664 + $0xd4] sm:$0xff]
        %1769 = vst [vmem:[%s1665 + $0xcc] sm:$0xff] %v1768
        %v1770 = vld [vmem:[%s1664 + $0xc8] sm:$0xff]
        %1771 = vst [vmem:[%s1665 + $0xd0] sm:$0xff] %v1770
        %v1772 = vld [vmem:[%s1664 + $0xd8] sm:$0xff]
        %1773 = vst [vmem:[%s1665 + $0xd4] sm:$0xff] %v1772
        %v1774 = vld [vmem:[%s1664 + $0xcc] sm:$0xff]
        %1775 = vst [vmem:[%s1665 + $0xd8] sm:$0xff] %v1774
        %v1776 = vld [vmem:[%s1664 + $0xdc] sm:$0xff]
        %1777 = vst [vmem:[%s1665 + $0xdc] sm:$0xff] %v1776
        %v1778 = vld [vmem:[%s1664 + $0xe0] sm:$0xff]
        %1779 = vst [vmem:[%s1665 + $0xe0] sm:$0xff] %v1778
        %v1780 = vld [vmem:[%s1664 + $0xf0] sm:$0xff]
        %1781 = vst [vmem:[%s1665 + $0xe4] sm:$0xff] %v1780
        %v1782 = vld [vmem:[%s1664 + $0xe4] sm:$0xff]
        %1783 = vst [vmem:[%s1665 + $0xe8] sm:$0xff] %v1782
        %v1784 = vld [vmem:[%s1664 + $0xf4] sm:$0xff]
        %1785 = vst [vmem:[%s1665 + $0xec] sm:$0xff] %v1784
        %v1786 = vld [vmem:[%s1664 + $0xe8] sm:$0xff]
        %1787 = vst [vmem:[%s1665 + $0xf0] sm:$0xff] %v1786
        %v1788 = vld [vmem:[%s1664 + $0xf8] sm:$0xff]
        %1789 = vst [vmem:[%s1665 + $0xf4] sm:$0xff] %v1788
        %v1790 = vld [vmem:[%s1664 + $0xec] sm:$0xff]
        %1791 = vst [vmem:[%s1665 + $0xf8] sm:$0xff] %v1790
        %v1792 = vld [vmem:[%s1664 + $0xfc] sm:$0xff]
        %1793 = vst [vmem:[%s1665 + $0xfc] sm:$0xff] %v1792
        %v1794 = vld [vmem:[%s1664 + $0x100] sm:$0xff]
        %1795 = vst [vmem:[%s1665 + $0x100] sm:$0xff] %v1794
        %v1796 = vld [vmem:[%s1664 + $0x110] sm:$0xff]
        %1797 = vst [vmem:[%s1665 + $0x104] sm:$0xff] %v1796
        %v1798 = vld [vmem:[%s1664 + $0x104] sm:$0xff]
        %1799 = vst [vmem:[%s1665 + $0x108] sm:$0xff] %v1798
        %v1800 = vld [vmem:[%s1664 + $0x114] sm:$0xff]
        %1801 = vst [vmem:[%s1665 + $0x10c] sm:$0xff] %v1800
        %v1802 = vld [vmem:[%s1664 + $0x108] sm:$0xff]
        %1803 = vst [vmem:[%s1665 + $0x110] sm:$0xff] %v1802
        %v1804 = vld [vmem:[%s1664 + $0x118] sm:$0xff]
        %1805 = vst [vmem:[%s1665 + $0x114] sm:$0xff] %v1804
        %v1806 = vld [vmem:[%s1664 + $0x10c] sm:$0xff]
        %1807 = vst [vmem:[%s1665 + $0x118] sm:$0xff] %v1806
        %v1808 = vld [vmem:[%s1664 + $0x11c] sm:$0xff]
        %1809 = vst [vmem:[%s1665 + $0x11c] sm:$0xff] %v1808
        %v1810 = vld [vmem:[%s1664 + $0x120] sm:$0xff]
        %1811 = vst [vmem:[%s1665 + $0x120] sm:$0xff] %v1810
        %v1812 = vld [vmem:[%s1664 + $0x130] sm:$0xff]
        %1813 = vst [vmem:[%s1665 + $0x124] sm:$0xff] %v1812
        %v1814 = vld [vmem:[%s1664 + $0x124] sm:$0xff]
        %1815 = vst [vmem:[%s1665 + $0x128] sm:$0xff] %v1814
        %v1816 = vld [vmem:[%s1664 + $0x134] sm:$0xff]
        %1817 = vst [vmem:[%s1665 + $0x12c] sm:$0xff] %v1816
        %v1818 = vld [vmem:[%s1664 + $0x128] sm:$0xff]
        %1819 = vst [vmem:[%s1665 + $0x130] sm:$0xff] %v1818
        %v1820 = vld [vmem:[%s1664 + $0x138] sm:$0xff]
        %1821 = vst [vmem:[%s1665 + $0x134] sm:$0xff] %v1820
        %v1822 = vld [vmem:[%s1664 + $0x12c] sm:$0xff]
        %1823 = vst [vmem:[%s1665 + $0x138] sm:$0xff] %v1822
        %v1824 = vld [vmem:[%s1664 + $0x13c] sm:$0xff]
        %1825 = vst [vmem:[%s1665 + $0x13c] sm:$0xff] %v1824
        %v1826 = vld [vmem:[%s1664 + $0x140] sm:$0xff]
        %1827 = vst [vmem:[%s1665 + $0x140] sm:$0xff] %v1826
        %v1828 = vld [vmem:[%s1664 + $0x150] sm:$0xff]
        %1829 = vst [vmem:[%s1665 + $0x144] sm:$0xff] %v1828
        %v1830 = vld [vmem:[%s1664 + $0x144] sm:$0xff]
        %1831 = vst [vmem:[%s1665 + $0x148] sm:$0xff] %v1830
        %v1832 = vld [vmem:[%s1664 + $0x154] sm:$0xff]
        %1833 = vst [vmem:[%s1665 + $0x14c] sm:$0xff] %v1832
        %v1834 = vld [vmem:[%s1664 + $0x148] sm:$0xff]
        %1835 = vst [vmem:[%s1665 + $0x150] sm:$0xff] %v1834
        %v1836 = vld [vmem:[%s1664 + $0x158] sm:$0xff]
        %1837 = vst [vmem:[%s1665 + $0x154] sm:$0xff] %v1836
        %v1838 = vld [vmem:[%s1664 + $0x14c] sm:$0xff]
        %1839 = vst [vmem:[%s1665 + $0x158] sm:$0xff] %v1838
        %v1840 = vld [vmem:[%s1664 + $0x15c] sm:$0xff]
        %1841 = vst [vmem:[%s1665 + $0x15c] sm:$0xff] %v1840
        %v1842 = vld [vmem:[%s1664 + $0x160] sm:$0xff]
        %1843 = vst [vmem:[%s1665 + $0x160] sm:$0xff] %v1842
        %v1844 = vld [vmem:[%s1664 + $0x170] sm:$0xff]
        %1845 = vst [vmem:[%s1665 + $0x164] sm:$0xff] %v1844
        %v1846 = vld [vmem:[%s1664 + $0x164] sm:$0xff]
        %1847 = vst [vmem:[%s1665 + $0x168] sm:$0xff] %v1846
        %v1848 = vld [vmem:[%s1664 + $0x174] sm:$0xff]
        %1849 = vst [vmem:[%s1665 + $0x16c] sm:$0xff] %v1848
        %v1850 = vld [vmem:[%s1664 + $0x168] sm:$0xff]
        %1851 = vst [vmem:[%s1665 + $0x170] sm:$0xff] %v1850
        %v1852 = vld [vmem:[%s1664 + $0x178] sm:$0xff]
        %1853 = vst [vmem:[%s1665 + $0x174] sm:$0xff] %v1852
        %v1854 = vld [vmem:[%s1664 + $0x16c] sm:$0xff]
        %1855 = vst [vmem:[%s1665 + $0x178] sm:$0xff] %v1854
        %v1856 = vld [vmem:[%s1664 + $0x17c] sm:$0xff]
        %1857 = vst [vmem:[%s1665 + $0x17c] sm:$0xff] %v1856
        %v1858 = vld [vmem:[%s1664 + $0x180] sm:$0xff]
        %1859 = vst [vmem:[%s1665 + $0x180] sm:$0xff] %v1858
        %v1860 = vld [vmem:[%s1664 + $0x190] sm:$0xff]
        %1861 = vst [vmem:[%s1665 + $0x184] sm:$0xff] %v1860
        %v1862 = vld [vmem:[%s1664 + $0x184] sm:$0xff]
        %1863 = vst [vmem:[%s1665 + $0x188] sm:$0xff] %v1862
        %v1864 = vld [vmem:[%s1664 + $0x194] sm:$0xff]
        %1865 = vst [vmem:[%s1665 + $0x18c] sm:$0xff] %v1864
        %v1866 = vld [vmem:[%s1664 + $0x188] sm:$0xff]
        %1867 = vst [vmem:[%s1665 + $0x190] sm:$0xff] %v1866
        %v1868 = vld [vmem:[%s1664 + $0x198] sm:$0xff]
        %1869 = vst [vmem:[%s1665 + $0x194] sm:$0xff] %v1868
        %v1870 = vld [vmem:[%s1664 + $0x18c] sm:$0xff]
        %1871 = vst [vmem:[%s1665 + $0x198] sm:$0xff] %v1870
        %v1872 = vld [vmem:[%s1664 + $0x19c] sm:$0xff]
        %1873 = vst [vmem:[%s1665 + $0x19c] sm:$0xff] %v1872
        %v1874 = vld [vmem:[%s1664 + $0x1a0] sm:$0xff]
        %1875 = vst [vmem:[%s1665 + $0x1a0] sm:$0xff] %v1874
        %v1876 = vld [vmem:[%s1664 + $0x1b0] sm:$0xff]
        %1877 = vst [vmem:[%s1665 + $0x1a4] sm:$0xff] %v1876
        %v1878 = vld [vmem:[%s1664 + $0x1a4] sm:$0xff]
        %1879 = vst [vmem:[%s1665 + $0x1a8] sm:$0xff] %v1878
        %v1880 = vld [vmem:[%s1664 + $0x1b4] sm:$0xff]
        %1881 = vst [vmem:[%s1665 + $0x1ac] sm:$0xff] %v1880
        %v1882 = vld [vmem:[%s1664 + $0x1a8] sm:$0xff]
        %1883 = vst [vmem:[%s1665 + $0x1b0] sm:$0xff] %v1882
        %v1884 = vld [vmem:[%s1664 + $0x1b8] sm:$0xff]
        %1885 = vst [vmem:[%s1665 + $0x1b4] sm:$0xff] %v1884
        %v1886 = vld [vmem:[%s1664 + $0x1ac] sm:$0xff]
        %1887 = vst [vmem:[%s1665 + $0x1b8] sm:$0xff] %v1886
        %v1888 = vld [vmem:[%s1664 + $0x1bc] sm:$0xff]
        %1889 = vst [vmem:[%s1665 + $0x1bc] sm:$0xff] %v1888
        %v1890 = vld [vmem:[%s1664 + $0x1c0] sm:$0xff]
        %1891 = vst [vmem:[%s1665 + $0x1c0] sm:$0xff] %v1890
        %v1892 = vld [vmem:[%s1664 + $0x1d0] sm:$0xff]
        %1893 = vst [vmem:[%s1665 + $0x1c4] sm:$0xff] %v1892
        %v1894 = vld [vmem:[%s1664 + $0x1c4] sm:$0xff]
        %1895 = vst [vmem:[%s1665 + $0x1c8] sm:$0xff] %v1894
        %v1896 = vld [vmem:[%s1664 + $0x1d4] sm:$0xff]
        %1897 = vst [vmem:[%s1665 + $0x1cc] sm:$0xff] %v1896
        %v1898 = vld [vmem:[%s1664 + $0x1c8] sm:$0xff]
        %1899 = vst [vmem:[%s1665 + $0x1d0] sm:$0xff] %v1898
        %v1900 = vld [vmem:[%s1664 + $0x1d8] sm:$0xff]
        %1901 = vst [vmem:[%s1665 + $0x1d4] sm:$0xff] %v1900
        %v1902 = vld [vmem:[%s1664 + $0x1cc] sm:$0xff]
        %1903 = vst [vmem:[%s1665 + $0x1d8] sm:$0xff] %v1902
        %v1904 = vld [vmem:[%s1664 + $0x1dc] sm:$0xff]
        %1905 = vst [vmem:[%s1665 + $0x1dc] sm:$0xff] %v1904
        %v1906 = vld [vmem:[%s1664 + $0x1e0] sm:$0xff]
        %1907 = vst [vmem:[%s1665 + $0x1e0] sm:$0xff] %v1906
        %v1908 = vld [vmem:[%s1664 + $0x1f0] sm:$0xff]
        %1909 = vst [vmem:[%s1665 + $0x1e4] sm:$0xff] %v1908
        %v1910 = vld [vmem:[%s1664 + $0x1e4] sm:$0xff]
        %1911 = vst [vmem:[%s1665 + $0x1e8] sm:$0xff] %v1910
        %v1912 = vld [vmem:[%s1664 + $0x1f4] sm:$0xff]
        %1913 = vst [vmem:[%s1665 + $0x1ec] sm:$0xff] %v1912
        %v1914 = vld [vmem:[%s1664 + $0x1e8] sm:$0xff]
        %1915 = vst [vmem:[%s1665 + $0x1f0] sm:$0xff] %v1914
        %v1916 = vld [vmem:[%s1664 + $0x1f8] sm:$0xff]
        %1917 = vst [vmem:[%s1665 + $0x1f4] sm:$0xff] %v1916
        %v1918 = vld [vmem:[%s1664 + $0x1ec] sm:$0xff]
        %1919 = vst [vmem:[%s1665 + $0x1f8] sm:$0xff] %v1918
        %v1920 = vld [vmem:[%s1664 + $0x1fc] sm:$0xff]
        %1921 = vst [vmem:[%s1665 + $0x1fc] sm:$0xff] %v1920
        %v1922 = vld [vmem:[%s1664 + $0x200] sm:$0xff]
        %1923 = vst [vmem:[%s1665 + $0x200] sm:$0xff] %v1922
        %v1924 = vld [vmem:[%s1664 + $0x210] sm:$0xff]
        %1925 = vst [vmem:[%s1665 + $0x204] sm:$0xff] %v1924
        %v1926 = vld [vmem:[%s1664 + $0x204] sm:$0xff]
        %1927 = vst [vmem:[%s1665 + $0x208] sm:$0xff] %v1926
        %v1928 = vld [vmem:[%s1664 + $0x214] sm:$0xff]
        %1929 = vst [vmem:[%s1665 + $0x20c] sm:$0xff] %v1928
        %v1930 = vld [vmem:[%s1664 + $0x208] sm:$0xff]
        %1931 = vst [vmem:[%s1665 + $0x210] sm:$0xff] %v1930
        %v1932 = vld [vmem:[%s1664 + $0x218] sm:$0xff]
        %1933 = vst [vmem:[%s1665 + $0x214] sm:$0xff] %v1932
        %v1934 = vld [vmem:[%s1664 + $0x20c] sm:$0xff]
        %1935 = vst [vmem:[%s1665 + $0x218] sm:$0xff] %v1934
        %v1936 = vld [vmem:[%s1664 + $0x21c] sm:$0xff]
        %1937 = vst [vmem:[%s1665 + $0x21c] sm:$0xff] %v1936
        %v1938 = vld [vmem:[%s1664 + $0x220] sm:$0xff]
        %1939 = vst [vmem:[%s1665 + $0x220] sm:$0xff] %v1938
        %v1940 = vld [vmem:[%s1664 + $0x230] sm:$0xff]
        %1941 = vst [vmem:[%s1665 + $0x224] sm:$0xff] %v1940
        %v1942 = vld [vmem:[%s1664 + $0x224] sm:$0xff]
        %1943 = vst [vmem:[%s1665 + $0x228] sm:$0xff] %v1942
        %v1944 = vld [vmem:[%s1664 + $0x234] sm:$0xff]
        %1945 = vst [vmem:[%s1665 + $0x22c] sm:$0xff] %v1944
        %v1946 = vld [vmem:[%s1664 + $0x228] sm:$0xff]
        %1947 = vst [vmem:[%s1665 + $0x230] sm:$0xff] %v1946
        %v1948 = vld [vmem:[%s1664 + $0x238] sm:$0xff]
        %1949 = vst [vmem:[%s1665 + $0x234] sm:$0xff] %v1948
        %v1950 = vld [vmem:[%s1664 + $0x22c] sm:$0xff]
        %1951 = vst [vmem:[%s1665 + $0x238] sm:$0xff] %v1950
        %v1952 = vld [vmem:[%s1664 + $0x23c] sm:$0xff]
        %1953 = vst [vmem:[%s1665 + $0x23c] sm:$0xff] %v1952
        %v1954 = vld [vmem:[%s1664 + $0x240] sm:$0xff]
        %1955 = vst [vmem:[%s1665 + $0x240] sm:$0xff] %v1954
        %v1956 = vld [vmem:[%s1664 + $0x250] sm:$0xff]
        %1957 = vst [vmem:[%s1665 + $0x244] sm:$0xff] %v1956
        %v1958 = vld [vmem:[%s1664 + $0x244] sm:$0xff]
        %1959 = vst [vmem:[%s1665 + $0x248] sm:$0xff] %v1958
        %v1960 = vld [vmem:[%s1664 + $0x254] sm:$0xff]
        %1961 = vst [vmem:[%s1665 + $0x24c] sm:$0xff] %v1960
        %v1962 = vld [vmem:[%s1664 + $0x248] sm:$0xff]
        %1963 = vst [vmem:[%s1665 + $0x250] sm:$0xff] %v1962
        %v1964 = vld [vmem:[%s1664 + $0x258] sm:$0xff]
        %1965 = vst [vmem:[%s1665 + $0x254] sm:$0xff] %v1964
        %v1966 = vld [vmem:[%s1664 + $0x24c] sm:$0xff]
        %1967 = vst [vmem:[%s1665 + $0x258] sm:$0xff] %v1966
        %v1968 = vld [vmem:[%s1664 + $0x25c] sm:$0xff]
        %1969 = vst [vmem:[%s1665 + $0x25c] sm:$0xff] %v1968
        %v1970 = vld [vmem:[%s1664 + $0x260] sm:$0xff]
        %1971 = vst [vmem:[%s1665 + $0x260] sm:$0xff] %v1970
        %v1972 = vld [vmem:[%s1664 + $0x270] sm:$0xff]
        %1973 = vst [vmem:[%s1665 + $0x264] sm:$0xff] %v1972
        %v1974 = vld [vmem:[%s1664 + $0x264] sm:$0xff]
        %1975 = vst [vmem:[%s1665 + $0x268] sm:$0xff] %v1974
        %v1976 = vld [vmem:[%s1664 + $0x274] sm:$0xff]
        %1977 = vst [vmem:[%s1665 + $0x26c] sm:$0xff] %v1976
        %v1978 = vld [vmem:[%s1664 + $0x268] sm:$0xff]
        %1979 = vst [vmem:[%s1665 + $0x270] sm:$0xff] %v1978
        %v1980 = vld [vmem:[%s1664 + $0x278] sm:$0xff]
        %1981 = vst [vmem:[%s1665 + $0x274] sm:$0xff] %v1980
        %v1982 = vld [vmem:[%s1664 + $0x26c] sm:$0xff]
        %1983 = vst [vmem:[%s1665 + $0x278] sm:$0xff] %v1982
        %v1984 = vld [vmem:[%s1664 + $0x27c] sm:$0xff]
        %1985 = vst [vmem:[%s1665 + $0x27c] sm:$0xff] %v1984
        %v1986 = vld [vmem:[%s1664 + $0x280] sm:$0xff]
        %1987 = vst [vmem:[%s1665 + $0x280] sm:$0xff] %v1986
        %v1988 = vld [vmem:[%s1664 + $0x290] sm:$0xff]
        %1989 = vst [vmem:[%s1665 + $0x284] sm:$0xff] %v1988
        %v1990 = vld [vmem:[%s1664 + $0x284] sm:$0xff]
        %1991 = vst [vmem:[%s1665 + $0x288] sm:$0xff] %v1990
        %v1992 = vld [vmem:[%s1664 + $0x294] sm:$0xff]
        %1993 = vst [vmem:[%s1665 + $0x28c] sm:$0xff] %v1992
        %v1994 = vld [vmem:[%s1664 + $0x288] sm:$0xff]
        %1995 = vst [vmem:[%s1665 + $0x290] sm:$0xff] %v1994
        %v1996 = vld [vmem:[%s1664 + $0x298] sm:$0xff]
        %1997 = vst [vmem:[%s1665 + $0x294] sm:$0xff] %v1996
        %v1998 = vld [vmem:[%s1664 + $0x28c] sm:$0xff]
        %1999 = vst [vmem:[%s1665 + $0x298] sm:$0xff] %v1998
        %v2000 = vld [vmem:[%s1664 + $0x29c] sm:$0xff]
        %2001 = vst [vmem:[%s1665 + $0x29c] sm:$0xff] %v2000
        %v2002 = vld [vmem:[%s1664 + $0x2a0] sm:$0xff]
        %2003 = vst [vmem:[%s1665 + $0x2a0] sm:$0xff] %v2002
        %v2004 = vld [vmem:[%s1664 + $0x2b0] sm:$0xff]
        %2005 = vst [vmem:[%s1665 + $0x2a4] sm:$0xff] %v2004
        %v2006 = vld [vmem:[%s1664 + $0x2a4] sm:$0xff]
        %2007 = vst [vmem:[%s1665 + $0x2a8] sm:$0xff] %v2006
        %v2008 = vld [vmem:[%s1664 + $0x2b4] sm:$0xff]
        %2009 = vst [vmem:[%s1665 + $0x2ac] sm:$0xff] %v2008
        %v2010 = vld [vmem:[%s1664 + $0x2a8] sm:$0xff]
        %2011 = vst [vmem:[%s1665 + $0x2b0] sm:$0xff] %v2010
        %v2012 = vld [vmem:[%s1664 + $0x2b8] sm:$0xff]
        %2013 = vst [vmem:[%s1665 + $0x2b4] sm:$0xff] %v2012
        %v2014 = vld [vmem:[%s1664 + $0x2ac] sm:$0xff]
        %2015 = vst [vmem:[%s1665 + $0x2b8] sm:$0xff] %v2014
        %v2016 = vld [vmem:[%s1664 + $0x2bc] sm:$0xff]
        %2017 = vst [vmem:[%s1665 + $0x2bc] sm:$0xff] %v2016
        %v2018 = vld [vmem:[%s1664 + $0x2c0] sm:$0xff]
        %2019 = vst [vmem:[%s1665 + $0x2c0] sm:$0xff] %v2018
        %v2020 = vld [vmem:[%s1664 + $0x2d0] sm:$0xff]
        %2021 = vst [vmem:[%s1665 + $0x2c4] sm:$0xff] %v2020
        %v2022 = vld [vmem:[%s1664 + $0x2c4] sm:$0xff]
        %2023 = vst [vmem:[%s1665 + $0x2c8] sm:$0xff] %v2022
        %v2024 = vld [vmem:[%s1664 + $0x2d4] sm:$0xff]
        %2025 = vst [vmem:[%s1665 + $0x2cc] sm:$0xff] %v2024
        %v2026 = vld [vmem:[%s1664 + $0x2c8] sm:$0xff]
        %2027 = vst [vmem:[%s1665 + $0x2d0] sm:$0xff] %v2026
        %v2028 = vld [vmem:[%s1664 + $0x2d8] sm:$0xff]
        %2029 = vst [vmem:[%s1665 + $0x2d4] sm:$0xff] %v2028
        %v2030 = vld [vmem:[%s1664 + $0x2cc] sm:$0xff]
        %2031 = vst [vmem:[%s1665 + $0x2d8] sm:$0xff] %v2030
        %v2032 = vld [vmem:[%s1664 + $0x2dc] sm:$0xff]
        %2033 = vst [vmem:[%s1665 + $0x2dc] sm:$0xff] %v2032
        %v2034 = vld [vmem:[%s1664 + $0x2e0] sm:$0xff]
        %2035 = vst [vmem:[%s1665 + $0x2e0] sm:$0xff] %v2034
        %v2036 = vld [vmem:[%s1664 + $0x2f0] sm:$0xff]
        %2037 = vst [vmem:[%s1665 + $0x2e4] sm:$0xff] %v2036
        %v2038 = vld [vmem:[%s1664 + $0x2e4] sm:$0xff]
        %2039 = vst [vmem:[%s1665 + $0x2e8] sm:$0xff] %v2038
        %v2040 = vld [vmem:[%s1664 + $0x2f4] sm:$0xff]
        %2041 = vst [vmem:[%s1665 + $0x2ec] sm:$0xff] %v2040
        %v2042 = vld [vmem:[%s1664 + $0x2e8] sm:$0xff]
        %2043 = vst [vmem:[%s1665 + $0x2f0] sm:$0xff] %v2042
        %v2044 = vld [vmem:[%s1664 + $0x2f8] sm:$0xff]
        %2045 = vst [vmem:[%s1665 + $0x2f4] sm:$0xff] %v2044
        %v2046 = vld [vmem:[%s1664 + $0x2ec] sm:$0xff]
        %2047 = vst [vmem:[%s1665 + $0x2f8] sm:$0xff] %v2046
        %v2048 = vld [vmem:[%s1664 + $0x2fc] sm:$0xff]
        %2049 = vst [vmem:[%s1665 + $0x2fc] sm:$0xff] %v2048
        %v2050 = vld [vmem:[%s1664 + $0x300] sm:$0xff]
        %2051 = vst [vmem:[%s1665 + $0x300] sm:$0xff] %v2050
        %v2052 = vld [vmem:[%s1664 + $0x310] sm:$0xff]
        %2053 = vst [vmem:[%s1665 + $0x304] sm:$0xff] %v2052
        %v2054 = vld [vmem:[%s1664 + $0x304] sm:$0xff]
        %2055 = vst [vmem:[%s1665 + $0x308] sm:$0xff] %v2054
        %v2056 = vld [vmem:[%s1664 + $0x314] sm:$0xff]
        %2057 = vst [vmem:[%s1665 + $0x30c] sm:$0xff] %v2056
        %v2058 = vld [vmem:[%s1664 + $0x308] sm:$0xff]
        %2059 = vst [vmem:[%s1665 + $0x310] sm:$0xff] %v2058
        %v2060 = vld [vmem:[%s1664 + $0x318] sm:$0xff]
        %2061 = vst [vmem:[%s1665 + $0x314] sm:$0xff] %v2060
        %v2062 = vld [vmem:[%s1664 + $0x30c] sm:$0xff]
        %2063 = vst [vmem:[%s1665 + $0x318] sm:$0xff] %v2062
        %v2064 = vld [vmem:[%s1664 + $0x31c] sm:$0xff]
        %2065 = vst [vmem:[%s1665 + $0x31c] sm:$0xff] %v2064
        %v2066 = vld [vmem:[%s1664 + $0x320] sm:$0xff]
        %2067 = vst [vmem:[%s1665 + $0x320] sm:$0xff] %v2066
        %v2068 = vld [vmem:[%s1664 + $0x330] sm:$0xff]
        %2069 = vst [vmem:[%s1665 + $0x324] sm:$0xff] %v2068
        %v2070 = vld [vmem:[%s1664 + $0x324] sm:$0xff]
        %2071 = vst [vmem:[%s1665 + $0x328] sm:$0xff] %v2070
        %v2072 = vld [vmem:[%s1664 + $0x334] sm:$0xff]
        %2073 = vst [vmem:[%s1665 + $0x32c] sm:$0xff] %v2072
        %v2074 = vld [vmem:[%s1664 + $0x328] sm:$0xff]
        %2075 = vst [vmem:[%s1665 + $0x330] sm:$0xff] %v2074
        %v2076 = vld [vmem:[%s1664 + $0x338] sm:$0xff]
        %2077 = vst [vmem:[%s1665 + $0x334] sm:$0xff] %v2076
        %v2078 = vld [vmem:[%s1664 + $0x32c] sm:$0xff]
        %2079 = vst [vmem:[%s1665 + $0x338] sm:$0xff] %v2078
        %v2080 = vld [vmem:[%s1664 + $0x33c] sm:$0xff]
        %2081 = vst [vmem:[%s1665 + $0x33c] sm:$0xff] %v2080
        %v2082 = vld [vmem:[%s1664 + $0x340] sm:$0xff]
        %2083 = vst [vmem:[%s1665 + $0x340] sm:$0xff] %v2082
        %v2084 = vld [vmem:[%s1664 + $0x350] sm:$0xff]
        %2085 = vst [vmem:[%s1665 + $0x344] sm:$0xff] %v2084
        %v2086 = vld [vmem:[%s1664 + $0x344] sm:$0xff]
        %2087 = vst [vmem:[%s1665 + $0x348] sm:$0xff] %v2086
        %v2088 = vld [vmem:[%s1664 + $0x354] sm:$0xff]
        %2089 = vst [vmem:[%s1665 + $0x34c] sm:$0xff] %v2088
        %v2090 = vld [vmem:[%s1664 + $0x348] sm:$0xff]
        %2091 = vst [vmem:[%s1665 + $0x350] sm:$0xff] %v2090
        %v2092 = vld [vmem:[%s1664 + $0x358] sm:$0xff]
        %2093 = vst [vmem:[%s1665 + $0x354] sm:$0xff] %v2092
        %v2094 = vld [vmem:[%s1664 + $0x34c] sm:$0xff]
        %2095 = vst [vmem:[%s1665 + $0x358] sm:$0xff] %v2094
        %v2096 = vld [vmem:[%s1664 + $0x35c] sm:$0xff]
        %2097 = vst [vmem:[%s1665 + $0x35c] sm:$0xff] %v2096
        %v2098 = vld [vmem:[%s1664 + $0x360] sm:$0xff]
        %2099 = vst [vmem:[%s1665 + $0x360] sm:$0xff] %v2098
        %v2100 = vld [vmem:[%s1664 + $0x370] sm:$0xff]
        %2101 = vst [vmem:[%s1665 + $0x364] sm:$0xff] %v2100
        %v2102 = vld [vmem:[%s1664 + $0x364] sm:$0xff]
        %2103 = vst [vmem:[%s1665 + $0x368] sm:$0xff] %v2102
        %v2104 = vld [vmem:[%s1664 + $0x374] sm:$0xff]
        %2105 = vst [vmem:[%s1665 + $0x36c] sm:$0xff] %v2104
        %v2106 = vld [vmem:[%s1664 + $0x368] sm:$0xff]
        %2107 = vst [vmem:[%s1665 + $0x370] sm:$0xff] %v2106
        %v2108 = vld [vmem:[%s1664 + $0x378] sm:$0xff]
        %2109 = vst [vmem:[%s1665 + $0x374] sm:$0xff] %v2108
        %v2110 = vld [vmem:[%s1664 + $0x36c] sm:$0xff]
        %2111 = vst [vmem:[%s1665 + $0x378] sm:$0xff] %v2110
        %v2112 = vld [vmem:[%s1664 + $0x37c] sm:$0xff]
        %2113 = vst [vmem:[%s1665 + $0x37c] sm:$0xff] %v2112
        %v2114 = vld [vmem:[%s1664 + $0x380] sm:$0xff]
        %2115 = vst [vmem:[%s1665 + $0x380] sm:$0xff] %v2114
        %v2116 = vld [vmem:[%s1664 + $0x390] sm:$0xff]
        %2117 = vst [vmem:[%s1665 + $0x384] sm:$0xff] %v2116
        %v2118 = vld [vmem:[%s1664 + $0x384] sm:$0xff]
        %2119 = vst [vmem:[%s1665 + $0x388] sm:$0xff] %v2118
        %v2120 = vld [vmem:[%s1664 + $0x394] sm:$0xff]
        %2121 = vst [vmem:[%s1665 + $0x38c] sm:$0xff] %v2120
        %v2122 = vld [vmem:[%s1664 + $0x388] sm:$0xff]
        %2123 = vst [vmem:[%s1665 + $0x390] sm:$0xff] %v2122
        %v2124 = vld [vmem:[%s1664 + $0x398] sm:$0xff]
        %2125 = vst [vmem:[%s1665 + $0x394] sm:$0xff] %v2124
        %v2126 = vld [vmem:[%s1664 + $0x38c] sm:$0xff]
        %2127 = vst [vmem:[%s1665 + $0x398] sm:$0xff] %v2126
        %v2128 = vld [vmem:[%s1664 + $0x39c] sm:$0xff]
        %2129 = vst [vmem:[%s1665 + $0x39c] sm:$0xff] %v2128
        %v2130 = vld [vmem:[%s1664 + $0x3a0] sm:$0xff]
        %2131 = vst [vmem:[%s1665 + $0x3a0] sm:$0xff] %v2130
        %v2132 = vld [vmem:[%s1664 + $0x3b0] sm:$0xff]
        %2133 = vst [vmem:[%s1665 + $0x3a4] sm:$0xff] %v2132
        %v2134 = vld [vmem:[%s1664 + $0x3a4] sm:$0xff]
        %2135 = vst [vmem:[%s1665 + $0x3a8] sm:$0xff] %v2134
        %v2136 = vld [vmem:[%s1664 + $0x3b4] sm:$0xff]
        %2137 = vst [vmem:[%s1665 + $0x3ac] sm:$0xff] %v2136
        %v2138 = vld [vmem:[%s1664 + $0x3a8] sm:$0xff]
        %2139 = vst [vmem:[%s1665 + $0x3b0] sm:$0xff] %v2138
        %v2140 = vld [vmem:[%s1664 + $0x3b8] sm:$0xff]
        %2141 = vst [vmem:[%s1665 + $0x3b4] sm:$0xff] %v2140
        %v2142 = vld [vmem:[%s1664 + $0x3ac] sm:$0xff]
        %2143 = vst [vmem:[%s1665 + $0x3b8] sm:$0xff] %v2142
        %v2144 = vld [vmem:[%s1664 + $0x3bc] sm:$0xff]
        %2145 = vst [vmem:[%s1665 + $0x3bc] sm:$0xff] %v2144
        %v2146 = vld [vmem:[%s1664 + $0x3c0] sm:$0xff]
        %2147 = vst [vmem:[%s1665 + $0x3c0] sm:$0xff] %v2146
        %v2148 = vld [vmem:[%s1664 + $0x3d0] sm:$0xff]
        %2149 = vst [vmem:[%s1665 + $0x3c4] sm:$0xff] %v2148
        %v2150 = vld [vmem:[%s1664 + $0x3c4] sm:$0xff]
        %2151 = vst [vmem:[%s1665 + $0x3c8] sm:$0xff] %v2150
        %v2152 = vld [vmem:[%s1664 + $0x3d4] sm:$0xff]
        %2153 = vst [vmem:[%s1665 + $0x3cc] sm:$0xff] %v2152
        %v2154 = vld [vmem:[%s1664 + $0x3c8] sm:$0xff]
        %2155 = vst [vmem:[%s1665 + $0x3d0] sm:$0xff] %v2154
        %v2156 = vld [vmem:[%s1664 + $0x3d8] sm:$0xff]
        %2157 = vst [vmem:[%s1665 + $0x3d4] sm:$0xff] %v2156
        %v2158 = vld [vmem:[%s1664 + $0x3cc] sm:$0xff]
        %2159 = vst [vmem:[%s1665 + $0x3d8] sm:$0xff] %v2158
        %v2160 = vld [vmem:[%s1664 + $0x3dc] sm:$0xff]
        %2161 = vst [vmem:[%s1665 + $0x3dc] sm:$0xff] %v2160
        %v2162 = vld [vmem:[%s1664 + $0x3e0] sm:$0xff]
        %2163 = vst [vmem:[%s1665 + $0x3e0] sm:$0xff] %v2162
        %v2164 = vld [vmem:[%s1664 + $0x3f0] sm:$0xff]
        %2165 = vst [vmem:[%s1665 + $0x3e4] sm:$0xff] %v2164
        %v2166 = vld [vmem:[%s1664 + $0x3e4] sm:$0xff]
        %2167 = vst [vmem:[%s1665 + $0x3e8] sm:$0xff] %v2166
        %v2168 = vld [vmem:[%s1664 + $0x3f4] sm:$0xff]
        %2169 = vst [vmem:[%s1665 + $0x3ec] sm:$0xff] %v2168
        %v2170 = vld [vmem:[%s1664 + $0x3e8] sm:$0xff]
        %2171 = vst [vmem:[%s1665 + $0x3f0] sm:$0xff] %v2170
        %v2172 = vld [vmem:[%s1664 + $0x3f8] sm:$0xff]
        %2173 = vst [vmem:[%s1665 + $0x3f4] sm:$0xff] %v2172
        %v2174 = vld [vmem:[%s1664 + $0x3ec] sm:$0xff]
        %2175 = vst [vmem:[%s1665 + $0x3f8] sm:$0xff] %v2174
        %v2176 = vld [vmem:[%s1664 + $0x3fc] sm:$0xff]
        %2177 = vst [vmem:[%s1665 + $0x3fc] sm:$0xff] %v2176
        %v2178 = vld [vmem:[%s1664 + $0x400] sm:$0xff]
        %2179 = vst [vmem:[%s1665 + $0x400] sm:$0xff] %v2178
        %v2180 = vld [vmem:[%s1664 + $0x410] sm:$0xff]
        %2181 = vst [vmem:[%s1665 + $0x404] sm:$0xff] %v2180
        %v2182 = vld [vmem:[%s1664 + $0x404] sm:$0xff]
        %2183 = vst [vmem:[%s1665 + $0x408] sm:$0xff] %v2182
        %v2184 = vld [vmem:[%s1664 + $0x414] sm:$0xff]
        %2185 = vst [vmem:[%s1665 + $0x40c] sm:$0xff] %v2184
        %v2186 = vld [vmem:[%s1664 + $0x408] sm:$0xff]
        %2187 = vst [vmem:[%s1665 + $0x410] sm:$0xff] %v2186
        %v2188 = vld [vmem:[%s1664 + $0x418] sm:$0xff]
        %2189 = vst [vmem:[%s1665 + $0x414] sm:$0xff] %v2188
        %v2190 = vld [vmem:[%s1664 + $0x40c] sm:$0xff]
        %2191 = vst [vmem:[%s1665 + $0x418] sm:$0xff] %v2190
        %v2192 = vld [vmem:[%s1664 + $0x41c] sm:$0xff]
        %2193 = vst [vmem:[%s1665 + $0x41c] sm:$0xff] %v2192
        %v2194 = vld [vmem:[%s1664 + $0x420] sm:$0xff]
        %2195 = vst [vmem:[%s1665 + $0x420] sm:$0xff] %v2194
        %v2196 = vld [vmem:[%s1664 + $0x430] sm:$0xff]
        %2197 = vst [vmem:[%s1665 + $0x424] sm:$0xff] %v2196
        %v2198 = vld [vmem:[%s1664 + $0x424] sm:$0xff]
        %2199 = vst [vmem:[%s1665 + $0x428] sm:$0xff] %v2198
        %v2200 = vld [vmem:[%s1664 + $0x434] sm:$0xff]
        %2201 = vst [vmem:[%s1665 + $0x42c] sm:$0xff] %v2200
        %v2202 = vld [vmem:[%s1664 + $0x428] sm:$0xff]
        %2203 = vst [vmem:[%s1665 + $0x430] sm:$0xff] %v2202
        %v2204 = vld [vmem:[%s1664 + $0x438] sm:$0xff]
        %2205 = vst [vmem:[%s1665 + $0x434] sm:$0xff] %v2204
        %v2206 = vld [vmem:[%s1664 + $0x42c] sm:$0xff]
        %2207 = vst [vmem:[%s1665 + $0x438] sm:$0xff] %v2206
        %v2208 = vld [vmem:[%s1664 + $0x43c] sm:$0xff]
        %2209 = vst [vmem:[%s1665 + $0x43c] sm:$0xff] %v2208
        %v2210 = vld [vmem:[%s1664 + $0x440] sm:$0xff]
        %2211 = vst [vmem:[%s1665 + $0x440] sm:$0xff] %v2210
        %v2212 = vld [vmem:[%s1664 + $0x450] sm:$0xff]
        %2213 = vst [vmem:[%s1665 + $0x444] sm:$0xff] %v2212
        %v2214 = vld [vmem:[%s1664 + $0x444] sm:$0xff]
        %2215 = vst [vmem:[%s1665 + $0x448] sm:$0xff] %v2214
        %v2216 = vld [vmem:[%s1664 + $0x454] sm:$0xff]
        %2217 = vst [vmem:[%s1665 + $0x44c] sm:$0xff] %v2216
        %v2218 = vld [vmem:[%s1664 + $0x448] sm:$0xff]
        %2219 = vst [vmem:[%s1665 + $0x450] sm:$0xff] %v2218
        %v2220 = vld [vmem:[%s1664 + $0x458] sm:$0xff]
        %2221 = vst [vmem:[%s1665 + $0x454] sm:$0xff] %v2220
        %v2222 = vld [vmem:[%s1664 + $0x44c] sm:$0xff]
        %2223 = vst [vmem:[%s1665 + $0x458] sm:$0xff] %v2222
        %v2224 = vld [vmem:[%s1664 + $0x45c] sm:$0xff]
        %2225 = vst [vmem:[%s1665 + $0x45c] sm:$0xff] %v2224
        %v2226 = vld [vmem:[%s1664 + $0x460] sm:$0xff]
        %2227 = vst [vmem:[%s1665 + $0x460] sm:$0xff] %v2226
        %v2228 = vld [vmem:[%s1664 + $0x470] sm:$0xff]
        %2229 = vst [vmem:[%s1665 + $0x464] sm:$0xff] %v2228
        %v2230 = vld [vmem:[%s1664 + $0x464] sm:$0xff]
        %2231 = vst [vmem:[%s1665 + $0x468] sm:$0xff] %v2230
        %v2232 = vld [vmem:[%s1664 + $0x474] sm:$0xff]
        %2233 = vst [vmem:[%s1665 + $0x46c] sm:$0xff] %v2232
        %v2234 = vld [vmem:[%s1664 + $0x468] sm:$0xff]
        %2235 = vst [vmem:[%s1665 + $0x470] sm:$0xff] %v2234
        %v2236 = vld [vmem:[%s1664 + $0x478] sm:$0xff]
        %2237 = vst [vmem:[%s1665 + $0x474] sm:$0xff] %v2236
        %v2238 = vld [vmem:[%s1664 + $0x46c] sm:$0xff]
        %2239 = vst [vmem:[%s1665 + $0x478] sm:$0xff] %v2238
        %v2240 = vld [vmem:[%s1664 + $0x47c] sm:$0xff]
        %2241 = vst [vmem:[%s1665 + $0x47c] sm:$0xff] %v2240
        %v2242 = vld [vmem:[%s1664 + $0x480] sm:$0xff]
        %2243 = vst [vmem:[%s1665 + $0x480] sm:$0xff] %v2242
        %v2244 = vld [vmem:[%s1664 + $0x490] sm:$0xff]
        %2245 = vst [vmem:[%s1665 + $0x484] sm:$0xff] %v2244
        %v2246 = vld [vmem:[%s1664 + $0x484] sm:$0xff]
        %2247 = vst [vmem:[%s1665 + $0x488] sm:$0xff] %v2246
        %v2248 = vld [vmem:[%s1664 + $0x494] sm:$0xff]
        %2249 = vst [vmem:[%s1665 + $0x48c] sm:$0xff] %v2248
        %v2250 = vld [vmem:[%s1664 + $0x488] sm:$0xff]
        %2251 = vst [vmem:[%s1665 + $0x490] sm:$0xff] %v2250
        %v2252 = vld [vmem:[%s1664 + $0x498] sm:$0xff]
        %2253 = vst [vmem:[%s1665 + $0x494] sm:$0xff] %v2252
        %v2254 = vld [vmem:[%s1664 + $0x48c] sm:$0xff]
        %2255 = vst [vmem:[%s1665 + $0x498] sm:$0xff] %v2254
        %v2256 = vld [vmem:[%s1664 + $0x49c] sm:$0xff]
        %2257 = vst [vmem:[%s1665 + $0x49c] sm:$0xff] %v2256
        %v2258 = vld [vmem:[%s1664 + $0x4a0] sm:$0xff]
        %2259 = vst [vmem:[%s1665 + $0x4a0] sm:$0xff] %v2258
        %v2260 = vld [vmem:[%s1664 + $0x4b0] sm:$0xff]
        %2261 = vst [vmem:[%s1665 + $0x4a4] sm:$0xff] %v2260
        %v2262 = vld [vmem:[%s1664 + $0x4a4] sm:$0xff]
        %2263 = vst [vmem:[%s1665 + $0x4a8] sm:$0xff] %v2262
        %v2264 = vld [vmem:[%s1664 + $0x4b4] sm:$0xff]
        %2265 = vst [vmem:[%s1665 + $0x4ac] sm:$0xff] %v2264
        %v2266 = vld [vmem:[%s1664 + $0x4a8] sm:$0xff]
        %2267 = vst [vmem:[%s1665 + $0x4b0] sm:$0xff] %v2266
        %v2268 = vld [vmem:[%s1664 + $0x4b8] sm:$0xff]
        %2269 = vst [vmem:[%s1665 + $0x4b4] sm:$0xff] %v2268
        %v2270 = vld [vmem:[%s1664 + $0x4ac] sm:$0xff]
        %2271 = vst [vmem:[%s1665 + $0x4b8] sm:$0xff] %v2270
        %v2272 = vld [vmem:[%s1664 + $0x4bc] sm:$0xff]
        %2273 = vst [vmem:[%s1665 + $0x4bc] sm:$0xff] %v2272
        %v2274 = vld [vmem:[%s1664 + $0x4c0] sm:$0xff]
        %2275 = vst [vmem:[%s1665 + $0x4c0] sm:$0xff] %v2274
        %v2276 = vld [vmem:[%s1664 + $0x4d0] sm:$0xff]
        %2277 = vst [vmem:[%s1665 + $0x4c4] sm:$0xff] %v2276
        %v2278 = vld [vmem:[%s1664 + $0x4c4] sm:$0xff]
        %2279 = vst [vmem:[%s1665 + $0x4c8] sm:$0xff] %v2278
        %v2280 = vld [vmem:[%s1664 + $0x4d4] sm:$0xff]
        %2281 = vst [vmem:[%s1665 + $0x4cc] sm:$0xff] %v2280
        %v2282 = vld [vmem:[%s1664 + $0x4c8] sm:$0xff]
        %2283 = vst [vmem:[%s1665 + $0x4d0] sm:$0xff] %v2282
        %v2284 = vld [vmem:[%s1664 + $0x4d8] sm:$0xff]
        %2285 = vst [vmem:[%s1665 + $0x4d4] sm:$0xff] %v2284
        %v2286 = vld [vmem:[%s1664 + $0x4cc] sm:$0xff]
        %2287 = vst [vmem:[%s1665 + $0x4d8] sm:$0xff] %v2286
        %v2288 = vld [vmem:[%s1664 + $0x4dc] sm:$0xff]
        %2289 = vst [vmem:[%s1665 + $0x4dc] sm:$0xff] %v2288
        %v2290 = vld [vmem:[%s1664 + $0x4e0] sm:$0xff]
        %2291 = vst [vmem:[%s1665 + $0x4e0] sm:$0xff] %v2290
        %v2292 = vld [vmem:[%s1664 + $0x4f0] sm:$0xff]
        %2293 = vst [vmem:[%s1665 + $0x4e4] sm:$0xff] %v2292
        %v2294 = vld [vmem:[%s1664 + $0x4e4] sm:$0xff]
        %2295 = vst [vmem:[%s1665 + $0x4e8] sm:$0xff] %v2294
        %v2296 = vld [vmem:[%s1664 + $0x4f4] sm:$0xff]
        %2297 = vst [vmem:[%s1665 + $0x4ec] sm:$0xff] %v2296
        %v2298 = vld [vmem:[%s1664 + $0x4e8] sm:$0xff]
        %2299 = vst [vmem:[%s1665 + $0x4f0] sm:$0xff] %v2298
        %v2300 = vld [vmem:[%s1664 + $0x4f8] sm:$0xff]
        %2301 = vst [vmem:[%s1665 + $0x4f4] sm:$0xff] %v2300
        %v2302 = vld [vmem:[%s1664 + $0x4ec] sm:$0xff]
        %2303 = vst [vmem:[%s1665 + $0x4f8] sm:$0xff] %v2302
        %v2304 = vld [vmem:[%s1664 + $0x4fc] sm:$0xff]
        %2305 = vst [vmem:[%s1665 + $0x4fc] sm:$0xff] %v2304
        %v2306 = vld [vmem:[%s1664 + $0x500] sm:$0xff]
        %2307 = vst [vmem:[%s1665 + $0x500] sm:$0xff] %v2306
        %v2308 = vld [vmem:[%s1664 + $0x510] sm:$0xff]
        %2309 = vst [vmem:[%s1665 + $0x504] sm:$0xff] %v2308
        %v2310 = vld [vmem:[%s1664 + $0x504] sm:$0xff]
        %2311 = vst [vmem:[%s1665 + $0x508] sm:$0xff] %v2310
        %v2312 = vld [vmem:[%s1664 + $0x514] sm:$0xff]
        %2313 = vst [vmem:[%s1665 + $0x50c] sm:$0xff] %v2312
        %v2314 = vld [vmem:[%s1664 + $0x508] sm:$0xff]
        %2315 = vst [vmem:[%s1665 + $0x510] sm:$0xff] %v2314
        %v2316 = vld [vmem:[%s1664 + $0x518] sm:$0xff]
        %2317 = vst [vmem:[%s1665 + $0x514] sm:$0xff] %v2316
        %v2318 = vld [vmem:[%s1664 + $0x50c] sm:$0xff]
        %2319 = vst [vmem:[%s1665 + $0x518] sm:$0xff] %v2318
        %v2320 = vld [vmem:[%s1664 + $0x51c] sm:$0xff]
        %2321 = vst [vmem:[%s1665 + $0x51c] sm:$0xff] %v2320
        %v2322 = vld [vmem:[%s1664 + $0x520] sm:$0xff]
        %2323 = vst [vmem:[%s1665 + $0x520] sm:$0xff] %v2322
        %v2324 = vld [vmem:[%s1664 + $0x530] sm:$0xff]
        %2325 = vst [vmem:[%s1665 + $0x524] sm:$0xff] %v2324
        %v2326 = vld [vmem:[%s1664 + $0x524] sm:$0xff]
        %2327 = vst [vmem:[%s1665 + $0x528] sm:$0xff] %v2326
        %v2328 = vld [vmem:[%s1664 + $0x534] sm:$0xff]
        %2329 = vst [vmem:[%s1665 + $0x52c] sm:$0xff] %v2328
        %v2330 = vld [vmem:[%s1664 + $0x528] sm:$0xff]
        %2331 = vst [vmem:[%s1665 + $0x530] sm:$0xff] %v2330
        %v2332 = vld [vmem:[%s1664 + $0x538] sm:$0xff]
        %2333 = vst [vmem:[%s1665 + $0x534] sm:$0xff] %v2332
        %v2334 = vld [vmem:[%s1664 + $0x52c] sm:$0xff]
        %2335 = vst [vmem:[%s1665 + $0x538] sm:$0xff] %v2334
        %v2336 = vld [vmem:[%s1664 + $0x53c] sm:$0xff]
        %2337 = vst [vmem:[%s1665 + $0x53c] sm:$0xff] %v2336
        %v2338 = vld [vmem:[%s1664 + $0x540] sm:$0xff]
        %2339 = vst [vmem:[%s1665 + $0x540] sm:$0xff] %v2338
        %v2340 = vld [vmem:[%s1664 + $0x550] sm:$0xff]
        %2341 = vst [vmem:[%s1665 + $0x544] sm:$0xff] %v2340
        %v2342 = vld [vmem:[%s1664 + $0x544] sm:$0xff]
        %2343 = vst [vmem:[%s1665 + $0x548] sm:$0xff] %v2342
        %v2344 = vld [vmem:[%s1664 + $0x554] sm:$0xff]
        %2345 = vst [vmem:[%s1665 + $0x54c] sm:$0xff] %v2344
        %v2346 = vld [vmem:[%s1664 + $0x548] sm:$0xff]
        %2347 = vst [vmem:[%s1665 + $0x550] sm:$0xff] %v2346
        %v2348 = vld [vmem:[%s1664 + $0x558] sm:$0xff]
        %2349 = vst [vmem:[%s1665 + $0x554] sm:$0xff] %v2348
        %v2350 = vld [vmem:[%s1664 + $0x54c] sm:$0xff]
        %2351 = vst [vmem:[%s1665 + $0x558] sm:$0xff] %v2350
        %v2352 = vld [vmem:[%s1664 + $0x55c] sm:$0xff]
        %2353 = vst [vmem:[%s1665 + $0x55c] sm:$0xff] %v2352
        %v2354 = vld [vmem:[%s1664 + $0x560] sm:$0xff]
        %2355 = vst [vmem:[%s1665 + $0x560] sm:$0xff] %v2354
        %v2356 = vld [vmem:[%s1664 + $0x570] sm:$0xff]
        %2357 = vst [vmem:[%s1665 + $0x564] sm:$0xff] %v2356
        %v2358 = vld [vmem:[%s1664 + $0x564] sm:$0xff]
        %2359 = vst [vmem:[%s1665 + $0x568] sm:$0xff] %v2358
        %v2360 = vld [vmem:[%s1664 + $0x574] sm:$0xff]
        %2361 = vst [vmem:[%s1665 + $0x56c] sm:$0xff] %v2360
        %v2362 = vld [vmem:[%s1664 + $0x568] sm:$0xff]
        %2363 = vst [vmem:[%s1665 + $0x570] sm:$0xff] %v2362
        %v2364 = vld [vmem:[%s1664 + $0x578] sm:$0xff]
        %2365 = vst [vmem:[%s1665 + $0x574] sm:$0xff] %v2364
        %v2366 = vld [vmem:[%s1664 + $0x56c] sm:$0xff]
        %2367 = vst [vmem:[%s1665 + $0x578] sm:$0xff] %v2366
        %v2368 = vld [vmem:[%s1664 + $0x57c] sm:$0xff]
        %2369 = vst [vmem:[%s1665 + $0x57c] sm:$0xff] %v2368
        %v2370 = vld [vmem:[%s1664 + $0x580] sm:$0xff]
        %2371 = vst [vmem:[%s1665 + $0x580] sm:$0xff] %v2370
        %v2372 = vld [vmem:[%s1664 + $0x590] sm:$0xff]
        %2373 = vst [vmem:[%s1665 + $0x584] sm:$0xff] %v2372
        %v2374 = vld [vmem:[%s1664 + $0x584] sm:$0xff]
        %2375 = vst [vmem:[%s1665 + $0x588] sm:$0xff] %v2374
        %v2376 = vld [vmem:[%s1664 + $0x594] sm:$0xff]
        %2377 = vst [vmem:[%s1665 + $0x58c] sm:$0xff] %v2376
        %v2378 = vld [vmem:[%s1664 + $0x588] sm:$0xff]
        %2379 = vst [vmem:[%s1665 + $0x590] sm:$0xff] %v2378
        %v2380 = vld [vmem:[%s1664 + $0x598] sm:$0xff]
        %2381 = vst [vmem:[%s1665 + $0x594] sm:$0xff] %v2380
        %v2382 = vld [vmem:[%s1664 + $0x58c] sm:$0xff]
        %2383 = vst [vmem:[%s1665 + $0x598] sm:$0xff] %v2382
        %v2384 = vld [vmem:[%s1664 + $0x59c] sm:$0xff]
        %2385 = vst [vmem:[%s1665 + $0x59c] sm:$0xff] %v2384
        %v2386 = vld [vmem:[%s1664 + $0x5a0] sm:$0xff]
        %2387 = vst [vmem:[%s1665 + $0x5a0] sm:$0xff] %v2386
        %v2388 = vld [vmem:[%s1664 + $0x5b0] sm:$0xff]
        %2389 = vst [vmem:[%s1665 + $0x5a4] sm:$0xff] %v2388
        %v2390 = vld [vmem:[%s1664 + $0x5a4] sm:$0xff]
        %2391 = vst [vmem:[%s1665 + $0x5a8] sm:$0xff] %v2390
        %v2392 = vld [vmem:[%s1664 + $0x5b4] sm:$0xff]
        %2393 = vst [vmem:[%s1665 + $0x5ac] sm:$0xff] %v2392
        %v2394 = vld [vmem:[%s1664 + $0x5a8] sm:$0xff]
        %2395 = vst [vmem:[%s1665 + $0x5b0] sm:$0xff] %v2394
        %v2396 = vld [vmem:[%s1664 + $0x5b8] sm:$0xff]
        %2397 = vst [vmem:[%s1665 + $0x5b4] sm:$0xff] %v2396
        %v2398 = vld [vmem:[%s1664 + $0x5ac] sm:$0xff]
        %2399 = vst [vmem:[%s1665 + $0x5b8] sm:$0xff] %v2398
        %v2400 = vld [vmem:[%s1664 + $0x5bc] sm:$0xff]
        %2401 = vst [vmem:[%s1665 + $0x5bc] sm:$0xff] %v2400
        %v2402 = vld [vmem:[%s1664 + $0x5c0] sm:$0xff]
        %2403 = vst [vmem:[%s1665 + $0x5c0] sm:$0xff] %v2402
        %v2404 = vld [vmem:[%s1664 + $0x5d0] sm:$0xff]
        %2405 = vst [vmem:[%s1665 + $0x5c4] sm:$0xff] %v2404
        %v2406 = vld [vmem:[%s1664 + $0x5c4] sm:$0xff]
        %2407 = vst [vmem:[%s1665 + $0x5c8] sm:$0xff] %v2406
        %v2408 = vld [vmem:[%s1664 + $0x5d4] sm:$0xff]
        %2409 = vst [vmem:[%s1665 + $0x5cc] sm:$0xff] %v2408
        %v2410 = vld [vmem:[%s1664 + $0x5c8] sm:$0xff]
        %2411 = vst [vmem:[%s1665 + $0x5d0] sm:$0xff] %v2410
        %v2412 = vld [vmem:[%s1664 + $0x5d8] sm:$0xff]
        %2413 = vst [vmem:[%s1665 + $0x5d4] sm:$0xff] %v2412
        %v2414 = vld [vmem:[%s1664 + $0x5cc] sm:$0xff]
        %2415 = vst [vmem:[%s1665 + $0x5d8] sm:$0xff] %v2414
        %v2416 = vld [vmem:[%s1664 + $0x5dc] sm:$0xff]
        %2417 = vst [vmem:[%s1665 + $0x5dc] sm:$0xff] %v2416
        %v2418 = vld [vmem:[%s1664 + $0x5e0] sm:$0xff]
        %2419 = vst [vmem:[%s1665 + $0x5e0] sm:$0xff] %v2418
        %v2420 = vld [vmem:[%s1664 + $0x5f0] sm:$0xff]
        %2421 = vst [vmem:[%s1665 + $0x5e4] sm:$0xff] %v2420
        %v2422 = vld [vmem:[%s1664 + $0x5e4] sm:$0xff]
        %2423 = vst [vmem:[%s1665 + $0x5e8] sm:$0xff] %v2422
        %v2424 = vld [vmem:[%s1664 + $0x5f4] sm:$0xff]
        %2425 = vst [vmem:[%s1665 + $0x5ec] sm:$0xff] %v2424
        %v2426 = vld [vmem:[%s1664 + $0x5e8] sm:$0xff]
        %2427 = vst [vmem:[%s1665 + $0x5f0] sm:$0xff] %v2426
        %v2428 = vld [vmem:[%s1664 + $0x5f8] sm:$0xff]
        %2429 = vst [vmem:[%s1665 + $0x5f4] sm:$0xff] %v2428
        %v2430 = vld [vmem:[%s1664 + $0x5ec] sm:$0xff]
        %2431 = vst [vmem:[%s1665 + $0x5f8] sm:$0xff] %v2430
        %v2432 = vld [vmem:[%s1664 + $0x5fc] sm:$0xff]
        %2433 = vst [vmem:[%s1665 + $0x5fc] sm:$0xff] %v2432
        %v2434 = vld [vmem:[%s1664 + $0x600] sm:$0xff]
        %2435 = vst [vmem:[%s1665 + $0x600] sm:$0xff] %v2434
        %v2436 = vld [vmem:[%s1664 + $0x610] sm:$0xff]
        %2437 = vst [vmem:[%s1665 + $0x604] sm:$0xff] %v2436
        %v2438 = vld [vmem:[%s1664 + $0x604] sm:$0xff]
        %2439 = vst [vmem:[%s1665 + $0x608] sm:$0xff] %v2438
        %v2440 = vld [vmem:[%s1664 + $0x614] sm:$0xff]
        %2441 = vst [vmem:[%s1665 + $0x60c] sm:$0xff] %v2440
        %v2442 = vld [vmem:[%s1664 + $0x608] sm:$0xff]
        %2443 = vst [vmem:[%s1665 + $0x610] sm:$0xff] %v2442
        %v2444 = vld [vmem:[%s1664 + $0x618] sm:$0xff]
        %2445 = vst [vmem:[%s1665 + $0x614] sm:$0xff] %v2444
        %v2446 = vld [vmem:[%s1664 + $0x60c] sm:$0xff]
        %2447 = vst [vmem:[%s1665 + $0x618] sm:$0xff] %v2446
        %v2448 = vld [vmem:[%s1664 + $0x61c] sm:$0xff]
        %2449 = vst [vmem:[%s1665 + $0x61c] sm:$0xff] %v2448
        %v2450 = vld [vmem:[%s1664 + $0x620] sm:$0xff]
        %2451 = vst [vmem:[%s1665 + $0x620] sm:$0xff] %v2450
        %v2452 = vld [vmem:[%s1664 + $0x630] sm:$0xff]
        %2453 = vst [vmem:[%s1665 + $0x624] sm:$0xff] %v2452
        %v2454 = vld [vmem:[%s1664 + $0x624] sm:$0xff]
        %2455 = vst [vmem:[%s1665 + $0x628] sm:$0xff] %v2454
        %v2456 = vld [vmem:[%s1664 + $0x634] sm:$0xff]
        %2457 = vst [vmem:[%s1665 + $0x62c] sm:$0xff] %v2456
        %v2458 = vld [vmem:[%s1664 + $0x628] sm:$0xff]
        %2459 = vst [vmem:[%s1665 + $0x630] sm:$0xff] %v2458
        %v2460 = vld [vmem:[%s1664 + $0x638] sm:$0xff]
        %2461 = vst [vmem:[%s1665 + $0x634] sm:$0xff] %v2460
        %v2462 = vld [vmem:[%s1664 + $0x62c] sm:$0xff]
        %2463 = vst [vmem:[%s1665 + $0x638] sm:$0xff] %v2462
        %v2464 = vld [vmem:[%s1664 + $0x63c] sm:$0xff]
        %2465 = vst [vmem:[%s1665 + $0x63c] sm:$0xff] %v2464
        %v2466 = vld [vmem:[%s1664 + $0x640] sm:$0xff]
        %2467 = vst [vmem:[%s1665 + $0x640] sm:$0xff] %v2466
        %v2468 = vld [vmem:[%s1664 + $0x650] sm:$0xff]
        %2469 = vst [vmem:[%s1665 + $0x644] sm:$0xff] %v2468
        %v2470 = vld [vmem:[%s1664 + $0x644] sm:$0xff]
        %2471 = vst [vmem:[%s1665 + $0x648] sm:$0xff] %v2470
        %v2472 = vld [vmem:[%s1664 + $0x654] sm:$0xff]
        %2473 = vst [vmem:[%s1665 + $0x64c] sm:$0xff] %v2472
        %v2474 = vld [vmem:[%s1664 + $0x648] sm:$0xff]
        %2475 = vst [vmem:[%s1665 + $0x650] sm:$0xff] %v2474
        %v2476 = vld [vmem:[%s1664 + $0x658] sm:$0xff]
        %2477 = vst [vmem:[%s1665 + $0x654] sm:$0xff] %v2476
        %v2478 = vld [vmem:[%s1664 + $0x64c] sm:$0xff]
        %2479 = vst [vmem:[%s1665 + $0x658] sm:$0xff] %v2478
        %v2480 = vld [vmem:[%s1664 + $0x65c] sm:$0xff]
        %2481 = vst [vmem:[%s1665 + $0x65c] sm:$0xff] %v2480
        %v2482 = vld [vmem:[%s1664 + $0x660] sm:$0xff]
        %2483 = vst [vmem:[%s1665 + $0x660] sm:$0xff] %v2482
        %v2484 = vld [vmem:[%s1664 + $0x670] sm:$0xff]
        %2485 = vst [vmem:[%s1665 + $0x664] sm:$0xff] %v2484
        %v2486 = vld [vmem:[%s1664 + $0x664] sm:$0xff]
        %2487 = vst [vmem:[%s1665 + $0x668] sm:$0xff] %v2486
        %v2488 = vld [vmem:[%s1664 + $0x674] sm:$0xff]
        %2489 = vst [vmem:[%s1665 + $0x66c] sm:$0xff] %v2488
        %v2490 = vld [vmem:[%s1664 + $0x668] sm:$0xff]
        %2491 = vst [vmem:[%s1665 + $0x670] sm:$0xff] %v2490
        %v2492 = vld [vmem:[%s1664 + $0x678] sm:$0xff]
        %2493 = vst [vmem:[%s1665 + $0x674] sm:$0xff] %v2492
        %v2494 = vld [vmem:[%s1664 + $0x66c] sm:$0xff]
        %2495 = vst [vmem:[%s1665 + $0x678] sm:$0xff] %v2494
        %v2496 = vld [vmem:[%s1664 + $0x67c] sm:$0xff]
        %2497 = vst [vmem:[%s1665 + $0x67c] sm:$0xff] %v2496
        %v2498 = vld [vmem:[%s1664 + $0x680] sm:$0xff]
        %2499 = vst [vmem:[%s1665 + $0x680] sm:$0xff] %v2498
        %v2500 = vld [vmem:[%s1664 + $0x690] sm:$0xff]
        %2501 = vst [vmem:[%s1665 + $0x684] sm:$0xff] %v2500
        %v2502 = vld [vmem:[%s1664 + $0x684] sm:$0xff]
        %2503 = vst [vmem:[%s1665 + $0x688] sm:$0xff] %v2502
        %v2504 = vld [vmem:[%s1664 + $0x694] sm:$0xff]
        %2505 = vst [vmem:[%s1665 + $0x68c] sm:$0xff] %v2504
        %v2506 = vld [vmem:[%s1664 + $0x688] sm:$0xff]
        %2507 = vst [vmem:[%s1665 + $0x690] sm:$0xff] %v2506
        %v2508 = vld [vmem:[%s1664 + $0x698] sm:$0xff]
        %2509 = vst [vmem:[%s1665 + $0x694] sm:$0xff] %v2508
        %v2510 = vld [vmem:[%s1664 + $0x68c] sm:$0xff]
        %2511 = vst [vmem:[%s1665 + $0x698] sm:$0xff] %v2510
        %v2512 = vld [vmem:[%s1664 + $0x69c] sm:$0xff]
        %2513 = vst [vmem:[%s1665 + $0x69c] sm:$0xff] %v2512
        %v2514 = vld [vmem:[%s1664 + $0x6a0] sm:$0xff]
        %2515 = vst [vmem:[%s1665 + $0x6a0] sm:$0xff] %v2514
        %v2516 = vld [vmem:[%s1664 + $0x6b0] sm:$0xff]
        %2517 = vst [vmem:[%s1665 + $0x6a4] sm:$0xff] %v2516
        %v2518 = vld [vmem:[%s1664 + $0x6a4] sm:$0xff]
        %2519 = vst [vmem:[%s1665 + $0x6a8] sm:$0xff] %v2518
        %v2520 = vld [vmem:[%s1664 + $0x6b4] sm:$0xff]
        %2521 = vst [vmem:[%s1665 + $0x6ac] sm:$0xff] %v2520
        %v2522 = vld [vmem:[%s1664 + $0x6a8] sm:$0xff]
        %2523 = vst [vmem:[%s1665 + $0x6b0] sm:$0xff] %v2522
        %v2524 = vld [vmem:[%s1664 + $0x6b8] sm:$0xff]
        %2525 = vst [vmem:[%s1665 + $0x6b4] sm:$0xff] %v2524
        %v2526 = vld [vmem:[%s1664 + $0x6ac] sm:$0xff]
        %2527 = vst [vmem:[%s1665 + $0x6b8] sm:$0xff] %v2526
        %v2528 = vld [vmem:[%s1664 + $0x6bc] sm:$0xff]
        %2529 = vst [vmem:[%s1665 + $0x6bc] sm:$0xff] %v2528
        %v2530 = vld [vmem:[%s1664 + $0x6c0] sm:$0xff]
        %2531 = vst [vmem:[%s1665 + $0x6c0] sm:$0xff] %v2530
        %v2532 = vld [vmem:[%s1664 + $0x6d0] sm:$0xff]
        %2533 = vst [vmem:[%s1665 + $0x6c4] sm:$0xff] %v2532
        %v2534 = vld [vmem:[%s1664 + $0x6c4] sm:$0xff]
        %2535 = vst [vmem:[%s1665 + $0x6c8] sm:$0xff] %v2534
        %v2536 = vld [vmem:[%s1664 + $0x6d4] sm:$0xff]
        %2537 = vst [vmem:[%s1665 + $0x6cc] sm:$0xff] %v2536
        %v2538 = vld [vmem:[%s1664 + $0x6c8] sm:$0xff]
        %2539 = vst [vmem:[%s1665 + $0x6d0] sm:$0xff] %v2538
        %v2540 = vld [vmem:[%s1664 + $0x6d8] sm:$0xff]
        %2541 = vst [vmem:[%s1665 + $0x6d4] sm:$0xff] %v2540
        %v2542 = vld [vmem:[%s1664 + $0x6cc] sm:$0xff]
        %2543 = vst [vmem:[%s1665 + $0x6d8] sm:$0xff] %v2542
        %v2544 = vld [vmem:[%s1664 + $0x6dc] sm:$0xff]
        %2545 = vst [vmem:[%s1665 + $0x6dc] sm:$0xff] %v2544
        %v2546 = vld [vmem:[%s1664 + $0x6e0] sm:$0xff]
        %2547 = vst [vmem:[%s1665 + $0x6e0] sm:$0xff] %v2546
        %v2548 = vld [vmem:[%s1664 + $0x6f0] sm:$0xff]
        %2549 = vst [vmem:[%s1665 + $0x6e4] sm:$0xff] %v2548
        %v2550 = vld [vmem:[%s1664 + $0x6e4] sm:$0xff]
        %2551 = vst [vmem:[%s1665 + $0x6e8] sm:$0xff] %v2550
        %v2552 = vld [vmem:[%s1664 + $0x6f4] sm:$0xff]
        %2553 = vst [vmem:[%s1665 + $0x6ec] sm:$0xff] %v2552
        %v2554 = vld [vmem:[%s1664 + $0x6e8] sm:$0xff]
        %2555 = vst [vmem:[%s1665 + $0x6f0] sm:$0xff] %v2554
        %v2556 = vld [vmem:[%s1664 + $0x6f8] sm:$0xff]
        %2557 = vst [vmem:[%s1665 + $0x6f4] sm:$0xff] %v2556
        %v2558 = vld [vmem:[%s1664 + $0x6ec] sm:$0xff]
        %2559 = vst [vmem:[%s1665 + $0x6f8] sm:$0xff] %v2558
        %v2560 = vld [vmem:[%s1664 + $0x6fc] sm:$0xff]
        %2561 = vst [vmem:[%s1665 + $0x6fc] sm:$0xff] %v2560
        %v2562 = vld [vmem:[%s1664 + $0x700] sm:$0xff]
        %2563 = vst [vmem:[%s1665 + $0x700] sm:$0xff] %v2562
        %v2564 = vld [vmem:[%s1664 + $0x710] sm:$0xff]
        %2565 = vst [vmem:[%s1665 + $0x704] sm:$0xff] %v2564
        %v2566 = vld [vmem:[%s1664 + $0x704] sm:$0xff]
        %2567 = vst [vmem:[%s1665 + $0x708] sm:$0xff] %v2566
        %v2568 = vld [vmem:[%s1664 + $0x714] sm:$0xff]
        %2569 = vst [vmem:[%s1665 + $0x70c] sm:$0xff] %v2568
        %v2570 = vld [vmem:[%s1664 + $0x708] sm:$0xff]
        %2571 = vst [vmem:[%s1665 + $0x710] sm:$0xff] %v2570
        %v2572 = vld [vmem:[%s1664 + $0x718] sm:$0xff]
        %2573 = vst [vmem:[%s1665 + $0x714] sm:$0xff] %v2572
        %v2574 = vld [vmem:[%s1664 + $0x70c] sm:$0xff]
        %2575 = vst [vmem:[%s1665 + $0x718] sm:$0xff] %v2574
        %v2576 = vld [vmem:[%s1664 + $0x71c] sm:$0xff]
        %2577 = vst [vmem:[%s1665 + $0x71c] sm:$0xff] %v2576
        %v2578 = vld [vmem:[%s1664 + $0x720] sm:$0xff]
        %2579 = vst [vmem:[%s1665 + $0x720] sm:$0xff] %v2578
        %v2580 = vld [vmem:[%s1664 + $0x730] sm:$0xff]
        %2581 = vst [vmem:[%s1665 + $0x724] sm:$0xff] %v2580
        %v2582 = vld [vmem:[%s1664 + $0x724] sm:$0xff]
        %2583 = vst [vmem:[%s1665 + $0x728] sm:$0xff] %v2582
        %v2584 = vld [vmem:[%s1664 + $0x734] sm:$0xff]
        %2585 = vst [vmem:[%s1665 + $0x72c] sm:$0xff] %v2584
        %v2586 = vld [vmem:[%s1664 + $0x728] sm:$0xff]
        %2587 = vst [vmem:[%s1665 + $0x730] sm:$0xff] %v2586
        %v2588 = vld [vmem:[%s1664 + $0x738] sm:$0xff]
        %2589 = vst [vmem:[%s1665 + $0x734] sm:$0xff] %v2588
        %v2590 = vld [vmem:[%s1664 + $0x72c] sm:$0xff]
        %2591 = vst [vmem:[%s1665 + $0x738] sm:$0xff] %v2590
        %v2592 = vld [vmem:[%s1664 + $0x73c] sm:$0xff]
        %2593 = vst [vmem:[%s1665 + $0x73c] sm:$0xff] %v2592
        %v2594 = vld [vmem:[%s1664 + $0x740] sm:$0xff]
        %2595 = vst [vmem:[%s1665 + $0x740] sm:$0xff] %v2594
        %v2596 = vld [vmem:[%s1664 + $0x750] sm:$0xff]
        %2597 = vst [vmem:[%s1665 + $0x744] sm:$0xff] %v2596
        %v2598 = vld [vmem:[%s1664 + $0x744] sm:$0xff]
        %2599 = vst [vmem:[%s1665 + $0x748] sm:$0xff] %v2598
        %v2600 = vld [vmem:[%s1664 + $0x754] sm:$0xff]
        %2601 = vst [vmem:[%s1665 + $0x74c] sm:$0xff] %v2600
        %v2602 = vld [vmem:[%s1664 + $0x748] sm:$0xff]
        %2603 = vst [vmem:[%s1665 + $0x750] sm:$0xff] %v2602
        %v2604 = vld [vmem:[%s1664 + $0x758] sm:$0xff]
        %2605 = vst [vmem:[%s1665 + $0x754] sm:$0xff] %v2604
        %v2606 = vld [vmem:[%s1664 + $0x74c] sm:$0xff]
        %2607 = vst [vmem:[%s1665 + $0x758] sm:$0xff] %v2606
        %v2608 = vld [vmem:[%s1664 + $0x75c] sm:$0xff]
        %2609 = vst [vmem:[%s1665 + $0x75c] sm:$0xff] %v2608
        %v2610 = vld [vmem:[%s1664 + $0x760] sm:$0xff]
        %2611 = vst [vmem:[%s1665 + $0x760] sm:$0xff] %v2610
        %v2612 = vld [vmem:[%s1664 + $0x770] sm:$0xff]
        %2613 = vst [vmem:[%s1665 + $0x764] sm:$0xff] %v2612
        %v2614 = vld [vmem:[%s1664 + $0x764] sm:$0xff]
        %2615 = vst [vmem:[%s1665 + $0x768] sm:$0xff] %v2614
        %v2616 = vld [vmem:[%s1664 + $0x774] sm:$0xff]
        %2617 = vst [vmem:[%s1665 + $0x76c] sm:$0xff] %v2616
        %v2618 = vld [vmem:[%s1664 + $0x768] sm:$0xff]
        %2619 = vst [vmem:[%s1665 + $0x770] sm:$0xff] %v2618
        %v2620 = vld [vmem:[%s1664 + $0x778] sm:$0xff]
        %2621 = vst [vmem:[%s1665 + $0x774] sm:$0xff] %v2620
        %v2622 = vld [vmem:[%s1664 + $0x76c] sm:$0xff]
        %2623 = vst [vmem:[%s1665 + $0x778] sm:$0xff] %v2622
        %v2624 = vld [vmem:[%s1664 + $0x77c] sm:$0xff]
        %2625 = vst [vmem:[%s1665 + $0x77c] sm:$0xff] %v2624
        %v2626 = vld [vmem:[%s1664 + $0x780] sm:$0xff]
        %2627 = vst [vmem:[%s1665 + $0x780] sm:$0xff] %v2626
        %v2628 = vld [vmem:[%s1664 + $0x790] sm:$0xff]
        %2629 = vst [vmem:[%s1665 + $0x784] sm:$0xff] %v2628
        %v2630 = vld [vmem:[%s1664 + $0x784] sm:$0xff]
        %2631 = vst [vmem:[%s1665 + $0x788] sm:$0xff] %v2630
        %v2632 = vld [vmem:[%s1664 + $0x794] sm:$0xff]
        %2633 = vst [vmem:[%s1665 + $0x78c] sm:$0xff] %v2632
        %v2634 = vld [vmem:[%s1664 + $0x788] sm:$0xff]
        %2635 = vst [vmem:[%s1665 + $0x790] sm:$0xff] %v2634
        %v2636 = vld [vmem:[%s1664 + $0x798] sm:$0xff]
        %2637 = vst [vmem:[%s1665 + $0x794] sm:$0xff] %v2636
        %v2638 = vld [vmem:[%s1664 + $0x78c] sm:$0xff]
        %2639 = vst [vmem:[%s1665 + $0x798] sm:$0xff] %v2638
        %v2640 = vld [vmem:[%s1664 + $0x79c] sm:$0xff]
        %2641 = vst [vmem:[%s1665 + $0x79c] sm:$0xff] %v2640
        %v2642 = vld [vmem:[%s1664 + $0x7a0] sm:$0xff]
        %2643 = vst [vmem:[%s1665 + $0x7a0] sm:$0xff] %v2642
        %v2644 = vld [vmem:[%s1664 + $0x7b0] sm:$0xff]
        %2645 = vst [vmem:[%s1665 + $0x7a4] sm:$0xff] %v2644
        %v2646 = vld [vmem:[%s1664 + $0x7a4] sm:$0xff]
        %2647 = vst [vmem:[%s1665 + $0x7a8] sm:$0xff] %v2646
        %v2648 = vld [vmem:[%s1664 + $0x7b4] sm:$0xff]
        %2649 = vst [vmem:[%s1665 + $0x7ac] sm:$0xff] %v2648
        %v2650 = vld [vmem:[%s1664 + $0x7a8] sm:$0xff]
        %2651 = vst [vmem:[%s1665 + $0x7b0] sm:$0xff] %v2650
        %v2652 = vld [vmem:[%s1664 + $0x7b8] sm:$0xff]
        %2653 = vst [vmem:[%s1665 + $0x7b4] sm:$0xff] %v2652
        %v2654 = vld [vmem:[%s1664 + $0x7ac] sm:$0xff]
        %2655 = vst [vmem:[%s1665 + $0x7b8] sm:$0xff] %v2654
        %v2656 = vld [vmem:[%s1664 + $0x7bc] sm:$0xff]
        %2657 = vst [vmem:[%s1665 + $0x7bc] sm:$0xff] %v2656
        %v2658 = vld [vmem:[%s1664 + $0x7c0] sm:$0xff]
        %2659 = vst [vmem:[%s1665 + $0x7c0] sm:$0xff] %v2658
        %v2660 = vld [vmem:[%s1664 + $0x7d0] sm:$0xff]
        %2661 = vst [vmem:[%s1665 + $0x7c4] sm:$0xff] %v2660
        %v2662 = vld [vmem:[%s1664 + $0x7c4] sm:$0xff]
        %2663 = vst [vmem:[%s1665 + $0x7c8] sm:$0xff] %v2662
        %v2664 = vld [vmem:[%s1664 + $0x7d4] sm:$0xff]
        %2665 = vst [vmem:[%s1665 + $0x7cc] sm:$0xff] %v2664
        %v2666 = vld [vmem:[%s1664 + $0x7c8] sm:$0xff]
        %2667 = vst [vmem:[%s1665 + $0x7d0] sm:$0xff] %v2666
        %v2668 = vld [vmem:[%s1664 + $0x7d8] sm:$0xff]
        %2669 = vst [vmem:[%s1665 + $0x7d4] sm:$0xff] %v2668
        %v2670 = vld [vmem:[%s1664 + $0x7cc] sm:$0xff]
        %2671 = vst [vmem:[%s1665 + $0x7d8] sm:$0xff] %v2670
        %v2672 = vld [vmem:[%s1664 + $0x7dc] sm:$0xff]
        %2673 = vst [vmem:[%s1665 + $0x7dc] sm:$0xff] %v2672
        %v2674 = vld [vmem:[%s1664 + $0x7e0] sm:$0xff]
        %2675 = vst [vmem:[%s1665 + $0x7e0] sm:$0xff] %v2674
        %v2676 = vld [vmem:[%s1664 + $0x7f0] sm:$0xff]
        %2677 = vst [vmem:[%s1665 + $0x7e4] sm:$0xff] %v2676
        %v2678 = vld [vmem:[%s1664 + $0x7e4] sm:$0xff]
        %2679 = vst [vmem:[%s1665 + $0x7e8] sm:$0xff] %v2678
        %v2680 = vld [vmem:[%s1664 + $0x7f4] sm:$0xff]
        %2681 = vst [vmem:[%s1665 + $0x7ec] sm:$0xff] %v2680
        %v2682 = vld [vmem:[%s1664 + $0x7e8] sm:$0xff]
        %2683 = vst [vmem:[%s1665 + $0x7f0] sm:$0xff] %v2682
        %v2684 = vld [vmem:[%s1664 + $0x7f8] sm:$0xff]
        %2685 = vst [vmem:[%s1665 + $0x7f4] sm:$0xff] %v2684
        %v2686 = vld [vmem:[%s1664 + $0x7ec] sm:$0xff]
        %2687 = vst [vmem:[%s1665 + $0x7f8] sm:$0xff] %v2686
        %v2688 = vld [vmem:[%s1664 + $0x7fc] sm:$0xff]
        %2689 = vst [vmem:[%s1665 + $0x7fc] sm:$0xff] %v2688
        %s2690 = sadd.s32 1, %s1663
        %p2691 = scmp.ge.s32.totalorder %s2690, %s1654
        %s2692 = scalar_select %p2691, 0, %s2690
        %s2693 = smul.u32 %s2692, 8
        %s2694 = smul.u32 %s2692, 8
        %s2695 = scalar_lea.vmem %s12, %s2693
        %s2696 = scalar_lea.vmem [#allocation3], %s2694
      $region114: #{discriminator_forward.1} parent=108 // loop_footer
        %s1660 = sadd.s32 %s1658, 1
      $region115: #{discriminator_forward.1} parent=108 // loop_footer_branch
        %1657 = sbr.rel target = $region111
      $region116: #{discriminator_forward.1} parent=108 // loop_exit
        _
    $region109: #{discriminator_forward.1} parent=93 // pred_fallthru
      _
    %p2697 = pneg %p1650
    // Predicated region
    $region117: #{discriminator_forward.1} parent=93 // pred_check
      _
    $region118: #{discriminator_forward.1} parent=93 // pred_check_branch
      %2699 = sbr.rel (%p1650) target = $region120
    $region119: #{discriminator_forward.1} parent=93 // pred_region
      %s2700 = sand.u32 4, 7
      %s2701 = ssub.s32 4, %s2700
      %s2702 = scalar_lea.vmem %s12, %s2701
      %s2703 = ssub.s32 4, %s2700
      %s2704 = scalar_lea.vmem [#allocation3], %s2703
      %s2705 = sshrl.u32 4, 3
      // While loop
      $region121: #{discriminator_forward.1} parent=119 // loop_pre_header
        _
      $region122: #{discriminator_forward.1} parent=119 // loop_header
        %s2709 = sphi 0, %s2711
        %p2710 = scmp.ge.s32.totalorder %s2709, %s2705
        %s2714 = sphi 0, %s3743
        %s2715 = sphi %s12, %s3746
        %s2716 = sphi [#allocation3], %s3747
      $region123: #{discriminator_forward.1} parent=119 // loop_header_branch
        %2713 = sbr.rel (%p2710) target = $region127
      $region124: #{discriminator_forward.1} parent=119 // loop_body
        %v2717 = vld [vmem:[%s2715] sm:$0xff]
        %2718 = vst [vmem:[%s2716] sm:$0xff] %v2717
        %v2719 = vld [vmem:[%s2715 + $0x10] sm:$0xff]
        %2720 = vst [vmem:[%s2716 + $0x4] sm:$0xff] %v2719
        %v2721 = vld [vmem:[%s2715 + $0x4] sm:$0xff]
        %2722 = vst [vmem:[%s2716 + $0x8] sm:$0xff] %v2721
        %v2723 = vld [vmem:[%s2715 + $0x14] sm:$0xff]
        %2724 = vst [vmem:[%s2716 + $0xc] sm:$0xff] %v2723
        %v2725 = vld [vmem:[%s2715 + $0x8] sm:$0xff]
        %2726 = vst [vmem:[%s2716 + $0x10] sm:$0xff] %v2725
        %v2727 = vld [vmem:[%s2715 + $0x18] sm:$0xff]
        %2728 = vst [vmem:[%s2716 + $0x14] sm:$0xff] %v2727
        %v2729 = vld [vmem:[%s2715 + $0xc] sm:$0xff]
        %2730 = vst [vmem:[%s2716 + $0x18] sm:$0xff] %v2729
        %v2731 = vld [vmem:[%s2715 + $0x1c] sm:$0xff]
        %2732 = vst [vmem:[%s2716 + $0x1c] sm:$0xff] %v2731
        %v2733 = vld [vmem:[%s2715 + $0x20] sm:$0xff]
        %2734 = vst [vmem:[%s2716 + $0x20] sm:$0xff] %v2733
        %v2735 = vld [vmem:[%s2715 + $0x30] sm:$0xff]
        %2736 = vst [vmem:[%s2716 + $0x24] sm:$0xff] %v2735
        %v2737 = vld [vmem:[%s2715 + $0x24] sm:$0xff]
        %2738 = vst [vmem:[%s2716 + $0x28] sm:$0xff] %v2737
        %v2739 = vld [vmem:[%s2715 + $0x34] sm:$0xff]
        %2740 = vst [vmem:[%s2716 + $0x2c] sm:$0xff] %v2739
        %v2741 = vld [vmem:[%s2715 + $0x28] sm:$0xff]
        %2742 = vst [vmem:[%s2716 + $0x30] sm:$0xff] %v2741
        %v2743 = vld [vmem:[%s2715 + $0x38] sm:$0xff]
        %2744 = vst [vmem:[%s2716 + $0x34] sm:$0xff] %v2743
        %v2745 = vld [vmem:[%s2715 + $0x2c] sm:$0xff]
        %2746 = vst [vmem:[%s2716 + $0x38] sm:$0xff] %v2745
        %v2747 = vld [vmem:[%s2715 + $0x3c] sm:$0xff]
        %2748 = vst [vmem:[%s2716 + $0x3c] sm:$0xff] %v2747
        %v2749 = vld [vmem:[%s2715 + $0x40] sm:$0xff]
        %2750 = vst [vmem:[%s2716 + $0x40] sm:$0xff] %v2749
        %v2751 = vld [vmem:[%s2715 + $0x50] sm:$0xff]
        %2752 = vst [vmem:[%s2716 + $0x44] sm:$0xff] %v2751
        %v2753 = vld [vmem:[%s2715 + $0x44] sm:$0xff]
        %2754 = vst [vmem:[%s2716 + $0x48] sm:$0xff] %v2753
        %v2755 = vld [vmem:[%s2715 + $0x54] sm:$0xff]
        %2756 = vst [vmem:[%s2716 + $0x4c] sm:$0xff] %v2755
        %v2757 = vld [vmem:[%s2715 + $0x48] sm:$0xff]
        %2758 = vst [vmem:[%s2716 + $0x50] sm:$0xff] %v2757
        %v2759 = vld [vmem:[%s2715 + $0x58] sm:$0xff]
        %2760 = vst [vmem:[%s2716 + $0x54] sm:$0xff] %v2759
        %v2761 = vld [vmem:[%s2715 + $0x4c] sm:$0xff]
        %2762 = vst [vmem:[%s2716 + $0x58] sm:$0xff] %v2761
        %v2763 = vld [vmem:[%s2715 + $0x5c] sm:$0xff]
        %2764 = vst [vmem:[%s2716 + $0x5c] sm:$0xff] %v2763
        %v2765 = vld [vmem:[%s2715 + $0x60] sm:$0xff]
        %2766 = vst [vmem:[%s2716 + $0x60] sm:$0xff] %v2765
        %v2767 = vld [vmem:[%s2715 + $0x70] sm:$0xff]
        %2768 = vst [vmem:[%s2716 + $0x64] sm:$0xff] %v2767
        %v2769 = vld [vmem:[%s2715 + $0x64] sm:$0xff]
        %2770 = vst [vmem:[%s2716 + $0x68] sm:$0xff] %v2769
        %v2771 = vld [vmem:[%s2715 + $0x74] sm:$0xff]
        %2772 = vst [vmem:[%s2716 + $0x6c] sm:$0xff] %v2771
        %v2773 = vld [vmem:[%s2715 + $0x68] sm:$0xff]
        %2774 = vst [vmem:[%s2716 + $0x70] sm:$0xff] %v2773
        %v2775 = vld [vmem:[%s2715 + $0x78] sm:$0xff]
        %2776 = vst [vmem:[%s2716 + $0x74] sm:$0xff] %v2775
        %v2777 = vld [vmem:[%s2715 + $0x6c] sm:$0xff]
        %2778 = vst [vmem:[%s2716 + $0x78] sm:$0xff] %v2777
        %v2779 = vld [vmem:[%s2715 + $0x7c] sm:$0xff]
        %2780 = vst [vmem:[%s2716 + $0x7c] sm:$0xff] %v2779
        %v2781 = vld [vmem:[%s2715 + $0x80] sm:$0xff]
        %2782 = vst [vmem:[%s2716 + $0x80] sm:$0xff] %v2781
        %v2783 = vld [vmem:[%s2715 + $0x90] sm:$0xff]
        %2784 = vst [vmem:[%s2716 + $0x84] sm:$0xff] %v2783
        %v2785 = vld [vmem:[%s2715 + $0x84] sm:$0xff]
        %2786 = vst [vmem:[%s2716 + $0x88] sm:$0xff] %v2785
        %v2787 = vld [vmem:[%s2715 + $0x94] sm:$0xff]
        %2788 = vst [vmem:[%s2716 + $0x8c] sm:$0xff] %v2787
        %v2789 = vld [vmem:[%s2715 + $0x88] sm:$0xff]
        %2790 = vst [vmem:[%s2716 + $0x90] sm:$0xff] %v2789
        %v2791 = vld [vmem:[%s2715 + $0x98] sm:$0xff]
        %2792 = vst [vmem:[%s2716 + $0x94] sm:$0xff] %v2791
        %v2793 = vld [vmem:[%s2715 + $0x8c] sm:$0xff]
        %2794 = vst [vmem:[%s2716 + $0x98] sm:$0xff] %v2793
        %v2795 = vld [vmem:[%s2715 + $0x9c] sm:$0xff]
        %2796 = vst [vmem:[%s2716 + $0x9c] sm:$0xff] %v2795
        %v2797 = vld [vmem:[%s2715 + $0xa0] sm:$0xff]
        %2798 = vst [vmem:[%s2716 + $0xa0] sm:$0xff] %v2797
        %v2799 = vld [vmem:[%s2715 + $0xb0] sm:$0xff]
        %2800 = vst [vmem:[%s2716 + $0xa4] sm:$0xff] %v2799
        %v2801 = vld [vmem:[%s2715 + $0xa4] sm:$0xff]
        %2802 = vst [vmem:[%s2716 + $0xa8] sm:$0xff] %v2801
        %v2803 = vld [vmem:[%s2715 + $0xb4] sm:$0xff]
        %2804 = vst [vmem:[%s2716 + $0xac] sm:$0xff] %v2803
        %v2805 = vld [vmem:[%s2715 + $0xa8] sm:$0xff]
        %2806 = vst [vmem:[%s2716 + $0xb0] sm:$0xff] %v2805
        %v2807 = vld [vmem:[%s2715 + $0xb8] sm:$0xff]
        %2808 = vst [vmem:[%s2716 + $0xb4] sm:$0xff] %v2807
        %v2809 = vld [vmem:[%s2715 + $0xac] sm:$0xff]
        %2810 = vst [vmem:[%s2716 + $0xb8] sm:$0xff] %v2809
        %v2811 = vld [vmem:[%s2715 + $0xbc] sm:$0xff]
        %2812 = vst [vmem:[%s2716 + $0xbc] sm:$0xff] %v2811
        %v2813 = vld [vmem:[%s2715 + $0xc0] sm:$0xff]
        %2814 = vst [vmem:[%s2716 + $0xc0] sm:$0xff] %v2813
        %v2815 = vld [vmem:[%s2715 + $0xd0] sm:$0xff]
        %2816 = vst [vmem:[%s2716 + $0xc4] sm:$0xff] %v2815
        %v2817 = vld [vmem:[%s2715 + $0xc4] sm:$0xff]
        %2818 = vst [vmem:[%s2716 + $0xc8] sm:$0xff] %v2817
        %v2819 = vld [vmem:[%s2715 + $0xd4] sm:$0xff]
        %2820 = vst [vmem:[%s2716 + $0xcc] sm:$0xff] %v2819
        %v2821 = vld [vmem:[%s2715 + $0xc8] sm:$0xff]
        %2822 = vst [vmem:[%s2716 + $0xd0] sm:$0xff] %v2821
        %v2823 = vld [vmem:[%s2715 + $0xd8] sm:$0xff]
        %2824 = vst [vmem:[%s2716 + $0xd4] sm:$0xff] %v2823
        %v2825 = vld [vmem:[%s2715 + $0xcc] sm:$0xff]
        %2826 = vst [vmem:[%s2716 + $0xd8] sm:$0xff] %v2825
        %v2827 = vld [vmem:[%s2715 + $0xdc] sm:$0xff]
        %2828 = vst [vmem:[%s2716 + $0xdc] sm:$0xff] %v2827
        %v2829 = vld [vmem:[%s2715 + $0xe0] sm:$0xff]
        %2830 = vst [vmem:[%s2716 + $0xe0] sm:$0xff] %v2829
        %v2831 = vld [vmem:[%s2715 + $0xf0] sm:$0xff]
        %2832 = vst [vmem:[%s2716 + $0xe4] sm:$0xff] %v2831
        %v2833 = vld [vmem:[%s2715 + $0xe4] sm:$0xff]
        %2834 = vst [vmem:[%s2716 + $0xe8] sm:$0xff] %v2833
        %v2835 = vld [vmem:[%s2715 + $0xf4] sm:$0xff]
        %2836 = vst [vmem:[%s2716 + $0xec] sm:$0xff] %v2835
        %v2837 = vld [vmem:[%s2715 + $0xe8] sm:$0xff]
        %2838 = vst [vmem:[%s2716 + $0xf0] sm:$0xff] %v2837
        %v2839 = vld [vmem:[%s2715 + $0xf8] sm:$0xff]
        %2840 = vst [vmem:[%s2716 + $0xf4] sm:$0xff] %v2839
        %v2841 = vld [vmem:[%s2715 + $0xec] sm:$0xff]
        %2842 = vst [vmem:[%s2716 + $0xf8] sm:$0xff] %v2841
        %v2843 = vld [vmem:[%s2715 + $0xfc] sm:$0xff]
        %2844 = vst [vmem:[%s2716 + $0xfc] sm:$0xff] %v2843
        %v2845 = vld [vmem:[%s2715 + $0x100] sm:$0xff]
        %2846 = vst [vmem:[%s2716 + $0x100] sm:$0xff] %v2845
        %v2847 = vld [vmem:[%s2715 + $0x110] sm:$0xff]
        %2848 = vst [vmem:[%s2716 + $0x104] sm:$0xff] %v2847
        %v2849 = vld [vmem:[%s2715 + $0x104] sm:$0xff]
        %2850 = vst [vmem:[%s2716 + $0x108] sm:$0xff] %v2849
        %v2851 = vld [vmem:[%s2715 + $0x114] sm:$0xff]
        %2852 = vst [vmem:[%s2716 + $0x10c] sm:$0xff] %v2851
        %v2853 = vld [vmem:[%s2715 + $0x108] sm:$0xff]
        %2854 = vst [vmem:[%s2716 + $0x110] sm:$0xff] %v2853
        %v2855 = vld [vmem:[%s2715 + $0x118] sm:$0xff]
        %2856 = vst [vmem:[%s2716 + $0x114] sm:$0xff] %v2855
        %v2857 = vld [vmem:[%s2715 + $0x10c] sm:$0xff]
        %2858 = vst [vmem:[%s2716 + $0x118] sm:$0xff] %v2857
        %v2859 = vld [vmem:[%s2715 + $0x11c] sm:$0xff]
        %2860 = vst [vmem:[%s2716 + $0x11c] sm:$0xff] %v2859
        %v2861 = vld [vmem:[%s2715 + $0x120] sm:$0xff]
        %2862 = vst [vmem:[%s2716 + $0x120] sm:$0xff] %v2861
        %v2863 = vld [vmem:[%s2715 + $0x130] sm:$0xff]
        %2864 = vst [vmem:[%s2716 + $0x124] sm:$0xff] %v2863
        %v2865 = vld [vmem:[%s2715 + $0x124] sm:$0xff]
        %2866 = vst [vmem:[%s2716 + $0x128] sm:$0xff] %v2865
        %v2867 = vld [vmem:[%s2715 + $0x134] sm:$0xff]
        %2868 = vst [vmem:[%s2716 + $0x12c] sm:$0xff] %v2867
        %v2869 = vld [vmem:[%s2715 + $0x128] sm:$0xff]
        %2870 = vst [vmem:[%s2716 + $0x130] sm:$0xff] %v2869
        %v2871 = vld [vmem:[%s2715 + $0x138] sm:$0xff]
        %2872 = vst [vmem:[%s2716 + $0x134] sm:$0xff] %v2871
        %v2873 = vld [vmem:[%s2715 + $0x12c] sm:$0xff]
        %2874 = vst [vmem:[%s2716 + $0x138] sm:$0xff] %v2873
        %v2875 = vld [vmem:[%s2715 + $0x13c] sm:$0xff]
        %2876 = vst [vmem:[%s2716 + $0x13c] sm:$0xff] %v2875
        %v2877 = vld [vmem:[%s2715 + $0x140] sm:$0xff]
        %2878 = vst [vmem:[%s2716 + $0x140] sm:$0xff] %v2877
        %v2879 = vld [vmem:[%s2715 + $0x150] sm:$0xff]
        %2880 = vst [vmem:[%s2716 + $0x144] sm:$0xff] %v2879
        %v2881 = vld [vmem:[%s2715 + $0x144] sm:$0xff]
        %2882 = vst [vmem:[%s2716 + $0x148] sm:$0xff] %v2881
        %v2883 = vld [vmem:[%s2715 + $0x154] sm:$0xff]
        %2884 = vst [vmem:[%s2716 + $0x14c] sm:$0xff] %v2883
        %v2885 = vld [vmem:[%s2715 + $0x148] sm:$0xff]
        %2886 = vst [vmem:[%s2716 + $0x150] sm:$0xff] %v2885
        %v2887 = vld [vmem:[%s2715 + $0x158] sm:$0xff]
        %2888 = vst [vmem:[%s2716 + $0x154] sm:$0xff] %v2887
        %v2889 = vld [vmem:[%s2715 + $0x14c] sm:$0xff]
        %2890 = vst [vmem:[%s2716 + $0x158] sm:$0xff] %v2889
        %v2891 = vld [vmem:[%s2715 + $0x15c] sm:$0xff]
        %2892 = vst [vmem:[%s2716 + $0x15c] sm:$0xff] %v2891
        %v2893 = vld [vmem:[%s2715 + $0x160] sm:$0xff]
        %2894 = vst [vmem:[%s2716 + $0x160] sm:$0xff] %v2893
        %v2895 = vld [vmem:[%s2715 + $0x170] sm:$0xff]
        %2896 = vst [vmem:[%s2716 + $0x164] sm:$0xff] %v2895
        %v2897 = vld [vmem:[%s2715 + $0x164] sm:$0xff]
        %2898 = vst [vmem:[%s2716 + $0x168] sm:$0xff] %v2897
        %v2899 = vld [vmem:[%s2715 + $0x174] sm:$0xff]
        %2900 = vst [vmem:[%s2716 + $0x16c] sm:$0xff] %v2899
        %v2901 = vld [vmem:[%s2715 + $0x168] sm:$0xff]
        %2902 = vst [vmem:[%s2716 + $0x170] sm:$0xff] %v2901
        %v2903 = vld [vmem:[%s2715 + $0x178] sm:$0xff]
        %2904 = vst [vmem:[%s2716 + $0x174] sm:$0xff] %v2903
        %v2905 = vld [vmem:[%s2715 + $0x16c] sm:$0xff]
        %2906 = vst [vmem:[%s2716 + $0x178] sm:$0xff] %v2905
        %v2907 = vld [vmem:[%s2715 + $0x17c] sm:$0xff]
        %2908 = vst [vmem:[%s2716 + $0x17c] sm:$0xff] %v2907
        %v2909 = vld [vmem:[%s2715 + $0x180] sm:$0xff]
        %2910 = vst [vmem:[%s2716 + $0x180] sm:$0xff] %v2909
        %v2911 = vld [vmem:[%s2715 + $0x190] sm:$0xff]
        %2912 = vst [vmem:[%s2716 + $0x184] sm:$0xff] %v2911
        %v2913 = vld [vmem:[%s2715 + $0x184] sm:$0xff]
        %2914 = vst [vmem:[%s2716 + $0x188] sm:$0xff] %v2913
        %v2915 = vld [vmem:[%s2715 + $0x194] sm:$0xff]
        %2916 = vst [vmem:[%s2716 + $0x18c] sm:$0xff] %v2915
        %v2917 = vld [vmem:[%s2715 + $0x188] sm:$0xff]
        %2918 = vst [vmem:[%s2716 + $0x190] sm:$0xff] %v2917
        %v2919 = vld [vmem:[%s2715 + $0x198] sm:$0xff]
        %2920 = vst [vmem:[%s2716 + $0x194] sm:$0xff] %v2919
        %v2921 = vld [vmem:[%s2715 + $0x18c] sm:$0xff]
        %2922 = vst [vmem:[%s2716 + $0x198] sm:$0xff] %v2921
        %v2923 = vld [vmem:[%s2715 + $0x19c] sm:$0xff]
        %2924 = vst [vmem:[%s2716 + $0x19c] sm:$0xff] %v2923
        %v2925 = vld [vmem:[%s2715 + $0x1a0] sm:$0xff]
        %2926 = vst [vmem:[%s2716 + $0x1a0] sm:$0xff] %v2925
        %v2927 = vld [vmem:[%s2715 + $0x1b0] sm:$0xff]
        %2928 = vst [vmem:[%s2716 + $0x1a4] sm:$0xff] %v2927
        %v2929 = vld [vmem:[%s2715 + $0x1a4] sm:$0xff]
        %2930 = vst [vmem:[%s2716 + $0x1a8] sm:$0xff] %v2929
        %v2931 = vld [vmem:[%s2715 + $0x1b4] sm:$0xff]
        %2932 = vst [vmem:[%s2716 + $0x1ac] sm:$0xff] %v2931
        %v2933 = vld [vmem:[%s2715 + $0x1a8] sm:$0xff]
        %2934 = vst [vmem:[%s2716 + $0x1b0] sm:$0xff] %v2933
        %v2935 = vld [vmem:[%s2715 + $0x1b8] sm:$0xff]
        %2936 = vst [vmem:[%s2716 + $0x1b4] sm:$0xff] %v2935
        %v2937 = vld [vmem:[%s2715 + $0x1ac] sm:$0xff]
        %2938 = vst [vmem:[%s2716 + $0x1b8] sm:$0xff] %v2937
        %v2939 = vld [vmem:[%s2715 + $0x1bc] sm:$0xff]
        %2940 = vst [vmem:[%s2716 + $0x1bc] sm:$0xff] %v2939
        %v2941 = vld [vmem:[%s2715 + $0x1c0] sm:$0xff]
        %2942 = vst [vmem:[%s2716 + $0x1c0] sm:$0xff] %v2941
        %v2943 = vld [vmem:[%s2715 + $0x1d0] sm:$0xff]
        %2944 = vst [vmem:[%s2716 + $0x1c4] sm:$0xff] %v2943
        %v2945 = vld [vmem:[%s2715 + $0x1c4] sm:$0xff]
        %2946 = vst [vmem:[%s2716 + $0x1c8] sm:$0xff] %v2945
        %v2947 = vld [vmem:[%s2715 + $0x1d4] sm:$0xff]
        %2948 = vst [vmem:[%s2716 + $0x1cc] sm:$0xff] %v2947
        %v2949 = vld [vmem:[%s2715 + $0x1c8] sm:$0xff]
        %2950 = vst [vmem:[%s2716 + $0x1d0] sm:$0xff] %v2949
        %v2951 = vld [vmem:[%s2715 + $0x1d8] sm:$0xff]
        %2952 = vst [vmem:[%s2716 + $0x1d4] sm:$0xff] %v2951
        %v2953 = vld [vmem:[%s2715 + $0x1cc] sm:$0xff]
        %2954 = vst [vmem:[%s2716 + $0x1d8] sm:$0xff] %v2953
        %v2955 = vld [vmem:[%s2715 + $0x1dc] sm:$0xff]
        %2956 = vst [vmem:[%s2716 + $0x1dc] sm:$0xff] %v2955
        %v2957 = vld [vmem:[%s2715 + $0x1e0] sm:$0xff]
        %2958 = vst [vmem:[%s2716 + $0x1e0] sm:$0xff] %v2957
        %v2959 = vld [vmem:[%s2715 + $0x1f0] sm:$0xff]
        %2960 = vst [vmem:[%s2716 + $0x1e4] sm:$0xff] %v2959
        %v2961 = vld [vmem:[%s2715 + $0x1e4] sm:$0xff]
        %2962 = vst [vmem:[%s2716 + $0x1e8] sm:$0xff] %v2961
        %v2963 = vld [vmem:[%s2715 + $0x1f4] sm:$0xff]
        %2964 = vst [vmem:[%s2716 + $0x1ec] sm:$0xff] %v2963
        %v2965 = vld [vmem:[%s2715 + $0x1e8] sm:$0xff]
        %2966 = vst [vmem:[%s2716 + $0x1f0] sm:$0xff] %v2965
        %v2967 = vld [vmem:[%s2715 + $0x1f8] sm:$0xff]
        %2968 = vst [vmem:[%s2716 + $0x1f4] sm:$0xff] %v2967
        %v2969 = vld [vmem:[%s2715 + $0x1ec] sm:$0xff]
        %2970 = vst [vmem:[%s2716 + $0x1f8] sm:$0xff] %v2969
        %v2971 = vld [vmem:[%s2715 + $0x1fc] sm:$0xff]
        %2972 = vst [vmem:[%s2716 + $0x1fc] sm:$0xff] %v2971
        %v2973 = vld [vmem:[%s2715 + $0x200] sm:$0xff]
        %2974 = vst [vmem:[%s2716 + $0x200] sm:$0xff] %v2973
        %v2975 = vld [vmem:[%s2715 + $0x210] sm:$0xff]
        %2976 = vst [vmem:[%s2716 + $0x204] sm:$0xff] %v2975
        %v2977 = vld [vmem:[%s2715 + $0x204] sm:$0xff]
        %2978 = vst [vmem:[%s2716 + $0x208] sm:$0xff] %v2977
        %v2979 = vld [vmem:[%s2715 + $0x214] sm:$0xff]
        %2980 = vst [vmem:[%s2716 + $0x20c] sm:$0xff] %v2979
        %v2981 = vld [vmem:[%s2715 + $0x208] sm:$0xff]
        %2982 = vst [vmem:[%s2716 + $0x210] sm:$0xff] %v2981
        %v2983 = vld [vmem:[%s2715 + $0x218] sm:$0xff]
        %2984 = vst [vmem:[%s2716 + $0x214] sm:$0xff] %v2983
        %v2985 = vld [vmem:[%s2715 + $0x20c] sm:$0xff]
        %2986 = vst [vmem:[%s2716 + $0x218] sm:$0xff] %v2985
        %v2987 = vld [vmem:[%s2715 + $0x21c] sm:$0xff]
        %2988 = vst [vmem:[%s2716 + $0x21c] sm:$0xff] %v2987
        %v2989 = vld [vmem:[%s2715 + $0x220] sm:$0xff]
        %2990 = vst [vmem:[%s2716 + $0x220] sm:$0xff] %v2989
        %v2991 = vld [vmem:[%s2715 + $0x230] sm:$0xff]
        %2992 = vst [vmem:[%s2716 + $0x224] sm:$0xff] %v2991
        %v2993 = vld [vmem:[%s2715 + $0x224] sm:$0xff]
        %2994 = vst [vmem:[%s2716 + $0x228] sm:$0xff] %v2993
        %v2995 = vld [vmem:[%s2715 + $0x234] sm:$0xff]
        %2996 = vst [vmem:[%s2716 + $0x22c] sm:$0xff] %v2995
        %v2997 = vld [vmem:[%s2715 + $0x228] sm:$0xff]
        %2998 = vst [vmem:[%s2716 + $0x230] sm:$0xff] %v2997
        %v2999 = vld [vmem:[%s2715 + $0x238] sm:$0xff]
        %3000 = vst [vmem:[%s2716 + $0x234] sm:$0xff] %v2999
        %v3001 = vld [vmem:[%s2715 + $0x22c] sm:$0xff]
        %3002 = vst [vmem:[%s2716 + $0x238] sm:$0xff] %v3001
        %v3003 = vld [vmem:[%s2715 + $0x23c] sm:$0xff]
        %3004 = vst [vmem:[%s2716 + $0x23c] sm:$0xff] %v3003
        %v3005 = vld [vmem:[%s2715 + $0x240] sm:$0xff]
        %3006 = vst [vmem:[%s2716 + $0x240] sm:$0xff] %v3005
        %v3007 = vld [vmem:[%s2715 + $0x250] sm:$0xff]
        %3008 = vst [vmem:[%s2716 + $0x244] sm:$0xff] %v3007
        %v3009 = vld [vmem:[%s2715 + $0x244] sm:$0xff]
        %3010 = vst [vmem:[%s2716 + $0x248] sm:$0xff] %v3009
        %v3011 = vld [vmem:[%s2715 + $0x254] sm:$0xff]
        %3012 = vst [vmem:[%s2716 + $0x24c] sm:$0xff] %v3011
        %v3013 = vld [vmem:[%s2715 + $0x248] sm:$0xff]
        %3014 = vst [vmem:[%s2716 + $0x250] sm:$0xff] %v3013
        %v3015 = vld [vmem:[%s2715 + $0x258] sm:$0xff]
        %3016 = vst [vmem:[%s2716 + $0x254] sm:$0xff] %v3015
        %v3017 = vld [vmem:[%s2715 + $0x24c] sm:$0xff]
        %3018 = vst [vmem:[%s2716 + $0x258] sm:$0xff] %v3017
        %v3019 = vld [vmem:[%s2715 + $0x25c] sm:$0xff]
        %3020 = vst [vmem:[%s2716 + $0x25c] sm:$0xff] %v3019
        %v3021 = vld [vmem:[%s2715 + $0x260] sm:$0xff]
        %3022 = vst [vmem:[%s2716 + $0x260] sm:$0xff] %v3021
        %v3023 = vld [vmem:[%s2715 + $0x270] sm:$0xff]
        %3024 = vst [vmem:[%s2716 + $0x264] sm:$0xff] %v3023
        %v3025 = vld [vmem:[%s2715 + $0x264] sm:$0xff]
        %3026 = vst [vmem:[%s2716 + $0x268] sm:$0xff] %v3025
        %v3027 = vld [vmem:[%s2715 + $0x274] sm:$0xff]
        %3028 = vst [vmem:[%s2716 + $0x26c] sm:$0xff] %v3027
        %v3029 = vld [vmem:[%s2715 + $0x268] sm:$0xff]
        %3030 = vst [vmem:[%s2716 + $0x270] sm:$0xff] %v3029
        %v3031 = vld [vmem:[%s2715 + $0x278] sm:$0xff]
        %3032 = vst [vmem:[%s2716 + $0x274] sm:$0xff] %v3031
        %v3033 = vld [vmem:[%s2715 + $0x26c] sm:$0xff]
        %3034 = vst [vmem:[%s2716 + $0x278] sm:$0xff] %v3033
        %v3035 = vld [vmem:[%s2715 + $0x27c] sm:$0xff]
        %3036 = vst [vmem:[%s2716 + $0x27c] sm:$0xff] %v3035
        %v3037 = vld [vmem:[%s2715 + $0x280] sm:$0xff]
        %3038 = vst [vmem:[%s2716 + $0x280] sm:$0xff] %v3037
        %v3039 = vld [vmem:[%s2715 + $0x290] sm:$0xff]
        %3040 = vst [vmem:[%s2716 + $0x284] sm:$0xff] %v3039
        %v3041 = vld [vmem:[%s2715 + $0x284] sm:$0xff]
        %3042 = vst [vmem:[%s2716 + $0x288] sm:$0xff] %v3041
        %v3043 = vld [vmem:[%s2715 + $0x294] sm:$0xff]
        %3044 = vst [vmem:[%s2716 + $0x28c] sm:$0xff] %v3043
        %v3045 = vld [vmem:[%s2715 + $0x288] sm:$0xff]
        %3046 = vst [vmem:[%s2716 + $0x290] sm:$0xff] %v3045
        %v3047 = vld [vmem:[%s2715 + $0x298] sm:$0xff]
        %3048 = vst [vmem:[%s2716 + $0x294] sm:$0xff] %v3047
        %v3049 = vld [vmem:[%s2715 + $0x28c] sm:$0xff]
        %3050 = vst [vmem:[%s2716 + $0x298] sm:$0xff] %v3049
        %v3051 = vld [vmem:[%s2715 + $0x29c] sm:$0xff]
        %3052 = vst [vmem:[%s2716 + $0x29c] sm:$0xff] %v3051
        %v3053 = vld [vmem:[%s2715 + $0x2a0] sm:$0xff]
        %3054 = vst [vmem:[%s2716 + $0x2a0] sm:$0xff] %v3053
        %v3055 = vld [vmem:[%s2715 + $0x2b0] sm:$0xff]
        %3056 = vst [vmem:[%s2716 + $0x2a4] sm:$0xff] %v3055
        %v3057 = vld [vmem:[%s2715 + $0x2a4] sm:$0xff]
        %3058 = vst [vmem:[%s2716 + $0x2a8] sm:$0xff] %v3057
        %v3059 = vld [vmem:[%s2715 + $0x2b4] sm:$0xff]
        %3060 = vst [vmem:[%s2716 + $0x2ac] sm:$0xff] %v3059
        %v3061 = vld [vmem:[%s2715 + $0x2a8] sm:$0xff]
        %3062 = vst [vmem:[%s2716 + $0x2b0] sm:$0xff] %v3061
        %v3063 = vld [vmem:[%s2715 + $0x2b8] sm:$0xff]
        %3064 = vst [vmem:[%s2716 + $0x2b4] sm:$0xff] %v3063
        %v3065 = vld [vmem:[%s2715 + $0x2ac] sm:$0xff]
        %3066 = vst [vmem:[%s2716 + $0x2b8] sm:$0xff] %v3065
        %v3067 = vld [vmem:[%s2715 + $0x2bc] sm:$0xff]
        %3068 = vst [vmem:[%s2716 + $0x2bc] sm:$0xff] %v3067
        %v3069 = vld [vmem:[%s2715 + $0x2c0] sm:$0xff]
        %3070 = vst [vmem:[%s2716 + $0x2c0] sm:$0xff] %v3069
        %v3071 = vld [vmem:[%s2715 + $0x2d0] sm:$0xff]
        %3072 = vst [vmem:[%s2716 + $0x2c4] sm:$0xff] %v3071
        %v3073 = vld [vmem:[%s2715 + $0x2c4] sm:$0xff]
        %3074 = vst [vmem:[%s2716 + $0x2c8] sm:$0xff] %v3073
        %v3075 = vld [vmem:[%s2715 + $0x2d4] sm:$0xff]
        %3076 = vst [vmem:[%s2716 + $0x2cc] sm:$0xff] %v3075
        %v3077 = vld [vmem:[%s2715 + $0x2c8] sm:$0xff]
        %3078 = vst [vmem:[%s2716 + $0x2d0] sm:$0xff] %v3077
        %v3079 = vld [vmem:[%s2715 + $0x2d8] sm:$0xff]
        %3080 = vst [vmem:[%s2716 + $0x2d4] sm:$0xff] %v3079
        %v3081 = vld [vmem:[%s2715 + $0x2cc] sm:$0xff]
        %3082 = vst [vmem:[%s2716 + $0x2d8] sm:$0xff] %v3081
        %v3083 = vld [vmem:[%s2715 + $0x2dc] sm:$0xff]
        %3084 = vst [vmem:[%s2716 + $0x2dc] sm:$0xff] %v3083
        %v3085 = vld [vmem:[%s2715 + $0x2e0] sm:$0xff]
        %3086 = vst [vmem:[%s2716 + $0x2e0] sm:$0xff] %v3085
        %v3087 = vld [vmem:[%s2715 + $0x2f0] sm:$0xff]
        %3088 = vst [vmem:[%s2716 + $0x2e4] sm:$0xff] %v3087
        %v3089 = vld [vmem:[%s2715 + $0x2e4] sm:$0xff]
        %3090 = vst [vmem:[%s2716 + $0x2e8] sm:$0xff] %v3089
        %v3091 = vld [vmem:[%s2715 + $0x2f4] sm:$0xff]
        %3092 = vst [vmem:[%s2716 + $0x2ec] sm:$0xff] %v3091
        %v3093 = vld [vmem:[%s2715 + $0x2e8] sm:$0xff]
        %3094 = vst [vmem:[%s2716 + $0x2f0] sm:$0xff] %v3093
        %v3095 = vld [vmem:[%s2715 + $0x2f8] sm:$0xff]
        %3096 = vst [vmem:[%s2716 + $0x2f4] sm:$0xff] %v3095
        %v3097 = vld [vmem:[%s2715 + $0x2ec] sm:$0xff]
        %3098 = vst [vmem:[%s2716 + $0x2f8] sm:$0xff] %v3097
        %v3099 = vld [vmem:[%s2715 + $0x2fc] sm:$0xff]
        %3100 = vst [vmem:[%s2716 + $0x2fc] sm:$0xff] %v3099
        %v3101 = vld [vmem:[%s2715 + $0x300] sm:$0xff]
        %3102 = vst [vmem:[%s2716 + $0x300] sm:$0xff] %v3101
        %v3103 = vld [vmem:[%s2715 + $0x310] sm:$0xff]
        %3104 = vst [vmem:[%s2716 + $0x304] sm:$0xff] %v3103
        %v3105 = vld [vmem:[%s2715 + $0x304] sm:$0xff]
        %3106 = vst [vmem:[%s2716 + $0x308] sm:$0xff] %v3105
        %v3107 = vld [vmem:[%s2715 + $0x314] sm:$0xff]
        %3108 = vst [vmem:[%s2716 + $0x30c] sm:$0xff] %v3107
        %v3109 = vld [vmem:[%s2715 + $0x308] sm:$0xff]
        %3110 = vst [vmem:[%s2716 + $0x310] sm:$0xff] %v3109
        %v3111 = vld [vmem:[%s2715 + $0x318] sm:$0xff]
        %3112 = vst [vmem:[%s2716 + $0x314] sm:$0xff] %v3111
        %v3113 = vld [vmem:[%s2715 + $0x30c] sm:$0xff]
        %3114 = vst [vmem:[%s2716 + $0x318] sm:$0xff] %v3113
        %v3115 = vld [vmem:[%s2715 + $0x31c] sm:$0xff]
        %3116 = vst [vmem:[%s2716 + $0x31c] sm:$0xff] %v3115
        %v3117 = vld [vmem:[%s2715 + $0x320] sm:$0xff]
        %3118 = vst [vmem:[%s2716 + $0x320] sm:$0xff] %v3117
        %v3119 = vld [vmem:[%s2715 + $0x330] sm:$0xff]
        %3120 = vst [vmem:[%s2716 + $0x324] sm:$0xff] %v3119
        %v3121 = vld [vmem:[%s2715 + $0x324] sm:$0xff]
        %3122 = vst [vmem:[%s2716 + $0x328] sm:$0xff] %v3121
        %v3123 = vld [vmem:[%s2715 + $0x334] sm:$0xff]
        %3124 = vst [vmem:[%s2716 + $0x32c] sm:$0xff] %v3123
        %v3125 = vld [vmem:[%s2715 + $0x328] sm:$0xff]
        %3126 = vst [vmem:[%s2716 + $0x330] sm:$0xff] %v3125
        %v3127 = vld [vmem:[%s2715 + $0x338] sm:$0xff]
        %3128 = vst [vmem:[%s2716 + $0x334] sm:$0xff] %v3127
        %v3129 = vld [vmem:[%s2715 + $0x32c] sm:$0xff]
        %3130 = vst [vmem:[%s2716 + $0x338] sm:$0xff] %v3129
        %v3131 = vld [vmem:[%s2715 + $0x33c] sm:$0xff]
        %3132 = vst [vmem:[%s2716 + $0x33c] sm:$0xff] %v3131
        %v3133 = vld [vmem:[%s2715 + $0x340] sm:$0xff]
        %3134 = vst [vmem:[%s2716 + $0x340] sm:$0xff] %v3133
        %v3135 = vld [vmem:[%s2715 + $0x350] sm:$0xff]
        %3136 = vst [vmem:[%s2716 + $0x344] sm:$0xff] %v3135
        %v3137 = vld [vmem:[%s2715 + $0x344] sm:$0xff]
        %3138 = vst [vmem:[%s2716 + $0x348] sm:$0xff] %v3137
        %v3139 = vld [vmem:[%s2715 + $0x354] sm:$0xff]
        %3140 = vst [vmem:[%s2716 + $0x34c] sm:$0xff] %v3139
        %v3141 = vld [vmem:[%s2715 + $0x348] sm:$0xff]
        %3142 = vst [vmem:[%s2716 + $0x350] sm:$0xff] %v3141
        %v3143 = vld [vmem:[%s2715 + $0x358] sm:$0xff]
        %3144 = vst [vmem:[%s2716 + $0x354] sm:$0xff] %v3143
        %v3145 = vld [vmem:[%s2715 + $0x34c] sm:$0xff]
        %3146 = vst [vmem:[%s2716 + $0x358] sm:$0xff] %v3145
        %v3147 = vld [vmem:[%s2715 + $0x35c] sm:$0xff]
        %3148 = vst [vmem:[%s2716 + $0x35c] sm:$0xff] %v3147
        %v3149 = vld [vmem:[%s2715 + $0x360] sm:$0xff]
        %3150 = vst [vmem:[%s2716 + $0x360] sm:$0xff] %v3149
        %v3151 = vld [vmem:[%s2715 + $0x370] sm:$0xff]
        %3152 = vst [vmem:[%s2716 + $0x364] sm:$0xff] %v3151
        %v3153 = vld [vmem:[%s2715 + $0x364] sm:$0xff]
        %3154 = vst [vmem:[%s2716 + $0x368] sm:$0xff] %v3153
        %v3155 = vld [vmem:[%s2715 + $0x374] sm:$0xff]
        %3156 = vst [vmem:[%s2716 + $0x36c] sm:$0xff] %v3155
        %v3157 = vld [vmem:[%s2715 + $0x368] sm:$0xff]
        %3158 = vst [vmem:[%s2716 + $0x370] sm:$0xff] %v3157
        %v3159 = vld [vmem:[%s2715 + $0x378] sm:$0xff]
        %3160 = vst [vmem:[%s2716 + $0x374] sm:$0xff] %v3159
        %v3161 = vld [vmem:[%s2715 + $0x36c] sm:$0xff]
        %3162 = vst [vmem:[%s2716 + $0x378] sm:$0xff] %v3161
        %v3163 = vld [vmem:[%s2715 + $0x37c] sm:$0xff]
        %3164 = vst [vmem:[%s2716 + $0x37c] sm:$0xff] %v3163
        %v3165 = vld [vmem:[%s2715 + $0x380] sm:$0xff]
        %3166 = vst [vmem:[%s2716 + $0x380] sm:$0xff] %v3165
        %v3167 = vld [vmem:[%s2715 + $0x390] sm:$0xff]
        %3168 = vst [vmem:[%s2716 + $0x384] sm:$0xff] %v3167
        %v3169 = vld [vmem:[%s2715 + $0x384] sm:$0xff]
        %3170 = vst [vmem:[%s2716 + $0x388] sm:$0xff] %v3169
        %v3171 = vld [vmem:[%s2715 + $0x394] sm:$0xff]
        %3172 = vst [vmem:[%s2716 + $0x38c] sm:$0xff] %v3171
        %v3173 = vld [vmem:[%s2715 + $0x388] sm:$0xff]
        %3174 = vst [vmem:[%s2716 + $0x390] sm:$0xff] %v3173
        %v3175 = vld [vmem:[%s2715 + $0x398] sm:$0xff]
        %3176 = vst [vmem:[%s2716 + $0x394] sm:$0xff] %v3175
        %v3177 = vld [vmem:[%s2715 + $0x38c] sm:$0xff]
        %3178 = vst [vmem:[%s2716 + $0x398] sm:$0xff] %v3177
        %v3179 = vld [vmem:[%s2715 + $0x39c] sm:$0xff]
        %3180 = vst [vmem:[%s2716 + $0x39c] sm:$0xff] %v3179
        %v3181 = vld [vmem:[%s2715 + $0x3a0] sm:$0xff]
        %3182 = vst [vmem:[%s2716 + $0x3a0] sm:$0xff] %v3181
        %v3183 = vld [vmem:[%s2715 + $0x3b0] sm:$0xff]
        %3184 = vst [vmem:[%s2716 + $0x3a4] sm:$0xff] %v3183
        %v3185 = vld [vmem:[%s2715 + $0x3a4] sm:$0xff]
        %3186 = vst [vmem:[%s2716 + $0x3a8] sm:$0xff] %v3185
        %v3187 = vld [vmem:[%s2715 + $0x3b4] sm:$0xff]
        %3188 = vst [vmem:[%s2716 + $0x3ac] sm:$0xff] %v3187
        %v3189 = vld [vmem:[%s2715 + $0x3a8] sm:$0xff]
        %3190 = vst [vmem:[%s2716 + $0x3b0] sm:$0xff] %v3189
        %v3191 = vld [vmem:[%s2715 + $0x3b8] sm:$0xff]
        %3192 = vst [vmem:[%s2716 + $0x3b4] sm:$0xff] %v3191
        %v3193 = vld [vmem:[%s2715 + $0x3ac] sm:$0xff]
        %3194 = vst [vmem:[%s2716 + $0x3b8] sm:$0xff] %v3193
        %v3195 = vld [vmem:[%s2715 + $0x3bc] sm:$0xff]
        %3196 = vst [vmem:[%s2716 + $0x3bc] sm:$0xff] %v3195
        %v3197 = vld [vmem:[%s2715 + $0x3c0] sm:$0xff]
        %3198 = vst [vmem:[%s2716 + $0x3c0] sm:$0xff] %v3197
        %v3199 = vld [vmem:[%s2715 + $0x3d0] sm:$0xff]
        %3200 = vst [vmem:[%s2716 + $0x3c4] sm:$0xff] %v3199
        %v3201 = vld [vmem:[%s2715 + $0x3c4] sm:$0xff]
        %3202 = vst [vmem:[%s2716 + $0x3c8] sm:$0xff] %v3201
        %v3203 = vld [vmem:[%s2715 + $0x3d4] sm:$0xff]
        %3204 = vst [vmem:[%s2716 + $0x3cc] sm:$0xff] %v3203
        %v3205 = vld [vmem:[%s2715 + $0x3c8] sm:$0xff]
        %3206 = vst [vmem:[%s2716 + $0x3d0] sm:$0xff] %v3205
        %v3207 = vld [vmem:[%s2715 + $0x3d8] sm:$0xff]
        %3208 = vst [vmem:[%s2716 + $0x3d4] sm:$0xff] %v3207
        %v3209 = vld [vmem:[%s2715 + $0x3cc] sm:$0xff]
        %3210 = vst [vmem:[%s2716 + $0x3d8] sm:$0xff] %v3209
        %v3211 = vld [vmem:[%s2715 + $0x3dc] sm:$0xff]
        %3212 = vst [vmem:[%s2716 + $0x3dc] sm:$0xff] %v3211
        %v3213 = vld [vmem:[%s2715 + $0x3e0] sm:$0xff]
        %3214 = vst [vmem:[%s2716 + $0x3e0] sm:$0xff] %v3213
        %v3215 = vld [vmem:[%s2715 + $0x3f0] sm:$0xff]
        %3216 = vst [vmem:[%s2716 + $0x3e4] sm:$0xff] %v3215
        %v3217 = vld [vmem:[%s2715 + $0x3e4] sm:$0xff]
        %3218 = vst [vmem:[%s2716 + $0x3e8] sm:$0xff] %v3217
        %v3219 = vld [vmem:[%s2715 + $0x3f4] sm:$0xff]
        %3220 = vst [vmem:[%s2716 + $0x3ec] sm:$0xff] %v3219
        %v3221 = vld [vmem:[%s2715 + $0x3e8] sm:$0xff]
        %3222 = vst [vmem:[%s2716 + $0x3f0] sm:$0xff] %v3221
        %v3223 = vld [vmem:[%s2715 + $0x3f8] sm:$0xff]
        %3224 = vst [vmem:[%s2716 + $0x3f4] sm:$0xff] %v3223
        %v3225 = vld [vmem:[%s2715 + $0x3ec] sm:$0xff]
        %3226 = vst [vmem:[%s2716 + $0x3f8] sm:$0xff] %v3225
        %v3227 = vld [vmem:[%s2715 + $0x3fc] sm:$0xff]
        %3228 = vst [vmem:[%s2716 + $0x3fc] sm:$0xff] %v3227
        %v3229 = vld [vmem:[%s2715 + $0x400] sm:$0xff]
        %3230 = vst [vmem:[%s2716 + $0x400] sm:$0xff] %v3229
        %v3231 = vld [vmem:[%s2715 + $0x410] sm:$0xff]
        %3232 = vst [vmem:[%s2716 + $0x404] sm:$0xff] %v3231
        %v3233 = vld [vmem:[%s2715 + $0x404] sm:$0xff]
        %3234 = vst [vmem:[%s2716 + $0x408] sm:$0xff] %v3233
        %v3235 = vld [vmem:[%s2715 + $0x414] sm:$0xff]
        %3236 = vst [vmem:[%s2716 + $0x40c] sm:$0xff] %v3235
        %v3237 = vld [vmem:[%s2715 + $0x408] sm:$0xff]
        %3238 = vst [vmem:[%s2716 + $0x410] sm:$0xff] %v3237
        %v3239 = vld [vmem:[%s2715 + $0x418] sm:$0xff]
        %3240 = vst [vmem:[%s2716 + $0x414] sm:$0xff] %v3239
        %v3241 = vld [vmem:[%s2715 + $0x40c] sm:$0xff]
        %3242 = vst [vmem:[%s2716 + $0x418] sm:$0xff] %v3241
        %v3243 = vld [vmem:[%s2715 + $0x41c] sm:$0xff]
        %3244 = vst [vmem:[%s2716 + $0x41c] sm:$0xff] %v3243
        %v3245 = vld [vmem:[%s2715 + $0x420] sm:$0xff]
        %3246 = vst [vmem:[%s2716 + $0x420] sm:$0xff] %v3245
        %v3247 = vld [vmem:[%s2715 + $0x430] sm:$0xff]
        %3248 = vst [vmem:[%s2716 + $0x424] sm:$0xff] %v3247
        %v3249 = vld [vmem:[%s2715 + $0x424] sm:$0xff]
        %3250 = vst [vmem:[%s2716 + $0x428] sm:$0xff] %v3249
        %v3251 = vld [vmem:[%s2715 + $0x434] sm:$0xff]
        %3252 = vst [vmem:[%s2716 + $0x42c] sm:$0xff] %v3251
        %v3253 = vld [vmem:[%s2715 + $0x428] sm:$0xff]
        %3254 = vst [vmem:[%s2716 + $0x430] sm:$0xff] %v3253
        %v3255 = vld [vmem:[%s2715 + $0x438] sm:$0xff]
        %3256 = vst [vmem:[%s2716 + $0x434] sm:$0xff] %v3255
        %v3257 = vld [vmem:[%s2715 + $0x42c] sm:$0xff]
        %3258 = vst [vmem:[%s2716 + $0x438] sm:$0xff] %v3257
        %v3259 = vld [vmem:[%s2715 + $0x43c] sm:$0xff]
        %3260 = vst [vmem:[%s2716 + $0x43c] sm:$0xff] %v3259
        %v3261 = vld [vmem:[%s2715 + $0x440] sm:$0xff]
        %3262 = vst [vmem:[%s2716 + $0x440] sm:$0xff] %v3261
        %v3263 = vld [vmem:[%s2715 + $0x450] sm:$0xff]
        %3264 = vst [vmem:[%s2716 + $0x444] sm:$0xff] %v3263
        %v3265 = vld [vmem:[%s2715 + $0x444] sm:$0xff]
        %3266 = vst [vmem:[%s2716 + $0x448] sm:$0xff] %v3265
        %v3267 = vld [vmem:[%s2715 + $0x454] sm:$0xff]
        %3268 = vst [vmem:[%s2716 + $0x44c] sm:$0xff] %v3267
        %v3269 = vld [vmem:[%s2715 + $0x448] sm:$0xff]
        %3270 = vst [vmem:[%s2716 + $0x450] sm:$0xff] %v3269
        %v3271 = vld [vmem:[%s2715 + $0x458] sm:$0xff]
        %3272 = vst [vmem:[%s2716 + $0x454] sm:$0xff] %v3271
        %v3273 = vld [vmem:[%s2715 + $0x44c] sm:$0xff]
        %3274 = vst [vmem:[%s2716 + $0x458] sm:$0xff] %v3273
        %v3275 = vld [vmem:[%s2715 + $0x45c] sm:$0xff]
        %3276 = vst [vmem:[%s2716 + $0x45c] sm:$0xff] %v3275
        %v3277 = vld [vmem:[%s2715 + $0x460] sm:$0xff]
        %3278 = vst [vmem:[%s2716 + $0x460] sm:$0xff] %v3277
        %v3279 = vld [vmem:[%s2715 + $0x470] sm:$0xff]
        %3280 = vst [vmem:[%s2716 + $0x464] sm:$0xff] %v3279
        %v3281 = vld [vmem:[%s2715 + $0x464] sm:$0xff]
        %3282 = vst [vmem:[%s2716 + $0x468] sm:$0xff] %v3281
        %v3283 = vld [vmem:[%s2715 + $0x474] sm:$0xff]
        %3284 = vst [vmem:[%s2716 + $0x46c] sm:$0xff] %v3283
        %v3285 = vld [vmem:[%s2715 + $0x468] sm:$0xff]
        %3286 = vst [vmem:[%s2716 + $0x470] sm:$0xff] %v3285
        %v3287 = vld [vmem:[%s2715 + $0x478] sm:$0xff]
        %3288 = vst [vmem:[%s2716 + $0x474] sm:$0xff] %v3287
        %v3289 = vld [vmem:[%s2715 + $0x46c] sm:$0xff]
        %3290 = vst [vmem:[%s2716 + $0x478] sm:$0xff] %v3289
        %v3291 = vld [vmem:[%s2715 + $0x47c] sm:$0xff]
        %3292 = vst [vmem:[%s2716 + $0x47c] sm:$0xff] %v3291
        %v3293 = vld [vmem:[%s2715 + $0x480] sm:$0xff]
        %3294 = vst [vmem:[%s2716 + $0x480] sm:$0xff] %v3293
        %v3295 = vld [vmem:[%s2715 + $0x490] sm:$0xff]
        %3296 = vst [vmem:[%s2716 + $0x484] sm:$0xff] %v3295
        %v3297 = vld [vmem:[%s2715 + $0x484] sm:$0xff]
        %3298 = vst [vmem:[%s2716 + $0x488] sm:$0xff] %v3297
        %v3299 = vld [vmem:[%s2715 + $0x494] sm:$0xff]
        %3300 = vst [vmem:[%s2716 + $0x48c] sm:$0xff] %v3299
        %v3301 = vld [vmem:[%s2715 + $0x488] sm:$0xff]
        %3302 = vst [vmem:[%s2716 + $0x490] sm:$0xff] %v3301
        %v3303 = vld [vmem:[%s2715 + $0x498] sm:$0xff]
        %3304 = vst [vmem:[%s2716 + $0x494] sm:$0xff] %v3303
        %v3305 = vld [vmem:[%s2715 + $0x48c] sm:$0xff]
        %3306 = vst [vmem:[%s2716 + $0x498] sm:$0xff] %v3305
        %v3307 = vld [vmem:[%s2715 + $0x49c] sm:$0xff]
        %3308 = vst [vmem:[%s2716 + $0x49c] sm:$0xff] %v3307
        %v3309 = vld [vmem:[%s2715 + $0x4a0] sm:$0xff]
        %3310 = vst [vmem:[%s2716 + $0x4a0] sm:$0xff] %v3309
        %v3311 = vld [vmem:[%s2715 + $0x4b0] sm:$0xff]
        %3312 = vst [vmem:[%s2716 + $0x4a4] sm:$0xff] %v3311
        %v3313 = vld [vmem:[%s2715 + $0x4a4] sm:$0xff]
        %3314 = vst [vmem:[%s2716 + $0x4a8] sm:$0xff] %v3313
        %v3315 = vld [vmem:[%s2715 + $0x4b4] sm:$0xff]
        %3316 = vst [vmem:[%s2716 + $0x4ac] sm:$0xff] %v3315
        %v3317 = vld [vmem:[%s2715 + $0x4a8] sm:$0xff]
        %3318 = vst [vmem:[%s2716 + $0x4b0] sm:$0xff] %v3317
        %v3319 = vld [vmem:[%s2715 + $0x4b8] sm:$0xff]
        %3320 = vst [vmem:[%s2716 + $0x4b4] sm:$0xff] %v3319
        %v3321 = vld [vmem:[%s2715 + $0x4ac] sm:$0xff]
        %3322 = vst [vmem:[%s2716 + $0x4b8] sm:$0xff] %v3321
        %v3323 = vld [vmem:[%s2715 + $0x4bc] sm:$0xff]
        %3324 = vst [vmem:[%s2716 + $0x4bc] sm:$0xff] %v3323
        %v3325 = vld [vmem:[%s2715 + $0x4c0] sm:$0xff]
        %3326 = vst [vmem:[%s2716 + $0x4c0] sm:$0xff] %v3325
        %v3327 = vld [vmem:[%s2715 + $0x4d0] sm:$0xff]
        %3328 = vst [vmem:[%s2716 + $0x4c4] sm:$0xff] %v3327
        %v3329 = vld [vmem:[%s2715 + $0x4c4] sm:$0xff]
        %3330 = vst [vmem:[%s2716 + $0x4c8] sm:$0xff] %v3329
        %v3331 = vld [vmem:[%s2715 + $0x4d4] sm:$0xff]
        %3332 = vst [vmem:[%s2716 + $0x4cc] sm:$0xff] %v3331
        %v3333 = vld [vmem:[%s2715 + $0x4c8] sm:$0xff]
        %3334 = vst [vmem:[%s2716 + $0x4d0] sm:$0xff] %v3333
        %v3335 = vld [vmem:[%s2715 + $0x4d8] sm:$0xff]
        %3336 = vst [vmem:[%s2716 + $0x4d4] sm:$0xff] %v3335
        %v3337 = vld [vmem:[%s2715 + $0x4cc] sm:$0xff]
        %3338 = vst [vmem:[%s2716 + $0x4d8] sm:$0xff] %v3337
        %v3339 = vld [vmem:[%s2715 + $0x4dc] sm:$0xff]
        %3340 = vst [vmem:[%s2716 + $0x4dc] sm:$0xff] %v3339
        %v3341 = vld [vmem:[%s2715 + $0x4e0] sm:$0xff]
        %3342 = vst [vmem:[%s2716 + $0x4e0] sm:$0xff] %v3341
        %v3343 = vld [vmem:[%s2715 + $0x4f0] sm:$0xff]
        %3344 = vst [vmem:[%s2716 + $0x4e4] sm:$0xff] %v3343
        %v3345 = vld [vmem:[%s2715 + $0x4e4] sm:$0xff]
        %3346 = vst [vmem:[%s2716 + $0x4e8] sm:$0xff] %v3345
        %v3347 = vld [vmem:[%s2715 + $0x4f4] sm:$0xff]
        %3348 = vst [vmem:[%s2716 + $0x4ec] sm:$0xff] %v3347
        %v3349 = vld [vmem:[%s2715 + $0x4e8] sm:$0xff]
        %3350 = vst [vmem:[%s2716 + $0x4f0] sm:$0xff] %v3349
        %v3351 = vld [vmem:[%s2715 + $0x4f8] sm:$0xff]
        %3352 = vst [vmem:[%s2716 + $0x4f4] sm:$0xff] %v3351
        %v3353 = vld [vmem:[%s2715 + $0x4ec] sm:$0xff]
        %3354 = vst [vmem:[%s2716 + $0x4f8] sm:$0xff] %v3353
        %v3355 = vld [vmem:[%s2715 + $0x4fc] sm:$0xff]
        %3356 = vst [vmem:[%s2716 + $0x4fc] sm:$0xff] %v3355
        %v3357 = vld [vmem:[%s2715 + $0x500] sm:$0xff]
        %3358 = vst [vmem:[%s2716 + $0x500] sm:$0xff] %v3357
        %v3359 = vld [vmem:[%s2715 + $0x510] sm:$0xff]
        %3360 = vst [vmem:[%s2716 + $0x504] sm:$0xff] %v3359
        %v3361 = vld [vmem:[%s2715 + $0x504] sm:$0xff]
        %3362 = vst [vmem:[%s2716 + $0x508] sm:$0xff] %v3361
        %v3363 = vld [vmem:[%s2715 + $0x514] sm:$0xff]
        %3364 = vst [vmem:[%s2716 + $0x50c] sm:$0xff] %v3363
        %v3365 = vld [vmem:[%s2715 + $0x508] sm:$0xff]
        %3366 = vst [vmem:[%s2716 + $0x510] sm:$0xff] %v3365
        %v3367 = vld [vmem:[%s2715 + $0x518] sm:$0xff]
        %3368 = vst [vmem:[%s2716 + $0x514] sm:$0xff] %v3367
        %v3369 = vld [vmem:[%s2715 + $0x50c] sm:$0xff]
        %3370 = vst [vmem:[%s2716 + $0x518] sm:$0xff] %v3369
        %v3371 = vld [vmem:[%s2715 + $0x51c] sm:$0xff]
        %3372 = vst [vmem:[%s2716 + $0x51c] sm:$0xff] %v3371
        %v3373 = vld [vmem:[%s2715 + $0x520] sm:$0xff]
        %3374 = vst [vmem:[%s2716 + $0x520] sm:$0xff] %v3373
        %v3375 = vld [vmem:[%s2715 + $0x530] sm:$0xff]
        %3376 = vst [vmem:[%s2716 + $0x524] sm:$0xff] %v3375
        %v3377 = vld [vmem:[%s2715 + $0x524] sm:$0xff]
        %3378 = vst [vmem:[%s2716 + $0x528] sm:$0xff] %v3377
        %v3379 = vld [vmem:[%s2715 + $0x534] sm:$0xff]
        %3380 = vst [vmem:[%s2716 + $0x52c] sm:$0xff] %v3379
        %v3381 = vld [vmem:[%s2715 + $0x528] sm:$0xff]
        %3382 = vst [vmem:[%s2716 + $0x530] sm:$0xff] %v3381
        %v3383 = vld [vmem:[%s2715 + $0x538] sm:$0xff]
        %3384 = vst [vmem:[%s2716 + $0x534] sm:$0xff] %v3383
        %v3385 = vld [vmem:[%s2715 + $0x52c] sm:$0xff]
        %3386 = vst [vmem:[%s2716 + $0x538] sm:$0xff] %v3385
        %v3387 = vld [vmem:[%s2715 + $0x53c] sm:$0xff]
        %3388 = vst [vmem:[%s2716 + $0x53c] sm:$0xff] %v3387
        %v3389 = vld [vmem:[%s2715 + $0x540] sm:$0xff]
        %3390 = vst [vmem:[%s2716 + $0x540] sm:$0xff] %v3389
        %v3391 = vld [vmem:[%s2715 + $0x550] sm:$0xff]
        %3392 = vst [vmem:[%s2716 + $0x544] sm:$0xff] %v3391
        %v3393 = vld [vmem:[%s2715 + $0x544] sm:$0xff]
        %3394 = vst [vmem:[%s2716 + $0x548] sm:$0xff] %v3393
        %v3395 = vld [vmem:[%s2715 + $0x554] sm:$0xff]
        %3396 = vst [vmem:[%s2716 + $0x54c] sm:$0xff] %v3395
        %v3397 = vld [vmem:[%s2715 + $0x548] sm:$0xff]
        %3398 = vst [vmem:[%s2716 + $0x550] sm:$0xff] %v3397
        %v3399 = vld [vmem:[%s2715 + $0x558] sm:$0xff]
        %3400 = vst [vmem:[%s2716 + $0x554] sm:$0xff] %v3399
        %v3401 = vld [vmem:[%s2715 + $0x54c] sm:$0xff]
        %3402 = vst [vmem:[%s2716 + $0x558] sm:$0xff] %v3401
        %v3403 = vld [vmem:[%s2715 + $0x55c] sm:$0xff]
        %3404 = vst [vmem:[%s2716 + $0x55c] sm:$0xff] %v3403
        %v3405 = vld [vmem:[%s2715 + $0x560] sm:$0xff]
        %3406 = vst [vmem:[%s2716 + $0x560] sm:$0xff] %v3405
        %v3407 = vld [vmem:[%s2715 + $0x570] sm:$0xff]
        %3408 = vst [vmem:[%s2716 + $0x564] sm:$0xff] %v3407
        %v3409 = vld [vmem:[%s2715 + $0x564] sm:$0xff]
        %3410 = vst [vmem:[%s2716 + $0x568] sm:$0xff] %v3409
        %v3411 = vld [vmem:[%s2715 + $0x574] sm:$0xff]
        %3412 = vst [vmem:[%s2716 + $0x56c] sm:$0xff] %v3411
        %v3413 = vld [vmem:[%s2715 + $0x568] sm:$0xff]
        %3414 = vst [vmem:[%s2716 + $0x570] sm:$0xff] %v3413
        %v3415 = vld [vmem:[%s2715 + $0x578] sm:$0xff]
        %3416 = vst [vmem:[%s2716 + $0x574] sm:$0xff] %v3415
        %v3417 = vld [vmem:[%s2715 + $0x56c] sm:$0xff]
        %3418 = vst [vmem:[%s2716 + $0x578] sm:$0xff] %v3417
        %v3419 = vld [vmem:[%s2715 + $0x57c] sm:$0xff]
        %3420 = vst [vmem:[%s2716 + $0x57c] sm:$0xff] %v3419
        %v3421 = vld [vmem:[%s2715 + $0x580] sm:$0xff]
        %3422 = vst [vmem:[%s2716 + $0x580] sm:$0xff] %v3421
        %v3423 = vld [vmem:[%s2715 + $0x590] sm:$0xff]
        %3424 = vst [vmem:[%s2716 + $0x584] sm:$0xff] %v3423
        %v3425 = vld [vmem:[%s2715 + $0x584] sm:$0xff]
        %3426 = vst [vmem:[%s2716 + $0x588] sm:$0xff] %v3425
        %v3427 = vld [vmem:[%s2715 + $0x594] sm:$0xff]
        %3428 = vst [vmem:[%s2716 + $0x58c] sm:$0xff] %v3427
        %v3429 = vld [vmem:[%s2715 + $0x588] sm:$0xff]
        %3430 = vst [vmem:[%s2716 + $0x590] sm:$0xff] %v3429
        %v3431 = vld [vmem:[%s2715 + $0x598] sm:$0xff]
        %3432 = vst [vmem:[%s2716 + $0x594] sm:$0xff] %v3431
        %v3433 = vld [vmem:[%s2715 + $0x58c] sm:$0xff]
        %3434 = vst [vmem:[%s2716 + $0x598] sm:$0xff] %v3433
        %v3435 = vld [vmem:[%s2715 + $0x59c] sm:$0xff]
        %3436 = vst [vmem:[%s2716 + $0x59c] sm:$0xff] %v3435
        %v3437 = vld [vmem:[%s2715 + $0x5a0] sm:$0xff]
        %3438 = vst [vmem:[%s2716 + $0x5a0] sm:$0xff] %v3437
        %v3439 = vld [vmem:[%s2715 + $0x5b0] sm:$0xff]
        %3440 = vst [vmem:[%s2716 + $0x5a4] sm:$0xff] %v3439
        %v3441 = vld [vmem:[%s2715 + $0x5a4] sm:$0xff]
        %3442 = vst [vmem:[%s2716 + $0x5a8] sm:$0xff] %v3441
        %v3443 = vld [vmem:[%s2715 + $0x5b4] sm:$0xff]
        %3444 = vst [vmem:[%s2716 + $0x5ac] sm:$0xff] %v3443
        %v3445 = vld [vmem:[%s2715 + $0x5a8] sm:$0xff]
        %3446 = vst [vmem:[%s2716 + $0x5b0] sm:$0xff] %v3445
        %v3447 = vld [vmem:[%s2715 + $0x5b8] sm:$0xff]
        %3448 = vst [vmem:[%s2716 + $0x5b4] sm:$0xff] %v3447
        %v3449 = vld [vmem:[%s2715 + $0x5ac] sm:$0xff]
        %3450 = vst [vmem:[%s2716 + $0x5b8] sm:$0xff] %v3449
        %v3451 = vld [vmem:[%s2715 + $0x5bc] sm:$0xff]
        %3452 = vst [vmem:[%s2716 + $0x5bc] sm:$0xff] %v3451
        %v3453 = vld [vmem:[%s2715 + $0x5c0] sm:$0xff]
        %3454 = vst [vmem:[%s2716 + $0x5c0] sm:$0xff] %v3453
        %v3455 = vld [vmem:[%s2715 + $0x5d0] sm:$0xff]
        %3456 = vst [vmem:[%s2716 + $0x5c4] sm:$0xff] %v3455
        %v3457 = vld [vmem:[%s2715 + $0x5c4] sm:$0xff]
        %3458 = vst [vmem:[%s2716 + $0x5c8] sm:$0xff] %v3457
        %v3459 = vld [vmem:[%s2715 + $0x5d4] sm:$0xff]
        %3460 = vst [vmem:[%s2716 + $0x5cc] sm:$0xff] %v3459
        %v3461 = vld [vmem:[%s2715 + $0x5c8] sm:$0xff]
        %3462 = vst [vmem:[%s2716 + $0x5d0] sm:$0xff] %v3461
        %v3463 = vld [vmem:[%s2715 + $0x5d8] sm:$0xff]
        %3464 = vst [vmem:[%s2716 + $0x5d4] sm:$0xff] %v3463
        %v3465 = vld [vmem:[%s2715 + $0x5cc] sm:$0xff]
        %3466 = vst [vmem:[%s2716 + $0x5d8] sm:$0xff] %v3465
        %v3467 = vld [vmem:[%s2715 + $0x5dc] sm:$0xff]
        %3468 = vst [vmem:[%s2716 + $0x5dc] sm:$0xff] %v3467
        %v3469 = vld [vmem:[%s2715 + $0x5e0] sm:$0xff]
        %3470 = vst [vmem:[%s2716 + $0x5e0] sm:$0xff] %v3469
        %v3471 = vld [vmem:[%s2715 + $0x5f0] sm:$0xff]
        %3472 = vst [vmem:[%s2716 + $0x5e4] sm:$0xff] %v3471
        %v3473 = vld [vmem:[%s2715 + $0x5e4] sm:$0xff]
        %3474 = vst [vmem:[%s2716 + $0x5e8] sm:$0xff] %v3473
        %v3475 = vld [vmem:[%s2715 + $0x5f4] sm:$0xff]
        %3476 = vst [vmem:[%s2716 + $0x5ec] sm:$0xff] %v3475
        %v3477 = vld [vmem:[%s2715 + $0x5e8] sm:$0xff]
        %3478 = vst [vmem:[%s2716 + $0x5f0] sm:$0xff] %v3477
        %v3479 = vld [vmem:[%s2715 + $0x5f8] sm:$0xff]
        %3480 = vst [vmem:[%s2716 + $0x5f4] sm:$0xff] %v3479
        %v3481 = vld [vmem:[%s2715 + $0x5ec] sm:$0xff]
        %3482 = vst [vmem:[%s2716 + $0x5f8] sm:$0xff] %v3481
        %v3483 = vld [vmem:[%s2715 + $0x5fc] sm:$0xff]
        %3484 = vst [vmem:[%s2716 + $0x5fc] sm:$0xff] %v3483
        %v3485 = vld [vmem:[%s2715 + $0x600] sm:$0xff]
        %3486 = vst [vmem:[%s2716 + $0x600] sm:$0xff] %v3485
        %v3487 = vld [vmem:[%s2715 + $0x610] sm:$0xff]
        %3488 = vst [vmem:[%s2716 + $0x604] sm:$0xff] %v3487
        %v3489 = vld [vmem:[%s2715 + $0x604] sm:$0xff]
        %3490 = vst [vmem:[%s2716 + $0x608] sm:$0xff] %v3489
        %v3491 = vld [vmem:[%s2715 + $0x614] sm:$0xff]
        %3492 = vst [vmem:[%s2716 + $0x60c] sm:$0xff] %v3491
        %v3493 = vld [vmem:[%s2715 + $0x608] sm:$0xff]
        %3494 = vst [vmem:[%s2716 + $0x610] sm:$0xff] %v3493
        %v3495 = vld [vmem:[%s2715 + $0x618] sm:$0xff]
        %3496 = vst [vmem:[%s2716 + $0x614] sm:$0xff] %v3495
        %v3497 = vld [vmem:[%s2715 + $0x60c] sm:$0xff]
        %3498 = vst [vmem:[%s2716 + $0x618] sm:$0xff] %v3497
        %v3499 = vld [vmem:[%s2715 + $0x61c] sm:$0xff]
        %3500 = vst [vmem:[%s2716 + $0x61c] sm:$0xff] %v3499
        %v3501 = vld [vmem:[%s2715 + $0x620] sm:$0xff]
        %3502 = vst [vmem:[%s2716 + $0x620] sm:$0xff] %v3501
        %v3503 = vld [vmem:[%s2715 + $0x630] sm:$0xff]
        %3504 = vst [vmem:[%s2716 + $0x624] sm:$0xff] %v3503
        %v3505 = vld [vmem:[%s2715 + $0x624] sm:$0xff]
        %3506 = vst [vmem:[%s2716 + $0x628] sm:$0xff] %v3505
        %v3507 = vld [vmem:[%s2715 + $0x634] sm:$0xff]
        %3508 = vst [vmem:[%s2716 + $0x62c] sm:$0xff] %v3507
        %v3509 = vld [vmem:[%s2715 + $0x628] sm:$0xff]
        %3510 = vst [vmem:[%s2716 + $0x630] sm:$0xff] %v3509
        %v3511 = vld [vmem:[%s2715 + $0x638] sm:$0xff]
        %3512 = vst [vmem:[%s2716 + $0x634] sm:$0xff] %v3511
        %v3513 = vld [vmem:[%s2715 + $0x62c] sm:$0xff]
        %3514 = vst [vmem:[%s2716 + $0x638] sm:$0xff] %v3513
        %v3515 = vld [vmem:[%s2715 + $0x63c] sm:$0xff]
        %3516 = vst [vmem:[%s2716 + $0x63c] sm:$0xff] %v3515
        %v3517 = vld [vmem:[%s2715 + $0x640] sm:$0xff]
        %3518 = vst [vmem:[%s2716 + $0x640] sm:$0xff] %v3517
        %v3519 = vld [vmem:[%s2715 + $0x650] sm:$0xff]
        %3520 = vst [vmem:[%s2716 + $0x644] sm:$0xff] %v3519
        %v3521 = vld [vmem:[%s2715 + $0x644] sm:$0xff]
        %3522 = vst [vmem:[%s2716 + $0x648] sm:$0xff] %v3521
        %v3523 = vld [vmem:[%s2715 + $0x654] sm:$0xff]
        %3524 = vst [vmem:[%s2716 + $0x64c] sm:$0xff] %v3523
        %v3525 = vld [vmem:[%s2715 + $0x648] sm:$0xff]
        %3526 = vst [vmem:[%s2716 + $0x650] sm:$0xff] %v3525
        %v3527 = vld [vmem:[%s2715 + $0x658] sm:$0xff]
        %3528 = vst [vmem:[%s2716 + $0x654] sm:$0xff] %v3527
        %v3529 = vld [vmem:[%s2715 + $0x64c] sm:$0xff]
        %3530 = vst [vmem:[%s2716 + $0x658] sm:$0xff] %v3529
        %v3531 = vld [vmem:[%s2715 + $0x65c] sm:$0xff]
        %3532 = vst [vmem:[%s2716 + $0x65c] sm:$0xff] %v3531
        %v3533 = vld [vmem:[%s2715 + $0x660] sm:$0xff]
        %3534 = vst [vmem:[%s2716 + $0x660] sm:$0xff] %v3533
        %v3535 = vld [vmem:[%s2715 + $0x670] sm:$0xff]
        %3536 = vst [vmem:[%s2716 + $0x664] sm:$0xff] %v3535
        %v3537 = vld [vmem:[%s2715 + $0x664] sm:$0xff]
        %3538 = vst [vmem:[%s2716 + $0x668] sm:$0xff] %v3537
        %v3539 = vld [vmem:[%s2715 + $0x674] sm:$0xff]
        %3540 = vst [vmem:[%s2716 + $0x66c] sm:$0xff] %v3539
        %v3541 = vld [vmem:[%s2715 + $0x668] sm:$0xff]
        %3542 = vst [vmem:[%s2716 + $0x670] sm:$0xff] %v3541
        %v3543 = vld [vmem:[%s2715 + $0x678] sm:$0xff]
        %3544 = vst [vmem:[%s2716 + $0x674] sm:$0xff] %v3543
        %v3545 = vld [vmem:[%s2715 + $0x66c] sm:$0xff]
        %3546 = vst [vmem:[%s2716 + $0x678] sm:$0xff] %v3545
        %v3547 = vld [vmem:[%s2715 + $0x67c] sm:$0xff]
        %3548 = vst [vmem:[%s2716 + $0x67c] sm:$0xff] %v3547
        %v3549 = vld [vmem:[%s2715 + $0x680] sm:$0xff]
        %3550 = vst [vmem:[%s2716 + $0x680] sm:$0xff] %v3549
        %v3551 = vld [vmem:[%s2715 + $0x690] sm:$0xff]
        %3552 = vst [vmem:[%s2716 + $0x684] sm:$0xff] %v3551
        %v3553 = vld [vmem:[%s2715 + $0x684] sm:$0xff]
        %3554 = vst [vmem:[%s2716 + $0x688] sm:$0xff] %v3553
        %v3555 = vld [vmem:[%s2715 + $0x694] sm:$0xff]
        %3556 = vst [vmem:[%s2716 + $0x68c] sm:$0xff] %v3555
        %v3557 = vld [vmem:[%s2715 + $0x688] sm:$0xff]
        %3558 = vst [vmem:[%s2716 + $0x690] sm:$0xff] %v3557
        %v3559 = vld [vmem:[%s2715 + $0x698] sm:$0xff]
        %3560 = vst [vmem:[%s2716 + $0x694] sm:$0xff] %v3559
        %v3561 = vld [vmem:[%s2715 + $0x68c] sm:$0xff]
        %3562 = vst [vmem:[%s2716 + $0x698] sm:$0xff] %v3561
        %v3563 = vld [vmem:[%s2715 + $0x69c] sm:$0xff]
        %3564 = vst [vmem:[%s2716 + $0x69c] sm:$0xff] %v3563
        %v3565 = vld [vmem:[%s2715 + $0x6a0] sm:$0xff]
        %3566 = vst [vmem:[%s2716 + $0x6a0] sm:$0xff] %v3565
        %v3567 = vld [vmem:[%s2715 + $0x6b0] sm:$0xff]
        %3568 = vst [vmem:[%s2716 + $0x6a4] sm:$0xff] %v3567
        %v3569 = vld [vmem:[%s2715 + $0x6a4] sm:$0xff]
        %3570 = vst [vmem:[%s2716 + $0x6a8] sm:$0xff] %v3569
        %v3571 = vld [vmem:[%s2715 + $0x6b4] sm:$0xff]
        %3572 = vst [vmem:[%s2716 + $0x6ac] sm:$0xff] %v3571
        %v3573 = vld [vmem:[%s2715 + $0x6a8] sm:$0xff]
        %3574 = vst [vmem:[%s2716 + $0x6b0] sm:$0xff] %v3573
        %v3575 = vld [vmem:[%s2715 + $0x6b8] sm:$0xff]
        %3576 = vst [vmem:[%s2716 + $0x6b4] sm:$0xff] %v3575
        %v3577 = vld [vmem:[%s2715 + $0x6ac] sm:$0xff]
        %3578 = vst [vmem:[%s2716 + $0x6b8] sm:$0xff] %v3577
        %v3579 = vld [vmem:[%s2715 + $0x6bc] sm:$0xff]
        %3580 = vst [vmem:[%s2716 + $0x6bc] sm:$0xff] %v3579
        %v3581 = vld [vmem:[%s2715 + $0x6c0] sm:$0xff]
        %3582 = vst [vmem:[%s2716 + $0x6c0] sm:$0xff] %v3581
        %v3583 = vld [vmem:[%s2715 + $0x6d0] sm:$0xff]
        %3584 = vst [vmem:[%s2716 + $0x6c4] sm:$0xff] %v3583
        %v3585 = vld [vmem:[%s2715 + $0x6c4] sm:$0xff]
        %3586 = vst [vmem:[%s2716 + $0x6c8] sm:$0xff] %v3585
        %v3587 = vld [vmem:[%s2715 + $0x6d4] sm:$0xff]
        %3588 = vst [vmem:[%s2716 + $0x6cc] sm:$0xff] %v3587
        %v3589 = vld [vmem:[%s2715 + $0x6c8] sm:$0xff]
        %3590 = vst [vmem:[%s2716 + $0x6d0] sm:$0xff] %v3589
        %v3591 = vld [vmem:[%s2715 + $0x6d8] sm:$0xff]
        %3592 = vst [vmem:[%s2716 + $0x6d4] sm:$0xff] %v3591
        %v3593 = vld [vmem:[%s2715 + $0x6cc] sm:$0xff]
        %3594 = vst [vmem:[%s2716 + $0x6d8] sm:$0xff] %v3593
        %v3595 = vld [vmem:[%s2715 + $0x6dc] sm:$0xff]
        %3596 = vst [vmem:[%s2716 + $0x6dc] sm:$0xff] %v3595
        %v3597 = vld [vmem:[%s2715 + $0x6e0] sm:$0xff]
        %3598 = vst [vmem:[%s2716 + $0x6e0] sm:$0xff] %v3597
        %v3599 = vld [vmem:[%s2715 + $0x6f0] sm:$0xff]
        %3600 = vst [vmem:[%s2716 + $0x6e4] sm:$0xff] %v3599
        %v3601 = vld [vmem:[%s2715 + $0x6e4] sm:$0xff]
        %3602 = vst [vmem:[%s2716 + $0x6e8] sm:$0xff] %v3601
        %v3603 = vld [vmem:[%s2715 + $0x6f4] sm:$0xff]
        %3604 = vst [vmem:[%s2716 + $0x6ec] sm:$0xff] %v3603
        %v3605 = vld [vmem:[%s2715 + $0x6e8] sm:$0xff]
        %3606 = vst [vmem:[%s2716 + $0x6f0] sm:$0xff] %v3605
        %v3607 = vld [vmem:[%s2715 + $0x6f8] sm:$0xff]
        %3608 = vst [vmem:[%s2716 + $0x6f4] sm:$0xff] %v3607
        %v3609 = vld [vmem:[%s2715 + $0x6ec] sm:$0xff]
        %3610 = vst [vmem:[%s2716 + $0x6f8] sm:$0xff] %v3609
        %v3611 = vld [vmem:[%s2715 + $0x6fc] sm:$0xff]
        %3612 = vst [vmem:[%s2716 + $0x6fc] sm:$0xff] %v3611
        %v3613 = vld [vmem:[%s2715 + $0x700] sm:$0xff]
        %3614 = vst [vmem:[%s2716 + $0x700] sm:$0xff] %v3613
        %v3615 = vld [vmem:[%s2715 + $0x710] sm:$0xff]
        %3616 = vst [vmem:[%s2716 + $0x704] sm:$0xff] %v3615
        %v3617 = vld [vmem:[%s2715 + $0x704] sm:$0xff]
        %3618 = vst [vmem:[%s2716 + $0x708] sm:$0xff] %v3617
        %v3619 = vld [vmem:[%s2715 + $0x714] sm:$0xff]
        %3620 = vst [vmem:[%s2716 + $0x70c] sm:$0xff] %v3619
        %v3621 = vld [vmem:[%s2715 + $0x708] sm:$0xff]
        %3622 = vst [vmem:[%s2716 + $0x710] sm:$0xff] %v3621
        %v3623 = vld [vmem:[%s2715 + $0x718] sm:$0xff]
        %3624 = vst [vmem:[%s2716 + $0x714] sm:$0xff] %v3623
        %v3625 = vld [vmem:[%s2715 + $0x70c] sm:$0xff]
        %3626 = vst [vmem:[%s2716 + $0x718] sm:$0xff] %v3625
        %v3627 = vld [vmem:[%s2715 + $0x71c] sm:$0xff]
        %3628 = vst [vmem:[%s2716 + $0x71c] sm:$0xff] %v3627
        %v3629 = vld [vmem:[%s2715 + $0x720] sm:$0xff]
        %3630 = vst [vmem:[%s2716 + $0x720] sm:$0xff] %v3629
        %v3631 = vld [vmem:[%s2715 + $0x730] sm:$0xff]
        %3632 = vst [vmem:[%s2716 + $0x724] sm:$0xff] %v3631
        %v3633 = vld [vmem:[%s2715 + $0x724] sm:$0xff]
        %3634 = vst [vmem:[%s2716 + $0x728] sm:$0xff] %v3633
        %v3635 = vld [vmem:[%s2715 + $0x734] sm:$0xff]
        %3636 = vst [vmem:[%s2716 + $0x72c] sm:$0xff] %v3635
        %v3637 = vld [vmem:[%s2715 + $0x728] sm:$0xff]
        %3638 = vst [vmem:[%s2716 + $0x730] sm:$0xff] %v3637
        %v3639 = vld [vmem:[%s2715 + $0x738] sm:$0xff]
        %3640 = vst [vmem:[%s2716 + $0x734] sm:$0xff] %v3639
        %v3641 = vld [vmem:[%s2715 + $0x72c] sm:$0xff]
        %3642 = vst [vmem:[%s2716 + $0x738] sm:$0xff] %v3641
        %v3643 = vld [vmem:[%s2715 + $0x73c] sm:$0xff]
        %3644 = vst [vmem:[%s2716 + $0x73c] sm:$0xff] %v3643
        %v3645 = vld [vmem:[%s2715 + $0x740] sm:$0xff]
        %3646 = vst [vmem:[%s2716 + $0x740] sm:$0xff] %v3645
        %v3647 = vld [vmem:[%s2715 + $0x750] sm:$0xff]
        %3648 = vst [vmem:[%s2716 + $0x744] sm:$0xff] %v3647
        %v3649 = vld [vmem:[%s2715 + $0x744] sm:$0xff]
        %3650 = vst [vmem:[%s2716 + $0x748] sm:$0xff] %v3649
        %v3651 = vld [vmem:[%s2715 + $0x754] sm:$0xff]
        %3652 = vst [vmem:[%s2716 + $0x74c] sm:$0xff] %v3651
        %v3653 = vld [vmem:[%s2715 + $0x748] sm:$0xff]
        %3654 = vst [vmem:[%s2716 + $0x750] sm:$0xff] %v3653
        %v3655 = vld [vmem:[%s2715 + $0x758] sm:$0xff]
        %3656 = vst [vmem:[%s2716 + $0x754] sm:$0xff] %v3655
        %v3657 = vld [vmem:[%s2715 + $0x74c] sm:$0xff]
        %3658 = vst [vmem:[%s2716 + $0x758] sm:$0xff] %v3657
        %v3659 = vld [vmem:[%s2715 + $0x75c] sm:$0xff]
        %3660 = vst [vmem:[%s2716 + $0x75c] sm:$0xff] %v3659
        %v3661 = vld [vmem:[%s2715 + $0x760] sm:$0xff]
        %3662 = vst [vmem:[%s2716 + $0x760] sm:$0xff] %v3661
        %v3663 = vld [vmem:[%s2715 + $0x770] sm:$0xff]
        %3664 = vst [vmem:[%s2716 + $0x764] sm:$0xff] %v3663
        %v3665 = vld [vmem:[%s2715 + $0x764] sm:$0xff]
        %3666 = vst [vmem:[%s2716 + $0x768] sm:$0xff] %v3665
        %v3667 = vld [vmem:[%s2715 + $0x774] sm:$0xff]
        %3668 = vst [vmem:[%s2716 + $0x76c] sm:$0xff] %v3667
        %v3669 = vld [vmem:[%s2715 + $0x768] sm:$0xff]
        %3670 = vst [vmem:[%s2716 + $0x770] sm:$0xff] %v3669
        %v3671 = vld [vmem:[%s2715 + $0x778] sm:$0xff]
        %3672 = vst [vmem:[%s2716 + $0x774] sm:$0xff] %v3671
        %v3673 = vld [vmem:[%s2715 + $0x76c] sm:$0xff]
        %3674 = vst [vmem:[%s2716 + $0x778] sm:$0xff] %v3673
        %v3675 = vld [vmem:[%s2715 + $0x77c] sm:$0xff]
        %3676 = vst [vmem:[%s2716 + $0x77c] sm:$0xff] %v3675
        %v3677 = vld [vmem:[%s2715 + $0x780] sm:$0xff]
        %3678 = vst [vmem:[%s2716 + $0x780] sm:$0xff] %v3677
        %v3679 = vld [vmem:[%s2715 + $0x790] sm:$0xff]
        %3680 = vst [vmem:[%s2716 + $0x784] sm:$0xff] %v3679
        %v3681 = vld [vmem:[%s2715 + $0x784] sm:$0xff]
        %3682 = vst [vmem:[%s2716 + $0x788] sm:$0xff] %v3681
        %v3683 = vld [vmem:[%s2715 + $0x794] sm:$0xff]
        %3684 = vst [vmem:[%s2716 + $0x78c] sm:$0xff] %v3683
        %v3685 = vld [vmem:[%s2715 + $0x788] sm:$0xff]
        %3686 = vst [vmem:[%s2716 + $0x790] sm:$0xff] %v3685
        %v3687 = vld [vmem:[%s2715 + $0x798] sm:$0xff]
        %3688 = vst [vmem:[%s2716 + $0x794] sm:$0xff] %v3687
        %v3689 = vld [vmem:[%s2715 + $0x78c] sm:$0xff]
        %3690 = vst [vmem:[%s2716 + $0x798] sm:$0xff] %v3689
        %v3691 = vld [vmem:[%s2715 + $0x79c] sm:$0xff]
        %3692 = vst [vmem:[%s2716 + $0x79c] sm:$0xff] %v3691
        %v3693 = vld [vmem:[%s2715 + $0x7a0] sm:$0xff]
        %3694 = vst [vmem:[%s2716 + $0x7a0] sm:$0xff] %v3693
        %v3695 = vld [vmem:[%s2715 + $0x7b0] sm:$0xff]
        %3696 = vst [vmem:[%s2716 + $0x7a4] sm:$0xff] %v3695
        %v3697 = vld [vmem:[%s2715 + $0x7a4] sm:$0xff]
        %3698 = vst [vmem:[%s2716 + $0x7a8] sm:$0xff] %v3697
        %v3699 = vld [vmem:[%s2715 + $0x7b4] sm:$0xff]
        %3700 = vst [vmem:[%s2716 + $0x7ac] sm:$0xff] %v3699
        %v3701 = vld [vmem:[%s2715 + $0x7a8] sm:$0xff]
        %3702 = vst [vmem:[%s2716 + $0x7b0] sm:$0xff] %v3701
        %v3703 = vld [vmem:[%s2715 + $0x7b8] sm:$0xff]
        %3704 = vst [vmem:[%s2716 + $0x7b4] sm:$0xff] %v3703
        %v3705 = vld [vmem:[%s2715 + $0x7ac] sm:$0xff]
        %3706 = vst [vmem:[%s2716 + $0x7b8] sm:$0xff] %v3705
        %v3707 = vld [vmem:[%s2715 + $0x7bc] sm:$0xff]
        %3708 = vst [vmem:[%s2716 + $0x7bc] sm:$0xff] %v3707
        %v3709 = vld [vmem:[%s2715 + $0x7c0] sm:$0xff]
        %3710 = vst [vmem:[%s2716 + $0x7c0] sm:$0xff] %v3709
        %v3711 = vld [vmem:[%s2715 + $0x7d0] sm:$0xff]
        %3712 = vst [vmem:[%s2716 + $0x7c4] sm:$0xff] %v3711
        %v3713 = vld [vmem:[%s2715 + $0x7c4] sm:$0xff]
        %3714 = vst [vmem:[%s2716 + $0x7c8] sm:$0xff] %v3713
        %v3715 = vld [vmem:[%s2715 + $0x7d4] sm:$0xff]
        %3716 = vst [vmem:[%s2716 + $0x7cc] sm:$0xff] %v3715
        %v3717 = vld [vmem:[%s2715 + $0x7c8] sm:$0xff]
        %3718 = vst [vmem:[%s2716 + $0x7d0] sm:$0xff] %v3717
        %v3719 = vld [vmem:[%s2715 + $0x7d8] sm:$0xff]
        %3720 = vst [vmem:[%s2716 + $0x7d4] sm:$0xff] %v3719
        %v3721 = vld [vmem:[%s2715 + $0x7cc] sm:$0xff]
        %3722 = vst [vmem:[%s2716 + $0x7d8] sm:$0xff] %v3721
        %v3723 = vld [vmem:[%s2715 + $0x7dc] sm:$0xff]
        %3724 = vst [vmem:[%s2716 + $0x7dc] sm:$0xff] %v3723
        %v3725 = vld [vmem:[%s2715 + $0x7e0] sm:$0xff]
        %3726 = vst [vmem:[%s2716 + $0x7e0] sm:$0xff] %v3725
        %v3727 = vld [vmem:[%s2715 + $0x7f0] sm:$0xff]
        %3728 = vst [vmem:[%s2716 + $0x7e4] sm:$0xff] %v3727
        %v3729 = vld [vmem:[%s2715 + $0x7e4] sm:$0xff]
        %3730 = vst [vmem:[%s2716 + $0x7e8] sm:$0xff] %v3729
        %v3731 = vld [vmem:[%s2715 + $0x7f4] sm:$0xff]
        %3732 = vst [vmem:[%s2716 + $0x7ec] sm:$0xff] %v3731
        %v3733 = vld [vmem:[%s2715 + $0x7e8] sm:$0xff]
        %3734 = vst [vmem:[%s2716 + $0x7f0] sm:$0xff] %v3733
        %v3735 = vld [vmem:[%s2715 + $0x7f8] sm:$0xff]
        %3736 = vst [vmem:[%s2716 + $0x7f4] sm:$0xff] %v3735
        %v3737 = vld [vmem:[%s2715 + $0x7ec] sm:$0xff]
        %3738 = vst [vmem:[%s2716 + $0x7f8] sm:$0xff] %v3737
        %v3739 = vld [vmem:[%s2715 + $0x7fc] sm:$0xff]
        %3740 = vst [vmem:[%s2716 + $0x7fc] sm:$0xff] %v3739
        %s3741 = sadd.s32 1, %s2714
        %p3742 = scmp.ge.s32.totalorder %s3741, %s2705
        %s3743 = scalar_select %p3742, 0, %s3741
        %s3744 = smul.u32 %s3743, 8
        %s3745 = smul.u32 %s3743, 8
        %s3746 = scalar_lea.vmem %s12, %s3744
        %s3747 = scalar_lea.vmem [#allocation3], %s3745
      $region125: #{discriminator_forward.1} parent=119 // loop_footer
        %s2711 = sadd.s32 %s2709, 1
      $region126: #{discriminator_forward.1} parent=119 // loop_footer_branch
        %2708 = sbr.rel target = $region122
      $region127: #{discriminator_forward.1} parent=119 // loop_exit
        _
      %s3748 = sshllo.u32 0, %s2700
      loop: start=0, step=1, limit=1
      $region128: #{discriminator_forward.1} parent=119 // loop_pre_header
        _
      $region129: #{discriminator_forward.1} parent=119 // loop_header
        %s3750 = sphi 0, %s3754
        %p3751 = scmp.ge.s32.totalorder %s3750, 1
        %s3755 = sphi %s2702, %s2702
        %s3756 = sphi %s2704, %s2704
      $region130: #{discriminator_forward.1} parent=119 // loop_header_branch
        %3753 = sbr.rel (%p3751) target = $region134
      $region131: #{discriminator_forward.1} parent=119 // loop_body
        %v3757 = vld [vmem:[%s3755] sm:%s3748]
        %3758 = vst [vmem:[%s3756] sm:%s3748] %v3757
        %v3759 = vld [vmem:[%s3755 + $0x10] sm:%s3748]
        %3760 = vst [vmem:[%s3756 + $0x4] sm:%s3748] %v3759
        %v3761 = vld [vmem:[%s3755 + $0x4] sm:%s3748]
        %3762 = vst [vmem:[%s3756 + $0x8] sm:%s3748] %v3761
        %v3763 = vld [vmem:[%s3755 + $0x14] sm:%s3748]
        %3764 = vst [vmem:[%s3756 + $0xc] sm:%s3748] %v3763
        %v3765 = vld [vmem:[%s3755 + $0x8] sm:%s3748]
        %3766 = vst [vmem:[%s3756 + $0x10] sm:%s3748] %v3765
        %v3767 = vld [vmem:[%s3755 + $0x18] sm:%s3748]
        %3768 = vst [vmem:[%s3756 + $0x14] sm:%s3748] %v3767
        %v3769 = vld [vmem:[%s3755 + $0xc] sm:%s3748]
        %3770 = vst [vmem:[%s3756 + $0x18] sm:%s3748] %v3769
        %v3771 = vld [vmem:[%s3755 + $0x1c] sm:%s3748]
        %3772 = vst [vmem:[%s3756 + $0x1c] sm:%s3748] %v3771
        %v3773 = vld [vmem:[%s3755 + $0x20] sm:%s3748]
        %3774 = vst [vmem:[%s3756 + $0x20] sm:%s3748] %v3773
        %v3775 = vld [vmem:[%s3755 + $0x30] sm:%s3748]
        %3776 = vst [vmem:[%s3756 + $0x24] sm:%s3748] %v3775
        %v3777 = vld [vmem:[%s3755 + $0x24] sm:%s3748]
        %3778 = vst [vmem:[%s3756 + $0x28] sm:%s3748] %v3777
        %v3779 = vld [vmem:[%s3755 + $0x34] sm:%s3748]
        %3780 = vst [vmem:[%s3756 + $0x2c] sm:%s3748] %v3779
        %v3781 = vld [vmem:[%s3755 + $0x28] sm:%s3748]
        %3782 = vst [vmem:[%s3756 + $0x30] sm:%s3748] %v3781
        %v3783 = vld [vmem:[%s3755 + $0x38] sm:%s3748]
        %3784 = vst [vmem:[%s3756 + $0x34] sm:%s3748] %v3783
        %v3785 = vld [vmem:[%s3755 + $0x2c] sm:%s3748]
        %3786 = vst [vmem:[%s3756 + $0x38] sm:%s3748] %v3785
        %v3787 = vld [vmem:[%s3755 + $0x3c] sm:%s3748]
        %3788 = vst [vmem:[%s3756 + $0x3c] sm:%s3748] %v3787
        %v3789 = vld [vmem:[%s3755 + $0x40] sm:%s3748]
        %3790 = vst [vmem:[%s3756 + $0x40] sm:%s3748] %v3789
        %v3791 = vld [vmem:[%s3755 + $0x50] sm:%s3748]
        %3792 = vst [vmem:[%s3756 + $0x44] sm:%s3748] %v3791
        %v3793 = vld [vmem:[%s3755 + $0x44] sm:%s3748]
        %3794 = vst [vmem:[%s3756 + $0x48] sm:%s3748] %v3793
        %v3795 = vld [vmem:[%s3755 + $0x54] sm:%s3748]
        %3796 = vst [vmem:[%s3756 + $0x4c] sm:%s3748] %v3795
        %v3797 = vld [vmem:[%s3755 + $0x48] sm:%s3748]
        %3798 = vst [vmem:[%s3756 + $0x50] sm:%s3748] %v3797
        %v3799 = vld [vmem:[%s3755 + $0x58] sm:%s3748]
        %3800 = vst [vmem:[%s3756 + $0x54] sm:%s3748] %v3799
        %v3801 = vld [vmem:[%s3755 + $0x4c] sm:%s3748]
        %3802 = vst [vmem:[%s3756 + $0x58] sm:%s3748] %v3801
        %v3803 = vld [vmem:[%s3755 + $0x5c] sm:%s3748]
        %3804 = vst [vmem:[%s3756 + $0x5c] sm:%s3748] %v3803
        %v3805 = vld [vmem:[%s3755 + $0x60] sm:%s3748]
        %3806 = vst [vmem:[%s3756 + $0x60] sm:%s3748] %v3805
        %v3807 = vld [vmem:[%s3755 + $0x70] sm:%s3748]
        %3808 = vst [vmem:[%s3756 + $0x64] sm:%s3748] %v3807
        %v3809 = vld [vmem:[%s3755 + $0x64] sm:%s3748]
        %3810 = vst [vmem:[%s3756 + $0x68] sm:%s3748] %v3809
        %v3811 = vld [vmem:[%s3755 + $0x74] sm:%s3748]
        %3812 = vst [vmem:[%s3756 + $0x6c] sm:%s3748] %v3811
        %v3813 = vld [vmem:[%s3755 + $0x68] sm:%s3748]
        %3814 = vst [vmem:[%s3756 + $0x70] sm:%s3748] %v3813
        %v3815 = vld [vmem:[%s3755 + $0x78] sm:%s3748]
        %3816 = vst [vmem:[%s3756 + $0x74] sm:%s3748] %v3815
        %v3817 = vld [vmem:[%s3755 + $0x6c] sm:%s3748]
        %3818 = vst [vmem:[%s3756 + $0x78] sm:%s3748] %v3817
        %v3819 = vld [vmem:[%s3755 + $0x7c] sm:%s3748]
        %3820 = vst [vmem:[%s3756 + $0x7c] sm:%s3748] %v3819
        %v3821 = vld [vmem:[%s3755 + $0x80] sm:%s3748]
        %3822 = vst [vmem:[%s3756 + $0x80] sm:%s3748] %v3821
        %v3823 = vld [vmem:[%s3755 + $0x90] sm:%s3748]
        %3824 = vst [vmem:[%s3756 + $0x84] sm:%s3748] %v3823
        %v3825 = vld [vmem:[%s3755 + $0x84] sm:%s3748]
        %3826 = vst [vmem:[%s3756 + $0x88] sm:%s3748] %v3825
        %v3827 = vld [vmem:[%s3755 + $0x94] sm:%s3748]
        %3828 = vst [vmem:[%s3756 + $0x8c] sm:%s3748] %v3827
        %v3829 = vld [vmem:[%s3755 + $0x88] sm:%s3748]
        %3830 = vst [vmem:[%s3756 + $0x90] sm:%s3748] %v3829
        %v3831 = vld [vmem:[%s3755 + $0x98] sm:%s3748]
        %3832 = vst [vmem:[%s3756 + $0x94] sm:%s3748] %v3831
        %v3833 = vld [vmem:[%s3755 + $0x8c] sm:%s3748]
        %3834 = vst [vmem:[%s3756 + $0x98] sm:%s3748] %v3833
        %v3835 = vld [vmem:[%s3755 + $0x9c] sm:%s3748]
        %3836 = vst [vmem:[%s3756 + $0x9c] sm:%s3748] %v3835
        %v3837 = vld [vmem:[%s3755 + $0xa0] sm:%s3748]
        %3838 = vst [vmem:[%s3756 + $0xa0] sm:%s3748] %v3837
        %v3839 = vld [vmem:[%s3755 + $0xb0] sm:%s3748]
        %3840 = vst [vmem:[%s3756 + $0xa4] sm:%s3748] %v3839
        %v3841 = vld [vmem:[%s3755 + $0xa4] sm:%s3748]
        %3842 = vst [vmem:[%s3756 + $0xa8] sm:%s3748] %v3841
        %v3843 = vld [vmem:[%s3755 + $0xb4] sm:%s3748]
        %3844 = vst [vmem:[%s3756 + $0xac] sm:%s3748] %v3843
        %v3845 = vld [vmem:[%s3755 + $0xa8] sm:%s3748]
        %3846 = vst [vmem:[%s3756 + $0xb0] sm:%s3748] %v3845
        %v3847 = vld [vmem:[%s3755 + $0xb8] sm:%s3748]
        %3848 = vst [vmem:[%s3756 + $0xb4] sm:%s3748] %v3847
        %v3849 = vld [vmem:[%s3755 + $0xac] sm:%s3748]
        %3850 = vst [vmem:[%s3756 + $0xb8] sm:%s3748] %v3849
        %v3851 = vld [vmem:[%s3755 + $0xbc] sm:%s3748]
        %3852 = vst [vmem:[%s3756 + $0xbc] sm:%s3748] %v3851
        %v3853 = vld [vmem:[%s3755 + $0xc0] sm:%s3748]
        %3854 = vst [vmem:[%s3756 + $0xc0] sm:%s3748] %v3853
        %v3855 = vld [vmem:[%s3755 + $0xd0] sm:%s3748]
        %3856 = vst [vmem:[%s3756 + $0xc4] sm:%s3748] %v3855
        %v3857 = vld [vmem:[%s3755 + $0xc4] sm:%s3748]
        %3858 = vst [vmem:[%s3756 + $0xc8] sm:%s3748] %v3857
        %v3859 = vld [vmem:[%s3755 + $0xd4] sm:%s3748]
        %3860 = vst [vmem:[%s3756 + $0xcc] sm:%s3748] %v3859
        %v3861 = vld [vmem:[%s3755 + $0xc8] sm:%s3748]
        %3862 = vst [vmem:[%s3756 + $0xd0] sm:%s3748] %v3861
        %v3863 = vld [vmem:[%s3755 + $0xd8] sm:%s3748]
        %3864 = vst [vmem:[%s3756 + $0xd4] sm:%s3748] %v3863
        %v3865 = vld [vmem:[%s3755 + $0xcc] sm:%s3748]
        %3866 = vst [vmem:[%s3756 + $0xd8] sm:%s3748] %v3865
        %v3867 = vld [vmem:[%s3755 + $0xdc] sm:%s3748]
        %3868 = vst [vmem:[%s3756 + $0xdc] sm:%s3748] %v3867
        %v3869 = vld [vmem:[%s3755 + $0xe0] sm:%s3748]
        %3870 = vst [vmem:[%s3756 + $0xe0] sm:%s3748] %v3869
        %v3871 = vld [vmem:[%s3755 + $0xf0] sm:%s3748]
        %3872 = vst [vmem:[%s3756 + $0xe4] sm:%s3748] %v3871
        %v3873 = vld [vmem:[%s3755 + $0xe4] sm:%s3748]
        %3874 = vst [vmem:[%s3756 + $0xe8] sm:%s3748] %v3873
        %v3875 = vld [vmem:[%s3755 + $0xf4] sm:%s3748]
        %3876 = vst [vmem:[%s3756 + $0xec] sm:%s3748] %v3875
        %v3877 = vld [vmem:[%s3755 + $0xe8] sm:%s3748]
        %3878 = vst [vmem:[%s3756 + $0xf0] sm:%s3748] %v3877
        %v3879 = vld [vmem:[%s3755 + $0xf8] sm:%s3748]
        %3880 = vst [vmem:[%s3756 + $0xf4] sm:%s3748] %v3879
        %v3881 = vld [vmem:[%s3755 + $0xec] sm:%s3748]
        %3882 = vst [vmem:[%s3756 + $0xf8] sm:%s3748] %v3881
        %v3883 = vld [vmem:[%s3755 + $0xfc] sm:%s3748]
        %3884 = vst [vmem:[%s3756 + $0xfc] sm:%s3748] %v3883
        %v3885 = vld [vmem:[%s3755 + $0x100] sm:%s3748]
        %3886 = vst [vmem:[%s3756 + $0x100] sm:%s3748] %v3885
        %v3887 = vld [vmem:[%s3755 + $0x110] sm:%s3748]
        %3888 = vst [vmem:[%s3756 + $0x104] sm:%s3748] %v3887
        %v3889 = vld [vmem:[%s3755 + $0x104] sm:%s3748]
        %3890 = vst [vmem:[%s3756 + $0x108] sm:%s3748] %v3889
        %v3891 = vld [vmem:[%s3755 + $0x114] sm:%s3748]
        %3892 = vst [vmem:[%s3756 + $0x10c] sm:%s3748] %v3891
        %v3893 = vld [vmem:[%s3755 + $0x108] sm:%s3748]
        %3894 = vst [vmem:[%s3756 + $0x110] sm:%s3748] %v3893
        %v3895 = vld [vmem:[%s3755 + $0x118] sm:%s3748]
        %3896 = vst [vmem:[%s3756 + $0x114] sm:%s3748] %v3895
        %v3897 = vld [vmem:[%s3755 + $0x10c] sm:%s3748]
        %3898 = vst [vmem:[%s3756 + $0x118] sm:%s3748] %v3897
        %v3899 = vld [vmem:[%s3755 + $0x11c] sm:%s3748]
        %3900 = vst [vmem:[%s3756 + $0x11c] sm:%s3748] %v3899
        %v3901 = vld [vmem:[%s3755 + $0x120] sm:%s3748]
        %3902 = vst [vmem:[%s3756 + $0x120] sm:%s3748] %v3901
        %v3903 = vld [vmem:[%s3755 + $0x130] sm:%s3748]
        %3904 = vst [vmem:[%s3756 + $0x124] sm:%s3748] %v3903
        %v3905 = vld [vmem:[%s3755 + $0x124] sm:%s3748]
        %3906 = vst [vmem:[%s3756 + $0x128] sm:%s3748] %v3905
        %v3907 = vld [vmem:[%s3755 + $0x134] sm:%s3748]
        %3908 = vst [vmem:[%s3756 + $0x12c] sm:%s3748] %v3907
        %v3909 = vld [vmem:[%s3755 + $0x128] sm:%s3748]
        %3910 = vst [vmem:[%s3756 + $0x130] sm:%s3748] %v3909
        %v3911 = vld [vmem:[%s3755 + $0x138] sm:%s3748]
        %3912 = vst [vmem:[%s3756 + $0x134] sm:%s3748] %v3911
        %v3913 = vld [vmem:[%s3755 + $0x12c] sm:%s3748]
        %3914 = vst [vmem:[%s3756 + $0x138] sm:%s3748] %v3913
        %v3915 = vld [vmem:[%s3755 + $0x13c] sm:%s3748]
        %3916 = vst [vmem:[%s3756 + $0x13c] sm:%s3748] %v3915
        %v3917 = vld [vmem:[%s3755 + $0x140] sm:%s3748]
        %3918 = vst [vmem:[%s3756 + $0x140] sm:%s3748] %v3917
        %v3919 = vld [vmem:[%s3755 + $0x150] sm:%s3748]
        %3920 = vst [vmem:[%s3756 + $0x144] sm:%s3748] %v3919
        %v3921 = vld [vmem:[%s3755 + $0x144] sm:%s3748]
        %3922 = vst [vmem:[%s3756 + $0x148] sm:%s3748] %v3921
        %v3923 = vld [vmem:[%s3755 + $0x154] sm:%s3748]
        %3924 = vst [vmem:[%s3756 + $0x14c] sm:%s3748] %v3923
        %v3925 = vld [vmem:[%s3755 + $0x148] sm:%s3748]
        %3926 = vst [vmem:[%s3756 + $0x150] sm:%s3748] %v3925
        %v3927 = vld [vmem:[%s3755 + $0x158] sm:%s3748]
        %3928 = vst [vmem:[%s3756 + $0x154] sm:%s3748] %v3927
        %v3929 = vld [vmem:[%s3755 + $0x14c] sm:%s3748]
        %3930 = vst [vmem:[%s3756 + $0x158] sm:%s3748] %v3929
        %v3931 = vld [vmem:[%s3755 + $0x15c] sm:%s3748]
        %3932 = vst [vmem:[%s3756 + $0x15c] sm:%s3748] %v3931
        %v3933 = vld [vmem:[%s3755 + $0x160] sm:%s3748]
        %3934 = vst [vmem:[%s3756 + $0x160] sm:%s3748] %v3933
        %v3935 = vld [vmem:[%s3755 + $0x170] sm:%s3748]
        %3936 = vst [vmem:[%s3756 + $0x164] sm:%s3748] %v3935
        %v3937 = vld [vmem:[%s3755 + $0x164] sm:%s3748]
        %3938 = vst [vmem:[%s3756 + $0x168] sm:%s3748] %v3937
        %v3939 = vld [vmem:[%s3755 + $0x174] sm:%s3748]
        %3940 = vst [vmem:[%s3756 + $0x16c] sm:%s3748] %v3939
        %v3941 = vld [vmem:[%s3755 + $0x168] sm:%s3748]
        %3942 = vst [vmem:[%s3756 + $0x170] sm:%s3748] %v3941
        %v3943 = vld [vmem:[%s3755 + $0x178] sm:%s3748]
        %3944 = vst [vmem:[%s3756 + $0x174] sm:%s3748] %v3943
        %v3945 = vld [vmem:[%s3755 + $0x16c] sm:%s3748]
        %3946 = vst [vmem:[%s3756 + $0x178] sm:%s3748] %v3945
        %v3947 = vld [vmem:[%s3755 + $0x17c] sm:%s3748]
        %3948 = vst [vmem:[%s3756 + $0x17c] sm:%s3748] %v3947
        %v3949 = vld [vmem:[%s3755 + $0x180] sm:%s3748]
        %3950 = vst [vmem:[%s3756 + $0x180] sm:%s3748] %v3949
        %v3951 = vld [vmem:[%s3755 + $0x190] sm:%s3748]
        %3952 = vst [vmem:[%s3756 + $0x184] sm:%s3748] %v3951
        %v3953 = vld [vmem:[%s3755 + $0x184] sm:%s3748]
        %3954 = vst [vmem:[%s3756 + $0x188] sm:%s3748] %v3953
        %v3955 = vld [vmem:[%s3755 + $0x194] sm:%s3748]
        %3956 = vst [vmem:[%s3756 + $0x18c] sm:%s3748] %v3955
        %v3957 = vld [vmem:[%s3755 + $0x188] sm:%s3748]
        %3958 = vst [vmem:[%s3756 + $0x190] sm:%s3748] %v3957
        %v3959 = vld [vmem:[%s3755 + $0x198] sm:%s3748]
        %3960 = vst [vmem:[%s3756 + $0x194] sm:%s3748] %v3959
        %v3961 = vld [vmem:[%s3755 + $0x18c] sm:%s3748]
        %3962 = vst [vmem:[%s3756 + $0x198] sm:%s3748] %v3961
        %v3963 = vld [vmem:[%s3755 + $0x19c] sm:%s3748]
        %3964 = vst [vmem:[%s3756 + $0x19c] sm:%s3748] %v3963
        %v3965 = vld [vmem:[%s3755 + $0x1a0] sm:%s3748]
        %3966 = vst [vmem:[%s3756 + $0x1a0] sm:%s3748] %v3965
        %v3967 = vld [vmem:[%s3755 + $0x1b0] sm:%s3748]
        %3968 = vst [vmem:[%s3756 + $0x1a4] sm:%s3748] %v3967
        %v3969 = vld [vmem:[%s3755 + $0x1a4] sm:%s3748]
        %3970 = vst [vmem:[%s3756 + $0x1a8] sm:%s3748] %v3969
        %v3971 = vld [vmem:[%s3755 + $0x1b4] sm:%s3748]
        %3972 = vst [vmem:[%s3756 + $0x1ac] sm:%s3748] %v3971
        %v3973 = vld [vmem:[%s3755 + $0x1a8] sm:%s3748]
        %3974 = vst [vmem:[%s3756 + $0x1b0] sm:%s3748] %v3973
        %v3975 = vld [vmem:[%s3755 + $0x1b8] sm:%s3748]
        %3976 = vst [vmem:[%s3756 + $0x1b4] sm:%s3748] %v3975
        %v3977 = vld [vmem:[%s3755 + $0x1ac] sm:%s3748]
        %3978 = vst [vmem:[%s3756 + $0x1b8] sm:%s3748] %v3977
        %v3979 = vld [vmem:[%s3755 + $0x1bc] sm:%s3748]
        %3980 = vst [vmem:[%s3756 + $0x1bc] sm:%s3748] %v3979
        %v3981 = vld [vmem:[%s3755 + $0x1c0] sm:%s3748]
        %3982 = vst [vmem:[%s3756 + $0x1c0] sm:%s3748] %v3981
        %v3983 = vld [vmem:[%s3755 + $0x1d0] sm:%s3748]
        %3984 = vst [vmem:[%s3756 + $0x1c4] sm:%s3748] %v3983
        %v3985 = vld [vmem:[%s3755 + $0x1c4] sm:%s3748]
        %3986 = vst [vmem:[%s3756 + $0x1c8] sm:%s3748] %v3985
        %v3987 = vld [vmem:[%s3755 + $0x1d4] sm:%s3748]
        %3988 = vst [vmem:[%s3756 + $0x1cc] sm:%s3748] %v3987
        %v3989 = vld [vmem:[%s3755 + $0x1c8] sm:%s3748]
        %3990 = vst [vmem:[%s3756 + $0x1d0] sm:%s3748] %v3989
        %v3991 = vld [vmem:[%s3755 + $0x1d8] sm:%s3748]
        %3992 = vst [vmem:[%s3756 + $0x1d4] sm:%s3748] %v3991
        %v3993 = vld [vmem:[%s3755 + $0x1cc] sm:%s3748]
        %3994 = vst [vmem:[%s3756 + $0x1d8] sm:%s3748] %v3993
        %v3995 = vld [vmem:[%s3755 + $0x1dc] sm:%s3748]
        %3996 = vst [vmem:[%s3756 + $0x1dc] sm:%s3748] %v3995
        %v3997 = vld [vmem:[%s3755 + $0x1e0] sm:%s3748]
        %3998 = vst [vmem:[%s3756 + $0x1e0] sm:%s3748] %v3997
        %v3999 = vld [vmem:[%s3755 + $0x1f0] sm:%s3748]
        %4000 = vst [vmem:[%s3756 + $0x1e4] sm:%s3748] %v3999
        %v4001 = vld [vmem:[%s3755 + $0x1e4] sm:%s3748]
        %4002 = vst [vmem:[%s3756 + $0x1e8] sm:%s3748] %v4001
        %v4003 = vld [vmem:[%s3755 + $0x1f4] sm:%s3748]
        %4004 = vst [vmem:[%s3756 + $0x1ec] sm:%s3748] %v4003
        %v4005 = vld [vmem:[%s3755 + $0x1e8] sm:%s3748]
        %4006 = vst [vmem:[%s3756 + $0x1f0] sm:%s3748] %v4005
        %v4007 = vld [vmem:[%s3755 + $0x1f8] sm:%s3748]
        %4008 = vst [vmem:[%s3756 + $0x1f4] sm:%s3748] %v4007
        %v4009 = vld [vmem:[%s3755 + $0x1ec] sm:%s3748]
        %4010 = vst [vmem:[%s3756 + $0x1f8] sm:%s3748] %v4009
        %v4011 = vld [vmem:[%s3755 + $0x1fc] sm:%s3748]
        %4012 = vst [vmem:[%s3756 + $0x1fc] sm:%s3748] %v4011
        %v4013 = vld [vmem:[%s3755 + $0x200] sm:%s3748]
        %4014 = vst [vmem:[%s3756 + $0x200] sm:%s3748] %v4013
        %v4015 = vld [vmem:[%s3755 + $0x210] sm:%s3748]
        %4016 = vst [vmem:[%s3756 + $0x204] sm:%s3748] %v4015
        %v4017 = vld [vmem:[%s3755 + $0x204] sm:%s3748]
        %4018 = vst [vmem:[%s3756 + $0x208] sm:%s3748] %v4017
        %v4019 = vld [vmem:[%s3755 + $0x214] sm:%s3748]
        %4020 = vst [vmem:[%s3756 + $0x20c] sm:%s3748] %v4019
        %v4021 = vld [vmem:[%s3755 + $0x208] sm:%s3748]
        %4022 = vst [vmem:[%s3756 + $0x210] sm:%s3748] %v4021
        %v4023 = vld [vmem:[%s3755 + $0x218] sm:%s3748]
        %4024 = vst [vmem:[%s3756 + $0x214] sm:%s3748] %v4023
        %v4025 = vld [vmem:[%s3755 + $0x20c] sm:%s3748]
        %4026 = vst [vmem:[%s3756 + $0x218] sm:%s3748] %v4025
        %v4027 = vld [vmem:[%s3755 + $0x21c] sm:%s3748]
        %4028 = vst [vmem:[%s3756 + $0x21c] sm:%s3748] %v4027
        %v4029 = vld [vmem:[%s3755 + $0x220] sm:%s3748]
        %4030 = vst [vmem:[%s3756 + $0x220] sm:%s3748] %v4029
        %v4031 = vld [vmem:[%s3755 + $0x230] sm:%s3748]
        %4032 = vst [vmem:[%s3756 + $0x224] sm:%s3748] %v4031
        %v4033 = vld [vmem:[%s3755 + $0x224] sm:%s3748]
        %4034 = vst [vmem:[%s3756 + $0x228] sm:%s3748] %v4033
        %v4035 = vld [vmem:[%s3755 + $0x234] sm:%s3748]
        %4036 = vst [vmem:[%s3756 + $0x22c] sm:%s3748] %v4035
        %v4037 = vld [vmem:[%s3755 + $0x228] sm:%s3748]
        %4038 = vst [vmem:[%s3756 + $0x230] sm:%s3748] %v4037
        %v4039 = vld [vmem:[%s3755 + $0x238] sm:%s3748]
        %4040 = vst [vmem:[%s3756 + $0x234] sm:%s3748] %v4039
        %v4041 = vld [vmem:[%s3755 + $0x22c] sm:%s3748]
        %4042 = vst [vmem:[%s3756 + $0x238] sm:%s3748] %v4041
        %v4043 = vld [vmem:[%s3755 + $0x23c] sm:%s3748]
        %4044 = vst [vmem:[%s3756 + $0x23c] sm:%s3748] %v4043
        %v4045 = vld [vmem:[%s3755 + $0x240] sm:%s3748]
        %4046 = vst [vmem:[%s3756 + $0x240] sm:%s3748] %v4045
        %v4047 = vld [vmem:[%s3755 + $0x250] sm:%s3748]
        %4048 = vst [vmem:[%s3756 + $0x244] sm:%s3748] %v4047
        %v4049 = vld [vmem:[%s3755 + $0x244] sm:%s3748]
        %4050 = vst [vmem:[%s3756 + $0x248] sm:%s3748] %v4049
        %v4051 = vld [vmem:[%s3755 + $0x254] sm:%s3748]
        %4052 = vst [vmem:[%s3756 + $0x24c] sm:%s3748] %v4051
        %v4053 = vld [vmem:[%s3755 + $0x248] sm:%s3748]
        %4054 = vst [vmem:[%s3756 + $0x250] sm:%s3748] %v4053
        %v4055 = vld [vmem:[%s3755 + $0x258] sm:%s3748]
        %4056 = vst [vmem:[%s3756 + $0x254] sm:%s3748] %v4055
        %v4057 = vld [vmem:[%s3755 + $0x24c] sm:%s3748]
        %4058 = vst [vmem:[%s3756 + $0x258] sm:%s3748] %v4057
        %v4059 = vld [vmem:[%s3755 + $0x25c] sm:%s3748]
        %4060 = vst [vmem:[%s3756 + $0x25c] sm:%s3748] %v4059
        %v4061 = vld [vmem:[%s3755 + $0x260] sm:%s3748]
        %4062 = vst [vmem:[%s3756 + $0x260] sm:%s3748] %v4061
        %v4063 = vld [vmem:[%s3755 + $0x270] sm:%s3748]
        %4064 = vst [vmem:[%s3756 + $0x264] sm:%s3748] %v4063
        %v4065 = vld [vmem:[%s3755 + $0x264] sm:%s3748]
        %4066 = vst [vmem:[%s3756 + $0x268] sm:%s3748] %v4065
        %v4067 = vld [vmem:[%s3755 + $0x274] sm:%s3748]
        %4068 = vst [vmem:[%s3756 + $0x26c] sm:%s3748] %v4067
        %v4069 = vld [vmem:[%s3755 + $0x268] sm:%s3748]
        %4070 = vst [vmem:[%s3756 + $0x270] sm:%s3748] %v4069
        %v4071 = vld [vmem:[%s3755 + $0x278] sm:%s3748]
        %4072 = vst [vmem:[%s3756 + $0x274] sm:%s3748] %v4071
        %v4073 = vld [vmem:[%s3755 + $0x26c] sm:%s3748]
        %4074 = vst [vmem:[%s3756 + $0x278] sm:%s3748] %v4073
        %v4075 = vld [vmem:[%s3755 + $0x27c] sm:%s3748]
        %4076 = vst [vmem:[%s3756 + $0x27c] sm:%s3748] %v4075
        %v4077 = vld [vmem:[%s3755 + $0x280] sm:%s3748]
        %4078 = vst [vmem:[%s3756 + $0x280] sm:%s3748] %v4077
        %v4079 = vld [vmem:[%s3755 + $0x290] sm:%s3748]
        %4080 = vst [vmem:[%s3756 + $0x284] sm:%s3748] %v4079
        %v4081 = vld [vmem:[%s3755 + $0x284] sm:%s3748]
        %4082 = vst [vmem:[%s3756 + $0x288] sm:%s3748] %v4081
        %v4083 = vld [vmem:[%s3755 + $0x294] sm:%s3748]
        %4084 = vst [vmem:[%s3756 + $0x28c] sm:%s3748] %v4083
        %v4085 = vld [vmem:[%s3755 + $0x288] sm:%s3748]
        %4086 = vst [vmem:[%s3756 + $0x290] sm:%s3748] %v4085
        %v4087 = vld [vmem:[%s3755 + $0x298] sm:%s3748]
        %4088 = vst [vmem:[%s3756 + $0x294] sm:%s3748] %v4087
        %v4089 = vld [vmem:[%s3755 + $0x28c] sm:%s3748]
        %4090 = vst [vmem:[%s3756 + $0x298] sm:%s3748] %v4089
        %v4091 = vld [vmem:[%s3755 + $0x29c] sm:%s3748]
        %4092 = vst [vmem:[%s3756 + $0x29c] sm:%s3748] %v4091
        %v4093 = vld [vmem:[%s3755 + $0x2a0] sm:%s3748]
        %4094 = vst [vmem:[%s3756 + $0x2a0] sm:%s3748] %v4093
        %v4095 = vld [vmem:[%s3755 + $0x2b0] sm:%s3748]
        %4096 = vst [vmem:[%s3756 + $0x2a4] sm:%s3748] %v4095
        %v4097 = vld [vmem:[%s3755 + $0x2a4] sm:%s3748]
        %4098 = vst [vmem:[%s3756 + $0x2a8] sm:%s3748] %v4097
        %v4099 = vld [vmem:[%s3755 + $0x2b4] sm:%s3748]
        %4100 = vst [vmem:[%s3756 + $0x2ac] sm:%s3748] %v4099
        %v4101 = vld [vmem:[%s3755 + $0x2a8] sm:%s3748]
        %4102 = vst [vmem:[%s3756 + $0x2b0] sm:%s3748] %v4101
        %v4103 = vld [vmem:[%s3755 + $0x2b8] sm:%s3748]
        %4104 = vst [vmem:[%s3756 + $0x2b4] sm:%s3748] %v4103
        %v4105 = vld [vmem:[%s3755 + $0x2ac] sm:%s3748]
        %4106 = vst [vmem:[%s3756 + $0x2b8] sm:%s3748] %v4105
        %v4107 = vld [vmem:[%s3755 + $0x2bc] sm:%s3748]
        %4108 = vst [vmem:[%s3756 + $0x2bc] sm:%s3748] %v4107
        %v4109 = vld [vmem:[%s3755 + $0x2c0] sm:%s3748]
        %4110 = vst [vmem:[%s3756 + $0x2c0] sm:%s3748] %v4109
        %v4111 = vld [vmem:[%s3755 + $0x2d0] sm:%s3748]
        %4112 = vst [vmem:[%s3756 + $0x2c4] sm:%s3748] %v4111
        %v4113 = vld [vmem:[%s3755 + $0x2c4] sm:%s3748]
        %4114 = vst [vmem:[%s3756 + $0x2c8] sm:%s3748] %v4113
        %v4115 = vld [vmem:[%s3755 + $0x2d4] sm:%s3748]
        %4116 = vst [vmem:[%s3756 + $0x2cc] sm:%s3748] %v4115
        %v4117 = vld [vmem:[%s3755 + $0x2c8] sm:%s3748]
        %4118 = vst [vmem:[%s3756 + $0x2d0] sm:%s3748] %v4117
        %v4119 = vld [vmem:[%s3755 + $0x2d8] sm:%s3748]
        %4120 = vst [vmem:[%s3756 + $0x2d4] sm:%s3748] %v4119
        %v4121 = vld [vmem:[%s3755 + $0x2cc] sm:%s3748]
        %4122 = vst [vmem:[%s3756 + $0x2d8] sm:%s3748] %v4121
        %v4123 = vld [vmem:[%s3755 + $0x2dc] sm:%s3748]
        %4124 = vst [vmem:[%s3756 + $0x2dc] sm:%s3748] %v4123
        %v4125 = vld [vmem:[%s3755 + $0x2e0] sm:%s3748]
        %4126 = vst [vmem:[%s3756 + $0x2e0] sm:%s3748] %v4125
        %v4127 = vld [vmem:[%s3755 + $0x2f0] sm:%s3748]
        %4128 = vst [vmem:[%s3756 + $0x2e4] sm:%s3748] %v4127
        %v4129 = vld [vmem:[%s3755 + $0x2e4] sm:%s3748]
        %4130 = vst [vmem:[%s3756 + $0x2e8] sm:%s3748] %v4129
        %v4131 = vld [vmem:[%s3755 + $0x2f4] sm:%s3748]
        %4132 = vst [vmem:[%s3756 + $0x2ec] sm:%s3748] %v4131
        %v4133 = vld [vmem:[%s3755 + $0x2e8] sm:%s3748]
        %4134 = vst [vmem:[%s3756 + $0x2f0] sm:%s3748] %v4133
        %v4135 = vld [vmem:[%s3755 + $0x2f8] sm:%s3748]
        %4136 = vst [vmem:[%s3756 + $0x2f4] sm:%s3748] %v4135
        %v4137 = vld [vmem:[%s3755 + $0x2ec] sm:%s3748]
        %4138 = vst [vmem:[%s3756 + $0x2f8] sm:%s3748] %v4137
        %v4139 = vld [vmem:[%s3755 + $0x2fc] sm:%s3748]
        %4140 = vst [vmem:[%s3756 + $0x2fc] sm:%s3748] %v4139
        %v4141 = vld [vmem:[%s3755 + $0x300] sm:%s3748]
        %4142 = vst [vmem:[%s3756 + $0x300] sm:%s3748] %v4141
        %v4143 = vld [vmem:[%s3755 + $0x310] sm:%s3748]
        %4144 = vst [vmem:[%s3756 + $0x304] sm:%s3748] %v4143
        %v4145 = vld [vmem:[%s3755 + $0x304] sm:%s3748]
        %4146 = vst [vmem:[%s3756 + $0x308] sm:%s3748] %v4145
        %v4147 = vld [vmem:[%s3755 + $0x314] sm:%s3748]
        %4148 = vst [vmem:[%s3756 + $0x30c] sm:%s3748] %v4147
        %v4149 = vld [vmem:[%s3755 + $0x308] sm:%s3748]
        %4150 = vst [vmem:[%s3756 + $0x310] sm:%s3748] %v4149
        %v4151 = vld [vmem:[%s3755 + $0x318] sm:%s3748]
        %4152 = vst [vmem:[%s3756 + $0x314] sm:%s3748] %v4151
        %v4153 = vld [vmem:[%s3755 + $0x30c] sm:%s3748]
        %4154 = vst [vmem:[%s3756 + $0x318] sm:%s3748] %v4153
        %v4155 = vld [vmem:[%s3755 + $0x31c] sm:%s3748]
        %4156 = vst [vmem:[%s3756 + $0x31c] sm:%s3748] %v4155
        %v4157 = vld [vmem:[%s3755 + $0x320] sm:%s3748]
        %4158 = vst [vmem:[%s3756 + $0x320] sm:%s3748] %v4157
        %v4159 = vld [vmem:[%s3755 + $0x330] sm:%s3748]
        %4160 = vst [vmem:[%s3756 + $0x324] sm:%s3748] %v4159
        %v4161 = vld [vmem:[%s3755 + $0x324] sm:%s3748]
        %4162 = vst [vmem:[%s3756 + $0x328] sm:%s3748] %v4161
        %v4163 = vld [vmem:[%s3755 + $0x334] sm:%s3748]
        %4164 = vst [vmem:[%s3756 + $0x32c] sm:%s3748] %v4163
        %v4165 = vld [vmem:[%s3755 + $0x328] sm:%s3748]
        %4166 = vst [vmem:[%s3756 + $0x330] sm:%s3748] %v4165
        %v4167 = vld [vmem:[%s3755 + $0x338] sm:%s3748]
        %4168 = vst [vmem:[%s3756 + $0x334] sm:%s3748] %v4167
        %v4169 = vld [vmem:[%s3755 + $0x32c] sm:%s3748]
        %4170 = vst [vmem:[%s3756 + $0x338] sm:%s3748] %v4169
        %v4171 = vld [vmem:[%s3755 + $0x33c] sm:%s3748]
        %4172 = vst [vmem:[%s3756 + $0x33c] sm:%s3748] %v4171
        %v4173 = vld [vmem:[%s3755 + $0x340] sm:%s3748]
        %4174 = vst [vmem:[%s3756 + $0x340] sm:%s3748] %v4173
        %v4175 = vld [vmem:[%s3755 + $0x350] sm:%s3748]
        %4176 = vst [vmem:[%s3756 + $0x344] sm:%s3748] %v4175
        %v4177 = vld [vmem:[%s3755 + $0x344] sm:%s3748]
        %4178 = vst [vmem:[%s3756 + $0x348] sm:%s3748] %v4177
        %v4179 = vld [vmem:[%s3755 + $0x354] sm:%s3748]
        %4180 = vst [vmem:[%s3756 + $0x34c] sm:%s3748] %v4179
        %v4181 = vld [vmem:[%s3755 + $0x348] sm:%s3748]
        %4182 = vst [vmem:[%s3756 + $0x350] sm:%s3748] %v4181
        %v4183 = vld [vmem:[%s3755 + $0x358] sm:%s3748]
        %4184 = vst [vmem:[%s3756 + $0x354] sm:%s3748] %v4183
        %v4185 = vld [vmem:[%s3755 + $0x34c] sm:%s3748]
        %4186 = vst [vmem:[%s3756 + $0x358] sm:%s3748] %v4185
        %v4187 = vld [vmem:[%s3755 + $0x35c] sm:%s3748]
        %4188 = vst [vmem:[%s3756 + $0x35c] sm:%s3748] %v4187
        %v4189 = vld [vmem:[%s3755 + $0x360] sm:%s3748]
        %4190 = vst [vmem:[%s3756 + $0x360] sm:%s3748] %v4189
        %v4191 = vld [vmem:[%s3755 + $0x370] sm:%s3748]
        %4192 = vst [vmem:[%s3756 + $0x364] sm:%s3748] %v4191
        %v4193 = vld [vmem:[%s3755 + $0x364] sm:%s3748]
        %4194 = vst [vmem:[%s3756 + $0x368] sm:%s3748] %v4193
        %v4195 = vld [vmem:[%s3755 + $0x374] sm:%s3748]
        %4196 = vst [vmem:[%s3756 + $0x36c] sm:%s3748] %v4195
        %v4197 = vld [vmem:[%s3755 + $0x368] sm:%s3748]
        %4198 = vst [vmem:[%s3756 + $0x370] sm:%s3748] %v4197
        %v4199 = vld [vmem:[%s3755 + $0x378] sm:%s3748]
        %4200 = vst [vmem:[%s3756 + $0x374] sm:%s3748] %v4199
        %v4201 = vld [vmem:[%s3755 + $0x36c] sm:%s3748]
        %4202 = vst [vmem:[%s3756 + $0x378] sm:%s3748] %v4201
        %v4203 = vld [vmem:[%s3755 + $0x37c] sm:%s3748]
        %4204 = vst [vmem:[%s3756 + $0x37c] sm:%s3748] %v4203
        %v4205 = vld [vmem:[%s3755 + $0x380] sm:%s3748]
        %4206 = vst [vmem:[%s3756 + $0x380] sm:%s3748] %v4205
        %v4207 = vld [vmem:[%s3755 + $0x390] sm:%s3748]
        %4208 = vst [vmem:[%s3756 + $0x384] sm:%s3748] %v4207
        %v4209 = vld [vmem:[%s3755 + $0x384] sm:%s3748]
        %4210 = vst [vmem:[%s3756 + $0x388] sm:%s3748] %v4209
        %v4211 = vld [vmem:[%s3755 + $0x394] sm:%s3748]
        %4212 = vst [vmem:[%s3756 + $0x38c] sm:%s3748] %v4211
        %v4213 = vld [vmem:[%s3755 + $0x388] sm:%s3748]
        %4214 = vst [vmem:[%s3756 + $0x390] sm:%s3748] %v4213
        %v4215 = vld [vmem:[%s3755 + $0x398] sm:%s3748]
        %4216 = vst [vmem:[%s3756 + $0x394] sm:%s3748] %v4215
        %v4217 = vld [vmem:[%s3755 + $0x38c] sm:%s3748]
        %4218 = vst [vmem:[%s3756 + $0x398] sm:%s3748] %v4217
        %v4219 = vld [vmem:[%s3755 + $0x39c] sm:%s3748]
        %4220 = vst [vmem:[%s3756 + $0x39c] sm:%s3748] %v4219
        %v4221 = vld [vmem:[%s3755 + $0x3a0] sm:%s3748]
        %4222 = vst [vmem:[%s3756 + $0x3a0] sm:%s3748] %v4221
        %v4223 = vld [vmem:[%s3755 + $0x3b0] sm:%s3748]
        %4224 = vst [vmem:[%s3756 + $0x3a4] sm:%s3748] %v4223
        %v4225 = vld [vmem:[%s3755 + $0x3a4] sm:%s3748]
        %4226 = vst [vmem:[%s3756 + $0x3a8] sm:%s3748] %v4225
        %v4227 = vld [vmem:[%s3755 + $0x3b4] sm:%s3748]
        %4228 = vst [vmem:[%s3756 + $0x3ac] sm:%s3748] %v4227
        %v4229 = vld [vmem:[%s3755 + $0x3a8] sm:%s3748]
        %4230 = vst [vmem:[%s3756 + $0x3b0] sm:%s3748] %v4229
        %v4231 = vld [vmem:[%s3755 + $0x3b8] sm:%s3748]
        %4232 = vst [vmem:[%s3756 + $0x3b4] sm:%s3748] %v4231
        %v4233 = vld [vmem:[%s3755 + $0x3ac] sm:%s3748]
        %4234 = vst [vmem:[%s3756 + $0x3b8] sm:%s3748] %v4233
        %v4235 = vld [vmem:[%s3755 + $0x3bc] sm:%s3748]
        %4236 = vst [vmem:[%s3756 + $0x3bc] sm:%s3748] %v4235
        %v4237 = vld [vmem:[%s3755 + $0x3c0] sm:%s3748]
        %4238 = vst [vmem:[%s3756 + $0x3c0] sm:%s3748] %v4237
        %v4239 = vld [vmem:[%s3755 + $0x3d0] sm:%s3748]
        %4240 = vst [vmem:[%s3756 + $0x3c4] sm:%s3748] %v4239
        %v4241 = vld [vmem:[%s3755 + $0x3c4] sm:%s3748]
        %4242 = vst [vmem:[%s3756 + $0x3c8] sm:%s3748] %v4241
        %v4243 = vld [vmem:[%s3755 + $0x3d4] sm:%s3748]
        %4244 = vst [vmem:[%s3756 + $0x3cc] sm:%s3748] %v4243
        %v4245 = vld [vmem:[%s3755 + $0x3c8] sm:%s3748]
        %4246 = vst [vmem:[%s3756 + $0x3d0] sm:%s3748] %v4245
        %v4247 = vld [vmem:[%s3755 + $0x3d8] sm:%s3748]
        %4248 = vst [vmem:[%s3756 + $0x3d4] sm:%s3748] %v4247
        %v4249 = vld [vmem:[%s3755 + $0x3cc] sm:%s3748]
        %4250 = vst [vmem:[%s3756 + $0x3d8] sm:%s3748] %v4249
        %v4251 = vld [vmem:[%s3755 + $0x3dc] sm:%s3748]
        %4252 = vst [vmem:[%s3756 + $0x3dc] sm:%s3748] %v4251
        %v4253 = vld [vmem:[%s3755 + $0x3e0] sm:%s3748]
        %4254 = vst [vmem:[%s3756 + $0x3e0] sm:%s3748] %v4253
        %v4255 = vld [vmem:[%s3755 + $0x3f0] sm:%s3748]
        %4256 = vst [vmem:[%s3756 + $0x3e4] sm:%s3748] %v4255
        %v4257 = vld [vmem:[%s3755 + $0x3e4] sm:%s3748]
        %4258 = vst [vmem:[%s3756 + $0x3e8] sm:%s3748] %v4257
        %v4259 = vld [vmem:[%s3755 + $0x3f4] sm:%s3748]
        %4260 = vst [vmem:[%s3756 + $0x3ec] sm:%s3748] %v4259
        %v4261 = vld [vmem:[%s3755 + $0x3e8] sm:%s3748]
        %4262 = vst [vmem:[%s3756 + $0x3f0] sm:%s3748] %v4261
        %v4263 = vld [vmem:[%s3755 + $0x3f8] sm:%s3748]
        %4264 = vst [vmem:[%s3756 + $0x3f4] sm:%s3748] %v4263
        %v4265 = vld [vmem:[%s3755 + $0x3ec] sm:%s3748]
        %4266 = vst [vmem:[%s3756 + $0x3f8] sm:%s3748] %v4265
        %v4267 = vld [vmem:[%s3755 + $0x3fc] sm:%s3748]
        %4268 = vst [vmem:[%s3756 + $0x3fc] sm:%s3748] %v4267
        %v4269 = vld [vmem:[%s3755 + $0x400] sm:%s3748]
        %4270 = vst [vmem:[%s3756 + $0x400] sm:%s3748] %v4269
        %v4271 = vld [vmem:[%s3755 + $0x410] sm:%s3748]
        %4272 = vst [vmem:[%s3756 + $0x404] sm:%s3748] %v4271
        %v4273 = vld [vmem:[%s3755 + $0x404] sm:%s3748]
        %4274 = vst [vmem:[%s3756 + $0x408] sm:%s3748] %v4273
        %v4275 = vld [vmem:[%s3755 + $0x414] sm:%s3748]
        %4276 = vst [vmem:[%s3756 + $0x40c] sm:%s3748] %v4275
        %v4277 = vld [vmem:[%s3755 + $0x408] sm:%s3748]
        %4278 = vst [vmem:[%s3756 + $0x410] sm:%s3748] %v4277
        %v4279 = vld [vmem:[%s3755 + $0x418] sm:%s3748]
        %4280 = vst [vmem:[%s3756 + $0x414] sm:%s3748] %v4279
        %v4281 = vld [vmem:[%s3755 + $0x40c] sm:%s3748]
        %4282 = vst [vmem:[%s3756 + $0x418] sm:%s3748] %v4281
        %v4283 = vld [vmem:[%s3755 + $0x41c] sm:%s3748]
        %4284 = vst [vmem:[%s3756 + $0x41c] sm:%s3748] %v4283
        %v4285 = vld [vmem:[%s3755 + $0x420] sm:%s3748]
        %4286 = vst [vmem:[%s3756 + $0x420] sm:%s3748] %v4285
        %v4287 = vld [vmem:[%s3755 + $0x430] sm:%s3748]
        %4288 = vst [vmem:[%s3756 + $0x424] sm:%s3748] %v4287
        %v4289 = vld [vmem:[%s3755 + $0x424] sm:%s3748]
        %4290 = vst [vmem:[%s3756 + $0x428] sm:%s3748] %v4289
        %v4291 = vld [vmem:[%s3755 + $0x434] sm:%s3748]
        %4292 = vst [vmem:[%s3756 + $0x42c] sm:%s3748] %v4291
        %v4293 = vld [vmem:[%s3755 + $0x428] sm:%s3748]
        %4294 = vst [vmem:[%s3756 + $0x430] sm:%s3748] %v4293
        %v4295 = vld [vmem:[%s3755 + $0x438] sm:%s3748]
        %4296 = vst [vmem:[%s3756 + $0x434] sm:%s3748] %v4295
        %v4297 = vld [vmem:[%s3755 + $0x42c] sm:%s3748]
        %4298 = vst [vmem:[%s3756 + $0x438] sm:%s3748] %v4297
        %v4299 = vld [vmem:[%s3755 + $0x43c] sm:%s3748]
        %4300 = vst [vmem:[%s3756 + $0x43c] sm:%s3748] %v4299
        %v4301 = vld [vmem:[%s3755 + $0x440] sm:%s3748]
        %4302 = vst [vmem:[%s3756 + $0x440] sm:%s3748] %v4301
        %v4303 = vld [vmem:[%s3755 + $0x450] sm:%s3748]
        %4304 = vst [vmem:[%s3756 + $0x444] sm:%s3748] %v4303
        %v4305 = vld [vmem:[%s3755 + $0x444] sm:%s3748]
        %4306 = vst [vmem:[%s3756 + $0x448] sm:%s3748] %v4305
        %v4307 = vld [vmem:[%s3755 + $0x454] sm:%s3748]
        %4308 = vst [vmem:[%s3756 + $0x44c] sm:%s3748] %v4307
        %v4309 = vld [vmem:[%s3755 + $0x448] sm:%s3748]
        %4310 = vst [vmem:[%s3756 + $0x450] sm:%s3748] %v4309
        %v4311 = vld [vmem:[%s3755 + $0x458] sm:%s3748]
        %4312 = vst [vmem:[%s3756 + $0x454] sm:%s3748] %v4311
        %v4313 = vld [vmem:[%s3755 + $0x44c] sm:%s3748]
        %4314 = vst [vmem:[%s3756 + $0x458] sm:%s3748] %v4313
        %v4315 = vld [vmem:[%s3755 + $0x45c] sm:%s3748]
        %4316 = vst [vmem:[%s3756 + $0x45c] sm:%s3748] %v4315
        %v4317 = vld [vmem:[%s3755 + $0x460] sm:%s3748]
        %4318 = vst [vmem:[%s3756 + $0x460] sm:%s3748] %v4317
        %v4319 = vld [vmem:[%s3755 + $0x470] sm:%s3748]
        %4320 = vst [vmem:[%s3756 + $0x464] sm:%s3748] %v4319
        %v4321 = vld [vmem:[%s3755 + $0x464] sm:%s3748]
        %4322 = vst [vmem:[%s3756 + $0x468] sm:%s3748] %v4321
        %v4323 = vld [vmem:[%s3755 + $0x474] sm:%s3748]
        %4324 = vst [vmem:[%s3756 + $0x46c] sm:%s3748] %v4323
        %v4325 = vld [vmem:[%s3755 + $0x468] sm:%s3748]
        %4326 = vst [vmem:[%s3756 + $0x470] sm:%s3748] %v4325
        %v4327 = vld [vmem:[%s3755 + $0x478] sm:%s3748]
        %4328 = vst [vmem:[%s3756 + $0x474] sm:%s3748] %v4327
        %v4329 = vld [vmem:[%s3755 + $0x46c] sm:%s3748]
        %4330 = vst [vmem:[%s3756 + $0x478] sm:%s3748] %v4329
        %v4331 = vld [vmem:[%s3755 + $0x47c] sm:%s3748]
        %4332 = vst [vmem:[%s3756 + $0x47c] sm:%s3748] %v4331
        %v4333 = vld [vmem:[%s3755 + $0x480] sm:%s3748]
        %4334 = vst [vmem:[%s3756 + $0x480] sm:%s3748] %v4333
        %v4335 = vld [vmem:[%s3755 + $0x490] sm:%s3748]
        %4336 = vst [vmem:[%s3756 + $0x484] sm:%s3748] %v4335
        %v4337 = vld [vmem:[%s3755 + $0x484] sm:%s3748]
        %4338 = vst [vmem:[%s3756 + $0x488] sm:%s3748] %v4337
        %v4339 = vld [vmem:[%s3755 + $0x494] sm:%s3748]
        %4340 = vst [vmem:[%s3756 + $0x48c] sm:%s3748] %v4339
        %v4341 = vld [vmem:[%s3755 + $0x488] sm:%s3748]
        %4342 = vst [vmem:[%s3756 + $0x490] sm:%s3748] %v4341
        %v4343 = vld [vmem:[%s3755 + $0x498] sm:%s3748]
        %4344 = vst [vmem:[%s3756 + $0x494] sm:%s3748] %v4343
        %v4345 = vld [vmem:[%s3755 + $0x48c] sm:%s3748]
        %4346 = vst [vmem:[%s3756 + $0x498] sm:%s3748] %v4345
        %v4347 = vld [vmem:[%s3755 + $0x49c] sm:%s3748]
        %4348 = vst [vmem:[%s3756 + $0x49c] sm:%s3748] %v4347
        %v4349 = vld [vmem:[%s3755 + $0x4a0] sm:%s3748]
        %4350 = vst [vmem:[%s3756 + $0x4a0] sm:%s3748] %v4349
        %v4351 = vld [vmem:[%s3755 + $0x4b0] sm:%s3748]
        %4352 = vst [vmem:[%s3756 + $0x4a4] sm:%s3748] %v4351
        %v4353 = vld [vmem:[%s3755 + $0x4a4] sm:%s3748]
        %4354 = vst [vmem:[%s3756 + $0x4a8] sm:%s3748] %v4353
        %v4355 = vld [vmem:[%s3755 + $0x4b4] sm:%s3748]
        %4356 = vst [vmem:[%s3756 + $0x4ac] sm:%s3748] %v4355
        %v4357 = vld [vmem:[%s3755 + $0x4a8] sm:%s3748]
        %4358 = vst [vmem:[%s3756 + $0x4b0] sm:%s3748] %v4357
        %v4359 = vld [vmem:[%s3755 + $0x4b8] sm:%s3748]
        %4360 = vst [vmem:[%s3756 + $0x4b4] sm:%s3748] %v4359
        %v4361 = vld [vmem:[%s3755 + $0x4ac] sm:%s3748]
        %4362 = vst [vmem:[%s3756 + $0x4b8] sm:%s3748] %v4361
        %v4363 = vld [vmem:[%s3755 + $0x4bc] sm:%s3748]
        %4364 = vst [vmem:[%s3756 + $0x4bc] sm:%s3748] %v4363
        %v4365 = vld [vmem:[%s3755 + $0x4c0] sm:%s3748]
        %4366 = vst [vmem:[%s3756 + $0x4c0] sm:%s3748] %v4365
        %v4367 = vld [vmem:[%s3755 + $0x4d0] sm:%s3748]
        %4368 = vst [vmem:[%s3756 + $0x4c4] sm:%s3748] %v4367
        %v4369 = vld [vmem:[%s3755 + $0x4c4] sm:%s3748]
        %4370 = vst [vmem:[%s3756 + $0x4c8] sm:%s3748] %v4369
        %v4371 = vld [vmem:[%s3755 + $0x4d4] sm:%s3748]
        %4372 = vst [vmem:[%s3756 + $0x4cc] sm:%s3748] %v4371
        %v4373 = vld [vmem:[%s3755 + $0x4c8] sm:%s3748]
        %4374 = vst [vmem:[%s3756 + $0x4d0] sm:%s3748] %v4373
        %v4375 = vld [vmem:[%s3755 + $0x4d8] sm:%s3748]
        %4376 = vst [vmem:[%s3756 + $0x4d4] sm:%s3748] %v4375
        %v4377 = vld [vmem:[%s3755 + $0x4cc] sm:%s3748]
        %4378 = vst [vmem:[%s3756 + $0x4d8] sm:%s3748] %v4377
        %v4379 = vld [vmem:[%s3755 + $0x4dc] sm:%s3748]
        %4380 = vst [vmem:[%s3756 + $0x4dc] sm:%s3748] %v4379
        %v4381 = vld [vmem:[%s3755 + $0x4e0] sm:%s3748]
        %4382 = vst [vmem:[%s3756 + $0x4e0] sm:%s3748] %v4381
        %v4383 = vld [vmem:[%s3755 + $0x4f0] sm:%s3748]
        %4384 = vst [vmem:[%s3756 + $0x4e4] sm:%s3748] %v4383
        %v4385 = vld [vmem:[%s3755 + $0x4e4] sm:%s3748]
        %4386 = vst [vmem:[%s3756 + $0x4e8] sm:%s3748] %v4385
        %v4387 = vld [vmem:[%s3755 + $0x4f4] sm:%s3748]
        %4388 = vst [vmem:[%s3756 + $0x4ec] sm:%s3748] %v4387
        %v4389 = vld [vmem:[%s3755 + $0x4e8] sm:%s3748]
        %4390 = vst [vmem:[%s3756 + $0x4f0] sm:%s3748] %v4389
        %v4391 = vld [vmem:[%s3755 + $0x4f8] sm:%s3748]
        %4392 = vst [vmem:[%s3756 + $0x4f4] sm:%s3748] %v4391
        %v4393 = vld [vmem:[%s3755 + $0x4ec] sm:%s3748]
        %4394 = vst [vmem:[%s3756 + $0x4f8] sm:%s3748] %v4393
        %v4395 = vld [vmem:[%s3755 + $0x4fc] sm:%s3748]
        %4396 = vst [vmem:[%s3756 + $0x4fc] sm:%s3748] %v4395
        %v4397 = vld [vmem:[%s3755 + $0x500] sm:%s3748]
        %4398 = vst [vmem:[%s3756 + $0x500] sm:%s3748] %v4397
        %v4399 = vld [vmem:[%s3755 + $0x510] sm:%s3748]
        %4400 = vst [vmem:[%s3756 + $0x504] sm:%s3748] %v4399
        %v4401 = vld [vmem:[%s3755 + $0x504] sm:%s3748]
        %4402 = vst [vmem:[%s3756 + $0x508] sm:%s3748] %v4401
        %v4403 = vld [vmem:[%s3755 + $0x514] sm:%s3748]
        %4404 = vst [vmem:[%s3756 + $0x50c] sm:%s3748] %v4403
        %v4405 = vld [vmem:[%s3755 + $0x508] sm:%s3748]
        %4406 = vst [vmem:[%s3756 + $0x510] sm:%s3748] %v4405
        %v4407 = vld [vmem:[%s3755 + $0x518] sm:%s3748]
        %4408 = vst [vmem:[%s3756 + $0x514] sm:%s3748] %v4407
        %v4409 = vld [vmem:[%s3755 + $0x50c] sm:%s3748]
        %4410 = vst [vmem:[%s3756 + $0x518] sm:%s3748] %v4409
        %v4411 = vld [vmem:[%s3755 + $0x51c] sm:%s3748]
        %4412 = vst [vmem:[%s3756 + $0x51c] sm:%s3748] %v4411
        %v4413 = vld [vmem:[%s3755 + $0x520] sm:%s3748]
        %4414 = vst [vmem:[%s3756 + $0x520] sm:%s3748] %v4413
        %v4415 = vld [vmem:[%s3755 + $0x530] sm:%s3748]
        %4416 = vst [vmem:[%s3756 + $0x524] sm:%s3748] %v4415
        %v4417 = vld [vmem:[%s3755 + $0x524] sm:%s3748]
        %4418 = vst [vmem:[%s3756 + $0x528] sm:%s3748] %v4417
        %v4419 = vld [vmem:[%s3755 + $0x534] sm:%s3748]
        %4420 = vst [vmem:[%s3756 + $0x52c] sm:%s3748] %v4419
        %v4421 = vld [vmem:[%s3755 + $0x528] sm:%s3748]
        %4422 = vst [vmem:[%s3756 + $0x530] sm:%s3748] %v4421
        %v4423 = vld [vmem:[%s3755 + $0x538] sm:%s3748]
        %4424 = vst [vmem:[%s3756 + $0x534] sm:%s3748] %v4423
        %v4425 = vld [vmem:[%s3755 + $0x52c] sm:%s3748]
        %4426 = vst [vmem:[%s3756 + $0x538] sm:%s3748] %v4425
        %v4427 = vld [vmem:[%s3755 + $0x53c] sm:%s3748]
        %4428 = vst [vmem:[%s3756 + $0x53c] sm:%s3748] %v4427
        %v4429 = vld [vmem:[%s3755 + $0x540] sm:%s3748]
        %4430 = vst [vmem:[%s3756 + $0x540] sm:%s3748] %v4429
        %v4431 = vld [vmem:[%s3755 + $0x550] sm:%s3748]
        %4432 = vst [vmem:[%s3756 + $0x544] sm:%s3748] %v4431
        %v4433 = vld [vmem:[%s3755 + $0x544] sm:%s3748]
        %4434 = vst [vmem:[%s3756 + $0x548] sm:%s3748] %v4433
        %v4435 = vld [vmem:[%s3755 + $0x554] sm:%s3748]
        %4436 = vst [vmem:[%s3756 + $0x54c] sm:%s3748] %v4435
        %v4437 = vld [vmem:[%s3755 + $0x548] sm:%s3748]
        %4438 = vst [vmem:[%s3756 + $0x550] sm:%s3748] %v4437
        %v4439 = vld [vmem:[%s3755 + $0x558] sm:%s3748]
        %4440 = vst [vmem:[%s3756 + $0x554] sm:%s3748] %v4439
        %v4441 = vld [vmem:[%s3755 + $0x54c] sm:%s3748]
        %4442 = vst [vmem:[%s3756 + $0x558] sm:%s3748] %v4441
        %v4443 = vld [vmem:[%s3755 + $0x55c] sm:%s3748]
        %4444 = vst [vmem:[%s3756 + $0x55c] sm:%s3748] %v4443
        %v4445 = vld [vmem:[%s3755 + $0x560] sm:%s3748]
        %4446 = vst [vmem:[%s3756 + $0x560] sm:%s3748] %v4445
        %v4447 = vld [vmem:[%s3755 + $0x570] sm:%s3748]
        %4448 = vst [vmem:[%s3756 + $0x564] sm:%s3748] %v4447
        %v4449 = vld [vmem:[%s3755 + $0x564] sm:%s3748]
        %4450 = vst [vmem:[%s3756 + $0x568] sm:%s3748] %v4449
        %v4451 = vld [vmem:[%s3755 + $0x574] sm:%s3748]
        %4452 = vst [vmem:[%s3756 + $0x56c] sm:%s3748] %v4451
        %v4453 = vld [vmem:[%s3755 + $0x568] sm:%s3748]
        %4454 = vst [vmem:[%s3756 + $0x570] sm:%s3748] %v4453
        %v4455 = vld [vmem:[%s3755 + $0x578] sm:%s3748]
        %4456 = vst [vmem:[%s3756 + $0x574] sm:%s3748] %v4455
        %v4457 = vld [vmem:[%s3755 + $0x56c] sm:%s3748]
        %4458 = vst [vmem:[%s3756 + $0x578] sm:%s3748] %v4457
        %v4459 = vld [vmem:[%s3755 + $0x57c] sm:%s3748]
        %4460 = vst [vmem:[%s3756 + $0x57c] sm:%s3748] %v4459
        %v4461 = vld [vmem:[%s3755 + $0x580] sm:%s3748]
        %4462 = vst [vmem:[%s3756 + $0x580] sm:%s3748] %v4461
        %v4463 = vld [vmem:[%s3755 + $0x590] sm:%s3748]
        %4464 = vst [vmem:[%s3756 + $0x584] sm:%s3748] %v4463
        %v4465 = vld [vmem:[%s3755 + $0x584] sm:%s3748]
        %4466 = vst [vmem:[%s3756 + $0x588] sm:%s3748] %v4465
        %v4467 = vld [vmem:[%s3755 + $0x594] sm:%s3748]
        %4468 = vst [vmem:[%s3756 + $0x58c] sm:%s3748] %v4467
        %v4469 = vld [vmem:[%s3755 + $0x588] sm:%s3748]
        %4470 = vst [vmem:[%s3756 + $0x590] sm:%s3748] %v4469
        %v4471 = vld [vmem:[%s3755 + $0x598] sm:%s3748]
        %4472 = vst [vmem:[%s3756 + $0x594] sm:%s3748] %v4471
        %v4473 = vld [vmem:[%s3755 + $0x58c] sm:%s3748]
        %4474 = vst [vmem:[%s3756 + $0x598] sm:%s3748] %v4473
        %v4475 = vld [vmem:[%s3755 + $0x59c] sm:%s3748]
        %4476 = vst [vmem:[%s3756 + $0x59c] sm:%s3748] %v4475
        %v4477 = vld [vmem:[%s3755 + $0x5a0] sm:%s3748]
        %4478 = vst [vmem:[%s3756 + $0x5a0] sm:%s3748] %v4477
        %v4479 = vld [vmem:[%s3755 + $0x5b0] sm:%s3748]
        %4480 = vst [vmem:[%s3756 + $0x5a4] sm:%s3748] %v4479
        %v4481 = vld [vmem:[%s3755 + $0x5a4] sm:%s3748]
        %4482 = vst [vmem:[%s3756 + $0x5a8] sm:%s3748] %v4481
        %v4483 = vld [vmem:[%s3755 + $0x5b4] sm:%s3748]
        %4484 = vst [vmem:[%s3756 + $0x5ac] sm:%s3748] %v4483
        %v4485 = vld [vmem:[%s3755 + $0x5a8] sm:%s3748]
        %4486 = vst [vmem:[%s3756 + $0x5b0] sm:%s3748] %v4485
        %v4487 = vld [vmem:[%s3755 + $0x5b8] sm:%s3748]
        %4488 = vst [vmem:[%s3756 + $0x5b4] sm:%s3748] %v4487
        %v4489 = vld [vmem:[%s3755 + $0x5ac] sm:%s3748]
        %4490 = vst [vmem:[%s3756 + $0x5b8] sm:%s3748] %v4489
        %v4491 = vld [vmem:[%s3755 + $0x5bc] sm:%s3748]
        %4492 = vst [vmem:[%s3756 + $0x5bc] sm:%s3748] %v4491
        %v4493 = vld [vmem:[%s3755 + $0x5c0] sm:%s3748]
        %4494 = vst [vmem:[%s3756 + $0x5c0] sm:%s3748] %v4493
        %v4495 = vld [vmem:[%s3755 + $0x5d0] sm:%s3748]
        %4496 = vst [vmem:[%s3756 + $0x5c4] sm:%s3748] %v4495
        %v4497 = vld [vmem:[%s3755 + $0x5c4] sm:%s3748]
        %4498 = vst [vmem:[%s3756 + $0x5c8] sm:%s3748] %v4497
        %v4499 = vld [vmem:[%s3755 + $0x5d4] sm:%s3748]
        %4500 = vst [vmem:[%s3756 + $0x5cc] sm:%s3748] %v4499
        %v4501 = vld [vmem:[%s3755 + $0x5c8] sm:%s3748]
        %4502 = vst [vmem:[%s3756 + $0x5d0] sm:%s3748] %v4501
        %v4503 = vld [vmem:[%s3755 + $0x5d8] sm:%s3748]
        %4504 = vst [vmem:[%s3756 + $0x5d4] sm:%s3748] %v4503
        %v4505 = vld [vmem:[%s3755 + $0x5cc] sm:%s3748]
        %4506 = vst [vmem:[%s3756 + $0x5d8] sm:%s3748] %v4505
        %v4507 = vld [vmem:[%s3755 + $0x5dc] sm:%s3748]
        %4508 = vst [vmem:[%s3756 + $0x5dc] sm:%s3748] %v4507
        %v4509 = vld [vmem:[%s3755 + $0x5e0] sm:%s3748]
        %4510 = vst [vmem:[%s3756 + $0x5e0] sm:%s3748] %v4509
        %v4511 = vld [vmem:[%s3755 + $0x5f0] sm:%s3748]
        %4512 = vst [vmem:[%s3756 + $0x5e4] sm:%s3748] %v4511
        %v4513 = vld [vmem:[%s3755 + $0x5e4] sm:%s3748]
        %4514 = vst [vmem:[%s3756 + $0x5e8] sm:%s3748] %v4513
        %v4515 = vld [vmem:[%s3755 + $0x5f4] sm:%s3748]
        %4516 = vst [vmem:[%s3756 + $0x5ec] sm:%s3748] %v4515
        %v4517 = vld [vmem:[%s3755 + $0x5e8] sm:%s3748]
        %4518 = vst [vmem:[%s3756 + $0x5f0] sm:%s3748] %v4517
        %v4519 = vld [vmem:[%s3755 + $0x5f8] sm:%s3748]
        %4520 = vst [vmem:[%s3756 + $0x5f4] sm:%s3748] %v4519
        %v4521 = vld [vmem:[%s3755 + $0x5ec] sm:%s3748]
        %4522 = vst [vmem:[%s3756 + $0x5f8] sm:%s3748] %v4521
        %v4523 = vld [vmem:[%s3755 + $0x5fc] sm:%s3748]
        %4524 = vst [vmem:[%s3756 + $0x5fc] sm:%s3748] %v4523
        %v4525 = vld [vmem:[%s3755 + $0x600] sm:%s3748]
        %4526 = vst [vmem:[%s3756 + $0x600] sm:%s3748] %v4525
        %v4527 = vld [vmem:[%s3755 + $0x610] sm:%s3748]
        %4528 = vst [vmem:[%s3756 + $0x604] sm:%s3748] %v4527
        %v4529 = vld [vmem:[%s3755 + $0x604] sm:%s3748]
        %4530 = vst [vmem:[%s3756 + $0x608] sm:%s3748] %v4529
        %v4531 = vld [vmem:[%s3755 + $0x614] sm:%s3748]
        %4532 = vst [vmem:[%s3756 + $0x60c] sm:%s3748] %v4531
        %v4533 = vld [vmem:[%s3755 + $0x608] sm:%s3748]
        %4534 = vst [vmem:[%s3756 + $0x610] sm:%s3748] %v4533
        %v4535 = vld [vmem:[%s3755 + $0x618] sm:%s3748]
        %4536 = vst [vmem:[%s3756 + $0x614] sm:%s3748] %v4535
        %v4537 = vld [vmem:[%s3755 + $0x60c] sm:%s3748]
        %4538 = vst [vmem:[%s3756 + $0x618] sm:%s3748] %v4537
        %v4539 = vld [vmem:[%s3755 + $0x61c] sm:%s3748]
        %4540 = vst [vmem:[%s3756 + $0x61c] sm:%s3748] %v4539
        %v4541 = vld [vmem:[%s3755 + $0x620] sm:%s3748]
        %4542 = vst [vmem:[%s3756 + $0x620] sm:%s3748] %v4541
        %v4543 = vld [vmem:[%s3755 + $0x630] sm:%s3748]
        %4544 = vst [vmem:[%s3756 + $0x624] sm:%s3748] %v4543
        %v4545 = vld [vmem:[%s3755 + $0x624] sm:%s3748]
        %4546 = vst [vmem:[%s3756 + $0x628] sm:%s3748] %v4545
        %v4547 = vld [vmem:[%s3755 + $0x634] sm:%s3748]
        %4548 = vst [vmem:[%s3756 + $0x62c] sm:%s3748] %v4547
        %v4549 = vld [vmem:[%s3755 + $0x628] sm:%s3748]
        %4550 = vst [vmem:[%s3756 + $0x630] sm:%s3748] %v4549
        %v4551 = vld [vmem:[%s3755 + $0x638] sm:%s3748]
        %4552 = vst [vmem:[%s3756 + $0x634] sm:%s3748] %v4551
        %v4553 = vld [vmem:[%s3755 + $0x62c] sm:%s3748]
        %4554 = vst [vmem:[%s3756 + $0x638] sm:%s3748] %v4553
        %v4555 = vld [vmem:[%s3755 + $0x63c] sm:%s3748]
        %4556 = vst [vmem:[%s3756 + $0x63c] sm:%s3748] %v4555
        %v4557 = vld [vmem:[%s3755 + $0x640] sm:%s3748]
        %4558 = vst [vmem:[%s3756 + $0x640] sm:%s3748] %v4557
        %v4559 = vld [vmem:[%s3755 + $0x650] sm:%s3748]
        %4560 = vst [vmem:[%s3756 + $0x644] sm:%s3748] %v4559
        %v4561 = vld [vmem:[%s3755 + $0x644] sm:%s3748]
        %4562 = vst [vmem:[%s3756 + $0x648] sm:%s3748] %v4561
        %v4563 = vld [vmem:[%s3755 + $0x654] sm:%s3748]
        %4564 = vst [vmem:[%s3756 + $0x64c] sm:%s3748] %v4563
        %v4565 = vld [vmem:[%s3755 + $0x648] sm:%s3748]
        %4566 = vst [vmem:[%s3756 + $0x650] sm:%s3748] %v4565
        %v4567 = vld [vmem:[%s3755 + $0x658] sm:%s3748]
        %4568 = vst [vmem:[%s3756 + $0x654] sm:%s3748] %v4567
        %v4569 = vld [vmem:[%s3755 + $0x64c] sm:%s3748]
        %4570 = vst [vmem:[%s3756 + $0x658] sm:%s3748] %v4569
        %v4571 = vld [vmem:[%s3755 + $0x65c] sm:%s3748]
        %4572 = vst [vmem:[%s3756 + $0x65c] sm:%s3748] %v4571
        %v4573 = vld [vmem:[%s3755 + $0x660] sm:%s3748]
        %4574 = vst [vmem:[%s3756 + $0x660] sm:%s3748] %v4573
        %v4575 = vld [vmem:[%s3755 + $0x670] sm:%s3748]
        %4576 = vst [vmem:[%s3756 + $0x664] sm:%s3748] %v4575
        %v4577 = vld [vmem:[%s3755 + $0x664] sm:%s3748]
        %4578 = vst [vmem:[%s3756 + $0x668] sm:%s3748] %v4577
        %v4579 = vld [vmem:[%s3755 + $0x674] sm:%s3748]
        %4580 = vst [vmem:[%s3756 + $0x66c] sm:%s3748] %v4579
        %v4581 = vld [vmem:[%s3755 + $0x668] sm:%s3748]
        %4582 = vst [vmem:[%s3756 + $0x670] sm:%s3748] %v4581
        %v4583 = vld [vmem:[%s3755 + $0x678] sm:%s3748]
        %4584 = vst [vmem:[%s3756 + $0x674] sm:%s3748] %v4583
        %v4585 = vld [vmem:[%s3755 + $0x66c] sm:%s3748]
        %4586 = vst [vmem:[%s3756 + $0x678] sm:%s3748] %v4585
        %v4587 = vld [vmem:[%s3755 + $0x67c] sm:%s3748]
        %4588 = vst [vmem:[%s3756 + $0x67c] sm:%s3748] %v4587
        %v4589 = vld [vmem:[%s3755 + $0x680] sm:%s3748]
        %4590 = vst [vmem:[%s3756 + $0x680] sm:%s3748] %v4589
        %v4591 = vld [vmem:[%s3755 + $0x690] sm:%s3748]
        %4592 = vst [vmem:[%s3756 + $0x684] sm:%s3748] %v4591
        %v4593 = vld [vmem:[%s3755 + $0x684] sm:%s3748]
        %4594 = vst [vmem:[%s3756 + $0x688] sm:%s3748] %v4593
        %v4595 = vld [vmem:[%s3755 + $0x694] sm:%s3748]
        %4596 = vst [vmem:[%s3756 + $0x68c] sm:%s3748] %v4595
        %v4597 = vld [vmem:[%s3755 + $0x688] sm:%s3748]
        %4598 = vst [vmem:[%s3756 + $0x690] sm:%s3748] %v4597
        %v4599 = vld [vmem:[%s3755 + $0x698] sm:%s3748]
        %4600 = vst [vmem:[%s3756 + $0x694] sm:%s3748] %v4599
        %v4601 = vld [vmem:[%s3755 + $0x68c] sm:%s3748]
        %4602 = vst [vmem:[%s3756 + $0x698] sm:%s3748] %v4601
        %v4603 = vld [vmem:[%s3755 + $0x69c] sm:%s3748]
        %4604 = vst [vmem:[%s3756 + $0x69c] sm:%s3748] %v4603
        %v4605 = vld [vmem:[%s3755 + $0x6a0] sm:%s3748]
        %4606 = vst [vmem:[%s3756 + $0x6a0] sm:%s3748] %v4605
        %v4607 = vld [vmem:[%s3755 + $0x6b0] sm:%s3748]
        %4608 = vst [vmem:[%s3756 + $0x6a4] sm:%s3748] %v4607
        %v4609 = vld [vmem:[%s3755 + $0x6a4] sm:%s3748]
        %4610 = vst [vmem:[%s3756 + $0x6a8] sm:%s3748] %v4609
        %v4611 = vld [vmem:[%s3755 + $0x6b4] sm:%s3748]
        %4612 = vst [vmem:[%s3756 + $0x6ac] sm:%s3748] %v4611
        %v4613 = vld [vmem:[%s3755 + $0x6a8] sm:%s3748]
        %4614 = vst [vmem:[%s3756 + $0x6b0] sm:%s3748] %v4613
        %v4615 = vld [vmem:[%s3755 + $0x6b8] sm:%s3748]
        %4616 = vst [vmem:[%s3756 + $0x6b4] sm:%s3748] %v4615
        %v4617 = vld [vmem:[%s3755 + $0x6ac] sm:%s3748]
        %4618 = vst [vmem:[%s3756 + $0x6b8] sm:%s3748] %v4617
        %v4619 = vld [vmem:[%s3755 + $0x6bc] sm:%s3748]
        %4620 = vst [vmem:[%s3756 + $0x6bc] sm:%s3748] %v4619
        %v4621 = vld [vmem:[%s3755 + $0x6c0] sm:%s3748]
        %4622 = vst [vmem:[%s3756 + $0x6c0] sm:%s3748] %v4621
        %v4623 = vld [vmem:[%s3755 + $0x6d0] sm:%s3748]
        %4624 = vst [vmem:[%s3756 + $0x6c4] sm:%s3748] %v4623
        %v4625 = vld [vmem:[%s3755 + $0x6c4] sm:%s3748]
        %4626 = vst [vmem:[%s3756 + $0x6c8] sm:%s3748] %v4625
        %v4627 = vld [vmem:[%s3755 + $0x6d4] sm:%s3748]
        %4628 = vst [vmem:[%s3756 + $0x6cc] sm:%s3748] %v4627
        %v4629 = vld [vmem:[%s3755 + $0x6c8] sm:%s3748]
        %4630 = vst [vmem:[%s3756 + $0x6d0] sm:%s3748] %v4629
        %v4631 = vld [vmem:[%s3755 + $0x6d8] sm:%s3748]
        %4632 = vst [vmem:[%s3756 + $0x6d4] sm:%s3748] %v4631
        %v4633 = vld [vmem:[%s3755 + $0x6cc] sm:%s3748]
        %4634 = vst [vmem:[%s3756 + $0x6d8] sm:%s3748] %v4633
        %v4635 = vld [vmem:[%s3755 + $0x6dc] sm:%s3748]
        %4636 = vst [vmem:[%s3756 + $0x6dc] sm:%s3748] %v4635
        %v4637 = vld [vmem:[%s3755 + $0x6e0] sm:%s3748]
        %4638 = vst [vmem:[%s3756 + $0x6e0] sm:%s3748] %v4637
        %v4639 = vld [vmem:[%s3755 + $0x6f0] sm:%s3748]
        %4640 = vst [vmem:[%s3756 + $0x6e4] sm:%s3748] %v4639
        %v4641 = vld [vmem:[%s3755 + $0x6e4] sm:%s3748]
        %4642 = vst [vmem:[%s3756 + $0x6e8] sm:%s3748] %v4641
        %v4643 = vld [vmem:[%s3755 + $0x6f4] sm:%s3748]
        %4644 = vst [vmem:[%s3756 + $0x6ec] sm:%s3748] %v4643
        %v4645 = vld [vmem:[%s3755 + $0x6e8] sm:%s3748]
        %4646 = vst [vmem:[%s3756 + $0x6f0] sm:%s3748] %v4645
        %v4647 = vld [vmem:[%s3755 + $0x6f8] sm:%s3748]
        %4648 = vst [vmem:[%s3756 + $0x6f4] sm:%s3748] %v4647
        %v4649 = vld [vmem:[%s3755 + $0x6ec] sm:%s3748]
        %4650 = vst [vmem:[%s3756 + $0x6f8] sm:%s3748] %v4649
        %v4651 = vld [vmem:[%s3755 + $0x6fc] sm:%s3748]
        %4652 = vst [vmem:[%s3756 + $0x6fc] sm:%s3748] %v4651
        %v4653 = vld [vmem:[%s3755 + $0x700] sm:%s3748]
        %4654 = vst [vmem:[%s3756 + $0x700] sm:%s3748] %v4653
        %v4655 = vld [vmem:[%s3755 + $0x710] sm:%s3748]
        %4656 = vst [vmem:[%s3756 + $0x704] sm:%s3748] %v4655
        %v4657 = vld [vmem:[%s3755 + $0x704] sm:%s3748]
        %4658 = vst [vmem:[%s3756 + $0x708] sm:%s3748] %v4657
        %v4659 = vld [vmem:[%s3755 + $0x714] sm:%s3748]
        %4660 = vst [vmem:[%s3756 + $0x70c] sm:%s3748] %v4659
        %v4661 = vld [vmem:[%s3755 + $0x708] sm:%s3748]
        %4662 = vst [vmem:[%s3756 + $0x710] sm:%s3748] %v4661
        %v4663 = vld [vmem:[%s3755 + $0x718] sm:%s3748]
        %4664 = vst [vmem:[%s3756 + $0x714] sm:%s3748] %v4663
        %v4665 = vld [vmem:[%s3755 + $0x70c] sm:%s3748]
        %4666 = vst [vmem:[%s3756 + $0x718] sm:%s3748] %v4665
        %v4667 = vld [vmem:[%s3755 + $0x71c] sm:%s3748]
        %4668 = vst [vmem:[%s3756 + $0x71c] sm:%s3748] %v4667
        %v4669 = vld [vmem:[%s3755 + $0x720] sm:%s3748]
        %4670 = vst [vmem:[%s3756 + $0x720] sm:%s3748] %v4669
        %v4671 = vld [vmem:[%s3755 + $0x730] sm:%s3748]
        %4672 = vst [vmem:[%s3756 + $0x724] sm:%s3748] %v4671
        %v4673 = vld [vmem:[%s3755 + $0x724] sm:%s3748]
        %4674 = vst [vmem:[%s3756 + $0x728] sm:%s3748] %v4673
        %v4675 = vld [vmem:[%s3755 + $0x734] sm:%s3748]
        %4676 = vst [vmem:[%s3756 + $0x72c] sm:%s3748] %v4675
        %v4677 = vld [vmem:[%s3755 + $0x728] sm:%s3748]
        %4678 = vst [vmem:[%s3756 + $0x730] sm:%s3748] %v4677
        %v4679 = vld [vmem:[%s3755 + $0x738] sm:%s3748]
        %4680 = vst [vmem:[%s3756 + $0x734] sm:%s3748] %v4679
        %v4681 = vld [vmem:[%s3755 + $0x72c] sm:%s3748]
        %4682 = vst [vmem:[%s3756 + $0x738] sm:%s3748] %v4681
        %v4683 = vld [vmem:[%s3755 + $0x73c] sm:%s3748]
        %4684 = vst [vmem:[%s3756 + $0x73c] sm:%s3748] %v4683
        %v4685 = vld [vmem:[%s3755 + $0x740] sm:%s3748]
        %4686 = vst [vmem:[%s3756 + $0x740] sm:%s3748] %v4685
        %v4687 = vld [vmem:[%s3755 + $0x750] sm:%s3748]
        %4688 = vst [vmem:[%s3756 + $0x744] sm:%s3748] %v4687
        %v4689 = vld [vmem:[%s3755 + $0x744] sm:%s3748]
        %4690 = vst [vmem:[%s3756 + $0x748] sm:%s3748] %v4689
        %v4691 = vld [vmem:[%s3755 + $0x754] sm:%s3748]
        %4692 = vst [vmem:[%s3756 + $0x74c] sm:%s3748] %v4691
        %v4693 = vld [vmem:[%s3755 + $0x748] sm:%s3748]
        %4694 = vst [vmem:[%s3756 + $0x750] sm:%s3748] %v4693
        %v4695 = vld [vmem:[%s3755 + $0x758] sm:%s3748]
        %4696 = vst [vmem:[%s3756 + $0x754] sm:%s3748] %v4695
        %v4697 = vld [vmem:[%s3755 + $0x74c] sm:%s3748]
        %4698 = vst [vmem:[%s3756 + $0x758] sm:%s3748] %v4697
        %v4699 = vld [vmem:[%s3755 + $0x75c] sm:%s3748]
        %4700 = vst [vmem:[%s3756 + $0x75c] sm:%s3748] %v4699
        %v4701 = vld [vmem:[%s3755 + $0x760] sm:%s3748]
        %4702 = vst [vmem:[%s3756 + $0x760] sm:%s3748] %v4701
        %v4703 = vld [vmem:[%s3755 + $0x770] sm:%s3748]
        %4704 = vst [vmem:[%s3756 + $0x764] sm:%s3748] %v4703
        %v4705 = vld [vmem:[%s3755 + $0x764] sm:%s3748]
        %4706 = vst [vmem:[%s3756 + $0x768] sm:%s3748] %v4705
        %v4707 = vld [vmem:[%s3755 + $0x774] sm:%s3748]
        %4708 = vst [vmem:[%s3756 + $0x76c] sm:%s3748] %v4707
        %v4709 = vld [vmem:[%s3755 + $0x768] sm:%s3748]
        %4710 = vst [vmem:[%s3756 + $0x770] sm:%s3748] %v4709
        %v4711 = vld [vmem:[%s3755 + $0x778] sm:%s3748]
        %4712 = vst [vmem:[%s3756 + $0x774] sm:%s3748] %v4711
        %v4713 = vld [vmem:[%s3755 + $0x76c] sm:%s3748]
        %4714 = vst [vmem:[%s3756 + $0x778] sm:%s3748] %v4713
        %v4715 = vld [vmem:[%s3755 + $0x77c] sm:%s3748]
        %4716 = vst [vmem:[%s3756 + $0x77c] sm:%s3748] %v4715
        %v4717 = vld [vmem:[%s3755 + $0x780] sm:%s3748]
        %4718 = vst [vmem:[%s3756 + $0x780] sm:%s3748] %v4717
        %v4719 = vld [vmem:[%s3755 + $0x790] sm:%s3748]
        %4720 = vst [vmem:[%s3756 + $0x784] sm:%s3748] %v4719
        %v4721 = vld [vmem:[%s3755 + $0x784] sm:%s3748]
        %4722 = vst [vmem:[%s3756 + $0x788] sm:%s3748] %v4721
        %v4723 = vld [vmem:[%s3755 + $0x794] sm:%s3748]
        %4724 = vst [vmem:[%s3756 + $0x78c] sm:%s3748] %v4723
        %v4725 = vld [vmem:[%s3755 + $0x788] sm:%s3748]
        %4726 = vst [vmem:[%s3756 + $0x790] sm:%s3748] %v4725
        %v4727 = vld [vmem:[%s3755 + $0x798] sm:%s3748]
        %4728 = vst [vmem:[%s3756 + $0x794] sm:%s3748] %v4727
        %v4729 = vld [vmem:[%s3755 + $0x78c] sm:%s3748]
        %4730 = vst [vmem:[%s3756 + $0x798] sm:%s3748] %v4729
        %v4731 = vld [vmem:[%s3755 + $0x79c] sm:%s3748]
        %4732 = vst [vmem:[%s3756 + $0x79c] sm:%s3748] %v4731
        %v4733 = vld [vmem:[%s3755 + $0x7a0] sm:%s3748]
        %4734 = vst [vmem:[%s3756 + $0x7a0] sm:%s3748] %v4733
        %v4735 = vld [vmem:[%s3755 + $0x7b0] sm:%s3748]
        %4736 = vst [vmem:[%s3756 + $0x7a4] sm:%s3748] %v4735
        %v4737 = vld [vmem:[%s3755 + $0x7a4] sm:%s3748]
        %4738 = vst [vmem:[%s3756 + $0x7a8] sm:%s3748] %v4737
        %v4739 = vld [vmem:[%s3755 + $0x7b4] sm:%s3748]
        %4740 = vst [vmem:[%s3756 + $0x7ac] sm:%s3748] %v4739
        %v4741 = vld [vmem:[%s3755 + $0x7a8] sm:%s3748]
        %4742 = vst [vmem:[%s3756 + $0x7b0] sm:%s3748] %v4741
        %v4743 = vld [vmem:[%s3755 + $0x7b8] sm:%s3748]
        %4744 = vst [vmem:[%s3756 + $0x7b4] sm:%s3748] %v4743
        %v4745 = vld [vmem:[%s3755 + $0x7ac] sm:%s3748]
        %4746 = vst [vmem:[%s3756 + $0x7b8] sm:%s3748] %v4745
        %v4747 = vld [vmem:[%s3755 + $0x7bc] sm:%s3748]
        %4748 = vst [vmem:[%s3756 + $0x7bc] sm:%s3748] %v4747
        %v4749 = vld [vmem:[%s3755 + $0x7c0] sm:%s3748]
        %4750 = vst [vmem:[%s3756 + $0x7c0] sm:%s3748] %v4749
        %v4751 = vld [vmem:[%s3755 + $0x7d0] sm:%s3748]
        %4752 = vst [vmem:[%s3756 + $0x7c4] sm:%s3748] %v4751
        %v4753 = vld [vmem:[%s3755 + $0x7c4] sm:%s3748]
        %4754 = vst [vmem:[%s3756 + $0x7c8] sm:%s3748] %v4753
        %v4755 = vld [vmem:[%s3755 + $0x7d4] sm:%s3748]
        %4756 = vst [vmem:[%s3756 + $0x7cc] sm:%s3748] %v4755
        %v4757 = vld [vmem:[%s3755 + $0x7c8] sm:%s3748]
        %4758 = vst [vmem:[%s3756 + $0x7d0] sm:%s3748] %v4757
        %v4759 = vld [vmem:[%s3755 + $0x7d8] sm:%s3748]
        %4760 = vst [vmem:[%s3756 + $0x7d4] sm:%s3748] %v4759
        %v4761 = vld [vmem:[%s3755 + $0x7cc] sm:%s3748]
        %4762 = vst [vmem:[%s3756 + $0x7d8] sm:%s3748] %v4761
        %v4763 = vld [vmem:[%s3755 + $0x7dc] sm:%s3748]
        %4764 = vst [vmem:[%s3756 + $0x7dc] sm:%s3748] %v4763
        %v4765 = vld [vmem:[%s3755 + $0x7e0] sm:%s3748]
        %4766 = vst [vmem:[%s3756 + $0x7e0] sm:%s3748] %v4765
        %v4767 = vld [vmem:[%s3755 + $0x7f0] sm:%s3748]
        %4768 = vst [vmem:[%s3756 + $0x7e4] sm:%s3748] %v4767
        %v4769 = vld [vmem:[%s3755 + $0x7e4] sm:%s3748]
        %4770 = vst [vmem:[%s3756 + $0x7e8] sm:%s3748] %v4769
        %v4771 = vld [vmem:[%s3755 + $0x7f4] sm:%s3748]
        %4772 = vst [vmem:[%s3756 + $0x7ec] sm:%s3748] %v4771
        %v4773 = vld [vmem:[%s3755 + $0x7e8] sm:%s3748]
        %4774 = vst [vmem:[%s3756 + $0x7f0] sm:%s3748] %v4773
        %v4775 = vld [vmem:[%s3755 + $0x7f8] sm:%s3748]
        %4776 = vst [vmem:[%s3756 + $0x7f4] sm:%s3748] %v4775
        %v4777 = vld [vmem:[%s3755 + $0x7ec] sm:%s3748]
        %4778 = vst [vmem:[%s3756 + $0x7f8] sm:%s3748] %v4777
        %v4779 = vld [vmem:[%s3755 + $0x7fc] sm:%s3748]
        %4780 = vst [vmem:[%s3756 + $0x7fc] sm:%s3748] %v4779
      $region132: #{discriminator_forward.1} parent=119 // loop_footer
        %s3754 = sadd.s32 1, %s3750
      $region133: #{discriminator_forward.1} parent=119 // loop_footer_branch
        %3749 = sbr.rel target = $region129
      $region134: #{discriminator_forward.1} parent=119 // loop_exit
        _
    $region120: #{discriminator_forward.1} parent=93 // pred_fallthru
      _
  $region94: #{discriminator_forward.1} parent=0 // pred_fallthru
    _
  // Predicated region
  $region95: #{discriminator_forward.1} parent=0 // pred_check
    %p613 = pneg %p609
  $region96: #{discriminator_forward.1} parent=0 // pred_check_branch
    %615 = sbr.rel (%p613) target = $region98
  $region97: #{discriminator_forward.1} parent=0 // pred_region
    %s616 = sshllo.u32 0, 4
    loop: start=0, step=1, limit=1
    $region99: #{discriminator_forward.1} parent=97 // loop_pre_header
      _
    $region100: #{discriminator_forward.1} parent=97 // loop_header
      %s618 = sphi 0, %s622
      %p619 = scmp.ge.s32.totalorder %s618, 1
      %s623 = sphi %s12, %s12
      %s624 = sphi [#allocation3], [#allocation3]
    $region101: #{discriminator_forward.1} parent=97 // loop_header_branch
      %621 = sbr.rel (%p619) target = $region105
    $region102: #{discriminator_forward.1} parent=97 // loop_body
      %v625 = vld [vmem:[%s623] sm:%s616]
      %626 = vst [vmem:[%s624] sm:%s616] %v625
      %v627 = vld [vmem:[%s623 + $0x10] sm:%s616]
      %628 = vst [vmem:[%s624 + $0x4] sm:%s616] %v627
      %v629 = vld [vmem:[%s623 + $0x4] sm:%s616]
      %630 = vst [vmem:[%s624 + $0x8] sm:%s616] %v629
      %v631 = vld [vmem:[%s623 + $0x14] sm:%s616]
      %632 = vst [vmem:[%s624 + $0xc] sm:%s616] %v631
      %v633 = vld [vmem:[%s623 + $0x8] sm:%s616]
      %634 = vst [vmem:[%s624 + $0x10] sm:%s616] %v633
      %v635 = vld [vmem:[%s623 + $0x18] sm:%s616]
      %636 = vst [vmem:[%s624 + $0x14] sm:%s616] %v635
      %v637 = vld [vmem:[%s623 + $0xc] sm:%s616]
      %638 = vst [vmem:[%s624 + $0x18] sm:%s616] %v637
      %v639 = vld [vmem:[%s623 + $0x1c] sm:%s616]
      %640 = vst [vmem:[%s624 + $0x1c] sm:%s616] %v639
      %v641 = vld [vmem:[%s623 + $0x20] sm:%s616]
      %642 = vst [vmem:[%s624 + $0x20] sm:%s616] %v641
      %v643 = vld [vmem:[%s623 + $0x30] sm:%s616]
      %644 = vst [vmem:[%s624 + $0x24] sm:%s616] %v643
      %v645 = vld [vmem:[%s623 + $0x24] sm:%s616]
      %646 = vst [vmem:[%s624 + $0x28] sm:%s616] %v645
      %v647 = vld [vmem:[%s623 + $0x34] sm:%s616]
      %648 = vst [vmem:[%s624 + $0x2c] sm:%s616] %v647
      %v649 = vld [vmem:[%s623 + $0x28] sm:%s616]
      %650 = vst [vmem:[%s624 + $0x30] sm:%s616] %v649
      %v651 = vld [vmem:[%s623 + $0x38] sm:%s616]
      %652 = vst [vmem:[%s624 + $0x34] sm:%s616] %v651
      %v653 = vld [vmem:[%s623 + $0x2c] sm:%s616]
      %654 = vst [vmem:[%s624 + $0x38] sm:%s616] %v653
      %v655 = vld [vmem:[%s623 + $0x3c] sm:%s616]
      %656 = vst [vmem:[%s624 + $0x3c] sm:%s616] %v655
      %v657 = vld [vmem:[%s623 + $0x40] sm:%s616]
      %658 = vst [vmem:[%s624 + $0x40] sm:%s616] %v657
      %v659 = vld [vmem:[%s623 + $0x50] sm:%s616]
      %660 = vst [vmem:[%s624 + $0x44] sm:%s616] %v659
      %v661 = vld [vmem:[%s623 + $0x44] sm:%s616]
      %662 = vst [vmem:[%s624 + $0x48] sm:%s616] %v661
      %v663 = vld [vmem:[%s623 + $0x54] sm:%s616]
      %664 = vst [vmem:[%s624 + $0x4c] sm:%s616] %v663
      %v665 = vld [vmem:[%s623 + $0x48] sm:%s616]
      %666 = vst [vmem:[%s624 + $0x50] sm:%s616] %v665
      %v667 = vld [vmem:[%s623 + $0x58] sm:%s616]
      %668 = vst [vmem:[%s624 + $0x54] sm:%s616] %v667
      %v669 = vld [vmem:[%s623 + $0x4c] sm:%s616]
      %670 = vst [vmem:[%s624 + $0x58] sm:%s616] %v669
      %v671 = vld [vmem:[%s623 + $0x5c] sm:%s616]
      %672 = vst [vmem:[%s624 + $0x5c] sm:%s616] %v671
      %v673 = vld [vmem:[%s623 + $0x60] sm:%s616]
      %674 = vst [vmem:[%s624 + $0x60] sm:%s616] %v673
      %v675 = vld [vmem:[%s623 + $0x70] sm:%s616]
      %676 = vst [vmem:[%s624 + $0x64] sm:%s616] %v675
      %v677 = vld [vmem:[%s623 + $0x64] sm:%s616]
      %678 = vst [vmem:[%s624 + $0x68] sm:%s616] %v677
      %v679 = vld [vmem:[%s623 + $0x74] sm:%s616]
      %680 = vst [vmem:[%s624 + $0x6c] sm:%s616] %v679
      %v681 = vld [vmem:[%s623 + $0x68] sm:%s616]
      %682 = vst [vmem:[%s624 + $0x70] sm:%s616] %v681
      %v683 = vld [vmem:[%s623 + $0x78] sm:%s616]
      %684 = vst [vmem:[%s624 + $0x74] sm:%s616] %v683
      %v685 = vld [vmem:[%s623 + $0x6c] sm:%s616]
      %686 = vst [vmem:[%s624 + $0x78] sm:%s616] %v685
      %v687 = vld [vmem:[%s623 + $0x7c] sm:%s616]
      %688 = vst [vmem:[%s624 + $0x7c] sm:%s616] %v687
      %v689 = vld [vmem:[%s623 + $0x80] sm:%s616]
      %690 = vst [vmem:[%s624 + $0x80] sm:%s616] %v689
      %v691 = vld [vmem:[%s623 + $0x90] sm:%s616]
      %692 = vst [vmem:[%s624 + $0x84] sm:%s616] %v691
      %v693 = vld [vmem:[%s623 + $0x84] sm:%s616]
      %694 = vst [vmem:[%s624 + $0x88] sm:%s616] %v693
      %v695 = vld [vmem:[%s623 + $0x94] sm:%s616]
      %696 = vst [vmem:[%s624 + $0x8c] sm:%s616] %v695
      %v697 = vld [vmem:[%s623 + $0x88] sm:%s616]
      %698 = vst [vmem:[%s624 + $0x90] sm:%s616] %v697
      %v699 = vld [vmem:[%s623 + $0x98] sm:%s616]
      %700 = vst [vmem:[%s624 + $0x94] sm:%s616] %v699
      %v701 = vld [vmem:[%s623 + $0x8c] sm:%s616]
      %702 = vst [vmem:[%s624 + $0x98] sm:%s616] %v701
      %v703 = vld [vmem:[%s623 + $0x9c] sm:%s616]
      %704 = vst [vmem:[%s624 + $0x9c] sm:%s616] %v703
      %v705 = vld [vmem:[%s623 + $0xa0] sm:%s616]
      %706 = vst [vmem:[%s624 + $0xa0] sm:%s616] %v705
      %v707 = vld [vmem:[%s623 + $0xb0] sm:%s616]
      %708 = vst [vmem:[%s624 + $0xa4] sm:%s616] %v707
      %v709 = vld [vmem:[%s623 + $0xa4] sm:%s616]
      %710 = vst [vmem:[%s624 + $0xa8] sm:%s616] %v709
      %v711 = vld [vmem:[%s623 + $0xb4] sm:%s616]
      %712 = vst [vmem:[%s624 + $0xac] sm:%s616] %v711
      %v713 = vld [vmem:[%s623 + $0xa8] sm:%s616]
      %714 = vst [vmem:[%s624 + $0xb0] sm:%s616] %v713
      %v715 = vld [vmem:[%s623 + $0xb8] sm:%s616]
      %716 = vst [vmem:[%s624 + $0xb4] sm:%s616] %v715
      %v717 = vld [vmem:[%s623 + $0xac] sm:%s616]
      %718 = vst [vmem:[%s624 + $0xb8] sm:%s616] %v717
      %v719 = vld [vmem:[%s623 + $0xbc] sm:%s616]
      %720 = vst [vmem:[%s624 + $0xbc] sm:%s616] %v719
      %v721 = vld [vmem:[%s623 + $0xc0] sm:%s616]
      %722 = vst [vmem:[%s624 + $0xc0] sm:%s616] %v721
      %v723 = vld [vmem:[%s623 + $0xd0] sm:%s616]
      %724 = vst [vmem:[%s624 + $0xc4] sm:%s616] %v723
      %v725 = vld [vmem:[%s623 + $0xc4] sm:%s616]
      %726 = vst [vmem:[%s624 + $0xc8] sm:%s616] %v725
      %v727 = vld [vmem:[%s623 + $0xd4] sm:%s616]
      %728 = vst [vmem:[%s624 + $0xcc] sm:%s616] %v727
      %v729 = vld [vmem:[%s623 + $0xc8] sm:%s616]
      %730 = vst [vmem:[%s624 + $0xd0] sm:%s616] %v729
      %v731 = vld [vmem:[%s623 + $0xd8] sm:%s616]
      %732 = vst [vmem:[%s624 + $0xd4] sm:%s616] %v731
      %v733 = vld [vmem:[%s623 + $0xcc] sm:%s616]
      %734 = vst [vmem:[%s624 + $0xd8] sm:%s616] %v733
      %v735 = vld [vmem:[%s623 + $0xdc] sm:%s616]
      %736 = vst [vmem:[%s624 + $0xdc] sm:%s616] %v735
      %v737 = vld [vmem:[%s623 + $0xe0] sm:%s616]
      %738 = vst [vmem:[%s624 + $0xe0] sm:%s616] %v737
      %v739 = vld [vmem:[%s623 + $0xf0] sm:%s616]
      %740 = vst [vmem:[%s624 + $0xe4] sm:%s616] %v739
      %v741 = vld [vmem:[%s623 + $0xe4] sm:%s616]
      %742 = vst [vmem:[%s624 + $0xe8] sm:%s616] %v741
      %v743 = vld [vmem:[%s623 + $0xf4] sm:%s616]
      %744 = vst [vmem:[%s624 + $0xec] sm:%s616] %v743
      %v745 = vld [vmem:[%s623 + $0xe8] sm:%s616]
      %746 = vst [vmem:[%s624 + $0xf0] sm:%s616] %v745
      %v747 = vld [vmem:[%s623 + $0xf8] sm:%s616]
      %748 = vst [vmem:[%s624 + $0xf4] sm:%s616] %v747
      %v749 = vld [vmem:[%s623 + $0xec] sm:%s616]
      %750 = vst [vmem:[%s624 + $0xf8] sm:%s616] %v749
      %v751 = vld [vmem:[%s623 + $0xfc] sm:%s616]
      %752 = vst [vmem:[%s624 + $0xfc] sm:%s616] %v751
      %v753 = vld [vmem:[%s623 + $0x100] sm:%s616]
      %754 = vst [vmem:[%s624 + $0x100] sm:%s616] %v753
      %v755 = vld [vmem:[%s623 + $0x110] sm:%s616]
      %756 = vst [vmem:[%s624 + $0x104] sm:%s616] %v755
      %v757 = vld [vmem:[%s623 + $0x104] sm:%s616]
      %758 = vst [vmem:[%s624 + $0x108] sm:%s616] %v757
      %v759 = vld [vmem:[%s623 + $0x114] sm:%s616]
      %760 = vst [vmem:[%s624 + $0x10c] sm:%s616] %v759
      %v761 = vld [vmem:[%s623 + $0x108] sm:%s616]
      %762 = vst [vmem:[%s624 + $0x110] sm:%s616] %v761
      %v763 = vld [vmem:[%s623 + $0x118] sm:%s616]
      %764 = vst [vmem:[%s624 + $0x114] sm:%s616] %v763
      %v765 = vld [vmem:[%s623 + $0x10c] sm:%s616]
      %766 = vst [vmem:[%s624 + $0x118] sm:%s616] %v765
      %v767 = vld [vmem:[%s623 + $0x11c] sm:%s616]
      %768 = vst [vmem:[%s624 + $0x11c] sm:%s616] %v767
      %v769 = vld [vmem:[%s623 + $0x120] sm:%s616]
      %770 = vst [vmem:[%s624 + $0x120] sm:%s616] %v769
      %v771 = vld [vmem:[%s623 + $0x130] sm:%s616]
      %772 = vst [vmem:[%s624 + $0x124] sm:%s616] %v771
      %v773 = vld [vmem:[%s623 + $0x124] sm:%s616]
      %774 = vst [vmem:[%s624 + $0x128] sm:%s616] %v773
      %v775 = vld [vmem:[%s623 + $0x134] sm:%s616]
      %776 = vst [vmem:[%s624 + $0x12c] sm:%s616] %v775
      %v777 = vld [vmem:[%s623 + $0x128] sm:%s616]
      %778 = vst [vmem:[%s624 + $0x130] sm:%s616] %v777
      %v779 = vld [vmem:[%s623 + $0x138] sm:%s616]
      %780 = vst [vmem:[%s624 + $0x134] sm:%s616] %v779
      %v781 = vld [vmem:[%s623 + $0x12c] sm:%s616]
      %782 = vst [vmem:[%s624 + $0x138] sm:%s616] %v781
      %v783 = vld [vmem:[%s623 + $0x13c] sm:%s616]
      %784 = vst [vmem:[%s624 + $0x13c] sm:%s616] %v783
      %v785 = vld [vmem:[%s623 + $0x140] sm:%s616]
      %786 = vst [vmem:[%s624 + $0x140] sm:%s616] %v785
      %v787 = vld [vmem:[%s623 + $0x150] sm:%s616]
      %788 = vst [vmem:[%s624 + $0x144] sm:%s616] %v787
      %v789 = vld [vmem:[%s623 + $0x144] sm:%s616]
      %790 = vst [vmem:[%s624 + $0x148] sm:%s616] %v789
      %v791 = vld [vmem:[%s623 + $0x154] sm:%s616]
      %792 = vst [vmem:[%s624 + $0x14c] sm:%s616] %v791
      %v793 = vld [vmem:[%s623 + $0x148] sm:%s616]
      %794 = vst [vmem:[%s624 + $0x150] sm:%s616] %v793
      %v795 = vld [vmem:[%s623 + $0x158] sm:%s616]
      %796 = vst [vmem:[%s624 + $0x154] sm:%s616] %v795
      %v797 = vld [vmem:[%s623 + $0x14c] sm:%s616]
      %798 = vst [vmem:[%s624 + $0x158] sm:%s616] %v797
      %v799 = vld [vmem:[%s623 + $0x15c] sm:%s616]
      %800 = vst [vmem:[%s624 + $0x15c] sm:%s616] %v799
      %v801 = vld [vmem:[%s623 + $0x160] sm:%s616]
      %802 = vst [vmem:[%s624 + $0x160] sm:%s616] %v801
      %v803 = vld [vmem:[%s623 + $0x170] sm:%s616]
      %804 = vst [vmem:[%s624 + $0x164] sm:%s616] %v803
      %v805 = vld [vmem:[%s623 + $0x164] sm:%s616]
      %806 = vst [vmem:[%s624 + $0x168] sm:%s616] %v805
      %v807 = vld [vmem:[%s623 + $0x174] sm:%s616]
      %808 = vst [vmem:[%s624 + $0x16c] sm:%s616] %v807
      %v809 = vld [vmem:[%s623 + $0x168] sm:%s616]
      %810 = vst [vmem:[%s624 + $0x170] sm:%s616] %v809
      %v811 = vld [vmem:[%s623 + $0x178] sm:%s616]
      %812 = vst [vmem:[%s624 + $0x174] sm:%s616] %v811
      %v813 = vld [vmem:[%s623 + $0x16c] sm:%s616]
      %814 = vst [vmem:[%s624 + $0x178] sm:%s616] %v813
      %v815 = vld [vmem:[%s623 + $0x17c] sm:%s616]
      %816 = vst [vmem:[%s624 + $0x17c] sm:%s616] %v815
      %v817 = vld [vmem:[%s623 + $0x180] sm:%s616]
      %818 = vst [vmem:[%s624 + $0x180] sm:%s616] %v817
      %v819 = vld [vmem:[%s623 + $0x190] sm:%s616]
      %820 = vst [vmem:[%s624 + $0x184] sm:%s616] %v819
      %v821 = vld [vmem:[%s623 + $0x184] sm:%s616]
      %822 = vst [vmem:[%s624 + $0x188] sm:%s616] %v821
      %v823 = vld [vmem:[%s623 + $0x194] sm:%s616]
      %824 = vst [vmem:[%s624 + $0x18c] sm:%s616] %v823
      %v825 = vld [vmem:[%s623 + $0x188] sm:%s616]
      %826 = vst [vmem:[%s624 + $0x190] sm:%s616] %v825
      %v827 = vld [vmem:[%s623 + $0x198] sm:%s616]
      %828 = vst [vmem:[%s624 + $0x194] sm:%s616] %v827
      %v829 = vld [vmem:[%s623 + $0x18c] sm:%s616]
      %830 = vst [vmem:[%s624 + $0x198] sm:%s616] %v829
      %v831 = vld [vmem:[%s623 + $0x19c] sm:%s616]
      %832 = vst [vmem:[%s624 + $0x19c] sm:%s616] %v831
      %v833 = vld [vmem:[%s623 + $0x1a0] sm:%s616]
      %834 = vst [vmem:[%s624 + $0x1a0] sm:%s616] %v833
      %v835 = vld [vmem:[%s623 + $0x1b0] sm:%s616]
      %836 = vst [vmem:[%s624 + $0x1a4] sm:%s616] %v835
      %v837 = vld [vmem:[%s623 + $0x1a4] sm:%s616]
      %838 = vst [vmem:[%s624 + $0x1a8] sm:%s616] %v837
      %v839 = vld [vmem:[%s623 + $0x1b4] sm:%s616]
      %840 = vst [vmem:[%s624 + $0x1ac] sm:%s616] %v839
      %v841 = vld [vmem:[%s623 + $0x1a8] sm:%s616]
      %842 = vst [vmem:[%s624 + $0x1b0] sm:%s616] %v841
      %v843 = vld [vmem:[%s623 + $0x1b8] sm:%s616]
      %844 = vst [vmem:[%s624 + $0x1b4] sm:%s616] %v843
      %v845 = vld [vmem:[%s623 + $0x1ac] sm:%s616]
      %846 = vst [vmem:[%s624 + $0x1b8] sm:%s616] %v845
      %v847 = vld [vmem:[%s623 + $0x1bc] sm:%s616]
      %848 = vst [vmem:[%s624 + $0x1bc] sm:%s616] %v847
      %v849 = vld [vmem:[%s623 + $0x1c0] sm:%s616]
      %850 = vst [vmem:[%s624 + $0x1c0] sm:%s616] %v849
      %v851 = vld [vmem:[%s623 + $0x1d0] sm:%s616]
      %852 = vst [vmem:[%s624 + $0x1c4] sm:%s616] %v851
      %v853 = vld [vmem:[%s623 + $0x1c4] sm:%s616]
      %854 = vst [vmem:[%s624 + $0x1c8] sm:%s616] %v853
      %v855 = vld [vmem:[%s623 + $0x1d4] sm:%s616]
      %856 = vst [vmem:[%s624 + $0x1cc] sm:%s616] %v855
      %v857 = vld [vmem:[%s623 + $0x1c8] sm:%s616]
      %858 = vst [vmem:[%s624 + $0x1d0] sm:%s616] %v857
      %v859 = vld [vmem:[%s623 + $0x1d8] sm:%s616]
      %860 = vst [vmem:[%s624 + $0x1d4] sm:%s616] %v859
      %v861 = vld [vmem:[%s623 + $0x1cc] sm:%s616]
      %862 = vst [vmem:[%s624 + $0x1d8] sm:%s616] %v861
      %v863 = vld [vmem:[%s623 + $0x1dc] sm:%s616]
      %864 = vst [vmem:[%s624 + $0x1dc] sm:%s616] %v863
      %v865 = vld [vmem:[%s623 + $0x1e0] sm:%s616]
      %866 = vst [vmem:[%s624 + $0x1e0] sm:%s616] %v865
      %v867 = vld [vmem:[%s623 + $0x1f0] sm:%s616]
      %868 = vst [vmem:[%s624 + $0x1e4] sm:%s616] %v867
      %v869 = vld [vmem:[%s623 + $0x1e4] sm:%s616]
      %870 = vst [vmem:[%s624 + $0x1e8] sm:%s616] %v869
      %v871 = vld [vmem:[%s623 + $0x1f4] sm:%s616]
      %872 = vst [vmem:[%s624 + $0x1ec] sm:%s616] %v871
      %v873 = vld [vmem:[%s623 + $0x1e8] sm:%s616]
      %874 = vst [vmem:[%s624 + $0x1f0] sm:%s616] %v873
      %v875 = vld [vmem:[%s623 + $0x1f8] sm:%s616]
      %876 = vst [vmem:[%s624 + $0x1f4] sm:%s616] %v875
      %v877 = vld [vmem:[%s623 + $0x1ec] sm:%s616]
      %878 = vst [vmem:[%s624 + $0x1f8] sm:%s616] %v877
      %v879 = vld [vmem:[%s623 + $0x1fc] sm:%s616]
      %880 = vst [vmem:[%s624 + $0x1fc] sm:%s616] %v879
      %v881 = vld [vmem:[%s623 + $0x200] sm:%s616]
      %882 = vst [vmem:[%s624 + $0x200] sm:%s616] %v881
      %v883 = vld [vmem:[%s623 + $0x210] sm:%s616]
      %884 = vst [vmem:[%s624 + $0x204] sm:%s616] %v883
      %v885 = vld [vmem:[%s623 + $0x204] sm:%s616]
      %886 = vst [vmem:[%s624 + $0x208] sm:%s616] %v885
      %v887 = vld [vmem:[%s623 + $0x214] sm:%s616]
      %888 = vst [vmem:[%s624 + $0x20c] sm:%s616] %v887
      %v889 = vld [vmem:[%s623 + $0x208] sm:%s616]
      %890 = vst [vmem:[%s624 + $0x210] sm:%s616] %v889
      %v891 = vld [vmem:[%s623 + $0x218] sm:%s616]
      %892 = vst [vmem:[%s624 + $0x214] sm:%s616] %v891
      %v893 = vld [vmem:[%s623 + $0x20c] sm:%s616]
      %894 = vst [vmem:[%s624 + $0x218] sm:%s616] %v893
      %v895 = vld [vmem:[%s623 + $0x21c] sm:%s616]
      %896 = vst [vmem:[%s624 + $0x21c] sm:%s616] %v895
      %v897 = vld [vmem:[%s623 + $0x220] sm:%s616]
      %898 = vst [vmem:[%s624 + $0x220] sm:%s616] %v897
      %v899 = vld [vmem:[%s623 + $0x230] sm:%s616]
      %900 = vst [vmem:[%s624 + $0x224] sm:%s616] %v899
      %v901 = vld [vmem:[%s623 + $0x224] sm:%s616]
      %902 = vst [vmem:[%s624 + $0x228] sm:%s616] %v901
      %v903 = vld [vmem:[%s623 + $0x234] sm:%s616]
      %904 = vst [vmem:[%s624 + $0x22c] sm:%s616] %v903
      %v905 = vld [vmem:[%s623 + $0x228] sm:%s616]
      %906 = vst [vmem:[%s624 + $0x230] sm:%s616] %v905
      %v907 = vld [vmem:[%s623 + $0x238] sm:%s616]
      %908 = vst [vmem:[%s624 + $0x234] sm:%s616] %v907
      %v909 = vld [vmem:[%s623 + $0x22c] sm:%s616]
      %910 = vst [vmem:[%s624 + $0x238] sm:%s616] %v909
      %v911 = vld [vmem:[%s623 + $0x23c] sm:%s616]
      %912 = vst [vmem:[%s624 + $0x23c] sm:%s616] %v911
      %v913 = vld [vmem:[%s623 + $0x240] sm:%s616]
      %914 = vst [vmem:[%s624 + $0x240] sm:%s616] %v913
      %v915 = vld [vmem:[%s623 + $0x250] sm:%s616]
      %916 = vst [vmem:[%s624 + $0x244] sm:%s616] %v915
      %v917 = vld [vmem:[%s623 + $0x244] sm:%s616]
      %918 = vst [vmem:[%s624 + $0x248] sm:%s616] %v917
      %v919 = vld [vmem:[%s623 + $0x254] sm:%s616]
      %920 = vst [vmem:[%s624 + $0x24c] sm:%s616] %v919
      %v921 = vld [vmem:[%s623 + $0x248] sm:%s616]
      %922 = vst [vmem:[%s624 + $0x250] sm:%s616] %v921
      %v923 = vld [vmem:[%s623 + $0x258] sm:%s616]
      %924 = vst [vmem:[%s624 + $0x254] sm:%s616] %v923
      %v925 = vld [vmem:[%s623 + $0x24c] sm:%s616]
      %926 = vst [vmem:[%s624 + $0x258] sm:%s616] %v925
      %v927 = vld [vmem:[%s623 + $0x25c] sm:%s616]
      %928 = vst [vmem:[%s624 + $0x25c] sm:%s616] %v927
      %v929 = vld [vmem:[%s623 + $0x260] sm:%s616]
      %930 = vst [vmem:[%s624 + $0x260] sm:%s616] %v929
      %v931 = vld [vmem:[%s623 + $0x270] sm:%s616]
      %932 = vst [vmem:[%s624 + $0x264] sm:%s616] %v931
      %v933 = vld [vmem:[%s623 + $0x264] sm:%s616]
      %934 = vst [vmem:[%s624 + $0x268] sm:%s616] %v933
      %v935 = vld [vmem:[%s623 + $0x274] sm:%s616]
      %936 = vst [vmem:[%s624 + $0x26c] sm:%s616] %v935
      %v937 = vld [vmem:[%s623 + $0x268] sm:%s616]
      %938 = vst [vmem:[%s624 + $0x270] sm:%s616] %v937
      %v939 = vld [vmem:[%s623 + $0x278] sm:%s616]
      %940 = vst [vmem:[%s624 + $0x274] sm:%s616] %v939
      %v941 = vld [vmem:[%s623 + $0x26c] sm:%s616]
      %942 = vst [vmem:[%s624 + $0x278] sm:%s616] %v941
      %v943 = vld [vmem:[%s623 + $0x27c] sm:%s616]
      %944 = vst [vmem:[%s624 + $0x27c] sm:%s616] %v943
      %v945 = vld [vmem:[%s623 + $0x280] sm:%s616]
      %946 = vst [vmem:[%s624 + $0x280] sm:%s616] %v945
      %v947 = vld [vmem:[%s623 + $0x290] sm:%s616]
      %948 = vst [vmem:[%s624 + $0x284] sm:%s616] %v947
      %v949 = vld [vmem:[%s623 + $0x284] sm:%s616]
      %950 = vst [vmem:[%s624 + $0x288] sm:%s616] %v949
      %v951 = vld [vmem:[%s623 + $0x294] sm:%s616]
      %952 = vst [vmem:[%s624 + $0x28c] sm:%s616] %v951
      %v953 = vld [vmem:[%s623 + $0x288] sm:%s616]
      %954 = vst [vmem:[%s624 + $0x290] sm:%s616] %v953
      %v955 = vld [vmem:[%s623 + $0x298] sm:%s616]
      %956 = vst [vmem:[%s624 + $0x294] sm:%s616] %v955
      %v957 = vld [vmem:[%s623 + $0x28c] sm:%s616]
      %958 = vst [vmem:[%s624 + $0x298] sm:%s616] %v957
      %v959 = vld [vmem:[%s623 + $0x29c] sm:%s616]
      %960 = vst [vmem:[%s624 + $0x29c] sm:%s616] %v959
      %v961 = vld [vmem:[%s623 + $0x2a0] sm:%s616]
      %962 = vst [vmem:[%s624 + $0x2a0] sm:%s616] %v961
      %v963 = vld [vmem:[%s623 + $0x2b0] sm:%s616]
      %964 = vst [vmem:[%s624 + $0x2a4] sm:%s616] %v963
      %v965 = vld [vmem:[%s623 + $0x2a4] sm:%s616]
      %966 = vst [vmem:[%s624 + $0x2a8] sm:%s616] %v965
      %v967 = vld [vmem:[%s623 + $0x2b4] sm:%s616]
      %968 = vst [vmem:[%s624 + $0x2ac] sm:%s616] %v967
      %v969 = vld [vmem:[%s623 + $0x2a8] sm:%s616]
      %970 = vst [vmem:[%s624 + $0x2b0] sm:%s616] %v969
      %v971 = vld [vmem:[%s623 + $0x2b8] sm:%s616]
      %972 = vst [vmem:[%s624 + $0x2b4] sm:%s616] %v971
      %v973 = vld [vmem:[%s623 + $0x2ac] sm:%s616]
      %974 = vst [vmem:[%s624 + $0x2b8] sm:%s616] %v973
      %v975 = vld [vmem:[%s623 + $0x2bc] sm:%s616]
      %976 = vst [vmem:[%s624 + $0x2bc] sm:%s616] %v975
      %v977 = vld [vmem:[%s623 + $0x2c0] sm:%s616]
      %978 = vst [vmem:[%s624 + $0x2c0] sm:%s616] %v977
      %v979 = vld [vmem:[%s623 + $0x2d0] sm:%s616]
      %980 = vst [vmem:[%s624 + $0x2c4] sm:%s616] %v979
      %v981 = vld [vmem:[%s623 + $0x2c4] sm:%s616]
      %982 = vst [vmem:[%s624 + $0x2c8] sm:%s616] %v981
      %v983 = vld [vmem:[%s623 + $0x2d4] sm:%s616]
      %984 = vst [vmem:[%s624 + $0x2cc] sm:%s616] %v983
      %v985 = vld [vmem:[%s623 + $0x2c8] sm:%s616]
      %986 = vst [vmem:[%s624 + $0x2d0] sm:%s616] %v985
      %v987 = vld [vmem:[%s623 + $0x2d8] sm:%s616]
      %988 = vst [vmem:[%s624 + $0x2d4] sm:%s616] %v987
      %v989 = vld [vmem:[%s623 + $0x2cc] sm:%s616]
      %990 = vst [vmem:[%s624 + $0x2d8] sm:%s616] %v989
      %v991 = vld [vmem:[%s623 + $0x2dc] sm:%s616]
      %992 = vst [vmem:[%s624 + $0x2dc] sm:%s616] %v991
      %v993 = vld [vmem:[%s623 + $0x2e0] sm:%s616]
      %994 = vst [vmem:[%s624 + $0x2e0] sm:%s616] %v993
      %v995 = vld [vmem:[%s623 + $0x2f0] sm:%s616]
      %996 = vst [vmem:[%s624 + $0x2e4] sm:%s616] %v995
      %v997 = vld [vmem:[%s623 + $0x2e4] sm:%s616]
      %998 = vst [vmem:[%s624 + $0x2e8] sm:%s616] %v997
      %v999 = vld [vmem:[%s623 + $0x2f4] sm:%s616]
      %1000 = vst [vmem:[%s624 + $0x2ec] sm:%s616] %v999
      %v1001 = vld [vmem:[%s623 + $0x2e8] sm:%s616]
      %1002 = vst [vmem:[%s624 + $0x2f0] sm:%s616] %v1001
      %v1003 = vld [vmem:[%s623 + $0x2f8] sm:%s616]
      %1004 = vst [vmem:[%s624 + $0x2f4] sm:%s616] %v1003
      %v1005 = vld [vmem:[%s623 + $0x2ec] sm:%s616]
      %1006 = vst [vmem:[%s624 + $0x2f8] sm:%s616] %v1005
      %v1007 = vld [vmem:[%s623 + $0x2fc] sm:%s616]
      %1008 = vst [vmem:[%s624 + $0x2fc] sm:%s616] %v1007
      %v1009 = vld [vmem:[%s623 + $0x300] sm:%s616]
      %1010 = vst [vmem:[%s624 + $0x300] sm:%s616] %v1009
      %v1011 = vld [vmem:[%s623 + $0x310] sm:%s616]
      %1012 = vst [vmem:[%s624 + $0x304] sm:%s616] %v1011
      %v1013 = vld [vmem:[%s623 + $0x304] sm:%s616]
      %1014 = vst [vmem:[%s624 + $0x308] sm:%s616] %v1013
      %v1015 = vld [vmem:[%s623 + $0x314] sm:%s616]
      %1016 = vst [vmem:[%s624 + $0x30c] sm:%s616] %v1015
      %v1017 = vld [vmem:[%s623 + $0x308] sm:%s616]
      %1018 = vst [vmem:[%s624 + $0x310] sm:%s616] %v1017
      %v1019 = vld [vmem:[%s623 + $0x318] sm:%s616]
      %1020 = vst [vmem:[%s624 + $0x314] sm:%s616] %v1019
      %v1021 = vld [vmem:[%s623 + $0x30c] sm:%s616]
      %1022 = vst [vmem:[%s624 + $0x318] sm:%s616] %v1021
      %v1023 = vld [vmem:[%s623 + $0x31c] sm:%s616]
      %1024 = vst [vmem:[%s624 + $0x31c] sm:%s616] %v1023
      %v1025 = vld [vmem:[%s623 + $0x320] sm:%s616]
      %1026 = vst [vmem:[%s624 + $0x320] sm:%s616] %v1025
      %v1027 = vld [vmem:[%s623 + $0x330] sm:%s616]
      %1028 = vst [vmem:[%s624 + $0x324] sm:%s616] %v1027
      %v1029 = vld [vmem:[%s623 + $0x324] sm:%s616]
      %1030 = vst [vmem:[%s624 + $0x328] sm:%s616] %v1029
      %v1031 = vld [vmem:[%s623 + $0x334] sm:%s616]
      %1032 = vst [vmem:[%s624 + $0x32c] sm:%s616] %v1031
      %v1033 = vld [vmem:[%s623 + $0x328] sm:%s616]
      %1034 = vst [vmem:[%s624 + $0x330] sm:%s616] %v1033
      %v1035 = vld [vmem:[%s623 + $0x338] sm:%s616]
      %1036 = vst [vmem:[%s624 + $0x334] sm:%s616] %v1035
      %v1037 = vld [vmem:[%s623 + $0x32c] sm:%s616]
      %1038 = vst [vmem:[%s624 + $0x338] sm:%s616] %v1037
      %v1039 = vld [vmem:[%s623 + $0x33c] sm:%s616]
      %1040 = vst [vmem:[%s624 + $0x33c] sm:%s616] %v1039
      %v1041 = vld [vmem:[%s623 + $0x340] sm:%s616]
      %1042 = vst [vmem:[%s624 + $0x340] sm:%s616] %v1041
      %v1043 = vld [vmem:[%s623 + $0x350] sm:%s616]
      %1044 = vst [vmem:[%s624 + $0x344] sm:%s616] %v1043
      %v1045 = vld [vmem:[%s623 + $0x344] sm:%s616]
      %1046 = vst [vmem:[%s624 + $0x348] sm:%s616] %v1045
      %v1047 = vld [vmem:[%s623 + $0x354] sm:%s616]
      %1048 = vst [vmem:[%s624 + $0x34c] sm:%s616] %v1047
      %v1049 = vld [vmem:[%s623 + $0x348] sm:%s616]
      %1050 = vst [vmem:[%s624 + $0x350] sm:%s616] %v1049
      %v1051 = vld [vmem:[%s623 + $0x358] sm:%s616]
      %1052 = vst [vmem:[%s624 + $0x354] sm:%s616] %v1051
      %v1053 = vld [vmem:[%s623 + $0x34c] sm:%s616]
      %1054 = vst [vmem:[%s624 + $0x358] sm:%s616] %v1053
      %v1055 = vld [vmem:[%s623 + $0x35c] sm:%s616]
      %1056 = vst [vmem:[%s624 + $0x35c] sm:%s616] %v1055
      %v1057 = vld [vmem:[%s623 + $0x360] sm:%s616]
      %1058 = vst [vmem:[%s624 + $0x360] sm:%s616] %v1057
      %v1059 = vld [vmem:[%s623 + $0x370] sm:%s616]
      %1060 = vst [vmem:[%s624 + $0x364] sm:%s616] %v1059
      %v1061 = vld [vmem:[%s623 + $0x364] sm:%s616]
      %1062 = vst [vmem:[%s624 + $0x368] sm:%s616] %v1061
      %v1063 = vld [vmem:[%s623 + $0x374] sm:%s616]
      %1064 = vst [vmem:[%s624 + $0x36c] sm:%s616] %v1063
      %v1065 = vld [vmem:[%s623 + $0x368] sm:%s616]
      %1066 = vst [vmem:[%s624 + $0x370] sm:%s616] %v1065
      %v1067 = vld [vmem:[%s623 + $0x378] sm:%s616]
      %1068 = vst [vmem:[%s624 + $0x374] sm:%s616] %v1067
      %v1069 = vld [vmem:[%s623 + $0x36c] sm:%s616]
      %1070 = vst [vmem:[%s624 + $0x378] sm:%s616] %v1069
      %v1071 = vld [vmem:[%s623 + $0x37c] sm:%s616]
      %1072 = vst [vmem:[%s624 + $0x37c] sm:%s616] %v1071
      %v1073 = vld [vmem:[%s623 + $0x380] sm:%s616]
      %1074 = vst [vmem:[%s624 + $0x380] sm:%s616] %v1073
      %v1075 = vld [vmem:[%s623 + $0x390] sm:%s616]
      %1076 = vst [vmem:[%s624 + $0x384] sm:%s616] %v1075
      %v1077 = vld [vmem:[%s623 + $0x384] sm:%s616]
      %1078 = vst [vmem:[%s624 + $0x388] sm:%s616] %v1077
      %v1079 = vld [vmem:[%s623 + $0x394] sm:%s616]
      %1080 = vst [vmem:[%s624 + $0x38c] sm:%s616] %v1079
      %v1081 = vld [vmem:[%s623 + $0x388] sm:%s616]
      %1082 = vst [vmem:[%s624 + $0x390] sm:%s616] %v1081
      %v1083 = vld [vmem:[%s623 + $0x398] sm:%s616]
      %1084 = vst [vmem:[%s624 + $0x394] sm:%s616] %v1083
      %v1085 = vld [vmem:[%s623 + $0x38c] sm:%s616]
      %1086 = vst [vmem:[%s624 + $0x398] sm:%s616] %v1085
      %v1087 = vld [vmem:[%s623 + $0x39c] sm:%s616]
      %1088 = vst [vmem:[%s624 + $0x39c] sm:%s616] %v1087
      %v1089 = vld [vmem:[%s623 + $0x3a0] sm:%s616]
      %1090 = vst [vmem:[%s624 + $0x3a0] sm:%s616] %v1089
      %v1091 = vld [vmem:[%s623 + $0x3b0] sm:%s616]
      %1092 = vst [vmem:[%s624 + $0x3a4] sm:%s616] %v1091
      %v1093 = vld [vmem:[%s623 + $0x3a4] sm:%s616]
      %1094 = vst [vmem:[%s624 + $0x3a8] sm:%s616] %v1093
      %v1095 = vld [vmem:[%s623 + $0x3b4] sm:%s616]
      %1096 = vst [vmem:[%s624 + $0x3ac] sm:%s616] %v1095
      %v1097 = vld [vmem:[%s623 + $0x3a8] sm:%s616]
      %1098 = vst [vmem:[%s624 + $0x3b0] sm:%s616] %v1097
      %v1099 = vld [vmem:[%s623 + $0x3b8] sm:%s616]
      %1100 = vst [vmem:[%s624 + $0x3b4] sm:%s616] %v1099
      %v1101 = vld [vmem:[%s623 + $0x3ac] sm:%s616]
      %1102 = vst [vmem:[%s624 + $0x3b8] sm:%s616] %v1101
      %v1103 = vld [vmem:[%s623 + $0x3bc] sm:%s616]
      %1104 = vst [vmem:[%s624 + $0x3bc] sm:%s616] %v1103
      %v1105 = vld [vmem:[%s623 + $0x3c0] sm:%s616]
      %1106 = vst [vmem:[%s624 + $0x3c0] sm:%s616] %v1105
      %v1107 = vld [vmem:[%s623 + $0x3d0] sm:%s616]
      %1108 = vst [vmem:[%s624 + $0x3c4] sm:%s616] %v1107
      %v1109 = vld [vmem:[%s623 + $0x3c4] sm:%s616]
      %1110 = vst [vmem:[%s624 + $0x3c8] sm:%s616] %v1109
      %v1111 = vld [vmem:[%s623 + $0x3d4] sm:%s616]
      %1112 = vst [vmem:[%s624 + $0x3cc] sm:%s616] %v1111
      %v1113 = vld [vmem:[%s623 + $0x3c8] sm:%s616]
      %1114 = vst [vmem:[%s624 + $0x3d0] sm:%s616] %v1113
      %v1115 = vld [vmem:[%s623 + $0x3d8] sm:%s616]
      %1116 = vst [vmem:[%s624 + $0x3d4] sm:%s616] %v1115
      %v1117 = vld [vmem:[%s623 + $0x3cc] sm:%s616]
      %1118 = vst [vmem:[%s624 + $0x3d8] sm:%s616] %v1117
      %v1119 = vld [vmem:[%s623 + $0x3dc] sm:%s616]
      %1120 = vst [vmem:[%s624 + $0x3dc] sm:%s616] %v1119
      %v1121 = vld [vmem:[%s623 + $0x3e0] sm:%s616]
      %1122 = vst [vmem:[%s624 + $0x3e0] sm:%s616] %v1121
      %v1123 = vld [vmem:[%s623 + $0x3f0] sm:%s616]
      %1124 = vst [vmem:[%s624 + $0x3e4] sm:%s616] %v1123
      %v1125 = vld [vmem:[%s623 + $0x3e4] sm:%s616]
      %1126 = vst [vmem:[%s624 + $0x3e8] sm:%s616] %v1125
      %v1127 = vld [vmem:[%s623 + $0x3f4] sm:%s616]
      %1128 = vst [vmem:[%s624 + $0x3ec] sm:%s616] %v1127
      %v1129 = vld [vmem:[%s623 + $0x3e8] sm:%s616]
      %1130 = vst [vmem:[%s624 + $0x3f0] sm:%s616] %v1129
      %v1131 = vld [vmem:[%s623 + $0x3f8] sm:%s616]
      %1132 = vst [vmem:[%s624 + $0x3f4] sm:%s616] %v1131
      %v1133 = vld [vmem:[%s623 + $0x3ec] sm:%s616]
      %1134 = vst [vmem:[%s624 + $0x3f8] sm:%s616] %v1133
      %v1135 = vld [vmem:[%s623 + $0x3fc] sm:%s616]
      %1136 = vst [vmem:[%s624 + $0x3fc] sm:%s616] %v1135
      %v1137 = vld [vmem:[%s623 + $0x400] sm:%s616]
      %1138 = vst [vmem:[%s624 + $0x400] sm:%s616] %v1137
      %v1139 = vld [vmem:[%s623 + $0x410] sm:%s616]
      %1140 = vst [vmem:[%s624 + $0x404] sm:%s616] %v1139
      %v1141 = vld [vmem:[%s623 + $0x404] sm:%s616]
      %1142 = vst [vmem:[%s624 + $0x408] sm:%s616] %v1141
      %v1143 = vld [vmem:[%s623 + $0x414] sm:%s616]
      %1144 = vst [vmem:[%s624 + $0x40c] sm:%s616] %v1143
      %v1145 = vld [vmem:[%s623 + $0x408] sm:%s616]
      %1146 = vst [vmem:[%s624 + $0x410] sm:%s616] %v1145
      %v1147 = vld [vmem:[%s623 + $0x418] sm:%s616]
      %1148 = vst [vmem:[%s624 + $0x414] sm:%s616] %v1147
      %v1149 = vld [vmem:[%s623 + $0x40c] sm:%s616]
      %1150 = vst [vmem:[%s624 + $0x418] sm:%s616] %v1149
      %v1151 = vld [vmem:[%s623 + $0x41c] sm:%s616]
      %1152 = vst [vmem:[%s624 + $0x41c] sm:%s616] %v1151
      %v1153 = vld [vmem:[%s623 + $0x420] sm:%s616]
      %1154 = vst [vmem:[%s624 + $0x420] sm:%s616] %v1153
      %v1155 = vld [vmem:[%s623 + $0x430] sm:%s616]
      %1156 = vst [vmem:[%s624 + $0x424] sm:%s616] %v1155
      %v1157 = vld [vmem:[%s623 + $0x424] sm:%s616]
      %1158 = vst [vmem:[%s624 + $0x428] sm:%s616] %v1157
      %v1159 = vld [vmem:[%s623 + $0x434] sm:%s616]
      %1160 = vst [vmem:[%s624 + $0x42c] sm:%s616] %v1159
      %v1161 = vld [vmem:[%s623 + $0x428] sm:%s616]
      %1162 = vst [vmem:[%s624 + $0x430] sm:%s616] %v1161
      %v1163 = vld [vmem:[%s623 + $0x438] sm:%s616]
      %1164 = vst [vmem:[%s624 + $0x434] sm:%s616] %v1163
      %v1165 = vld [vmem:[%s623 + $0x42c] sm:%s616]
      %1166 = vst [vmem:[%s624 + $0x438] sm:%s616] %v1165
      %v1167 = vld [vmem:[%s623 + $0x43c] sm:%s616]
      %1168 = vst [vmem:[%s624 + $0x43c] sm:%s616] %v1167
      %v1169 = vld [vmem:[%s623 + $0x440] sm:%s616]
      %1170 = vst [vmem:[%s624 + $0x440] sm:%s616] %v1169
      %v1171 = vld [vmem:[%s623 + $0x450] sm:%s616]
      %1172 = vst [vmem:[%s624 + $0x444] sm:%s616] %v1171
      %v1173 = vld [vmem:[%s623 + $0x444] sm:%s616]
      %1174 = vst [vmem:[%s624 + $0x448] sm:%s616] %v1173
      %v1175 = vld [vmem:[%s623 + $0x454] sm:%s616]
      %1176 = vst [vmem:[%s624 + $0x44c] sm:%s616] %v1175
      %v1177 = vld [vmem:[%s623 + $0x448] sm:%s616]
      %1178 = vst [vmem:[%s624 + $0x450] sm:%s616] %v1177
      %v1179 = vld [vmem:[%s623 + $0x458] sm:%s616]
      %1180 = vst [vmem:[%s624 + $0x454] sm:%s616] %v1179
      %v1181 = vld [vmem:[%s623 + $0x44c] sm:%s616]
      %1182 = vst [vmem:[%s624 + $0x458] sm:%s616] %v1181
      %v1183 = vld [vmem:[%s623 + $0x45c] sm:%s616]
      %1184 = vst [vmem:[%s624 + $0x45c] sm:%s616] %v1183
      %v1185 = vld [vmem:[%s623 + $0x460] sm:%s616]
      %1186 = vst [vmem:[%s624 + $0x460] sm:%s616] %v1185
      %v1187 = vld [vmem:[%s623 + $0x470] sm:%s616]
      %1188 = vst [vmem:[%s624 + $0x464] sm:%s616] %v1187
      %v1189 = vld [vmem:[%s623 + $0x464] sm:%s616]
      %1190 = vst [vmem:[%s624 + $0x468] sm:%s616] %v1189
      %v1191 = vld [vmem:[%s623 + $0x474] sm:%s616]
      %1192 = vst [vmem:[%s624 + $0x46c] sm:%s616] %v1191
      %v1193 = vld [vmem:[%s623 + $0x468] sm:%s616]
      %1194 = vst [vmem:[%s624 + $0x470] sm:%s616] %v1193
      %v1195 = vld [vmem:[%s623 + $0x478] sm:%s616]
      %1196 = vst [vmem:[%s624 + $0x474] sm:%s616] %v1195
      %v1197 = vld [vmem:[%s623 + $0x46c] sm:%s616]
      %1198 = vst [vmem:[%s624 + $0x478] sm:%s616] %v1197
      %v1199 = vld [vmem:[%s623 + $0x47c] sm:%s616]
      %1200 = vst [vmem:[%s624 + $0x47c] sm:%s616] %v1199
      %v1201 = vld [vmem:[%s623 + $0x480] sm:%s616]
      %1202 = vst [vmem:[%s624 + $0x480] sm:%s616] %v1201
      %v1203 = vld [vmem:[%s623 + $0x490] sm:%s616]
      %1204 = vst [vmem:[%s624 + $0x484] sm:%s616] %v1203
      %v1205 = vld [vmem:[%s623 + $0x484] sm:%s616]
      %1206 = vst [vmem:[%s624 + $0x488] sm:%s616] %v1205
      %v1207 = vld [vmem:[%s623 + $0x494] sm:%s616]
      %1208 = vst [vmem:[%s624 + $0x48c] sm:%s616] %v1207
      %v1209 = vld [vmem:[%s623 + $0x488] sm:%s616]
      %1210 = vst [vmem:[%s624 + $0x490] sm:%s616] %v1209
      %v1211 = vld [vmem:[%s623 + $0x498] sm:%s616]
      %1212 = vst [vmem:[%s624 + $0x494] sm:%s616] %v1211
      %v1213 = vld [vmem:[%s623 + $0x48c] sm:%s616]
      %1214 = vst [vmem:[%s624 + $0x498] sm:%s616] %v1213
      %v1215 = vld [vmem:[%s623 + $0x49c] sm:%s616]
      %1216 = vst [vmem:[%s624 + $0x49c] sm:%s616] %v1215
      %v1217 = vld [vmem:[%s623 + $0x4a0] sm:%s616]
      %1218 = vst [vmem:[%s624 + $0x4a0] sm:%s616] %v1217
      %v1219 = vld [vmem:[%s623 + $0x4b0] sm:%s616]
      %1220 = vst [vmem:[%s624 + $0x4a4] sm:%s616] %v1219
      %v1221 = vld [vmem:[%s623 + $0x4a4] sm:%s616]
      %1222 = vst [vmem:[%s624 + $0x4a8] sm:%s616] %v1221
      %v1223 = vld [vmem:[%s623 + $0x4b4] sm:%s616]
      %1224 = vst [vmem:[%s624 + $0x4ac] sm:%s616] %v1223
      %v1225 = vld [vmem:[%s623 + $0x4a8] sm:%s616]
      %1226 = vst [vmem:[%s624 + $0x4b0] sm:%s616] %v1225
      %v1227 = vld [vmem:[%s623 + $0x4b8] sm:%s616]
      %1228 = vst [vmem:[%s624 + $0x4b4] sm:%s616] %v1227
      %v1229 = vld [vmem:[%s623 + $0x4ac] sm:%s616]
      %1230 = vst [vmem:[%s624 + $0x4b8] sm:%s616] %v1229
      %v1231 = vld [vmem:[%s623 + $0x4bc] sm:%s616]
      %1232 = vst [vmem:[%s624 + $0x4bc] sm:%s616] %v1231
      %v1233 = vld [vmem:[%s623 + $0x4c0] sm:%s616]
      %1234 = vst [vmem:[%s624 + $0x4c0] sm:%s616] %v1233
      %v1235 = vld [vmem:[%s623 + $0x4d0] sm:%s616]
      %1236 = vst [vmem:[%s624 + $0x4c4] sm:%s616] %v1235
      %v1237 = vld [vmem:[%s623 + $0x4c4] sm:%s616]
      %1238 = vst [vmem:[%s624 + $0x4c8] sm:%s616] %v1237
      %v1239 = vld [vmem:[%s623 + $0x4d4] sm:%s616]
      %1240 = vst [vmem:[%s624 + $0x4cc] sm:%s616] %v1239
      %v1241 = vld [vmem:[%s623 + $0x4c8] sm:%s616]
      %1242 = vst [vmem:[%s624 + $0x4d0] sm:%s616] %v1241
      %v1243 = vld [vmem:[%s623 + $0x4d8] sm:%s616]
      %1244 = vst [vmem:[%s624 + $0x4d4] sm:%s616] %v1243
      %v1245 = vld [vmem:[%s623 + $0x4cc] sm:%s616]
      %1246 = vst [vmem:[%s624 + $0x4d8] sm:%s616] %v1245
      %v1247 = vld [vmem:[%s623 + $0x4dc] sm:%s616]
      %1248 = vst [vmem:[%s624 + $0x4dc] sm:%s616] %v1247
      %v1249 = vld [vmem:[%s623 + $0x4e0] sm:%s616]
      %1250 = vst [vmem:[%s624 + $0x4e0] sm:%s616] %v1249
      %v1251 = vld [vmem:[%s623 + $0x4f0] sm:%s616]
      %1252 = vst [vmem:[%s624 + $0x4e4] sm:%s616] %v1251
      %v1253 = vld [vmem:[%s623 + $0x4e4] sm:%s616]
      %1254 = vst [vmem:[%s624 + $0x4e8] sm:%s616] %v1253
      %v1255 = vld [vmem:[%s623 + $0x4f4] sm:%s616]
      %1256 = vst [vmem:[%s624 + $0x4ec] sm:%s616] %v1255
      %v1257 = vld [vmem:[%s623 + $0x4e8] sm:%s616]
      %1258 = vst [vmem:[%s624 + $0x4f0] sm:%s616] %v1257
      %v1259 = vld [vmem:[%s623 + $0x4f8] sm:%s616]
      %1260 = vst [vmem:[%s624 + $0x4f4] sm:%s616] %v1259
      %v1261 = vld [vmem:[%s623 + $0x4ec] sm:%s616]
      %1262 = vst [vmem:[%s624 + $0x4f8] sm:%s616] %v1261
      %v1263 = vld [vmem:[%s623 + $0x4fc] sm:%s616]
      %1264 = vst [vmem:[%s624 + $0x4fc] sm:%s616] %v1263
      %v1265 = vld [vmem:[%s623 + $0x500] sm:%s616]
      %1266 = vst [vmem:[%s624 + $0x500] sm:%s616] %v1265
      %v1267 = vld [vmem:[%s623 + $0x510] sm:%s616]
      %1268 = vst [vmem:[%s624 + $0x504] sm:%s616] %v1267
      %v1269 = vld [vmem:[%s623 + $0x504] sm:%s616]
      %1270 = vst [vmem:[%s624 + $0x508] sm:%s616] %v1269
      %v1271 = vld [vmem:[%s623 + $0x514] sm:%s616]
      %1272 = vst [vmem:[%s624 + $0x50c] sm:%s616] %v1271
      %v1273 = vld [vmem:[%s623 + $0x508] sm:%s616]
      %1274 = vst [vmem:[%s624 + $0x510] sm:%s616] %v1273
      %v1275 = vld [vmem:[%s623 + $0x518] sm:%s616]
      %1276 = vst [vmem:[%s624 + $0x514] sm:%s616] %v1275
      %v1277 = vld [vmem:[%s623 + $0x50c] sm:%s616]
      %1278 = vst [vmem:[%s624 + $0x518] sm:%s616] %v1277
      %v1279 = vld [vmem:[%s623 + $0x51c] sm:%s616]
      %1280 = vst [vmem:[%s624 + $0x51c] sm:%s616] %v1279
      %v1281 = vld [vmem:[%s623 + $0x520] sm:%s616]
      %1282 = vst [vmem:[%s624 + $0x520] sm:%s616] %v1281
      %v1283 = vld [vmem:[%s623 + $0x530] sm:%s616]
      %1284 = vst [vmem:[%s624 + $0x524] sm:%s616] %v1283
      %v1285 = vld [vmem:[%s623 + $0x524] sm:%s616]
      %1286 = vst [vmem:[%s624 + $0x528] sm:%s616] %v1285
      %v1287 = vld [vmem:[%s623 + $0x534] sm:%s616]
      %1288 = vst [vmem:[%s624 + $0x52c] sm:%s616] %v1287
      %v1289 = vld [vmem:[%s623 + $0x528] sm:%s616]
      %1290 = vst [vmem:[%s624 + $0x530] sm:%s616] %v1289
      %v1291 = vld [vmem:[%s623 + $0x538] sm:%s616]
      %1292 = vst [vmem:[%s624 + $0x534] sm:%s616] %v1291
      %v1293 = vld [vmem:[%s623 + $0x52c] sm:%s616]
      %1294 = vst [vmem:[%s624 + $0x538] sm:%s616] %v1293
      %v1295 = vld [vmem:[%s623 + $0x53c] sm:%s616]
      %1296 = vst [vmem:[%s624 + $0x53c] sm:%s616] %v1295
      %v1297 = vld [vmem:[%s623 + $0x540] sm:%s616]
      %1298 = vst [vmem:[%s624 + $0x540] sm:%s616] %v1297
      %v1299 = vld [vmem:[%s623 + $0x550] sm:%s616]
      %1300 = vst [vmem:[%s624 + $0x544] sm:%s616] %v1299
      %v1301 = vld [vmem:[%s623 + $0x544] sm:%s616]
      %1302 = vst [vmem:[%s624 + $0x548] sm:%s616] %v1301
      %v1303 = vld [vmem:[%s623 + $0x554] sm:%s616]
      %1304 = vst [vmem:[%s624 + $0x54c] sm:%s616] %v1303
      %v1305 = vld [vmem:[%s623 + $0x548] sm:%s616]
      %1306 = vst [vmem:[%s624 + $0x550] sm:%s616] %v1305
      %v1307 = vld [vmem:[%s623 + $0x558] sm:%s616]
      %1308 = vst [vmem:[%s624 + $0x554] sm:%s616] %v1307
      %v1309 = vld [vmem:[%s623 + $0x54c] sm:%s616]
      %1310 = vst [vmem:[%s624 + $0x558] sm:%s616] %v1309
      %v1311 = vld [vmem:[%s623 + $0x55c] sm:%s616]
      %1312 = vst [vmem:[%s624 + $0x55c] sm:%s616] %v1311
      %v1313 = vld [vmem:[%s623 + $0x560] sm:%s616]
      %1314 = vst [vmem:[%s624 + $0x560] sm:%s616] %v1313
      %v1315 = vld [vmem:[%s623 + $0x570] sm:%s616]
      %1316 = vst [vmem:[%s624 + $0x564] sm:%s616] %v1315
      %v1317 = vld [vmem:[%s623 + $0x564] sm:%s616]
      %1318 = vst [vmem:[%s624 + $0x568] sm:%s616] %v1317
      %v1319 = vld [vmem:[%s623 + $0x574] sm:%s616]
      %1320 = vst [vmem:[%s624 + $0x56c] sm:%s616] %v1319
      %v1321 = vld [vmem:[%s623 + $0x568] sm:%s616]
      %1322 = vst [vmem:[%s624 + $0x570] sm:%s616] %v1321
      %v1323 = vld [vmem:[%s623 + $0x578] sm:%s616]
      %1324 = vst [vmem:[%s624 + $0x574] sm:%s616] %v1323
      %v1325 = vld [vmem:[%s623 + $0x56c] sm:%s616]
      %1326 = vst [vmem:[%s624 + $0x578] sm:%s616] %v1325
      %v1327 = vld [vmem:[%s623 + $0x57c] sm:%s616]
      %1328 = vst [vmem:[%s624 + $0x57c] sm:%s616] %v1327
      %v1329 = vld [vmem:[%s623 + $0x580] sm:%s616]
      %1330 = vst [vmem:[%s624 + $0x580] sm:%s616] %v1329
      %v1331 = vld [vmem:[%s623 + $0x590] sm:%s616]
      %1332 = vst [vmem:[%s624 + $0x584] sm:%s616] %v1331
      %v1333 = vld [vmem:[%s623 + $0x584] sm:%s616]
      %1334 = vst [vmem:[%s624 + $0x588] sm:%s616] %v1333
      %v1335 = vld [vmem:[%s623 + $0x594] sm:%s616]
      %1336 = vst [vmem:[%s624 + $0x58c] sm:%s616] %v1335
      %v1337 = vld [vmem:[%s623 + $0x588] sm:%s616]
      %1338 = vst [vmem:[%s624 + $0x590] sm:%s616] %v1337
      %v1339 = vld [vmem:[%s623 + $0x598] sm:%s616]
      %1340 = vst [vmem:[%s624 + $0x594] sm:%s616] %v1339
      %v1341 = vld [vmem:[%s623 + $0x58c] sm:%s616]
      %1342 = vst [vmem:[%s624 + $0x598] sm:%s616] %v1341
      %v1343 = vld [vmem:[%s623 + $0x59c] sm:%s616]
      %1344 = vst [vmem:[%s624 + $0x59c] sm:%s616] %v1343
      %v1345 = vld [vmem:[%s623 + $0x5a0] sm:%s616]
      %1346 = vst [vmem:[%s624 + $0x5a0] sm:%s616] %v1345
      %v1347 = vld [vmem:[%s623 + $0x5b0] sm:%s616]
      %1348 = vst [vmem:[%s624 + $0x5a4] sm:%s616] %v1347
      %v1349 = vld [vmem:[%s623 + $0x5a4] sm:%s616]
      %1350 = vst [vmem:[%s624 + $0x5a8] sm:%s616] %v1349
      %v1351 = vld [vmem:[%s623 + $0x5b4] sm:%s616]
      %1352 = vst [vmem:[%s624 + $0x5ac] sm:%s616] %v1351
      %v1353 = vld [vmem:[%s623 + $0x5a8] sm:%s616]
      %1354 = vst [vmem:[%s624 + $0x5b0] sm:%s616] %v1353
      %v1355 = vld [vmem:[%s623 + $0x5b8] sm:%s616]
      %1356 = vst [vmem:[%s624 + $0x5b4] sm:%s616] %v1355
      %v1357 = vld [vmem:[%s623 + $0x5ac] sm:%s616]
      %1358 = vst [vmem:[%s624 + $0x5b8] sm:%s616] %v1357
      %v1359 = vld [vmem:[%s623 + $0x5bc] sm:%s616]
      %1360 = vst [vmem:[%s624 + $0x5bc] sm:%s616] %v1359
      %v1361 = vld [vmem:[%s623 + $0x5c0] sm:%s616]
      %1362 = vst [vmem:[%s624 + $0x5c0] sm:%s616] %v1361
      %v1363 = vld [vmem:[%s623 + $0x5d0] sm:%s616]
      %1364 = vst [vmem:[%s624 + $0x5c4] sm:%s616] %v1363
      %v1365 = vld [vmem:[%s623 + $0x5c4] sm:%s616]
      %1366 = vst [vmem:[%s624 + $0x5c8] sm:%s616] %v1365
      %v1367 = vld [vmem:[%s623 + $0x5d4] sm:%s616]
      %1368 = vst [vmem:[%s624 + $0x5cc] sm:%s616] %v1367
      %v1369 = vld [vmem:[%s623 + $0x5c8] sm:%s616]
      %1370 = vst [vmem:[%s624 + $0x5d0] sm:%s616] %v1369
      %v1371 = vld [vmem:[%s623 + $0x5d8] sm:%s616]
      %1372 = vst [vmem:[%s624 + $0x5d4] sm:%s616] %v1371
      %v1373 = vld [vmem:[%s623 + $0x5cc] sm:%s616]
      %1374 = vst [vmem:[%s624 + $0x5d8] sm:%s616] %v1373
      %v1375 = vld [vmem:[%s623 + $0x5dc] sm:%s616]
      %1376 = vst [vmem:[%s624 + $0x5dc] sm:%s616] %v1375
      %v1377 = vld [vmem:[%s623 + $0x5e0] sm:%s616]
      %1378 = vst [vmem:[%s624 + $0x5e0] sm:%s616] %v1377
      %v1379 = vld [vmem:[%s623 + $0x5f0] sm:%s616]
      %1380 = vst [vmem:[%s624 + $0x5e4] sm:%s616] %v1379
      %v1381 = vld [vmem:[%s623 + $0x5e4] sm:%s616]
      %1382 = vst [vmem:[%s624 + $0x5e8] sm:%s616] %v1381
      %v1383 = vld [vmem:[%s623 + $0x5f4] sm:%s616]
      %1384 = vst [vmem:[%s624 + $0x5ec] sm:%s616] %v1383
      %v1385 = vld [vmem:[%s623 + $0x5e8] sm:%s616]
      %1386 = vst [vmem:[%s624 + $0x5f0] sm:%s616] %v1385
      %v1387 = vld [vmem:[%s623 + $0x5f8] sm:%s616]
      %1388 = vst [vmem:[%s624 + $0x5f4] sm:%s616] %v1387
      %v1389 = vld [vmem:[%s623 + $0x5ec] sm:%s616]
      %1390 = vst [vmem:[%s624 + $0x5f8] sm:%s616] %v1389
      %v1391 = vld [vmem:[%s623 + $0x5fc] sm:%s616]
      %1392 = vst [vmem:[%s624 + $0x5fc] sm:%s616] %v1391
      %v1393 = vld [vmem:[%s623 + $0x600] sm:%s616]
      %1394 = vst [vmem:[%s624 + $0x600] sm:%s616] %v1393
      %v1395 = vld [vmem:[%s623 + $0x610] sm:%s616]
      %1396 = vst [vmem:[%s624 + $0x604] sm:%s616] %v1395
      %v1397 = vld [vmem:[%s623 + $0x604] sm:%s616]
      %1398 = vst [vmem:[%s624 + $0x608] sm:%s616] %v1397
      %v1399 = vld [vmem:[%s623 + $0x614] sm:%s616]
      %1400 = vst [vmem:[%s624 + $0x60c] sm:%s616] %v1399
      %v1401 = vld [vmem:[%s623 + $0x608] sm:%s616]
      %1402 = vst [vmem:[%s624 + $0x610] sm:%s616] %v1401
      %v1403 = vld [vmem:[%s623 + $0x618] sm:%s616]
      %1404 = vst [vmem:[%s624 + $0x614] sm:%s616] %v1403
      %v1405 = vld [vmem:[%s623 + $0x60c] sm:%s616]
      %1406 = vst [vmem:[%s624 + $0x618] sm:%s616] %v1405
      %v1407 = vld [vmem:[%s623 + $0x61c] sm:%s616]
      %1408 = vst [vmem:[%s624 + $0x61c] sm:%s616] %v1407
      %v1409 = vld [vmem:[%s623 + $0x620] sm:%s616]
      %1410 = vst [vmem:[%s624 + $0x620] sm:%s616] %v1409
      %v1411 = vld [vmem:[%s623 + $0x630] sm:%s616]
      %1412 = vst [vmem:[%s624 + $0x624] sm:%s616] %v1411
      %v1413 = vld [vmem:[%s623 + $0x624] sm:%s616]
      %1414 = vst [vmem:[%s624 + $0x628] sm:%s616] %v1413
      %v1415 = vld [vmem:[%s623 + $0x634] sm:%s616]
      %1416 = vst [vmem:[%s624 + $0x62c] sm:%s616] %v1415
      %v1417 = vld [vmem:[%s623 + $0x628] sm:%s616]
      %1418 = vst [vmem:[%s624 + $0x630] sm:%s616] %v1417
      %v1419 = vld [vmem:[%s623 + $0x638] sm:%s616]
      %1420 = vst [vmem:[%s624 + $0x634] sm:%s616] %v1419
      %v1421 = vld [vmem:[%s623 + $0x62c] sm:%s616]
      %1422 = vst [vmem:[%s624 + $0x638] sm:%s616] %v1421
      %v1423 = vld [vmem:[%s623 + $0x63c] sm:%s616]
      %1424 = vst [vmem:[%s624 + $0x63c] sm:%s616] %v1423
      %v1425 = vld [vmem:[%s623 + $0x640] sm:%s616]
      %1426 = vst [vmem:[%s624 + $0x640] sm:%s616] %v1425
      %v1427 = vld [vmem:[%s623 + $0x650] sm:%s616]
      %1428 = vst [vmem:[%s624 + $0x644] sm:%s616] %v1427
      %v1429 = vld [vmem:[%s623 + $0x644] sm:%s616]
      %1430 = vst [vmem:[%s624 + $0x648] sm:%s616] %v1429
      %v1431 = vld [vmem:[%s623 + $0x654] sm:%s616]
      %1432 = vst [vmem:[%s624 + $0x64c] sm:%s616] %v1431
      %v1433 = vld [vmem:[%s623 + $0x648] sm:%s616]
      %1434 = vst [vmem:[%s624 + $0x650] sm:%s616] %v1433
      %v1435 = vld [vmem:[%s623 + $0x658] sm:%s616]
      %1436 = vst [vmem:[%s624 + $0x654] sm:%s616] %v1435
      %v1437 = vld [vmem:[%s623 + $0x64c] sm:%s616]
      %1438 = vst [vmem:[%s624 + $0x658] sm:%s616] %v1437
      %v1439 = vld [vmem:[%s623 + $0x65c] sm:%s616]
      %1440 = vst [vmem:[%s624 + $0x65c] sm:%s616] %v1439
      %v1441 = vld [vmem:[%s623 + $0x660] sm:%s616]
      %1442 = vst [vmem:[%s624 + $0x660] sm:%s616] %v1441
      %v1443 = vld [vmem:[%s623 + $0x670] sm:%s616]
      %1444 = vst [vmem:[%s624 + $0x664] sm:%s616] %v1443
      %v1445 = vld [vmem:[%s623 + $0x664] sm:%s616]
      %1446 = vst [vmem:[%s624 + $0x668] sm:%s616] %v1445
      %v1447 = vld [vmem:[%s623 + $0x674] sm:%s616]
      %1448 = vst [vmem:[%s624 + $0x66c] sm:%s616] %v1447
      %v1449 = vld [vmem:[%s623 + $0x668] sm:%s616]
      %1450 = vst [vmem:[%s624 + $0x670] sm:%s616] %v1449
      %v1451 = vld [vmem:[%s623 + $0x678] sm:%s616]
      %1452 = vst [vmem:[%s624 + $0x674] sm:%s616] %v1451
      %v1453 = vld [vmem:[%s623 + $0x66c] sm:%s616]
      %1454 = vst [vmem:[%s624 + $0x678] sm:%s616] %v1453
      %v1455 = vld [vmem:[%s623 + $0x67c] sm:%s616]
      %1456 = vst [vmem:[%s624 + $0x67c] sm:%s616] %v1455
      %v1457 = vld [vmem:[%s623 + $0x680] sm:%s616]
      %1458 = vst [vmem:[%s624 + $0x680] sm:%s616] %v1457
      %v1459 = vld [vmem:[%s623 + $0x690] sm:%s616]
      %1460 = vst [vmem:[%s624 + $0x684] sm:%s616] %v1459
      %v1461 = vld [vmem:[%s623 + $0x684] sm:%s616]
      %1462 = vst [vmem:[%s624 + $0x688] sm:%s616] %v1461
      %v1463 = vld [vmem:[%s623 + $0x694] sm:%s616]
      %1464 = vst [vmem:[%s624 + $0x68c] sm:%s616] %v1463
      %v1465 = vld [vmem:[%s623 + $0x688] sm:%s616]
      %1466 = vst [vmem:[%s624 + $0x690] sm:%s616] %v1465
      %v1467 = vld [vmem:[%s623 + $0x698] sm:%s616]
      %1468 = vst [vmem:[%s624 + $0x694] sm:%s616] %v1467
      %v1469 = vld [vmem:[%s623 + $0x68c] sm:%s616]
      %1470 = vst [vmem:[%s624 + $0x698] sm:%s616] %v1469
      %v1471 = vld [vmem:[%s623 + $0x69c] sm:%s616]
      %1472 = vst [vmem:[%s624 + $0x69c] sm:%s616] %v1471
      %v1473 = vld [vmem:[%s623 + $0x6a0] sm:%s616]
      %1474 = vst [vmem:[%s624 + $0x6a0] sm:%s616] %v1473
      %v1475 = vld [vmem:[%s623 + $0x6b0] sm:%s616]
      %1476 = vst [vmem:[%s624 + $0x6a4] sm:%s616] %v1475
      %v1477 = vld [vmem:[%s623 + $0x6a4] sm:%s616]
      %1478 = vst [vmem:[%s624 + $0x6a8] sm:%s616] %v1477
      %v1479 = vld [vmem:[%s623 + $0x6b4] sm:%s616]
      %1480 = vst [vmem:[%s624 + $0x6ac] sm:%s616] %v1479
      %v1481 = vld [vmem:[%s623 + $0x6a8] sm:%s616]
      %1482 = vst [vmem:[%s624 + $0x6b0] sm:%s616] %v1481
      %v1483 = vld [vmem:[%s623 + $0x6b8] sm:%s616]
      %1484 = vst [vmem:[%s624 + $0x6b4] sm:%s616] %v1483
      %v1485 = vld [vmem:[%s623 + $0x6ac] sm:%s616]
      %1486 = vst [vmem:[%s624 + $0x6b8] sm:%s616] %v1485
      %v1487 = vld [vmem:[%s623 + $0x6bc] sm:%s616]
      %1488 = vst [vmem:[%s624 + $0x6bc] sm:%s616] %v1487
      %v1489 = vld [vmem:[%s623 + $0x6c0] sm:%s616]
      %1490 = vst [vmem:[%s624 + $0x6c0] sm:%s616] %v1489
      %v1491 = vld [vmem:[%s623 + $0x6d0] sm:%s616]
      %1492 = vst [vmem:[%s624 + $0x6c4] sm:%s616] %v1491
      %v1493 = vld [vmem:[%s623 + $0x6c4] sm:%s616]
      %1494 = vst [vmem:[%s624 + $0x6c8] sm:%s616] %v1493
      %v1495 = vld [vmem:[%s623 + $0x6d4] sm:%s616]
      %1496 = vst [vmem:[%s624 + $0x6cc] sm:%s616] %v1495
      %v1497 = vld [vmem:[%s623 + $0x6c8] sm:%s616]
      %1498 = vst [vmem:[%s624 + $0x6d0] sm:%s616] %v1497
      %v1499 = vld [vmem:[%s623 + $0x6d8] sm:%s616]
      %1500 = vst [vmem:[%s624 + $0x6d4] sm:%s616] %v1499
      %v1501 = vld [vmem:[%s623 + $0x6cc] sm:%s616]
      %1502 = vst [vmem:[%s624 + $0x6d8] sm:%s616] %v1501
      %v1503 = vld [vmem:[%s623 + $0x6dc] sm:%s616]
      %1504 = vst [vmem:[%s624 + $0x6dc] sm:%s616] %v1503
      %v1505 = vld [vmem:[%s623 + $0x6e0] sm:%s616]
      %1506 = vst [vmem:[%s624 + $0x6e0] sm:%s616] %v1505
      %v1507 = vld [vmem:[%s623 + $0x6f0] sm:%s616]
      %1508 = vst [vmem:[%s624 + $0x6e4] sm:%s616] %v1507
      %v1509 = vld [vmem:[%s623 + $0x6e4] sm:%s616]
      %1510 = vst [vmem:[%s624 + $0x6e8] sm:%s616] %v1509
      %v1511 = vld [vmem:[%s623 + $0x6f4] sm:%s616]
      %1512 = vst [vmem:[%s624 + $0x6ec] sm:%s616] %v1511
      %v1513 = vld [vmem:[%s623 + $0x6e8] sm:%s616]
      %1514 = vst [vmem:[%s624 + $0x6f0] sm:%s616] %v1513
      %v1515 = vld [vmem:[%s623 + $0x6f8] sm:%s616]
      %1516 = vst [vmem:[%s624 + $0x6f4] sm:%s616] %v1515
      %v1517 = vld [vmem:[%s623 + $0x6ec] sm:%s616]
      %1518 = vst [vmem:[%s624 + $0x6f8] sm:%s616] %v1517
      %v1519 = vld [vmem:[%s623 + $0x6fc] sm:%s616]
      %1520 = vst [vmem:[%s624 + $0x6fc] sm:%s616] %v1519
      %v1521 = vld [vmem:[%s623 + $0x700] sm:%s616]
      %1522 = vst [vmem:[%s624 + $0x700] sm:%s616] %v1521
      %v1523 = vld [vmem:[%s623 + $0x710] sm:%s616]
      %1524 = vst [vmem:[%s624 + $0x704] sm:%s616] %v1523
      %v1525 = vld [vmem:[%s623 + $0x704] sm:%s616]
      %1526 = vst [vmem:[%s624 + $0x708] sm:%s616] %v1525
      %v1527 = vld [vmem:[%s623 + $0x714] sm:%s616]
      %1528 = vst [vmem:[%s624 + $0x70c] sm:%s616] %v1527
      %v1529 = vld [vmem:[%s623 + $0x708] sm:%s616]
      %1530 = vst [vmem:[%s624 + $0x710] sm:%s616] %v1529
      %v1531 = vld [vmem:[%s623 + $0x718] sm:%s616]
      %1532 = vst [vmem:[%s624 + $0x714] sm:%s616] %v1531
      %v1533 = vld [vmem:[%s623 + $0x70c] sm:%s616]
      %1534 = vst [vmem:[%s624 + $0x718] sm:%s616] %v1533
      %v1535 = vld [vmem:[%s623 + $0x71c] sm:%s616]
      %1536 = vst [vmem:[%s624 + $0x71c] sm:%s616] %v1535
      %v1537 = vld [vmem:[%s623 + $0x720] sm:%s616]
      %1538 = vst [vmem:[%s624 + $0x720] sm:%s616] %v1537
      %v1539 = vld [vmem:[%s623 + $0x730] sm:%s616]
      %1540 = vst [vmem:[%s624 + $0x724] sm:%s616] %v1539
      %v1541 = vld [vmem:[%s623 + $0x724] sm:%s616]
      %1542 = vst [vmem:[%s624 + $0x728] sm:%s616] %v1541
      %v1543 = vld [vmem:[%s623 + $0x734] sm:%s616]
      %1544 = vst [vmem:[%s624 + $0x72c] sm:%s616] %v1543
      %v1545 = vld [vmem:[%s623 + $0x728] sm:%s616]
      %1546 = vst [vmem:[%s624 + $0x730] sm:%s616] %v1545
      %v1547 = vld [vmem:[%s623 + $0x738] sm:%s616]
      %1548 = vst [vmem:[%s624 + $0x734] sm:%s616] %v1547
      %v1549 = vld [vmem:[%s623 + $0x72c] sm:%s616]
      %1550 = vst [vmem:[%s624 + $0x738] sm:%s616] %v1549
      %v1551 = vld [vmem:[%s623 + $0x73c] sm:%s616]
      %1552 = vst [vmem:[%s624 + $0x73c] sm:%s616] %v1551
      %v1553 = vld [vmem:[%s623 + $0x740] sm:%s616]
      %1554 = vst [vmem:[%s624 + $0x740] sm:%s616] %v1553
      %v1555 = vld [vmem:[%s623 + $0x750] sm:%s616]
      %1556 = vst [vmem:[%s624 + $0x744] sm:%s616] %v1555
      %v1557 = vld [vmem:[%s623 + $0x744] sm:%s616]
      %1558 = vst [vmem:[%s624 + $0x748] sm:%s616] %v1557
      %v1559 = vld [vmem:[%s623 + $0x754] sm:%s616]
      %1560 = vst [vmem:[%s624 + $0x74c] sm:%s616] %v1559
      %v1561 = vld [vmem:[%s623 + $0x748] sm:%s616]
      %1562 = vst [vmem:[%s624 + $0x750] sm:%s616] %v1561
      %v1563 = vld [vmem:[%s623 + $0x758] sm:%s616]
      %1564 = vst [vmem:[%s624 + $0x754] sm:%s616] %v1563
      %v1565 = vld [vmem:[%s623 + $0x74c] sm:%s616]
      %1566 = vst [vmem:[%s624 + $0x758] sm:%s616] %v1565
      %v1567 = vld [vmem:[%s623 + $0x75c] sm:%s616]
      %1568 = vst [vmem:[%s624 + $0x75c] sm:%s616] %v1567
      %v1569 = vld [vmem:[%s623 + $0x760] sm:%s616]
      %1570 = vst [vmem:[%s624 + $0x760] sm:%s616] %v1569
      %v1571 = vld [vmem:[%s623 + $0x770] sm:%s616]
      %1572 = vst [vmem:[%s624 + $0x764] sm:%s616] %v1571
      %v1573 = vld [vmem:[%s623 + $0x764] sm:%s616]
      %1574 = vst [vmem:[%s624 + $0x768] sm:%s616] %v1573
      %v1575 = vld [vmem:[%s623 + $0x774] sm:%s616]
      %1576 = vst [vmem:[%s624 + $0x76c] sm:%s616] %v1575
      %v1577 = vld [vmem:[%s623 + $0x768] sm:%s616]
      %1578 = vst [vmem:[%s624 + $0x770] sm:%s616] %v1577
      %v1579 = vld [vmem:[%s623 + $0x778] sm:%s616]
      %1580 = vst [vmem:[%s624 + $0x774] sm:%s616] %v1579
      %v1581 = vld [vmem:[%s623 + $0x76c] sm:%s616]
      %1582 = vst [vmem:[%s624 + $0x778] sm:%s616] %v1581
      %v1583 = vld [vmem:[%s623 + $0x77c] sm:%s616]
      %1584 = vst [vmem:[%s624 + $0x77c] sm:%s616] %v1583
      %v1585 = vld [vmem:[%s623 + $0x780] sm:%s616]
      %1586 = vst [vmem:[%s624 + $0x780] sm:%s616] %v1585
      %v1587 = vld [vmem:[%s623 + $0x790] sm:%s616]
      %1588 = vst [vmem:[%s624 + $0x784] sm:%s616] %v1587
      %v1589 = vld [vmem:[%s623 + $0x784] sm:%s616]
      %1590 = vst [vmem:[%s624 + $0x788] sm:%s616] %v1589
      %v1591 = vld [vmem:[%s623 + $0x794] sm:%s616]
      %1592 = vst [vmem:[%s624 + $0x78c] sm:%s616] %v1591
      %v1593 = vld [vmem:[%s623 + $0x788] sm:%s616]
      %1594 = vst [vmem:[%s624 + $0x790] sm:%s616] %v1593
      %v1595 = vld [vmem:[%s623 + $0x798] sm:%s616]
      %1596 = vst [vmem:[%s624 + $0x794] sm:%s616] %v1595
      %v1597 = vld [vmem:[%s623 + $0x78c] sm:%s616]
      %1598 = vst [vmem:[%s624 + $0x798] sm:%s616] %v1597
      %v1599 = vld [vmem:[%s623 + $0x79c] sm:%s616]
      %1600 = vst [vmem:[%s624 + $0x79c] sm:%s616] %v1599
      %v1601 = vld [vmem:[%s623 + $0x7a0] sm:%s616]
      %1602 = vst [vmem:[%s624 + $0x7a0] sm:%s616] %v1601
      %v1603 = vld [vmem:[%s623 + $0x7b0] sm:%s616]
      %1604 = vst [vmem:[%s624 + $0x7a4] sm:%s616] %v1603
      %v1605 = vld [vmem:[%s623 + $0x7a4] sm:%s616]
      %1606 = vst [vmem:[%s624 + $0x7a8] sm:%s616] %v1605
      %v1607 = vld [vmem:[%s623 + $0x7b4] sm:%s616]
      %1608 = vst [vmem:[%s624 + $0x7ac] sm:%s616] %v1607
      %v1609 = vld [vmem:[%s623 + $0x7a8] sm:%s616]
      %1610 = vst [vmem:[%s624 + $0x7b0] sm:%s616] %v1609
      %v1611 = vld [vmem:[%s623 + $0x7b8] sm:%s616]
      %1612 = vst [vmem:[%s624 + $0x7b4] sm:%s616] %v1611
      %v1613 = vld [vmem:[%s623 + $0x7ac] sm:%s616]
      %1614 = vst [vmem:[%s624 + $0x7b8] sm:%s616] %v1613
      %v1615 = vld [vmem:[%s623 + $0x7bc] sm:%s616]
      %1616 = vst [vmem:[%s624 + $0x7bc] sm:%s616] %v1615
      %v1617 = vld [vmem:[%s623 + $0x7c0] sm:%s616]
      %1618 = vst [vmem:[%s624 + $0x7c0] sm:%s616] %v1617
      %v1619 = vld [vmem:[%s623 + $0x7d0] sm:%s616]
      %1620 = vst [vmem:[%s624 + $0x7c4] sm:%s616] %v1619
      %v1621 = vld [vmem:[%s623 + $0x7c4] sm:%s616]
      %1622 = vst [vmem:[%s624 + $0x7c8] sm:%s616] %v1621
      %v1623 = vld [vmem:[%s623 + $0x7d4] sm:%s616]
      %1624 = vst [vmem:[%s624 + $0x7cc] sm:%s616] %v1623
      %v1625 = vld [vmem:[%s623 + $0x7c8] sm:%s616]
      %1626 = vst [vmem:[%s624 + $0x7d0] sm:%s616] %v1625
      %v1627 = vld [vmem:[%s623 + $0x7d8] sm:%s616]
      %1628 = vst [vmem:[%s624 + $0x7d4] sm:%s616] %v1627
      %v1629 = vld [vmem:[%s623 + $0x7cc] sm:%s616]
      %1630 = vst [vmem:[%s624 + $0x7d8] sm:%s616] %v1629
      %v1631 = vld [vmem:[%s623 + $0x7dc] sm:%s616]
      %1632 = vst [vmem:[%s624 + $0x7dc] sm:%s616] %v1631
      %v1633 = vld [vmem:[%s623 + $0x7e0] sm:%s616]
      %1634 = vst [vmem:[%s624 + $0x7e0] sm:%s616] %v1633
      %v1635 = vld [vmem:[%s623 + $0x7f0] sm:%s616]
      %1636 = vst [vmem:[%s624 + $0x7e4] sm:%s616] %v1635
      %v1637 = vld [vmem:[%s623 + $0x7e4] sm:%s616]
      %1638 = vst [vmem:[%s624 + $0x7e8] sm:%s616] %v1637
      %v1639 = vld [vmem:[%s623 + $0x7f4] sm:%s616]
      %1640 = vst [vmem:[%s624 + $0x7ec] sm:%s616] %v1639
      %v1641 = vld [vmem:[%s623 + $0x7e8] sm:%s616]
      %1642 = vst [vmem:[%s624 + $0x7f0] sm:%s616] %v1641
      %v1643 = vld [vmem:[%s623 + $0x7f8] sm:%s616]
      %1644 = vst [vmem:[%s624 + $0x7f4] sm:%s616] %v1643
      %v1645 = vld [vmem:[%s623 + $0x7ec] sm:%s616]
      %1646 = vst [vmem:[%s624 + $0x7f8] sm:%s616] %v1645
      %v1647 = vld [vmem:[%s623 + $0x7fc] sm:%s616]
      %1648 = vst [vmem:[%s624 + $0x7fc] sm:%s616] %v1647
    $region103: #{discriminator_forward.1} parent=97 // loop_footer
      %s622 = sadd.s32 1, %s618
    $region104: #{discriminator_forward.1} parent=97 // loop_footer_branch
      %617 = sbr.rel target = $region100
    $region105: #{discriminator_forward.1} parent=97 // loop_exit
      _
  $region98: #{discriminator_forward.1} parent=0 // pred_fallthru
    _
  // Predicated region
  $region135: #{discriminator_forward.1} parent=0 // pred_check
    _
  $region136: #{discriminator_forward.1} parent=0 // pred_check_branch
    %4783 = sbr.rel (0) target = $region138
  $region137: #{discriminator_forward.1} parent=0 // pred_region
    %4784 = vsyncadd %s607, 32768
  $region138: #{discriminator_forward.1} parent=0 // pred_fallthru
    _
  %v4785 = vld [vmem:[%s0] sm:$0xf]
  %v4786 = vld [vmem:[%s0 + $0x4] sm:$0xf]
  %v4787 = vld [vmem:[%s0 + $0x8] sm:$0xf]
  %v4788 = vld [vmem:[%s0 + $0xc] sm:$0xf]
  %v4789 = vld [vmem:[%s0 + $0x10] sm:$0xf]
  %v4790 = vld [vmem:[%s0 + $0x14] sm:$0xf]
  %v4791 = vld [vmem:[%s0 + $0x18] sm:$0xf]
  %v4792 = vld [vmem:[%s0 + $0x1c] sm:$0xf]
  %v4793 = vld [vmem:[%s0 + $0x20] sm:$0xf]
  %v4794 = vld [vmem:[%s0 + $0x24] sm:$0xf]
  %v4795 = vld [vmem:[%s0 + $0x28] sm:$0xf]
  %v4796 = vld [vmem:[%s0 + $0x2c] sm:$0xf]
  %v4797 = vld [vmem:[%s0 + $0x30] sm:$0xf]
  %v4798 = vld [vmem:[%s0 + $0x34] sm:$0xf]
  %v4799 = vld [vmem:[%s0 + $0x38] sm:$0xf]
  %v4800 = vld [vmem:[%s0 + $0x3c] sm:$0xf]
  %v4801 = vld [vmem:[%s0 + $0x40] sm:$0xf]
  %v4802 = vld [vmem:[%s0 + $0x44] sm:$0xf]
  %v4803 = vld [vmem:[%s0 + $0x48] sm:$0xf]
  %v4804 = vld [vmem:[%s0 + $0x4c] sm:$0xf]
  %v4805 = vld [vmem:[%s0 + $0x50] sm:$0xf]
  %v4806 = vld [vmem:[%s0 + $0x54] sm:$0xf]
  %v4807 = vld [vmem:[%s0 + $0x58] sm:$0xf]
  %v4808 = vld [vmem:[%s0 + $0x5c] sm:$0xf]
  %v4809 = vld [vmem:[%s0 + $0x60] sm:$0xf]
  %v4810 = vld [vmem:[%s0 + $0x64] sm:$0xf]
  %v4811 = vld [vmem:[%s0 + $0x68] sm:$0xf]
  %v4812 = vld [vmem:[%s0 + $0x6c] sm:$0xf]
  %v4813 = vld [vmem:[%s0 + $0x70] sm:$0xf]
  %v4814 = vld [vmem:[%s0 + $0x74] sm:$0xf]
  %v4815 = vld [vmem:[%s0 + $0x78] sm:$0xf]
  %v4816 = vld [vmem:[%s0 + $0x7c] sm:$0xf]
  %v4817 = vld [vmem:[%s0 + $0x80] sm:$0xf]
  %v4818 = vld [vmem:[%s0 + $0x84] sm:$0xf]
  %v4819 = vld [vmem:[%s0 + $0x88] sm:$0xf]
  %v4820 = vld [vmem:[%s0 + $0x8c] sm:$0xf]
  %v4821 = vld [vmem:[%s1] sm:$0xff]
  %v4822 = vld [vmem:[%s1 + $0x8] sm:$0xff]
  %v4823 = vld [vmem:[%s1 + $0x10] sm:$0xff]
  %v4824 = vld [vmem:[%s1 + $0x18] sm:$0xff]
  %v4825 = vld [vmem:[%s1 + $0x20] sm:$0xff]
  %v4826 = vld [vmem:[%s1 + $0x28] sm:$0xff]
  %v4827 = vld [vmem:[%s1 + $0x30] sm:$0xff]
  %v4828 = vld [vmem:[%s1 + $0x38] sm:$0xff]
  %v4829 = vld [vmem:[%s1 + $0x40] sm:$0xff]
  %v4830 = vld [vmem:[%s1 + $0x48] sm:$0xff]
  %v4831 = vld [vmem:[%s1 + $0x50] sm:$0xff]
  %v4832 = vld [vmem:[%s1 + $0x58] sm:$0xff]
  %v4869 = vunpack.c.l.b16 %v4785
  %v4870 = vunpack.c.l.b16 %v4786
  %v4871 = vunpack.c.l.b16 %v4787
  %v4872 = vunpack.c.l.b16 %v4788
  %v4873 = vunpack.c.l.b16 %v4789
  %v4874 = vunpack.c.l.b16 %v4790
  %v4875 = vunpack.c.l.b16 %v4791
  %v4876 = vunpack.c.l.b16 %v4792
  %v4877 = vunpack.c.l.b16 %v4793
  %v4878 = vunpack.c.l.b16 %v4794
  %v4879 = vunpack.c.l.b16 %v4795
  %v4880 = vunpack.c.l.b16 %v4796
  %v4881 = vunpack.c.l.b16 %v4797
  %v4882 = vunpack.c.l.b16 %v4798
  %v4883 = vunpack.c.l.b16 %v4799
  %v4884 = vunpack.c.l.b16 %v4800
  %v4885 = vunpack.c.l.b16 %v4801
  %v4886 = vunpack.c.l.b16 %v4802
  %v4887 = vunpack.c.l.b16 %v4803
  %v4888 = vunpack.c.l.b16 %v4804
  %v4889 = vunpack.c.l.b16 %v4805
  %v4890 = vunpack.c.l.b16 %v4806
  %v4891 = vunpack.c.l.b16 %v4807
  %v4892 = vunpack.c.l.b16 %v4808
  %v4893 = vunpack.c.l.b16 %v4809
  %v4894 = vunpack.c.l.b16 %v4810
  %v4895 = vunpack.c.l.b16 %v4811
  %v4896 = vunpack.c.l.b16 %v4812
  %v4897 = vunpack.c.l.b16 %v4813
  %v4898 = vunpack.c.l.b16 %v4814
  %v4899 = vunpack.c.l.b16 %v4815
  %v4900 = vunpack.c.l.b16 %v4816
  %v4901 = vunpack.c.l.b16 %v4817
  %v4902 = vunpack.c.l.b16 %v4818
  %v4903 = vunpack.c.l.b16 %v4819
  %v4904 = vunpack.c.l.b16 %v4820
  %v4905 = vpack.c.b16 %v4870, %v4869
  %v4906 = vpack.c.b16 %v4872, %v4871
  %v4907 = vpack.c.b16 %v4874, %v4873
  %v4908 = vpack.c.b16 %v4876, %v4875
  %v4909 = vpack.c.b16 %v4878, %v4877
  %v4910 = vpack.c.b16 %v4880, %v4879
  %v4911 = vpack.c.b16 %v4882, %v4881
  %v4912 = vpack.c.b16 %v4884, %v4883
  %v4913 = vpack.c.b16 %v4886, %v4885
  %v4914 = vpack.c.b16 %v4888, %v4887
  %v4915 = vpack.c.b16 %v4890, %v4889
  %v4916 = vpack.c.b16 %v4892, %v4891
  %v4917 = vpack.c.b16 %v4894, %v4893
  %v4918 = vpack.c.b16 %v4896, %v4895
  %v4919 = vpack.c.b16 %v4898, %v4897
  %v4920 = vpack.c.b16 %v4900, %v4899
  %v4921 = vpack.c.b16 %v4902, %v4901
  %v4922 = vpack.c.b16 %v4904, %v4903
  %v4935 = vunpack.c.l.b16 %v4821
  %v4936 = vunpack.c.h.b16 %v4821
  %v4937 = vunpack.c.l.b16 %v4822
  %v4938 = vunpack.c.h.b16 %v4822
  %v4939 = vunpack.c.l.b16 %v4823
  %v4940 = vunpack.c.h.b16 %v4823
  %v4941 = vunpack.c.l.b16 %v4824
  %v4942 = vunpack.c.h.b16 %v4824
  %v4943 = vunpack.c.l.b16 %v4825
  %v4944 = vunpack.c.h.b16 %v4825
  %v4945 = vunpack.c.l.b16 %v4826
  %v4946 = vunpack.c.h.b16 %v4826
  %v4947 = vunpack.c.l.b16 %v4827
  %v4948 = vunpack.c.h.b16 %v4827
  %v4949 = vunpack.c.l.b16 %v4828
  %v4950 = vunpack.c.h.b16 %v4828
  %v4951 = vunpack.c.l.b16 %v4829
  %v4952 = vunpack.c.h.b16 %v4829
  %v4953 = vunpack.c.l.b16 %v4830
  %v4954 = vunpack.c.h.b16 %v4830
  %v4955 = vunpack.c.l.b16 %v4831
  %v4956 = vunpack.c.h.b16 %v4831
  %v4957 = vunpack.c.l.b16 %v4832
  %v4958 = vunpack.c.h.b16 %v4832
  %v4959 = vpack.c.b16 %v4939, %v4935
  %v4960 = vpack.c.b16 %v4940, %v4936
  %v4961 = vpack.c.b16 %v4941, %v4937
  %v4962 = vpack.c.b16 %v4942, %v4938
  %v4963 = vpack.c.b16 %v4947, %v4943
  %v4964 = vpack.c.b16 %v4948, %v4944
  %v4965 = vpack.c.b16 %v4949, %v4945
  %v4966 = vpack.c.b16 %v4950, %v4946
  %v4967 = vpack.c.b16 %v4955, %v4951
  %v4968 = vpack.c.b16 %v4956, %v4952
  %v4969 = vpack.c.b16 %v4957, %v4953
  %v4970 = vpack.c.b16 %v4958, %v4954
  %vm4983 = vcmask 392192
  %v4985 = vsel %vm4983, %v4905, 0
  %v4988 = vsel %vm4983, %v4906, 0
  %v4991 = vsel %vm4983, %v4907, 0
  %v4994 = vsel %vm4983, %v4908, 0
  %v4997 = vsel %vm4983, %v4909, 0
  %v5000 = vsel %vm4983, %v4910, 0
  %v5003 = vsel %vm4983, %v4911, 0
  %v5006 = vsel %vm4983, %v4912, 0
  %v5009 = vsel %vm4983, %v4913, 0
  %v5012 = vsel %vm4983, %v4914, 0
  %v5015 = vsel %vm4983, %v4915, 0
  %v5018 = vsel %vm4983, %v4916, 0
  %v5021 = vsel %vm4983, %v4917, 0
  %v5024 = vsel %vm4983, %v4918, 0
  %v5027 = vsel %vm4983, %v4919, 0
  %v5030 = vsel %vm4983, %v4920, 0
  %v5033 = vsel %vm4983, %v4921, 0
  %v5036 = vsel %vm4983, %v4922, 0
  %5038 = vmatprep.subr.bf16.mxu0 %v4960
  %5039 = vmatpush1.bf16.msra.mxu0 %v4959
  %5040 = vmatprep.subr.bf16.mxu0 %v4964
  %5041 = vmatpush1.bf16.msra.mxu0 %v4963
  %5042 = vmatprep.subr.bf16.mxu0 %v4968
  %5043 = vmatpush1.bf16.msra.mxu0 %v4967
  %5044 = vmatprep.subr.bf16.mxu0 0
  %5045 = vmatpush1.bf16.msra.mxu0 0
  %5046 = vmatprep.subr.bf16.mxu0 0
  %5047 = vmatpush1.bf16.msra.mxu0 0
  %5048 = vmatprep.subr.bf16.mxu0 0
  %5049 = vmatpush1.bf16.msra.mxu0 0
  %5050 = vmatprep.subr.bf16.mxu0 0
  %5051 = vmatpush1.bf16.msra.mxu0 0
  %5052 = vmatprep.subr.bf16.mxu0 0
  %5053 = vmatpush1.bf16.msra.mxu0 0
  %5054 = vmatprep.subr.bf16.mxu0 0
  %5055 = vmatpush1.bf16.msra.mxu0 0
  %5056 = vmatprep.subr.bf16.mxu0 0
  %5057 = vmatpush1.bf16.msra.mxu0 0
  %5058 = vmatprep.subr.bf16.mxu0 0
  %5059 = vmatpush1.bf16.msra.mxu0 0
  %5060 = vmatprep.subr.bf16.mxu0 0
  %5061 = vmatpush1.bf16.msra.mxu0 0
  %5062 = vmatprep.subr.bf16.mxu0 0
  %5063 = vmatpush1.bf16.msra.mxu0 0
  %5064 = vmatprep.subr.bf16.mxu0 0
  %5065 = vmatpush1.bf16.msra.mxu0 0
  %5066 = vmatprep.subr.bf16.mxu0 0
  %5067 = vmatpush1.bf16.msra.mxu0 0
  %5068 = vmatprep.subr.bf16.mxu0 0
  %5069 = vmatpush1.bf16.msra.mxu0 0
  %5070 = vmatprep.mubr.bf16.mxu0 0
  %5071 = vmatmul.mubr.bf16.gmra.mrb[0].mxu0 %v4985
  %v5072 = vpop.f32.mrb[0].mxu0
  %v5073 = vadd.f32 0.0, %v5072
  %v5074 = vpop.f32.mrb[0].mxu0
  %v5075 = vadd.f32 0.0, %v5074
  %v5076 = vpop.f32.mrb[0].mxu0
  %v5077 = vadd.f32 0.0, %v5076
  %v5078 = vpop.f32.mrb[0].mxu0
  %v5079 = vadd.f32 0.0, %v5078
  %5080 = vmatprep.mubr.bf16.mxu0 0
  %5081 = vmatmul.mubr.bf16.gmra.mrb[0].mxu0 %v4988
  %v5082 = vpop.f32.mrb[0].mxu0
  %v5083 = vadd.f32 0.0, %v5082
  %v5084 = vpop.f32.mrb[0].mxu0
  %v5085 = vadd.f32 0.0, %v5084
  %v5086 = vpop.f32.mrb[0].mxu0
  %v5087 = vadd.f32 0.0, %v5086
  %v5088 = vpop.f32.mrb[0].mxu0
  %v5089 = vadd.f32 0.0, %v5088
  %5090 = vmatprep.mubr.bf16.mxu0 0
  %5091 = vmatmul.mubr.bf16.gmra.mrb[0].mxu0 %v4991
  %v5092 = vpop.f32.mrb[0].mxu0
  %v5093 = vadd.f32 0.0, %v5092
  %v5094 = vpop.f32.mrb[0].mxu0
  %v5095 = vadd.f32 0.0, %v5094
  %v5096 = vpop.f32.mrb[0].mxu0
  %v5097 = vadd.f32 0.0, %v5096
  %v5098 = vpop.f32.mrb[0].mxu0
  %v5099 = vadd.f32 0.0, %v5098
  %5100 = vmatprep.mubr.bf16.mxu0 0
  %5101 = vmatmul.mubr.bf16.gmra.mrb[0].mxu0 %v4994
  %v5102 = vpop.f32.mrb[0].mxu0
  %v5103 = vadd.f32 0.0, %v5102
  %v5104 = vpop.f32.mrb[0].mxu0
  %v5105 = vadd.f32 0.0, %v5104
  %v5106 = vpop.f32.mrb[0].mxu0
  %v5107 = vadd.f32 0.0, %v5106
  %v5108 = vpop.f32.mrb[0].mxu0
  %v5109 = vadd.f32 0.0, %v5108
  %5110 = vmatprep.mubr.bf16.mxu0 0
  %5111 = vmatmul.mubr.bf16.gmra.mrb[0].mxu0 %v4997
  %v5112 = vpop.f32.mrb[0].mxu0
  %v5113 = vadd.f32 0.0, %v5112
  %v5114 = vpop.f32.mrb[0].mxu0
  %v5115 = vadd.f32 0.0, %v5114
  %v5116 = vpop.f32.mrb[0].mxu0
  %v5117 = vadd.f32 0.0, %v5116
  %v5118 = vpop.f32.mrb[0].mxu0
  %v5119 = vadd.f32 0.0, %v5118
  %5120 = vmatprep.mubr.bf16.mxu0 0
  %5121 = vmatmul.mubr.bf16.gmra.mrb[0].mxu0 %v5000
  %v5122 = vpop.f32.mrb[0].mxu0
  %v5123 = vadd.f32 0.0, %v5122
  %v5124 = vpop.f32.mrb[0].mxu0
  %v5125 = vadd.f32 0.0, %v5124
  %v5126 = vpop.f32.mrb[0].mxu0
  %v5127 = vadd.f32 0.0, %v5126
  %v5128 = vpop.f32.mrb[0].mxu0
  %v5129 = vadd.f32 0.0, %v5128
  %5130 = vmatprep.mubr.bf16.mxu0 0
  %5131 = vmatmul.mubr.bf16.gmra.mrb[0].mxu0 %v5003
  %v5132 = vpop.f32.mrb[0].mxu0
  %v5133 = vadd.f32 0.0, %v5132
  %v5134 = vpop.f32.mrb[0].mxu0
  %v5135 = vadd.f32 0.0, %v5134
  %v5136 = vpop.f32.mrb[0].mxu0
  %v5137 = vadd.f32 0.0, %v5136
  %v5138 = vpop.f32.mrb[0].mxu0
  %v5139 = vadd.f32 0.0, %v5138
  %5140 = vmatprep.mubr.bf16.mxu0 0
  %5141 = vmatmul.mubr.bf16.gmra.mrb[0].mxu0 %v5006
  %v5142 = vpop.f32.mrb[0].mxu0
  %v5143 = vadd.f32 0.0, %v5142
  %v5144 = vpop.f32.mrb[0].mxu0
  %v5145 = vadd.f32 0.0, %v5144
  %v5146 = vpop.f32.mrb[0].mxu0
  %v5147 = vadd.f32 0.0, %v5146
  %v5148 = vpop.f32.mrb[0].mxu0
  %v5149 = vadd.f32 0.0, %v5148
  %5150 = vmatprep.mubr.bf16.mxu0 0
  %5151 = vmatmul.mubr.bf16.gmra.mrb[0].mxu0 %v5009
  %v5152 = vpop.f32.mrb[0].mxu0
  %v5153 = vadd.f32 0.0, %v5152
  %v5154 = vpop.f32.mrb[0].mxu0
  %v5155 = vadd.f32 0.0, %v5154
  %v5156 = vpop.f32.mrb[0].mxu0
  %v5157 = vadd.f32 0.0, %v5156
  %v5158 = vpop.f32.mrb[0].mxu0
  %v5159 = vadd.f32 0.0, %v5158
  %5160 = vmatprep.mubr.bf16.mxu0 0
  %5161 = vmatmul.mubr.bf16.gmra.mrb[0].mxu0 %v5012
  %v5162 = vpop.f32.mrb[0].mxu0
  %v5163 = vadd.f32 0.0, %v5162
  %v5164 = vpop.f32.mrb[0].mxu0
  %v5165 = vadd.f32 0.0, %v5164
  %v5166 = vpop.f32.mrb[0].mxu0
  %v5167 = vadd.f32 0.0, %v5166
  %v5168 = vpop.f32.mrb[0].mxu0
  %v5169 = vadd.f32 0.0, %v5168
  %5170 = vmatprep.mubr.bf16.mxu0 0
  %5171 = vmatmul.mubr.bf16.gmra.mrb[0].mxu0 %v5015
  %v5172 = vpop.f32.mrb[0].mxu0
  %v5173 = vadd.f32 0.0, %v5172
  %v5174 = vpop.f32.mrb[0].mxu0
  %v5175 = vadd.f32 0.0, %v5174
  %v5176 = vpop.f32.mrb[0].mxu0
  %v5177 = vadd.f32 0.0, %v5176
  %v5178 = vpop.f32.mrb[0].mxu0
  %v5179 = vadd.f32 0.0, %v5178
  %5180 = vmatprep.mubr.bf16.mxu0 0
  %5181 = vmatmul.mubr.bf16.gmra.mrb[0].mxu0 %v5018
  %v5182 = vpop.f32.mrb[0].mxu0
  %v5183 = vadd.f32 0.0, %v5182
  %v5184 = vpop.f32.mrb[0].mxu0
  %v5185 = vadd.f32 0.0, %v5184
  %v5186 = vpop.f32.mrb[0].mxu0
  %v5187 = vadd.f32 0.0, %v5186
  %v5188 = vpop.f32.mrb[0].mxu0
  %v5189 = vadd.f32 0.0, %v5188
  %5190 = vmatprep.mubr.bf16.mxu0 0
  %5191 = vmatmul.mubr.bf16.gmra.mrb[0].mxu0 %v5021
  %v5192 = vpop.f32.mrb[0].mxu0
  %v5193 = vadd.f32 0.0, %v5192
  %v5194 = vpop.f32.mrb[0].mxu0
  %v5195 = vadd.f32 0.0, %v5194
  %v5196 = vpop.f32.mrb[0].mxu0
  %v5197 = vadd.f32 0.0, %v5196
  %v5198 = vpop.f32.mrb[0].mxu0
  %v5199 = vadd.f32 0.0, %v5198
  %5200 = vmatprep.mubr.bf16.mxu0 0
  %5201 = vmatmul.mubr.bf16.gmra.mrb[0].mxu0 %v5024
  %v5202 = vpop.f32.mrb[0].mxu0
  %v5203 = vadd.f32 0.0, %v5202
  %v5204 = vpop.f32.mrb[0].mxu0
  %v5205 = vadd.f32 0.0, %v5204
  %v5206 = vpop.f32.mrb[0].mxu0
  %v5207 = vadd.f32 0.0, %v5206
  %v5208 = vpop.f32.mrb[0].mxu0
  %v5209 = vadd.f32 0.0, %v5208
  %5210 = vmatprep.mubr.bf16.mxu0 0
  %5211 = vmatmul.mubr.bf16.gmra.mrb[0].mxu0 %v5027
  %v5212 = vpop.f32.mrb[0].mxu0
  %v5213 = vadd.f32 0.0, %v5212
  %v5214 = vpop.f32.mrb[0].mxu0
  %v5215 = vadd.f32 0.0, %v5214
  %v5216 = vpop.f32.mrb[0].mxu0
  %v5217 = vadd.f32 0.0, %v5216
  %v5218 = vpop.f32.mrb[0].mxu0
  %v5219 = vadd.f32 0.0, %v5218
  %5220 = vmatprep.mubr.bf16.mxu0 0
  %5221 = vmatmul.mubr.bf16.gmra.mrb[0].mxu0 %v5030
  %v5222 = vpop.f32.mrb[0].mxu0
  %v5223 = vadd.f32 0.0, %v5222
  %v5224 = vpop.f32.mrb[0].mxu0
  %v5225 = vadd.f32 0.0, %v5224
  %v5226 = vpop.f32.mrb[0].mxu0
  %v5227 = vadd.f32 0.0, %v5226
  %v5228 = vpop.f32.mrb[0].mxu0
  %v5229 = vadd.f32 0.0, %v5228
  %5230 = vmatprep.mubr.bf16.mxu0 0
  %5231 = vmatmul.mubr.bf16.gmra.mrb[0].mxu0 %v5033
  %v5232 = vpop.f32.mrb[0].mxu0
  %v5233 = vadd.f32 0.0, %v5232
  %v5234 = vpop.f32.mrb[0].mxu0
  %v5235 = vadd.f32 0.0, %v5234
  %v5236 = vpop.f32.mrb[0].mxu0
  %v5237 = vadd.f32 0.0, %v5236
  %v5238 = vpop.f32.mrb[0].mxu0
  %v5239 = vadd.f32 0.0, %v5238
  %5240 = vmatprep.mubr.bf16.mxu0 0
  %5241 = vmatmul.mubr.bf16.gmra.mrb[0].mxu0 %v5036
  %v5242 = vpop.f32.mrb[0].mxu0
  %v5243 = vadd.f32 0.0, %v5242
  %v5244 = vpop.f32.mrb[0].mxu0
  %v5245 = vadd.f32 0.0, %v5244
  %v5246 = vpop.f32.mrb[0].mxu0
  %v5247 = vadd.f32 0.0, %v5246
  %v5248 = vpop.f32.mrb[0].mxu0
  %v5249 = vadd.f32 0.0, %v5248
  %5250 = vdwg.mxu0
  %5251 = vmatprep.subr.bf16.mxu0 %v4962
  %5252 = vmatpush1.bf16.msra.mxu0 %v4961
  %5253 = vmatprep.subr.bf16.mxu0 %v4966
  %5254 = vmatpush1.bf16.msra.mxu0 %v4965
  %5255 = vmatprep.subr.bf16.mxu0 %v4970
  %5256 = vmatpush1.bf16.msra.mxu0 %v4969
  %5257 = vmatprep.subr.bf16.mxu0 0
  %5258 = vmatpush1.bf16.msra.mxu0 0
  %5259 = vmatprep.subr.bf16.mxu0 0
  %5260 = vmatpush1.bf16.msra.mxu0 0
  %5261 = vmatprep.subr.bf16.mxu0 0
  %5262 = vmatpush1.bf16.msra.mxu0 0
  %5263 = vmatprep.subr.bf16.mxu0 0
  %5264 = vmatpush1.bf16.msra.mxu0 0
  %5265 = vmatprep.subr.bf16.mxu0 0
  %5266 = vmatpush1.bf16.msra.mxu0 0
  %5267 = vmatprep.subr.bf16.mxu0 0
  %5268 = vmatpush1.bf16.msra.mxu0 0
  %5269 = vmatprep.subr.bf16.mxu0 0
  %5270 = vmatpush1.bf16.msra.mxu0 0
  %5271 = vmatprep.subr.bf16.mxu0 0
  %5272 = vmatpush1.bf16.msra.mxu0 0
  %5273 = vmatprep.subr.bf16.mxu0 0
  %5274 = vmatpush1.bf16.msra.mxu0 0
  %5275 = vmatprep.subr.bf16.mxu0 0
  %5276 = vmatpush1.bf16.msra.mxu0 0
  %5277 = vmatprep.subr.bf16.mxu0 0
  %5278 = vmatpush1.bf16.msra.mxu0 0
  %5279 = vmatprep.subr.bf16.mxu0 0
  %5280 = vmatpush1.bf16.msra.mxu0 0
  %5281 = vmatprep.subr.bf16.mxu0 0
  %5282 = vmatpush1.bf16.msra.mxu0 0
  %5283 = vmatprep.mubr.bf16.mxu0 0
  %5284 = vmatmul.mubr.bf16.gmra.mrb[0].mxu0 %v4985
  %v5285 = vpop.f32.mrb[0].mxu0
  %v5286 = vadd.f32 0.0, %v5285
  %v5287 = vpop.f32.mrb[0].mxu0
  %v5288 = vadd.f32 0.0, %v5287
  %v5289 = vpop.f32.mrb[0].mxu0
  %v5290 = vadd.f32 0.0, %v5289
  %v5291 = vpop.f32.mrb[0].mxu0
  %v5292 = vadd.f32 0.0, %v5291
  %5293 = vmatprep.mubr.bf16.mxu0 0
  %5294 = vmatmul.mubr.bf16.gmra.mrb[0].mxu0 %v4988
  %v5295 = vpop.f32.mrb[0].mxu0
  %v5296 = vadd.f32 0.0, %v5295
  %v5297 = vpop.f32.mrb[0].mxu0
  %v5298 = vadd.f32 0.0, %v5297
  %v5299 = vpop.f32.mrb[0].mxu0
  %v5300 = vadd.f32 0.0, %v5299
  %v5301 = vpop.f32.mrb[0].mxu0
  %v5302 = vadd.f32 0.0, %v5301
  %5303 = vmatprep.mubr.bf16.mxu0 0
  %5304 = vmatmul.mubr.bf16.gmra.mrb[0].mxu0 %v4991
  %v5305 = vpop.f32.mrb[0].mxu0
  %v5306 = vadd.f32 0.0, %v5305
  %v5307 = vpop.f32.mrb[0].mxu0
  %v5308 = vadd.f32 0.0, %v5307
  %v5309 = vpop.f32.mrb[0].mxu0
  %v5310 = vadd.f32 0.0, %v5309
  %v5311 = vpop.f32.mrb[0].mxu0
  %v5312 = vadd.f32 0.0, %v5311
  %5313 = vmatprep.mubr.bf16.mxu0 0
  %5314 = vmatmul.mubr.bf16.gmra.mrb[0].mxu0 %v4994
  %v5315 = vpop.f32.mrb[0].mxu0
  %v5316 = vadd.f32 0.0, %v5315
  %v5317 = vpop.f32.mrb[0].mxu0
  %v5318 = vadd.f32 0.0, %v5317
  %v5319 = vpop.f32.mrb[0].mxu0
  %v5320 = vadd.f32 0.0, %v5319
  %v5321 = vpop.f32.mrb[0].mxu0
  %v5322 = vadd.f32 0.0, %v5321
  %5323 = vmatprep.mubr.bf16.mxu0 0
  %5324 = vmatmul.mubr.bf16.gmra.mrb[0].mxu0 %v4997
  %v5325 = vpop.f32.mrb[0].mxu0
  %v5326 = vadd.f32 0.0, %v5325
  %v5327 = vpop.f32.mrb[0].mxu0
  %v5328 = vadd.f32 0.0, %v5327
  %v5329 = vpop.f32.mrb[0].mxu0
  %v5330 = vadd.f32 0.0, %v5329
  %v5331 = vpop.f32.mrb[0].mxu0
  %v5332 = vadd.f32 0.0, %v5331
  %5333 = vmatprep.mubr.bf16.mxu0 0
  %5334 = vmatmul.mubr.bf16.gmra.mrb[0].mxu0 %v5000
  %v5335 = vpop.f32.mrb[0].mxu0
  %v5336 = vadd.f32 0.0, %v5335
  %v5337 = vpop.f32.mrb[0].mxu0
  %v5338 = vadd.f32 0.0, %v5337
  %v5339 = vpop.f32.mrb[0].mxu0
  %v5340 = vadd.f32 0.0, %v5339
  %v5341 = vpop.f32.mrb[0].mxu0
  %v5342 = vadd.f32 0.0, %v5341
  %5343 = vmatprep.mubr.bf16.mxu0 0
  %5344 = vmatmul.mubr.bf16.gmra.mrb[0].mxu0 %v5003
  %v5345 = vpop.f32.mrb[0].mxu0
  %v5346 = vadd.f32 0.0, %v5345
  %v5347 = vpop.f32.mrb[0].mxu0
  %v5348 = vadd.f32 0.0, %v5347
  %v5349 = vpop.f32.mrb[0].mxu0
  %v5350 = vadd.f32 0.0, %v5349
  %v5351 = vpop.f32.mrb[0].mxu0
  %v5352 = vadd.f32 0.0, %v5351
  %5353 = vmatprep.mubr.bf16.mxu0 0
  %5354 = vmatmul.mubr.bf16.gmra.mrb[0].mxu0 %v5006
  %v5355 = vpop.f32.mrb[0].mxu0
  %v5356 = vadd.f32 0.0, %v5355
  %v5357 = vpop.f32.mrb[0].mxu0
  %v5358 = vadd.f32 0.0, %v5357
  %v5359 = vpop.f32.mrb[0].mxu0
  %v5360 = vadd.f32 0.0, %v5359
  %v5361 = vpop.f32.mrb[0].mxu0
  %v5362 = vadd.f32 0.0, %v5361
  %5363 = vmatprep.mubr.bf16.mxu0 0
  %5364 = vmatmul.mubr.bf16.gmra.mrb[0].mxu0 %v5009
  %v5365 = vpop.f32.mrb[0].mxu0
  %v5366 = vadd.f32 0.0, %v5365
  %v5367 = vpop.f32.mrb[0].mxu0
  %v5368 = vadd.f32 0.0, %v5367
  %v5369 = vpop.f32.mrb[0].mxu0
  %v5370 = vadd.f32 0.0, %v5369
  %v5371 = vpop.f32.mrb[0].mxu0
  %v5372 = vadd.f32 0.0, %v5371
  %5373 = vmatprep.mubr.bf16.mxu0 0
  %5374 = vmatmul.mubr.bf16.gmra.mrb[0].mxu0 %v5012
  %v5375 = vpop.f32.mrb[0].mxu0
  %v5376 = vadd.f32 0.0, %v5375
  %v5377 = vpop.f32.mrb[0].mxu0
  %v5378 = vadd.f32 0.0, %v5377
  %v5379 = vpop.f32.mrb[0].mxu0
  %v5380 = vadd.f32 0.0, %v5379
  %v5381 = vpop.f32.mrb[0].mxu0
  %v5382 = vadd.f32 0.0, %v5381
  %5383 = vmatprep.mubr.bf16.mxu0 0
  %5384 = vmatmul.mubr.bf16.gmra.mrb[0].mxu0 %v5015
  %v5385 = vpop.f32.mrb[0].mxu0
  %v5386 = vadd.f32 0.0, %v5385
  %v5387 = vpop.f32.mrb[0].mxu0
  %v5388 = vadd.f32 0.0, %v5387
  %v5389 = vpop.f32.mrb[0].mxu0
  %v5390 = vadd.f32 0.0, %v5389
  %v5391 = vpop.f32.mrb[0].mxu0
  %v5392 = vadd.f32 0.0, %v5391
  %5393 = vmatprep.mubr.bf16.mxu0 0
  %5394 = vmatmul.mubr.bf16.gmra.mrb[0].mxu0 %v5018
  %v5395 = vpop.f32.mrb[0].mxu0
  %v5396 = vadd.f32 0.0, %v5395
  %v5397 = vpop.f32.mrb[0].mxu0
  %v5398 = vadd.f32 0.0, %v5397
  %v5399 = vpop.f32.mrb[0].mxu0
  %v5400 = vadd.f32 0.0, %v5399
  %v5401 = vpop.f32.mrb[0].mxu0
  %v5402 = vadd.f32 0.0, %v5401
  %5403 = vmatprep.mubr.bf16.mxu0 0
  %5404 = vmatmul.mubr.bf16.gmra.mrb[0].mxu0 %v5021
  %v5405 = vpop.f32.mrb[0].mxu0
  %v5406 = vadd.f32 0.0, %v5405
  %v5407 = vpop.f32.mrb[0].mxu0
  %v5408 = vadd.f32 0.0, %v5407
  %v5409 = vpop.f32.mrb[0].mxu0
  %v5410 = vadd.f32 0.0, %v5409
  %v5411 = vpop.f32.mrb[0].mxu0
  %v5412 = vadd.f32 0.0, %v5411
  %5413 = vmatprep.mubr.bf16.mxu0 0
  %5414 = vmatmul.mubr.bf16.gmra.mrb[0].mxu0 %v5024
  %v5415 = vpop.f32.mrb[0].mxu0
  %v5416 = vadd.f32 0.0, %v5415
  %v5417 = vpop.f32.mrb[0].mxu0
  %v5418 = vadd.f32 0.0, %v5417
  %v5419 = vpop.f32.mrb[0].mxu0
  %v5420 = vadd.f32 0.0, %v5419
  %v5421 = vpop.f32.mrb[0].mxu0
  %v5422 = vadd.f32 0.0, %v5421
  %5423 = vmatprep.mubr.bf16.mxu0 0
  %5424 = vmatmul.mubr.bf16.gmra.mrb[0].mxu0 %v5027
  %v5425 = vpop.f32.mrb[0].mxu0
  %v5426 = vadd.f32 0.0, %v5425
  %v5427 = vpop.f32.mrb[0].mxu0
  %v5428 = vadd.f32 0.0, %v5427
  %v5429 = vpop.f32.mrb[0].mxu0
  %v5430 = vadd.f32 0.0, %v5429
  %v5431 = vpop.f32.mrb[0].mxu0
  %v5432 = vadd.f32 0.0, %v5431
  %5433 = vmatprep.mubr.bf16.mxu0 0
  %5434 = vmatmul.mubr.bf16.gmra.mrb[0].mxu0 %v5030
  %v5435 = vpop.f32.mrb[0].mxu0
  %v5436 = vadd.f32 0.0, %v5435
  %v5437 = vpop.f32.mrb[0].mxu0
  %v5438 = vadd.f32 0.0, %v5437
  %v5439 = vpop.f32.mrb[0].mxu0
  %v5440 = vadd.f32 0.0, %v5439
  %v5441 = vpop.f32.mrb[0].mxu0
  %v5442 = vadd.f32 0.0, %v5441
  %5443 = vmatprep.mubr.bf16.mxu0 0
  %5444 = vmatmul.mubr.bf16.gmra.mrb[0].mxu0 %v5033
  %v5445 = vpop.f32.mrb[0].mxu0
  %v5446 = vadd.f32 0.0, %v5445
  %v5447 = vpop.f32.mrb[0].mxu0
  %v5448 = vadd.f32 0.0, %v5447
  %v5449 = vpop.f32.mrb[0].mxu0
  %v5450 = vadd.f32 0.0, %v5449
  %v5451 = vpop.f32.mrb[0].mxu0
  %v5452 = vadd.f32 0.0, %v5451
  %5453 = vmatprep.mubr.bf16.mxu0 0
  %5454 = vmatmul.mubr.bf16.gmra.mrb[0].mxu0 %v5036
  %v5455 = vpop.f32.mrb[0].mxu0
  %v5456 = vadd.f32 0.0, %v5455
  %v5457 = vpop.f32.mrb[0].mxu0
  %v5458 = vadd.f32 0.0, %v5457
  %v5459 = vpop.f32.mrb[0].mxu0
  %v5460 = vadd.f32 0.0, %v5459
  %v5461 = vpop.f32.mrb[0].mxu0
  %v5462 = vadd.f32 0.0, %v5461
  %5463 = vdwg.mxu0
  %vm5464 = vcmp.gt.f32.partialorder %v5073, 0.0
  %vm5465 = vcmp.gt.f32.partialorder %v5075, 0.0
  %vm5466 = vcmp.gt.f32.partialorder %v5286, 0.0
  %vm5467 = vcmp.gt.f32.partialorder %v5288, 0.0
  %vm5468 = vcmp.gt.f32.partialorder %v5077, 0.0
  %vm5469 = vcmp.gt.f32.partialorder %v5079, 0.0
  %vm5470 = vcmp.gt.f32.partialorder %v5290, 0.0
  %vm5471 = vcmp.gt.f32.partialorder %v5292, 0.0
  %vm5472 = vcmp.gt.f32.partialorder %v5083, 0.0
  %vm5473 = vcmp.gt.f32.partialorder %v5085, 0.0
  %vm5474 = vcmp.gt.f32.partialorder %v5296, 0.0
  %vm5475 = vcmp.gt.f32.partialorder %v5298, 0.0
  %vm5476 = vcmp.gt.f32.partialorder %v5087, 0.0
  %vm5477 = vcmp.gt.f32.partialorder %v5089, 0.0
  %vm5478 = vcmp.gt.f32.partialorder %v5300, 0.0
  %vm5479 = vcmp.gt.f32.partialorder %v5302, 0.0
  %vm5480 = vcmp.gt.f32.partialorder %v5093, 0.0
  %vm5481 = vcmp.gt.f32.partialorder %v5095, 0.0
  %vm5482 = vcmp.gt.f32.partialorder %v5306, 0.0
  %vm5483 = vcmp.gt.f32.partialorder %v5308, 0.0
  %vm5484 = vcmp.gt.f32.partialorder %v5097, 0.0
  %vm5485 = vcmp.gt.f32.partialorder %v5099, 0.0
  %vm5486 = vcmp.gt.f32.partialorder %v5310, 0.0
  %vm5487 = vcmp.gt.f32.partialorder %v5312, 0.0
  %vm5488 = vcmp.gt.f32.partialorder %v5103, 0.0
  %vm5489 = vcmp.gt.f32.partialorder %v5105, 0.0
  %vm5490 = vcmp.gt.f32.partialorder %v5316, 0.0
  %vm5491 = vcmp.gt.f32.partialorder %v5318, 0.0
  %vm5492 = vcmp.gt.f32.partialorder %v5107, 0.0
  %vm5493 = vcmp.gt.f32.partialorder %v5109, 0.0
  %vm5494 = vcmp.gt.f32.partialorder %v5320, 0.0
  %vm5495 = vcmp.gt.f32.partialorder %v5322, 0.0
  %vm5496 = vcmp.gt.f32.partialorder %v5113, 0.0
  %vm5497 = vcmp.gt.f32.partialorder %v5115, 0.0
  %vm5498 = vcmp.gt.f32.partialorder %v5326, 0.0
  %vm5499 = vcmp.gt.f32.partialorder %v5328, 0.0
  %vm5500 = vcmp.gt.f32.partialorder %v5117, 0.0
  %vm5501 = vcmp.gt.f32.partialorder %v5119, 0.0
  %vm5502 = vcmp.gt.f32.partialorder %v5330, 0.0
  %vm5503 = vcmp.gt.f32.partialorder %v5332, 0.0
  %vm5504 = vcmp.gt.f32.partialorder %v5123, 0.0
  %vm5505 = vcmp.gt.f32.partialorder %v5125, 0.0
  %vm5506 = vcmp.gt.f32.partialorder %v5336, 0.0
  %vm5507 = vcmp.gt.f32.partialorder %v5338, 0.0
  %vm5508 = vcmp.gt.f32.partialorder %v5127, 0.0
  %vm5509 = vcmp.gt.f32.partialorder %v5129, 0.0
  %vm5510 = vcmp.gt.f32.partialorder %v5340, 0.0
  %vm5511 = vcmp.gt.f32.partialorder %v5342, 0.0
  %vm5512 = vcmp.gt.f32.partialorder %v5133, 0.0
  %vm5513 = vcmp.gt.f32.partialorder %v5135, 0.0
  %vm5514 = vcmp.gt.f32.partialorder %v5346, 0.0
  %vm5515 = vcmp.gt.f32.partialorder %v5348, 0.0
  %vm5516 = vcmp.gt.f32.partialorder %v5137, 0.0
  %vm5517 = vcmp.gt.f32.partialorder %v5139, 0.0
  %vm5518 = vcmp.gt.f32.partialorder %v5350, 0.0
  %vm5519 = vcmp.gt.f32.partialorder %v5352, 0.0
  %vm5520 = vcmp.gt.f32.partialorder %v5143, 0.0
  %vm5521 = vcmp.gt.f32.partialorder %v5145, 0.0
  %vm5522 = vcmp.gt.f32.partialorder %v5356, 0.0
  %vm5523 = vcmp.gt.f32.partialorder %v5358, 0.0
  %vm5524 = vcmp.gt.f32.partialorder %v5147, 0.0
  %vm5525 = vcmp.gt.f32.partialorder %v5149, 0.0
  %vm5526 = vcmp.gt.f32.partialorder %v5360, 0.0
  %vm5527 = vcmp.gt.f32.partialorder %v5362, 0.0
  %vm5528 = vcmp.gt.f32.partialorder %v5153, 0.0
  %vm5529 = vcmp.gt.f32.partialorder %v5155, 0.0
  %vm5530 = vcmp.gt.f32.partialorder %v5366, 0.0
  %vm5531 = vcmp.gt.f32.partialorder %v5368, 0.0
  %vm5532 = vcmp.gt.f32.partialorder %v5157, 0.0
  %vm5533 = vcmp.gt.f32.partialorder %v5159, 0.0
  %vm5534 = vcmp.gt.f32.partialorder %v5370, 0.0
  %vm5535 = vcmp.gt.f32.partialorder %v5372, 0.0
  %vm5536 = vcmp.gt.f32.partialorder %v5163, 0.0
  %vm5537 = vcmp.gt.f32.partialorder %v5165, 0.0
  %vm5538 = vcmp.gt.f32.partialorder %v5376, 0.0
  %vm5539 = vcmp.gt.f32.partialorder %v5378, 0.0
  %vm5540 = vcmp.gt.f32.partialorder %v5167, 0.0
  %vm5541 = vcmp.gt.f32.partialorder %v5169, 0.0
  %vm5542 = vcmp.gt.f32.partialorder %v5380, 0.0
  %vm5543 = vcmp.gt.f32.partialorder %v5382, 0.0
  %vm5544 = vcmp.gt.f32.partialorder %v5173, 0.0
  %vm5545 = vcmp.gt.f32.partialorder %v5175, 0.0
  %vm5546 = vcmp.gt.f32.partialorder %v5386, 0.0
  %vm5547 = vcmp.gt.f32.partialorder %v5388, 0.0
  %vm5548 = vcmp.gt.f32.partialorder %v5177, 0.0
  %vm5549 = vcmp.gt.f32.partialorder %v5179, 0.0
  %vm5550 = vcmp.gt.f32.partialorder %v5390, 0.0
  %vm5551 = vcmp.gt.f32.partialorder %v5392, 0.0
  %vm5552 = vcmp.gt.f32.partialorder %v5183, 0.0
  %vm5553 = vcmp.gt.f32.partialorder %v5185, 0.0
  %vm5554 = vcmp.gt.f32.partialorder %v5396, 0.0
  %vm5555 = vcmp.gt.f32.partialorder %v5398, 0.0
  %vm5556 = vcmp.gt.f32.partialorder %v5187, 0.0
  %vm5557 = vcmp.gt.f32.partialorder %v5189, 0.0
  %vm5558 = vcmp.gt.f32.partialorder %v5400, 0.0
  %vm5559 = vcmp.gt.f32.partialorder %v5402, 0.0
  %vm5560 = vcmp.gt.f32.partialorder %v5193, 0.0
  %vm5561 = vcmp.gt.f32.partialorder %v5195, 0.0
  %vm5562 = vcmp.gt.f32.partialorder %v5406, 0.0
  %vm5563 = vcmp.gt.f32.partialorder %v5408, 0.0
  %vm5564 = vcmp.gt.f32.partialorder %v5197, 0.0
  %vm5565 = vcmp.gt.f32.partialorder %v5199, 0.0
  %vm5566 = vcmp.gt.f32.partialorder %v5410, 0.0
  %vm5567 = vcmp.gt.f32.partialorder %v5412, 0.0
  %vm5568 = vcmp.gt.f32.partialorder %v5203, 0.0
  %vm5569 = vcmp.gt.f32.partialorder %v5205, 0.0
  %vm5570 = vcmp.gt.f32.partialorder %v5416, 0.0
  %vm5571 = vcmp.gt.f32.partialorder %v5418, 0.0
  %vm5572 = vcmp.gt.f32.partialorder %v5207, 0.0
  %vm5573 = vcmp.gt.f32.partialorder %v5209, 0.0
  %vm5574 = vcmp.gt.f32.partialorder %v5420, 0.0
  %vm5575 = vcmp.gt.f32.partialorder %v5422, 0.0
  %vm5576 = vcmp.gt.f32.partialorder %v5213, 0.0
  %vm5577 = vcmp.gt.f32.partialorder %v5215, 0.0
  %vm5578 = vcmp.gt.f32.partialorder %v5426, 0.0
  %vm5579 = vcmp.gt.f32.partialorder %v5428, 0.0
  %vm5580 = vcmp.gt.f32.partialorder %v5217, 0.0
  %vm5581 = vcmp.gt.f32.partialorder %v5219, 0.0
  %vm5582 = vcmp.gt.f32.partialorder %v5430, 0.0
  %vm5583 = vcmp.gt.f32.partialorder %v5432, 0.0
  %vm5584 = vcmp.gt.f32.partialorder %v5223, 0.0
  %vm5585 = vcmp.gt.f32.partialorder %v5225, 0.0
  %vm5586 = vcmp.gt.f32.partialorder %v5436, 0.0
  %vm5587 = vcmp.gt.f32.partialorder %v5438, 0.0
  %vm5588 = vcmp.gt.f32.partialorder %v5227, 0.0
  %vm5589 = vcmp.gt.f32.partialorder %v5229, 0.0
  %vm5590 = vcmp.gt.f32.partialorder %v5440, 0.0
  %vm5591 = vcmp.gt.f32.partialorder %v5442, 0.0
  %vm5592 = vcmp.gt.f32.partialorder %v5233, 0.0
  %vm5593 = vcmp.gt.f32.partialorder %v5235, 0.0
  %vm5594 = vcmp.gt.f32.partialorder %v5446, 0.0
  %vm5595 = vcmp.gt.f32.partialorder %v5448, 0.0
  %vm5596 = vcmp.gt.f32.partialorder %v5237, 0.0
  %vm5597 = vcmp.gt.f32.partialorder %v5239, 0.0
  %vm5598 = vcmp.gt.f32.partialorder %v5450, 0.0
  %vm5599 = vcmp.gt.f32.partialorder %v5452, 0.0
  %vm5600 = vcmp.gt.f32.partialorder %v5243, 0.0
  %vm5601 = vcmp.gt.f32.partialorder %v5245, 0.0
  %vm5602 = vcmp.gt.f32.partialorder %v5456, 0.0
  %vm5603 = vcmp.gt.f32.partialorder %v5458, 0.0
  %vm5604 = vcmp.gt.f32.partialorder %v5247, 0.0
  %vm5605 = vcmp.gt.f32.partialorder %v5249, 0.0
  %vm5606 = vcmp.gt.f32.partialorder %v5460, 0.0
  %vm5607 = vcmp.gt.f32.partialorder %v5462, 0.0
  %v5608 = vmul.f32 %v5073, 0.2
  %v5609 = vmul.f32 %v5075, 0.2
  %v5610 = vmul.f32 %v5286, 0.2
  %v5611 = vmul.f32 %v5288, 0.2
  %v5612 = vmul.f32 %v5077, 0.2
  %v5613 = vmul.f32 %v5079, 0.2
  %v5614 = vmul.f32 %v5290, 0.2
  %v5615 = vmul.f32 %v5292, 0.2
  %v5616 = vmul.f32 %v5083, 0.2
  %v5617 = vmul.f32 %v5085, 0.2
  %v5618 = vmul.f32 %v5296, 0.2
  %v5619 = vmul.f32 %v5298, 0.2
  %v5620 = vmul.f32 %v5087, 0.2
  %v5621 = vmul.f32 %v5089, 0.2
  %v5622 = vmul.f32 %v5300, 0.2
  %v5623 = vmul.f32 %v5302, 0.2
  %v5624 = vmul.f32 %v5093, 0.2
  %v5625 = vmul.f32 %v5095, 0.2
  %v5626 = vmul.f32 %v5306, 0.2
  %v5627 = vmul.f32 %v5308, 0.2
  %v5628 = vmul.f32 %v5097, 0.2
  %v5629 = vmul.f32 %v5099, 0.2
  %v5630 = vmul.f32 %v5310, 0.2
  %v5631 = vmul.f32 %v5312, 0.2
  %v5632 = vmul.f32 %v5103, 0.2
  %v5633 = vmul.f32 %v5105, 0.2
  %v5634 = vmul.f32 %v5316, 0.2
  %v5635 = vmul.f32 %v5318, 0.2
  %v5636 = vmul.f32 %v5107, 0.2
  %v5637 = vmul.f32 %v5109, 0.2
  %v5638 = vmul.f32 %v5320, 0.2
  %v5639 = vmul.f32 %v5322, 0.2
  %v5640 = vmul.f32 %v5113, 0.2
  %v5641 = vmul.f32 %v5115, 0.2
  %v5642 = vmul.f32 %v5326, 0.2
  %v5643 = vmul.f32 %v5328, 0.2
  %v5644 = vmul.f32 %v5117, 0.2
  %v5645 = vmul.f32 %v5119, 0.2
  %v5646 = vmul.f32 %v5330, 0.2
  %v5647 = vmul.f32 %v5332, 0.2
  %v5648 = vmul.f32 %v5123, 0.2
  %v5649 = vmul.f32 %v5125, 0.2
  %v5650 = vmul.f32 %v5336, 0.2
  %v5651 = vmul.f32 %v5338, 0.2
  %v5652 = vmul.f32 %v5127, 0.2
  %v5653 = vmul.f32 %v5129, 0.2
  %v5654 = vmul.f32 %v5340, 0.2
  %v5655 = vmul.f32 %v5342, 0.2
  %v5656 = vmul.f32 %v5133, 0.2
  %v5657 = vmul.f32 %v5135, 0.2
  %v5658 = vmul.f32 %v5346, 0.2
  %v5659 = vmul.f32 %v5348, 0.2
  %v5660 = vmul.f32 %v5137, 0.2
  %v5661 = vmul.f32 %v5139, 0.2
  %v5662 = vmul.f32 %v5350, 0.2
  %v5663 = vmul.f32 %v5352, 0.2
  %v5664 = vmul.f32 %v5143, 0.2
  %v5665 = vmul.f32 %v5145, 0.2
  %v5666 = vmul.f32 %v5356, 0.2
  %v5667 = vmul.f32 %v5358, 0.2
  %v5668 = vmul.f32 %v5147, 0.2
  %v5669 = vmul.f32 %v5149, 0.2
  %v5670 = vmul.f32 %v5360, 0.2
  %v5671 = vmul.f32 %v5362, 0.2
  %v5672 = vmul.f32 %v5153, 0.2
  %v5673 = vmul.f32 %v5155, 0.2
  %v5674 = vmul.f32 %v5366, 0.2
  %v5675 = vmul.f32 %v5368, 0.2
  %v5676 = vmul.f32 %v5157, 0.2
  %v5677 = vmul.f32 %v5159, 0.2
  %v5678 = vmul.f32 %v5370, 0.2
  %v5679 = vmul.f32 %v5372, 0.2
  %v5680 = vmul.f32 %v5163, 0.2
  %v5681 = vmul.f32 %v5165, 0.2
  %v5682 = vmul.f32 %v5376, 0.2
  %v5683 = vmul.f32 %v5378, 0.2
  %v5684 = vmul.f32 %v5167, 0.2
  %v5685 = vmul.f32 %v5169, 0.2
  %v5686 = vmul.f32 %v5380, 0.2
  %v5687 = vmul.f32 %v5382, 0.2
  %v5688 = vmul.f32 %v5173, 0.2
  %v5689 = vmul.f32 %v5175, 0.2
  %v5690 = vmul.f32 %v5386, 0.2
  %v5691 = vmul.f32 %v5388, 0.2
  %v5692 = vmul.f32 %v5177, 0.2
  %v5693 = vmul.f32 %v5179, 0.2
  %v5694 = vmul.f32 %v5390, 0.2
  %v5695 = vmul.f32 %v5392, 0.2
  %v5696 = vmul.f32 %v5183, 0.2
  %v5697 = vmul.f32 %v5185, 0.2
  %v5698 = vmul.f32 %v5396, 0.2
  %v5699 = vmul.f32 %v5398, 0.2
  %v5700 = vmul.f32 %v5187, 0.2
  %v5701 = vmul.f32 %v5189, 0.2
  %v5702 = vmul.f32 %v5400, 0.2
  %v5703 = vmul.f32 %v5402, 0.2
  %v5704 = vmul.f32 %v5193, 0.2
  %v5705 = vmul.f32 %v5195, 0.2
  %v5706 = vmul.f32 %v5406, 0.2
  %v5707 = vmul.f32 %v5408, 0.2
  %v5708 = vmul.f32 %v5197, 0.2
  %v5709 = vmul.f32 %v5199, 0.2
  %v5710 = vmul.f32 %v5410, 0.2
  %v5711 = vmul.f32 %v5412, 0.2
  %v5712 = vmul.f32 %v5203, 0.2
  %v5713 = vmul.f32 %v5205, 0.2
  %v5714 = vmul.f32 %v5416, 0.2
  %v5715 = vmul.f32 %v5418, 0.2
  %v5716 = vmul.f32 %v5207, 0.2
  %v5717 = vmul.f32 %v5209, 0.2
  %v5718 = vmul.f32 %v5420, 0.2
  %v5719 = vmul.f32 %v5422, 0.2
  %v5720 = vmul.f32 %v5213, 0.2
  %v5721 = vmul.f32 %v5215, 0.2
  %v5722 = vmul.f32 %v5426, 0.2
  %v5723 = vmul.f32 %v5428, 0.2
  %v5724 = vmul.f32 %v5217, 0.2
  %v5725 = vmul.f32 %v5219, 0.2
  %v5726 = vmul.f32 %v5430, 0.2
  %v5727 = vmul.f32 %v5432, 0.2
  %v5728 = vmul.f32 %v5223, 0.2
  %v5729 = vmul.f32 %v5225, 0.2
  %v5730 = vmul.f32 %v5436, 0.2
  %v5731 = vmul.f32 %v5438, 0.2
  %v5732 = vmul.f32 %v5227, 0.2
  %v5733 = vmul.f32 %v5229, 0.2
  %v5734 = vmul.f32 %v5440, 0.2
  %v5735 = vmul.f32 %v5442, 0.2
  %v5736 = vmul.f32 %v5233, 0.2
  %v5737 = vmul.f32 %v5235, 0.2
  %v5738 = vmul.f32 %v5446, 0.2
  %v5739 = vmul.f32 %v5448, 0.2
  %v5740 = vmul.f32 %v5237, 0.2
  %v5741 = vmul.f32 %v5239, 0.2
  %v5742 = vmul.f32 %v5450, 0.2
  %v5743 = vmul.f32 %v5452, 0.2
  %v5744 = vmul.f32 %v5243, 0.2
  %v5745 = vmul.f32 %v5245, 0.2
  %v5746 = vmul.f32 %v5456, 0.2
  %v5747 = vmul.f32 %v5458, 0.2
  %v5748 = vmul.f32 %v5247, 0.2
  %v5749 = vmul.f32 %v5249, 0.2
  %v5750 = vmul.f32 %v5460, 0.2
  %v5751 = vmul.f32 %v5462, 0.2
  %v5752 = vsel %vm5464, %v5073, %v5608
  %v5753 = vsel %vm5465, %v5075, %v5609
  %v5754 = vsel %vm5466, %v5286, %v5610
  %v5755 = vsel %vm5467, %v5288, %v5611
  %v5756 = vsel %vm5468, %v5077, %v5612
  %v5757 = vsel %vm5469, %v5079, %v5613
  %v5758 = vsel %vm5470, %v5290, %v5614
  %v5759 = vsel %vm5471, %v5292, %v5615
  %v5760 = vsel %vm5472, %v5083, %v5616
  %v5761 = vsel %vm5473, %v5085, %v5617
  %v5762 = vsel %vm5474, %v5296, %v5618
  %v5763 = vsel %vm5475, %v5298, %v5619
  %v5764 = vsel %vm5476, %v5087, %v5620
  %v5765 = vsel %vm5477, %v5089, %v5621
  %v5766 = vsel %vm5478, %v5300, %v5622
  %v5767 = vsel %vm5479, %v5302, %v5623
  %v5768 = vsel %vm5480, %v5093, %v5624
  %v5769 = vsel %vm5481, %v5095, %v5625
  %v5770 = vsel %vm5482, %v5306, %v5626
  %v5771 = vsel %vm5483, %v5308, %v5627
  %v5772 = vsel %vm5484, %v5097, %v5628
  %v5773 = vsel %vm5485, %v5099, %v5629
  %v5774 = vsel %vm5486, %v5310, %v5630
  %v5775 = vsel %vm5487, %v5312, %v5631
  %v5776 = vsel %vm5488, %v5103, %v5632
  %v5777 = vsel %vm5489, %v5105, %v5633
  %v5778 = vsel %vm5490, %v5316, %v5634
  %v5779 = vsel %vm5491, %v5318, %v5635
  %v5780 = vsel %vm5492, %v5107, %v5636
  %v5781 = vsel %vm5493, %v5109, %v5637
  %v5782 = vsel %vm5494, %v5320, %v5638
  %v5783 = vsel %vm5495, %v5322, %v5639
  %v5784 = vsel %vm5496, %v5113, %v5640
  %v5785 = vsel %vm5497, %v5115, %v5641
  %v5786 = vsel %vm5498, %v5326, %v5642
  %v5787 = vsel %vm5499, %v5328, %v5643
  %v5788 = vsel %vm5500, %v5117, %v5644
  %v5789 = vsel %vm5501, %v5119, %v5645
  %v5790 = vsel %vm5502, %v5330, %v5646
  %v5791 = vsel %vm5503, %v5332, %v5647
  %v5792 = vsel %vm5504, %v5123, %v5648
  %v5793 = vsel %vm5505, %v5125, %v5649
  %v5794 = vsel %vm5506, %v5336, %v5650
  %v5795 = vsel %vm5507, %v5338, %v5651
  %v5796 = vsel %vm5508, %v5127, %v5652
  %v5797 = vsel %vm5509, %v5129, %v5653
  %v5798 = vsel %vm5510, %v5340, %v5654
  %v5799 = vsel %vm5511, %v5342, %v5655
  %v5800 = vsel %vm5512, %v5133, %v5656
  %v5801 = vsel %vm5513, %v5135, %v5657
  %v5802 = vsel %vm5514, %v5346, %v5658
  %v5803 = vsel %vm5515, %v5348, %v5659
  %v5804 = vsel %vm5516, %v5137, %v5660
  %v5805 = vsel %vm5517, %v5139, %v5661
  %v5806 = vsel %vm5518, %v5350, %v5662
  %v5807 = vsel %vm5519, %v5352, %v5663
  %v5808 = vsel %vm5520, %v5143, %v5664
  %v5809 = vsel %vm5521, %v5145, %v5665
  %v5810 = vsel %vm5522, %v5356, %v5666
  %v5811 = vsel %vm5523, %v5358, %v5667
  %v5812 = vsel %vm5524, %v5147, %v5668
  %v5813 = vsel %vm5525, %v5149, %v5669
  %v5814 = vsel %vm5526, %v5360, %v5670
  %v5815 = vsel %vm5527, %v5362, %v5671
  %v5816 = vsel %vm5528, %v5153, %v5672
  %v5817 = vsel %vm5529, %v5155, %v5673
  %v5818 = vsel %vm5530, %v5366, %v5674
  %v5819 = vsel %vm5531, %v5368, %v5675
  %v5820 = vsel %vm5532, %v5157, %v5676
  %v5821 = vsel %vm5533, %v5159, %v5677
  %v5822 = vsel %vm5534, %v5370, %v5678
  %v5823 = vsel %vm5535, %v5372, %v5679
  %v5824 = vsel %vm5536, %v5163, %v5680
  %v5825 = vsel %vm5537, %v5165, %v5681
  %v5826 = vsel %vm5538, %v5376, %v5682
  %v5827 = vsel %vm5539, %v5378, %v5683
  %v5828 = vsel %vm5540, %v5167, %v5684
  %v5829 = vsel %vm5541, %v5169, %v5685
  %v5830 = vsel %vm5542, %v5380, %v5686
  %v5831 = vsel %vm5543, %v5382, %v5687
  %v5832 = vsel %vm5544, %v5173, %v5688
  %v5833 = vsel %vm5545, %v5175, %v5689
  %v5834 = vsel %vm5546, %v5386, %v5690
  %v5835 = vsel %vm5547, %v5388, %v5691
  %v5836 = vsel %vm5548, %v5177, %v5692
  %v5837 = vsel %vm5549, %v5179, %v5693
  %v5838 = vsel %vm5550, %v5390, %v5694
  %v5839 = vsel %vm5551, %v5392, %v5695
  %v5840 = vsel %vm5552, %v5183, %v5696
  %v5841 = vsel %vm5553, %v5185, %v5697
  %v5842 = vsel %vm5554, %v5396, %v5698
  %v5843 = vsel %vm5555, %v5398, %v5699
  %v5844 = vsel %vm5556, %v5187, %v5700
  %v5845 = vsel %vm5557, %v5189, %v5701
  %v5846 = vsel %vm5558, %v5400, %v5702
  %v5847 = vsel %vm5559, %v5402, %v5703
  %v5848 = vsel %vm5560, %v5193, %v5704
  %v5849 = vsel %vm5561, %v5195, %v5705
  %v5850 = vsel %vm5562, %v5406, %v5706
  %v5851 = vsel %vm5563, %v5408, %v5707
  %v5852 = vsel %vm5564, %v5197, %v5708
  %v5853 = vsel %vm5565, %v5199, %v5709
  %v5854 = vsel %vm5566, %v5410, %v5710
  %v5855 = vsel %vm5567, %v5412, %v5711
  %v5856 = vsel %vm5568, %v5203, %v5712
  %v5857 = vsel %vm5569, %v5205, %v5713
  %v5858 = vsel %vm5570, %v5416, %v5714
  %v5859 = vsel %vm5571, %v5418, %v5715
  %v5860 = vsel %vm5572, %v5207, %v5716
  %v5861 = vsel %vm5573, %v5209, %v5717
  %v5862 = vsel %vm5574, %v5420, %v5718
  %v5863 = vsel %vm5575, %v5422, %v5719
  %v5864 = vsel %vm5576, %v5213, %v5720
  %v5865 = vsel %vm5577, %v5215, %v5721
  %v5866 = vsel %vm5578, %v5426, %v5722
  %v5867 = vsel %vm5579, %v5428, %v5723
  %v5868 = vsel %vm5580, %v5217, %v5724
  %v5869 = vsel %vm5581, %v5219, %v5725
  %v5870 = vsel %vm5582, %v5430, %v5726
  %v5871 = vsel %vm5583, %v5432, %v5727
  %v5872 = vsel %vm5584, %v5223, %v5728
  %v5873 = vsel %vm5585, %v5225, %v5729
  %v5874 = vsel %vm5586, %v5436, %v5730
  %v5875 = vsel %vm5587, %v5438, %v5731
  %v5876 = vsel %vm5588, %v5227, %v5732
  %v5877 = vsel %vm5589, %v5229, %v5733
  %v5878 = vsel %vm5590, %v5440, %v5734
  %v5879 = vsel %vm5591, %v5442, %v5735
  %v5880 = vsel %vm5592, %v5233, %v5736
  %v5881 = vsel %vm5593, %v5235, %v5737
  %v5882 = vsel %vm5594, %v5446, %v5738
  %v5883 = vsel %vm5595, %v5448, %v5739
  %v5884 = vsel %vm5596, %v5237, %v5740
  %v5885 = vsel %vm5597, %v5239, %v5741
  %v5886 = vsel %vm5598, %v5450, %v5742
  %v5887 = vsel %vm5599, %v5452, %v5743
  %v5888 = vsel %vm5600, %v5243, %v5744
  %v5889 = vsel %vm5601, %v5245, %v5745
  %v5890 = vsel %vm5602, %v5456, %v5746
  %v5891 = vsel %vm5603, %v5458, %v5747
  %v5892 = vsel %vm5604, %v5247, %v5748
  %v5893 = vsel %vm5605, %v5249, %v5749
  %v5894 = vsel %vm5606, %v5460, %v5750
  %v5895 = vsel %vm5607, %v5462, %v5751
  %v5896 = vpack.c.bf16 %v5756, %v5752
  %v5897 = vpack.c.bf16 %v5757, %v5753
  %v5898 = vpack.c.bf16 %v5758, %v5754
  %v5899 = vpack.c.bf16 %v5759, %v5755
  %v5900 = vpack.c.bf16 %v5764, %v5760
  %v5901 = vpack.c.bf16 %v5765, %v5761
  %v5902 = vpack.c.bf16 %v5766, %v5762
  %v5903 = vpack.c.bf16 %v5767, %v5763
  %v5904 = vpack.c.bf16 %v5772, %v5768
  %v5905 = vpack.c.bf16 %v5773, %v5769
  %v5906 = vpack.c.bf16 %v5774, %v5770
  %v5907 = vpack.c.bf16 %v5775, %v5771
  %v5908 = vpack.c.bf16 %v5780, %v5776
  %v5909 = vpack.c.bf16 %v5781, %v5777
  %v5910 = vpack.c.bf16 %v5782, %v5778
  %v5911 = vpack.c.bf16 %v5783, %v5779
  %v5912 = vpack.c.bf16 %v5788, %v5784
  %v5913 = vpack.c.bf16 %v5789, %v5785
  %v5914 = vpack.c.bf16 %v5790, %v5786
  %v5915 = vpack.c.bf16 %v5791, %v5787
  %v5916 = vpack.c.bf16 %v5796, %v5792
  %v5917 = vpack.c.bf16 %v5797, %v5793
  %v5918 = vpack.c.bf16 %v5798, %v5794
  %v5919 = vpack.c.bf16 %v5799, %v5795
  %v5920 = vpack.c.bf16 %v5804, %v5800
  %v5921 = vpack.c.bf16 %v5805, %v5801
  %v5922 = vpack.c.bf16 %v5806, %v5802
  %v5923 = vpack.c.bf16 %v5807, %v5803
  %v5924 = vpack.c.bf16 %v5812, %v5808
  %v5925 = vpack.c.bf16 %v5813, %v5809
  %v5926 = vpack.c.bf16 %v5814, %v5810
  %v5927 = vpack.c.bf16 %v5815, %v5811
  %v5928 = vpack.c.bf16 %v5820, %v5816
  %v5929 = vpack.c.bf16 %v5821, %v5817
  %v5930 = vpack.c.bf16 %v5822, %v5818
  %v5931 = vpack.c.bf16 %v5823, %v5819
  %v5932 = vpack.c.bf16 %v5828, %v5824
  %v5933 = vpack.c.bf16 %v5829, %v5825
  %v5934 = vpack.c.bf16 %v5830, %v5826
  %v5935 = vpack.c.bf16 %v5831, %v5827
  %v5936 = vpack.c.bf16 %v5836, %v5832
  %v5937 = vpack.c.bf16 %v5837, %v5833
  %v5938 = vpack.c.bf16 %v5838, %v5834
  %v5939 = vpack.c.bf16 %v5839, %v5835
  %v5940 = vpack.c.bf16 %v5844, %v5840
  %v5941 = vpack.c.bf16 %v5845, %v5841
  %v5942 = vpack.c.bf16 %v5846, %v5842
  %v5943 = vpack.c.bf16 %v5847, %v5843
  %v5944 = vpack.c.bf16 %v5852, %v5848
  %v5945 = vpack.c.bf16 %v5853, %v5849
  %v5946 = vpack.c.bf16 %v5854, %v5850
  %v5947 = vpack.c.bf16 %v5855, %v5851
  %v5948 = vpack.c.bf16 %v5860, %v5856
  %v5949 = vpack.c.bf16 %v5861, %v5857
  %v5950 = vpack.c.bf16 %v5862, %v5858
  %v5951 = vpack.c.bf16 %v5863, %v5859
  %v5952 = vpack.c.bf16 %v5868, %v5864
  %v5953 = vpack.c.bf16 %v5869, %v5865
  %v5954 = vpack.c.bf16 %v5870, %v5866
  %v5955 = vpack.c.bf16 %v5871, %v5867
  %v5956 = vpack.c.bf16 %v5876, %v5872
  %v5957 = vpack.c.bf16 %v5877, %v5873
  %v5958 = vpack.c.bf16 %v5878, %v5874
  %v5959 = vpack.c.bf16 %v5879, %v5875
  %v5960 = vpack.c.bf16 %v5884, %v5880
  %v5961 = vpack.c.bf16 %v5885, %v5881
  %v5962 = vpack.c.bf16 %v5886, %v5882
  %v5963 = vpack.c.bf16 %v5887, %v5883
  %v5964 = vpack.c.bf16 %v5892, %v5888
  %v5965 = vpack.c.bf16 %v5893, %v5889
  %v5966 = vpack.c.bf16 %v5894, %v5890
  %v5967 = vpack.c.bf16 %v5895, %v5891
  %v5968 = vld [vmem:[%s2] sm:$0xf]
  %v5969 = vld [vmem:[%s2 + $0x4] sm:$0xf]
  %v5970 = vld [vmem:[%s2 + $0x8] sm:$0xf]
  %v5971 = vld [vmem:[%s2 + $0xc] sm:$0xf]
  %v5972 = vld [vmem:[%s2 + $0x10] sm:$0xf]
  %v5973 = vld [vmem:[%s2 + $0x14] sm:$0xf]
  %v5974 = vld [vmem:[%s2 + $0x18] sm:$0xf]
  %v5975 = vld [vmem:[%s2 + $0x1c] sm:$0xf]
  %v5976 = vld [vmem:[%s2 + $0x20] sm:$0xf]
  %v5977 = vld [vmem:[%s2 + $0x24] sm:$0xf]
  %v5978 = vld [vmem:[%s2 + $0x28] sm:$0xf]
  %v5979 = vld [vmem:[%s2 + $0x2c] sm:$0xf]
  %v5980 = vld [vmem:[%s2 + $0x30] sm:$0xf]
  %v5981 = vld [vmem:[%s2 + $0x34] sm:$0xf]
  %v5982 = vld [vmem:[%s2 + $0x38] sm:$0xf]
  %v5983 = vld [vmem:[%s2 + $0x3c] sm:$0xf]
  %v5984 = vld [vmem:[%s2 + $0x40] sm:$0xf]
  %v5985 = vld [vmem:[%s2 + $0x44] sm:$0xf]
  %v5986 = vld [vmem:[%s2 + $0x48] sm:$0xf]
  %v5987 = vld [vmem:[%s2 + $0x4c] sm:$0xf]
  %v5988 = vld [vmem:[%s2 + $0x50] sm:$0xf]
  %v5989 = vld [vmem:[%s2 + $0x54] sm:$0xf]
  %v5990 = vld [vmem:[%s2 + $0x58] sm:$0xf]
  %v5991 = vld [vmem:[%s2 + $0x5c] sm:$0xf]
  %v5992 = vld [vmem:[%s2 + $0x60] sm:$0xf]
  %v5993 = vld [vmem:[%s2 + $0x64] sm:$0xf]
  %v5994 = vld [vmem:[%s2 + $0x68] sm:$0xf]
  %v5995 = vld [vmem:[%s2 + $0x6c] sm:$0xf]
  %v5996 = vld [vmem:[%s2 + $0x70] sm:$0xf]
  %v5997 = vld [vmem:[%s2 + $0x74] sm:$0xf]
  %v5998 = vld [vmem:[%s2 + $0x78] sm:$0xf]
  %v5999 = vld [vmem:[%s2 + $0x7c] sm:$0xf]
  %v6000 = vld [vmem:[%s2 + $0x80] sm:$0xf]
  %v6001 = vld [vmem:[%s2 + $0x84] sm:$0xf]
  %v6002 = vld [vmem:[%s2 + $0x88] sm:$0xf]
  %v6003 = vld [vmem:[%s2 + $0x8c] sm:$0xf]
  %v6004 = vld [vmem:[%s2 + $0x90] sm:$0xf]
  %v6005 = vld [vmem:[%s2 + $0x94] sm:$0xf]
  %v6006 = vld [vmem:[%s2 + $0x98] sm:$0xf]
  %v6007 = vld [vmem:[%s2 + $0x9c] sm:$0xf]
  %v6008 = vld [vmem:[%s2 + $0xa0] sm:$0xf]
  %v6009 = vld [vmem:[%s2 + $0xa4] sm:$0xf]
  %v6010 = vld [vmem:[%s2 + $0xa8] sm:$0xf]
  %v6011 = vld [vmem:[%s2 + $0xac] sm:$0xf]
  %v6012 = vld [vmem:[%s2 + $0xb0] sm:$0xf]
  %v6013 = vld [vmem:[%s2 + $0xb4] sm:$0xf]
  %v6014 = vld [vmem:[%s2 + $0xb8] sm:$0xf]
  %v6015 = vld [vmem:[%s2 + $0xbc] sm:$0xf]
  %v6016 = vld [vmem:[%s2 + $0xc0] sm:$0xf]
  %v6017 = vld [vmem:[%s2 + $0xc4] sm:$0xf]
  %v6018 = vld [vmem:[%s2 + $0xc8] sm:$0xf]
  %v6019 = vld [vmem:[%s2 + $0xcc] sm:$0xf]
  %v6020 = vld [vmem:[%s2 + $0xd0] sm:$0xf]
  %v6021 = vld [vmem:[%s2 + $0xd4] sm:$0xf]
  %v6022 = vld [vmem:[%s2 + $0xd8] sm:$0xf]
  %v6023 = vld [vmem:[%s2 + $0xdc] sm:$0xf]
  %v6024 = vld [vmem:[%s2 + $0xe0] sm:$0xf]
  %v6025 = vld [vmem:[%s2 + $0xe4] sm:$0xf]
  %v6026 = vld [vmem:[%s2 + $0xe8] sm:$0xf]
  %v6027 = vld [vmem:[%s2 + $0xec] sm:$0xf]
  %v6028 = vld [vmem:[%s2 + $0xf0] sm:$0xf]
  %v6029 = vld [vmem:[%s2 + $0xf4] sm:$0xf]
  %v6030 = vld [vmem:[%s2 + $0xf8] sm:$0xf]
  %v6031 = vld [vmem:[%s2 + $0xfc] sm:$0xf]
  %v6096 = vunpack.c.l.b16 %v5968
  %v6097 = vunpack.c.l.b16 %v5969
  %v6098 = vunpack.c.l.b16 %v5970
  %v6099 = vunpack.c.l.b16 %v5971
  %v6100 = vunpack.c.l.b16 %v5972
  %v6101 = vunpack.c.l.b16 %v5973
  %v6102 = vunpack.c.l.b16 %v5974
  %v6103 = vunpack.c.l.b16 %v5975
  %v6104 = vunpack.c.l.b16 %v5976
  %v6105 = vunpack.c.l.b16 %v5977
  %v6106 = vunpack.c.l.b16 %v5978
  %v6107 = vunpack.c.l.b16 %v5979
  %v6108 = vunpack.c.l.b16 %v5980
  %v6109 = vunpack.c.l.b16 %v5981
  %v6110 = vunpack.c.l.b16 %v5982
  %v6111 = vunpack.c.l.b16 %v5983
  %v6112 = vunpack.c.l.b16 %v5984
  %v6113 = vunpack.c.l.b16 %v5985
  %v6114 = vunpack.c.l.b16 %v5986
  %v6115 = vunpack.c.l.b16 %v5987
  %v6116 = vunpack.c.l.b16 %v5988
  %v6117 = vunpack.c.l.b16 %v5989
  %v6118 = vunpack.c.l.b16 %v5990
  %v6119 = vunpack.c.l.b16 %v5991
  %v6120 = vunpack.c.l.b16 %v5992
  %v6121 = vunpack.c.l.b16 %v5993
  %v6122 = vunpack.c.l.b16 %v5994
  %v6123 = vunpack.c.l.b16 %v5995
  %v6124 = vunpack.c.l.b16 %v5996
  %v6125 = vunpack.c.l.b16 %v5997
  %v6126 = vunpack.c.l.b16 %v5998
  %v6127 = vunpack.c.l.b16 %v5999
  %v6128 = vunpack.c.l.b16 %v6000
  %v6129 = vunpack.c.l.b16 %v6001
  %v6130 = vunpack.c.l.b16 %v6002
  %v6131 = vunpack.c.l.b16 %v6003
  %v6132 = vunpack.c.l.b16 %v6004
  %v6133 = vunpack.c.l.b16 %v6005
  %v6134 = vunpack.c.l.b16 %v6006
  %v6135 = vunpack.c.l.b16 %v6007
  %v6136 = vunpack.c.l.b16 %v6008
  %v6137 = vunpack.c.l.b16 %v6009
  %v6138 = vunpack.c.l.b16 %v6010
  %v6139 = vunpack.c.l.b16 %v6011
  %v6140 = vunpack.c.l.b16 %v6012
  %v6141 = vunpack.c.l.b16 %v6013
  %v6142 = vunpack.c.l.b16 %v6014
  %v6143 = vunpack.c.l.b16 %v6015
  %v6144 = vunpack.c.l.b16 %v6016
  %v6145 = vunpack.c.l.b16 %v6017
  %v6146 = vunpack.c.l.b16 %v6018
  %v6147 = vunpack.c.l.b16 %v6019
  %v6148 = vunpack.c.l.b16 %v6020
  %v6149 = vunpack.c.l.b16 %v6021
  %v6150 = vunpack.c.l.b16 %v6022
  %v6151 = vunpack.c.l.b16 %v6023
  %v6152 = vunpack.c.l.b16 %v6024
  %v6153 = vunpack.c.l.b16 %v6025
  %v6154 = vunpack.c.l.b16 %v6026
  %v6155 = vunpack.c.l.b16 %v6027
  %v6156 = vunpack.c.l.b16 %v6028
  %v6157 = vunpack.c.l.b16 %v6029
  %v6158 = vunpack.c.l.b16 %v6030
  %v6159 = vunpack.c.l.b16 %v6031
  %v6160 = vpack.c.b16 %v6097, %v6096
  %v6161 = vpack.c.b16 %v6099, %v6098
  %v6162 = vpack.c.b16 %v6101, %v6100
  %v6163 = vpack.c.b16 %v6103, %v6102
  %v6164 = vpack.c.b16 %v6105, %v6104
  %v6165 = vpack.c.b16 %v6107, %v6106
  %v6166 = vpack.c.b16 %v6109, %v6108
  %v6167 = vpack.c.b16 %v6111, %v6110
  %v6168 = vpack.c.b16 %v6113, %v6112
  %v6169 = vpack.c.b16 %v6115, %v6114
  %v6170 = vpack.c.b16 %v6117, %v6116
  %v6171 = vpack.c.b16 %v6119, %v6118
  %v6172 = vpack.c.b16 %v6121, %v6120
  %v6173 = vpack.c.b16 %v6123, %v6122
  %v6174 = vpack.c.b16 %v6125, %v6124
  %v6175 = vpack.c.b16 %v6127, %v6126
  %v6176 = vpack.c.b16 %v6129, %v6128
  %v6177 = vpack.c.b16 %v6131, %v6130
  %v6178 = vpack.c.b16 %v6133, %v6132
  %v6179 = vpack.c.b16 %v6135, %v6134
  %v6180 = vpack.c.b16 %v6137, %v6136
  %v6181 = vpack.c.b16 %v6139, %v6138
  %v6182 = vpack.c.b16 %v6141, %v6140
  %v6183 = vpack.c.b16 %v6143, %v6142
  %v6184 = vpack.c.b16 %v6145, %v6144
  %v6185 = vpack.c.b16 %v6147, %v6146
  %v6186 = vpack.c.b16 %v6149, %v6148
  %v6187 = vpack.c.b16 %v6151, %v6150
  %v6188 = vpack.c.b16 %v6153, %v6152
  %v6189 = vpack.c.b16 %v6155, %v6154
  %v6190 = vpack.c.b16 %v6157, %v6156
  %v6191 = vpack.c.b16 %v6159, %v6158
  %6224 = vmatprep.subr.bf16.mxu0 0
  %6225 = vmatpush1.bf16.msra.mxu0 %v6160
  %6226 = vmatprep.subr.bf16.mxu0 0
  %6227 = vmatpush1.bf16.msra.mxu0 %v6161
  %6228 = vmatprep.subr.bf16.mxu0 0
  %6229 = vmatpush1.bf16.msra.mxu0 %v6162
  %6230 = vmatprep.subr.bf16.mxu0 0
  %6231 = vmatpush1.bf16.msra.mxu0 %v6163
  %6232 = vmatprep.subr.bf16.mxu0 0
  %6233 = vmatpush1.bf16.msra.mxu0 %v6164
  %6234 = vmatprep.subr.bf16.mxu0 0
  %6235 = vmatpush1.bf16.msra.mxu0 %v6165
  %6236 = vmatprep.subr.bf16.mxu0 0
  %6237 = vmatpush1.bf16.msra.mxu0 %v6166
  %6238 = vmatprep.subr.bf16.mxu0 0
  %6239 = vmatpush1.bf16.msra.mxu0 %v6167
  %6240 = vmatprep.subr.bf16.mxu0 0
  %6241 = vmatpush1.bf16.msra.mxu0 %v6168
  %6242 = vmatprep.subr.bf16.mxu0 0
  %6243 = vmatpush1.bf16.msra.mxu0 %v6169
  %6244 = vmatprep.subr.bf16.mxu0 0
  %6245 = vmatpush1.bf16.msra.mxu0 %v6170
  %6246 = vmatprep.subr.bf16.mxu0 0
  %6247 = vmatpush1.bf16.msra.mxu0 %v6171
  %6248 = vmatprep.subr.bf16.mxu0 0
  %6249 = vmatpush1.bf16.msra.mxu0 %v6172
  %6250 = vmatprep.subr.bf16.mxu0 0
  %6251 = vmatpush1.bf16.msra.mxu0 %v6173
  %6252 = vmatprep.subr.bf16.mxu0 0
  %6253 = vmatpush1.bf16.msra.mxu0 %v6174
  %6254 = vmatprep.subr.bf16.mxu0 0
  %6255 = vmatpush1.bf16.msra.mxu0 %v6175
  %6256 = vmatprep.mubr.bf16.mxu0 %v5897
  %6257 = vmatmul.mubr.bf16.gmra.mrb[0].mxu0 %v5896
  %v6258 = vpop.f32.mrb[0].mxu0
  %v6259 = vadd.f32 0.0, %v6258
  %v6260 = vpop.f32.mrb[0].mxu0
  %v6261 = vpop.f32.mrb[0].mxu0
  %v6262 = vadd.f32 0.0, %v6261
  %v6263 = vpop.f32.mrb[0].mxu0
  %6264 = vmatprep.mubr.bf16.mxu0 %v5901
  %6265 = vmatmul.mubr.bf16.gmra.mrb[0].mxu0 %v5900
  %v6266 = vpop.f32.mrb[0].mxu0
  %v6267 = vadd.f32 0.0, %v6266
  %v6268 = vpop.f32.mrb[0].mxu0
  %v6269 = vpop.f32.mrb[0].mxu0
  %v6270 = vadd.f32 0.0, %v6269
  %v6271 = vpop.f32.mrb[0].mxu0
  %6272 = vmatprep.mubr.bf16.mxu0 %v5905
  %6273 = vmatmul.mubr.bf16.gmra.mrb[0].mxu0 %v5904
  %v6274 = vpop.f32.mrb[0].mxu0
  %v6275 = vadd.f32 0.0, %v6274
  %v6276 = vpop.f32.mrb[0].mxu0
  %v6277 = vpop.f32.mrb[0].mxu0
  %v6278 = vadd.f32 0.0, %v6277
  %v6279 = vpop.f32.mrb[0].mxu0
  %6280 = vmatprep.mubr.bf16.mxu0 %v5909
  %6281 = vmatmul.mubr.bf16.gmra.mrb[0].mxu0 %v5908
  %v6282 = vpop.f32.mrb[0].mxu0
  %v6283 = vadd.f32 0.0, %v6282
  %v6284 = vpop.f32.mrb[0].mxu0
  %v6285 = vpop.f32.mrb[0].mxu0
  %v6286 = vadd.f32 0.0, %v6285
  %v6287 = vpop.f32.mrb[0].mxu0
  %6288 = vmatprep.mubr.bf16.mxu0 %v5913
  %6289 = vmatmul.mubr.bf16.gmra.mrb[0].mxu0 %v5912
  %v6290 = vpop.f32.mrb[0].mxu0
  %v6291 = vadd.f32 0.0, %v6290
  %v6292 = vpop.f32.mrb[0].mxu0
  %v6293 = vpop.f32.mrb[0].mxu0
  %v6294 = vadd.f32 0.0, %v6293
  %v6295 = vpop.f32.mrb[0].mxu0
  %6296 = vmatprep.mubr.bf16.mxu0 %v5917
  %6297 = vmatmul.mubr.bf16.gmra.mrb[0].mxu0 %v5916
  %v6298 = vpop.f32.mrb[0].mxu0
  %v6299 = vadd.f32 0.0, %v6298
  %v6300 = vpop.f32.mrb[0].mxu0
  %v6301 = vpop.f32.mrb[0].mxu0
  %v6302 = vadd.f32 0.0, %v6301
  %v6303 = vpop.f32.mrb[0].mxu0
  %6304 = vmatprep.mubr.bf16.mxu0 %v5921
  %6305 = vmatmul.mubr.bf16.gmra.mrb[0].mxu0 %v5920
  %v6306 = vpop.f32.mrb[0].mxu0
  %v6307 = vadd.f32 0.0, %v6306
  %v6308 = vpop.f32.mrb[0].mxu0
  %v6309 = vpop.f32.mrb[0].mxu0
  %v6310 = vadd.f32 0.0, %v6309
  %v6311 = vpop.f32.mrb[0].mxu0
  %6312 = vmatprep.mubr.bf16.mxu0 %v5925
  %6313 = vmatmul.mubr.bf16.gmra.mrb[0].mxu0 %v5924
  %v6314 = vpop.f32.mrb[0].mxu0
  %v6315 = vadd.f32 0.0, %v6314
  %v6316 = vpop.f32.mrb[0].mxu0
  %v6317 = vpop.f32.mrb[0].mxu0
  %v6318 = vadd.f32 0.0, %v6317
  %v6319 = vpop.f32.mrb[0].mxu0
  %6320 = vmatprep.mubr.bf16.mxu0 %v5929
  %6321 = vmatmul.mubr.bf16.gmra.mrb[0].mxu0 %v5928
  %v6322 = vpop.f32.mrb[0].mxu0
  %v6323 = vadd.f32 0.0, %v6322
  %v6324 = vpop.f32.mrb[0].mxu0
  %v6325 = vpop.f32.mrb[0].mxu0
  %v6326 = vadd.f32 0.0, %v6325
  %v6327 = vpop.f32.mrb[0].mxu0
  %6328 = vmatprep.mubr.bf16.mxu0 %v5933
  %6329 = vmatmul.mubr.bf16.gmra.mrb[0].mxu0 %v5932
  %v6330 = vpop.f32.mrb[0].mxu0
  %v6331 = vadd.f32 0.0, %v6330
  %v6332 = vpop.f32.mrb[0].mxu0
  %v6333 = vpop.f32.mrb[0].mxu0
  %v6334 = vadd.f32 0.0, %v6333
  %v6335 = vpop.f32.mrb[0].mxu0
  %6336 = vmatprep.mubr.bf16.mxu0 %v5937
  %6337 = vmatmul.mubr.bf16.gmra.mrb[0].mxu0 %v5936
  %v6338 = vpop.f32.mrb[0].mxu0
  %v6339 = vadd.f32 0.0, %v6338
  %v6340 = vpop.f32.mrb[0].mxu0
  %v6341 = vpop.f32.mrb[0].mxu0
  %v6342 = vadd.f32 0.0, %v6341
  %v6343 = vpop.f32.mrb[0].mxu0
  %6344 = vmatprep.mubr.bf16.mxu0 %v5941
  %6345 = vmatmul.mubr.bf16.gmra.mrb[0].mxu0 %v5940
  %v6346 = vpop.f32.mrb[0].mxu0
  %v6347 = vadd.f32 0.0, %v6346
  %v6348 = vpop.f32.mrb[0].mxu0
  %v6349 = vpop.f32.mrb[0].mxu0
  %v6350 = vadd.f32 0.0, %v6349
  %v6351 = vpop.f32.mrb[0].mxu0
  %6352 = vmatprep.mubr.bf16.mxu0 %v5945
  %6353 = vmatmul.mubr.bf16.gmra.mrb[0].mxu0 %v5944
  %v6354 = vpop.f32.mrb[0].mxu0
  %v6355 = vadd.f32 0.0, %v6354
  %v6356 = vpop.f32.mrb[0].mxu0
  %v6357 = vpop.f32.mrb[0].mxu0
  %v6358 = vadd.f32 0.0, %v6357
  %v6359 = vpop.f32.mrb[0].mxu0
  %6360 = vmatprep.mubr.bf16.mxu0 %v5949
  %6361 = vmatmul.mubr.bf16.gmra.mrb[0].mxu0 %v5948
  %v6362 = vpop.f32.mrb[0].mxu0
  %v6363 = vadd.f32 0.0, %v6362
  %v6364 = vpop.f32.mrb[0].mxu0
  %v6365 = vpop.f32.mrb[0].mxu0
  %v6366 = vadd.f32 0.0, %v6365
  %v6367 = vpop.f32.mrb[0].mxu0
  %6368 = vmatprep.mubr.bf16.mxu0 %v5953
  %6369 = vmatmul.mubr.bf16.gmra.mrb[0].mxu0 %v5952
  %v6370 = vpop.f32.mrb[0].mxu0
  %v6371 = vadd.f32 0.0, %v6370
  %v6372 = vpop.f32.mrb[0].mxu0
  %v6373 = vpop.f32.mrb[0].mxu0
  %v6374 = vadd.f32 0.0, %v6373
  %v6375 = vpop.f32.mrb[0].mxu0
  %6376 = vmatprep.mubr.bf16.mxu0 %v5957
  %6377 = vmatmul.mubr.bf16.gmra.mrb[0].mxu0 %v5956
  %v6378 = vpop.f32.mrb[0].mxu0
  %v6379 = vadd.f32 0.0, %v6378
  %v6380 = vpop.f32.mrb[0].mxu0
  %v6381 = vpop.f32.mrb[0].mxu0
  %v6382 = vadd.f32 0.0, %v6381
  %v6383 = vpop.f32.mrb[0].mxu0
  %6384 = vmatprep.mubr.bf16.mxu0 %v5961
  %6385 = vmatmul.mubr.bf16.gmra.mrb[0].mxu0 %v5960
  %v6386 = vpop.f32.mrb[0].mxu0
  %v6387 = vadd.f32 0.0, %v6386
  %v6388 = vpop.f32.mrb[0].mxu0
  %v6389 = vpop.f32.mrb[0].mxu0
  %v6390 = vadd.f32 0.0, %v6389
  %v6391 = vpop.f32.mrb[0].mxu0
  %6392 = vmatprep.mubr.bf16.mxu0 %v5965
  %6393 = vmatmul.mubr.bf16.gmra.mrb[0].mxu0 %v5964
  %v6394 = vpop.f32.mrb[0].mxu0
  %v6395 = vadd.f32 0.0, %v6394
  %v6396 = vpop.f32.mrb[0].mxu0
  %v6397 = vpop.f32.mrb[0].mxu0
  %v6398 = vadd.f32 0.0, %v6397
  %v6399 = vpop.f32.mrb[0].mxu0
  %6400 = vdwg.mxu0
  %6401 = vmatprep.subr.bf16.mxu0 0
  %6402 = vmatpush1.bf16.msra.mxu0 %v6176
  %6403 = vmatprep.subr.bf16.mxu0 0
  %6404 = vmatpush1.bf16.msra.mxu0 %v6177
  %6405 = vmatprep.subr.bf16.mxu0 0
  %6406 = vmatpush1.bf16.msra.mxu0 %v6178
  %6407 = vmatprep.subr.bf16.mxu0 0
  %6408 = vmatpush1.bf16.msra.mxu0 %v6179
  %6409 = vmatprep.subr.bf16.mxu0 0
  %6410 = vmatpush1.bf16.msra.mxu0 %v6180
  %6411 = vmatprep.subr.bf16.mxu0 0
  %6412 = vmatpush1.bf16.msra.mxu0 %v6181
  %6413 = vmatprep.subr.bf16.mxu0 0
  %6414 = vmatpush1.bf16.msra.mxu0 %v6182
  %6415 = vmatprep.subr.bf16.mxu0 0
  %6416 = vmatpush1.bf16.msra.mxu0 %v6183
  %6417 = vmatprep.subr.bf16.mxu0 0
  %6418 = vmatpush1.bf16.msra.mxu0 %v6184
  %6419 = vmatprep.subr.bf16.mxu0 0
  %6420 = vmatpush1.bf16.msra.mxu0 %v6185
  %6421 = vmatprep.subr.bf16.mxu0 0
  %6422 = vmatpush1.bf16.msra.mxu0 %v6186
  %6423 = vmatprep.subr.bf16.mxu0 0
  %6424 = vmatpush1.bf16.msra.mxu0 %v6187
  %6425 = vmatprep.subr.bf16.mxu0 0
  %6426 = vmatpush1.bf16.msra.mxu0 %v6188
  %6427 = vmatprep.subr.bf16.mxu0 0
  %6428 = vmatpush1.bf16.msra.mxu0 %v6189
  %6429 = vmatprep.subr.bf16.mxu0 0
  %6430 = vmatpush1.bf16.msra.mxu0 %v6190
  %6431 = vmatprep.subr.bf16.mxu0 0
  %6432 = vmatpush1.bf16.msra.mxu0 %v6191
  %6433 = vmatprep.mubr.bf16.mxu0 %v5899
  %6434 = vmatmul.mubr.bf16.gmra.mrb[0].mxu0 %v5898
  %v6435 = vpop.f32.mrb[0].mxu0
  %v6436 = vadd.f32 %v6259, %v6435
  %v6437 = vpop.f32.mrb[0].mxu0
  %v6438 = vpop.f32.mrb[0].mxu0
  %v6439 = vadd.f32 %v6262, %v6438
  %v6440 = vpop.f32.mrb[0].mxu0
  %6441 = vmatprep.mubr.bf16.mxu0 %v5903
  %6442 = vmatmul.mubr.bf16.gmra.mrb[0].mxu0 %v5902
  %v6443 = vpop.f32.mrb[0].mxu0
  %v6444 = vadd.f32 %v6267, %v6443
  %v6445 = vpop.f32.mrb[0].mxu0
  %v6446 = vpop.f32.mrb[0].mxu0
  %v6447 = vadd.f32 %v6270, %v6446
  %v6448 = vpop.f32.mrb[0].mxu0
  %6449 = vmatprep.mubr.bf16.mxu0 %v5907
  %6450 = vmatmul.mubr.bf16.gmra.mrb[0].mxu0 %v5906
  %v6451 = vpop.f32.mrb[0].mxu0
  %v6452 = vadd.f32 %v6275, %v6451
  %v6453 = vpop.f32.mrb[0].mxu0
  %v6454 = vpop.f32.mrb[0].mxu0
  %v6455 = vadd.f32 %v6278, %v6454
  %v6456 = vpop.f32.mrb[0].mxu0
  %6457 = vmatprep.mubr.bf16.mxu0 %v5911
  %6458 = vmatmul.mubr.bf16.gmra.mrb[0].mxu0 %v5910
  %v6459 = vpop.f32.mrb[0].mxu0
  %v6460 = vadd.f32 %v6283, %v6459
  %v6461 = vpop.f32.mrb[0].mxu0
  %v6462 = vpop.f32.mrb[0].mxu0
  %v6463 = vadd.f32 %v6286, %v6462
  %v6464 = vpop.f32.mrb[0].mxu0
  %6465 = vmatprep.mubr.bf16.mxu0 %v5915
  %6466 = vmatmul.mubr.bf16.gmra.mrb[0].mxu0 %v5914
  %v6467 = vpop.f32.mrb[0].mxu0
  %v6468 = vadd.f32 %v6291, %v6467
  %v6469 = vpop.f32.mrb[0].mxu0
  %v6470 = vpop.f32.mrb[0].mxu0
  %v6471 = vadd.f32 %v6294, %v6470
  %v6472 = vpop.f32.mrb[0].mxu0
  %6473 = vmatprep.mubr.bf16.mxu0 %v5919
  %6474 = vmatmul.mubr.bf16.gmra.mrb[0].mxu0 %v5918
  %v6475 = vpop.f32.mrb[0].mxu0
  %v6476 = vadd.f32 %v6299, %v6475
  %v6477 = vpop.f32.mrb[0].mxu0
  %v6478 = vpop.f32.mrb[0].mxu0
  %v6479 = vadd.f32 %v6302, %v6478
  %v6480 = vpop.f32.mrb[0].mxu0
  %6481 = vmatprep.mubr.bf16.mxu0 %v5923
  %6482 = vmatmul.mubr.bf16.gmra.mrb[0].mxu0 %v5922
  %v6483 = vpop.f32.mrb[0].mxu0
  %v6484 = vadd.f32 %v6307, %v6483
  %v6485 = vpop.f32.mrb[0].mxu0
  %v6486 = vpop.f32.mrb[0].mxu0
  %v6487 = vadd.f32 %v6310, %v6486
  %v6488 = vpop.f32.mrb[0].mxu0
  %6489 = vmatprep.mubr.bf16.mxu0 %v5927
  %6490 = vmatmul.mubr.bf16.gmra.mrb[0].mxu0 %v5926
  %v6491 = vpop.f32.mrb[0].mxu0
  %v6492 = vadd.f32 %v6315, %v6491
  %v6493 = vpop.f32.mrb[0].mxu0
  %v6494 = vpop.f32.mrb[0].mxu0
  %v6495 = vadd.f32 %v6318, %v6494
  %v6496 = vpop.f32.mrb[0].mxu0
  %6497 = vmatprep.mubr.bf16.mxu0 %v5931
  %6498 = vmatmul.mubr.bf16.gmra.mrb[0].mxu0 %v5930
  %v6499 = vpop.f32.mrb[0].mxu0
  %v6500 = vadd.f32 %v6323, %v6499
  %v6501 = vpop.f32.mrb[0].mxu0
  %v6502 = vpop.f32.mrb[0].mxu0
  %v6503 = vadd.f32 %v6326, %v6502
  %v6504 = vpop.f32.mrb[0].mxu0
  %6505 = vmatprep.mubr.bf16.mxu0 %v5935
  %6506 = vmatmul.mubr.bf16.gmra.mrb[0].mxu0 %v5934
  %v6507 = vpop.f32.mrb[0].mxu0
  %v6508 = vadd.f32 %v6331, %v6507
  %v6509 = vpop.f32.mrb[0].mxu0
  %v6510 = vpop.f32.mrb[0].mxu0
  %v6511 = vadd.f32 %v6334, %v6510
  %v6512 = vpop.f32.mrb[0].mxu0
  %6513 = vmatprep.mubr.bf16.mxu0 %v5939
  %6514 = vmatmul.mubr.bf16.gmra.mrb[0].mxu0 %v5938
  %v6515 = vpop.f32.mrb[0].mxu0
  %v6516 = vadd.f32 %v6339, %v6515
  %v6517 = vpop.f32.mrb[0].mxu0
  %v6518 = vpop.f32.mrb[0].mxu0
  %v6519 = vadd.f32 %v6342, %v6518
  %v6520 = vpop.f32.mrb[0].mxu0
  %6521 = vmatprep.mubr.bf16.mxu0 %v5943
  %6522 = vmatmul.mubr.bf16.gmra.mrb[0].mxu0 %v5942
  %v6523 = vpop.f32.mrb[0].mxu0
  %v6524 = vadd.f32 %v6347, %v6523
  %v6525 = vpop.f32.mrb[0].mxu0
  %v6526 = vpop.f32.mrb[0].mxu0
  %v6527 = vadd.f32 %v6350, %v6526
  %v6528 = vpop.f32.mrb[0].mxu0
  %6529 = vmatprep.mubr.bf16.mxu0 %v5947
  %6530 = vmatmul.mubr.bf16.gmra.mrb[0].mxu0 %v5946
  %v6531 = vpop.f32.mrb[0].mxu0
  %v6532 = vadd.f32 %v6355, %v6531
  %v6533 = vpop.f32.mrb[0].mxu0
  %v6534 = vpop.f32.mrb[0].mxu0
  %v6535 = vadd.f32 %v6358, %v6534
  %v6536 = vpop.f32.mrb[0].mxu0
  %6537 = vmatprep.mubr.bf16.mxu0 %v5951
  %6538 = vmatmul.mubr.bf16.gmra.mrb[0].mxu0 %v5950
  %v6539 = vpop.f32.mrb[0].mxu0
  %v6540 = vadd.f32 %v6363, %v6539
  %v6541 = vpop.f32.mrb[0].mxu0
  %v6542 = vpop.f32.mrb[0].mxu0
  %v6543 = vadd.f32 %v6366, %v6542
  %v6544 = vpop.f32.mrb[0].mxu0
  %6545 = vmatprep.mubr.bf16.mxu0 %v5955
  %6546 = vmatmul.mubr.bf16.gmra.mrb[0].mxu0 %v5954
  %v6547 = vpop.f32.mrb[0].mxu0
  %v6548 = vadd.f32 %v6371, %v6547
  %v6549 = vpop.f32.mrb[0].mxu0
  %v6550 = vpop.f32.mrb[0].mxu0
  %v6551 = vadd.f32 %v6374, %v6550
  %v6552 = vpop.f32.mrb[0].mxu0
  %6553 = vmatprep.mubr.bf16.mxu0 %v5959
  %6554 = vmatmul.mubr.bf16.gmra.mrb[0].mxu0 %v5958
  %v6555 = vpop.f32.mrb[0].mxu0
  %v6556 = vadd.f32 %v6379, %v6555
  %v6557 = vpop.f32.mrb[0].mxu0
  %v6558 = vpop.f32.mrb[0].mxu0
  %v6559 = vadd.f32 %v6382, %v6558
  %v6560 = vpop.f32.mrb[0].mxu0
  %6561 = vmatprep.mubr.bf16.mxu0 %v5963
  %6562 = vmatmul.mubr.bf16.gmra.mrb[0].mxu0 %v5962
  %v6563 = vpop.f32.mrb[0].mxu0
  %v6564 = vadd.f32 %v6387, %v6563
  %v6565 = vpop.f32.mrb[0].mxu0
  %v6566 = vpop.f32.mrb[0].mxu0
  %v6567 = vadd.f32 %v6390, %v6566
  %v6568 = vpop.f32.mrb[0].mxu0
  %6569 = vmatprep.mubr.bf16.mxu0 %v5967
  %6570 = vmatmul.mubr.bf16.gmra.mrb[0].mxu0 %v5966
  %v6571 = vpop.f32.mrb[0].mxu0
  %v6572 = vadd.f32 %v6395, %v6571
  %v6573 = vpop.f32.mrb[0].mxu0
  %v6574 = vpop.f32.mrb[0].mxu0
  %v6575 = vadd.f32 %v6398, %v6574
  %v6576 = vpop.f32.mrb[0].mxu0
  %6577 = vdwg.mxu0
  %v6578 = vld [vmem:[%s3] sm:$0x1]
  %v6579 = vld [vmem:[%s4] sm:$0x1]
  %v6580 = vadd.f32 %v6436, %v6439
  %v6581 = vadd.f32 %v6580, %v6444
  %v6582 = vadd.f32 %v6581, %v6447
  %v6583 = vadd.f32 %v6582, %v6452
  %v6584 = vadd.f32 %v6583, %v6455
  %v6585 = vadd.f32 %v6584, %v6460
  %v6586 = vadd.f32 %v6585, %v6463
  %v6587 = vadd.f32 %v6586, %v6468
  %v6588 = vadd.f32 %v6587, %v6471
  %v6589 = vadd.f32 %v6588, %v6476
  %v6590 = vadd.f32 %v6589, %v6479
  %v6591 = vadd.f32 %v6590, %v6484
  %v6592 = vadd.f32 %v6591, %v6487
  %v6593 = vadd.f32 %v6592, %v6492
  %v6594 = vadd.f32 %v6593, %v6495
  %v6595 = vadd.f32 %v6594, %v6500
  %v6596 = vadd.f32 %v6595, %v6503
  %v6597 = vadd.f32 %v6596, %v6508
  %v6598 = vadd.f32 %v6597, %v6511
  %v6599 = vadd.f32 %v6598, %v6516
  %v6600 = vadd.f32 %v6599, %v6519
  %v6601 = vadd.f32 %v6600, %v6524
  %v6602 = vadd.f32 %v6601, %v6527
  %v6603 = vadd.f32 %v6602, %v6532
  %v6604 = vadd.f32 %v6603, %v6535
  %v6605 = vadd.f32 %v6604, %v6540
  %v6606 = vadd.f32 %v6605, %v6543
  %v6607 = vadd.f32 %v6606, %v6548
  %v6608 = vadd.f32 %v6607, %v6551
  %v6609 = vadd.f32 %v6608, %v6556
  %v6610 = vadd.f32 %v6609, %v6559
  %v6611 = vadd.f32 %v6610, %v6564
  %v6612 = vadd.f32 %v6611, %v6567
  %v6613 = vadd.f32 %v6612, %v6572
  %v6614 = vadd.f32 %v6613, %v6575
  %v6615 = vrot.slane %v6614, 4
  %v6616 = vadd.f32 %v6614, %v6615
  %v6617 = vrot.slane %v6616, 2
  %v6618 = vadd.f32 %v6616, %v6617
  %v6619 = vrot.slane %v6618, 1
  %v6620 = vadd.f32 %v6618, %v6619
  %v6621 = vmul.f32 %v6436, %v6436
  %v6622 = vmul.f32 %v6439, %v6439
  %v6623 = vmul.f32 %v6444, %v6444
  %v6624 = vmul.f32 %v6447, %v6447
  %v6625 = vmul.f32 %v6452, %v6452
  %v6626 = vmul.f32 %v6455, %v6455
  %v6627 = vmul.f32 %v6460, %v6460
  %v6628 = vmul.f32 %v6463, %v6463
  %v6629 = vmul.f32 %v6468, %v6468
  %v6630 = vmul.f32 %v6471, %v6471
  %v6631 = vmul.f32 %v6476, %v6476
  %v6632 = vmul.f32 %v6479, %v6479
  %v6633 = vmul.f32 %v6484, %v6484
  %v6634 = vmul.f32 %v6487, %v6487
  %v6635 = vmul.f32 %v6492, %v6492
  %v6636 = vmul.f32 %v6495, %v6495
  %v6637 = vmul.f32 %v6500, %v6500
  %v6638 = vmul.f32 %v6503, %v6503
  %v6639 = vmul.f32 %v6508, %v6508
  %v6640 = vmul.f32 %v6511, %v6511
  %v6641 = vmul.f32 %v6516, %v6516
  %v6642 = vmul.f32 %v6519, %v6519
  %v6643 = vmul.f32 %v6524, %v6524
  %v6644 = vmul.f32 %v6527, %v6527
  %v6645 = vmul.f32 %v6532, %v6532
  %v6646 = vmul.f32 %v6535, %v6535
  %v6647 = vmul.f32 %v6540, %v6540
  %v6648 = vmul.f32 %v6543, %v6543
  %v6649 = vmul.f32 %v6548, %v6548
  %v6650 = vmul.f32 %v6551, %v6551
  %v6651 = vmul.f32 %v6556, %v6556
  %v6652 = vmul.f32 %v6559, %v6559
  %v6653 = vmul.f32 %v6564, %v6564
  %v6654 = vmul.f32 %v6567, %v6567
  %v6655 = vmul.f32 %v6572, %v6572
  %v6656 = vmul.f32 %v6575, %v6575
  %v6657 = vadd.f32 %v6621, %v6622
  %v6658 = vadd.f32 %v6657, %v6623
  %v6659 = vadd.f32 %v6658, %v6624
  %v6660 = vadd.f32 %v6659, %v6625
  %v6661 = vadd.f32 %v6660, %v6626
  %v6662 = vadd.f32 %v6661, %v6627
  %v6663 = vadd.f32 %v6662, %v6628
  %v6664 = vadd.f32 %v6663, %v6629
  %v6665 = vadd.f32 %v6664, %v6630
  %v6666 = vadd.f32 %v6665, %v6631
  %v6667 = vadd.f32 %v6666, %v6632
  %v6668 = vadd.f32 %v6667, %v6633
  %v6669 = vadd.f32 %v6668, %v6634
  %v6670 = vadd.f32 %v6669, %v6635
  %v6671 = vadd.f32 %v6670, %v6636
  %v6672 = vadd.f32 %v6671, %v6637
  %v6673 = vadd.f32 %v6672, %v6638
  %v6674 = vadd.f32 %v6673, %v6639
  %v6675 = vadd.f32 %v6674, %v6640
  %v6676 = vadd.f32 %v6675, %v6641
  %v6677 = vadd.f32 %v6676, %v6642
  %v6678 = vadd.f32 %v6677, %v6643
  %v6679 = vadd.f32 %v6678, %v6644
  %v6680 = vadd.f32 %v6679, %v6645
  %v6681 = vadd.f32 %v6680, %v6646
  %v6682 = vadd.f32 %v6681, %v6647
  %v6683 = vadd.f32 %v6682, %v6648
  %v6684 = vadd.f32 %v6683, %v6649
  %v6685 = vadd.f32 %v6684, %v6650
  %v6686 = vadd.f32 %v6685, %v6651
  %v6687 = vadd.f32 %v6686, %v6652
  %v6688 = vadd.f32 %v6687, %v6653
  %v6689 = vadd.f32 %v6688, %v6654
  %v6690 = vadd.f32 %v6689, %v6655
  %v6691 = vadd.f32 %v6690, %v6656
  %v6692 = vrot.slane %v6691, 4
  %v6693 = vadd.f32 %v6691, %v6692
  %v6694 = vrot.slane %v6693, 2
  %v6695 = vadd.f32 %v6693, %v6694
  %v6696 = vrot.slane %v6695, 1
  %v6697 = vadd.f32 %v6695, %v6696
  %v6698 = vmul.f32 %v6620, 0.0034722222
  %v6699 = vmul.f32 %v6697, 0.0034722222
  %v6700 = vmul.f32 %v6698, %v6698
  %v6701 = vsub.f32 %v6699, %v6700
  %v6702 = vmax.f32 %v6701, 0.0
  %v6703 = vsub.f32 %v6436, %v6698
  %v6704 = vsub.f32 %v6439, %v6698
  %v6705 = vsub.f32 %v6444, %v6698
  %v6706 = vsub.f32 %v6447, %v6698
  %v6707 = vsub.f32 %v6452, %v6698
  %v6708 = vsub.f32 %v6455, %v6698
  %v6709 = vsub.f32 %v6460, %v6698
  %v6710 = vsub.f32 %v6463, %v6698
  %v6711 = vsub.f32 %v6468, %v6698
  %v6712 = vsub.f32 %v6471, %v6698
  %v6713 = vsub.f32 %v6476, %v6698
  %v6714 = vsub.f32 %v6479, %v6698
  %v6715 = vsub.f32 %v6484, %v6698
  %v6716 = vsub.f32 %v6487, %v6698
  %v6717 = vsub.f32 %v6492, %v6698
  %v6718 = vsub.f32 %v6495, %v6698
  %v6719 = vsub.f32 %v6500, %v6698
  %v6720 = vsub.f32 %v6503, %v6698
  %v6721 = vsub.f32 %v6508, %v6698
  %v6722 = vsub.f32 %v6511, %v6698
  %v6723 = vsub.f32 %v6516, %v6698
  %v6724 = vsub.f32 %v6519, %v6698
  %v6725 = vsub.f32 %v6524, %v6698
  %v6726 = vsub.f32 %v6527, %v6698
  %v6727 = vsub.f32 %v6532, %v6698
  %v6728 = vsub.f32 %v6535, %v6698
  %v6729 = vsub.f32 %v6540, %v6698
  %v6730 = vsub.f32 %v6543, %v6698
  %v6731 = vsub.f32 %v6548, %v6698
  %v6732 = vsub.f32 %v6551, %v6698
  %v6733 = vsub.f32 %v6556, %v6698
  %v6734 = vsub.f32 %v6559, %v6698
  %v6735 = vsub.f32 %v6564, %v6698
  %v6736 = vsub.f32 %v6567, %v6698
  %v6737 = vsub.f32 %v6572, %v6698
  %v6738 = vsub.f32 %v6575, %v6698
  %v6739 = vadd.f32 %v6702, 1e-05
  %v6740 = vrsqrt.pop %v6739
  %v6741 = vmul.f32 %v6703, %v6740
  %v6742 = vmul.f32 %v6704, %v6740
  %v6743 = vmul.f32 %v6705, %v6740
  %v6744 = vmul.f32 %v6706, %v6740
  %v6745 = vmul.f32 %v6707, %v6740
  %v6746 = vmul.f32 %v6708, %v6740
  %v6747 = vmul.f32 %v6709, %v6740
  %v6748 = vmul.f32 %v6710, %v6740
  %v6749 = vmul.f32 %v6711, %v6740
  %v6750 = vmul.f32 %v6712, %v6740
  %v6751 = vmul.f32 %v6713, %v6740
  %v6752 = vmul.f32 %v6714, %v6740
  %v6753 = vmul.f32 %v6715, %v6740
  %v6754 = vmul.f32 %v6716, %v6740
  %v6755 = vmul.f32 %v6717, %v6740
  %v6756 = vmul.f32 %v6718, %v6740
  %v6757 = vmul.f32 %v6719, %v6740
  %v6758 = vmul.f32 %v6720, %v6740
  %v6759 = vmul.f32 %v6721, %v6740
  %v6760 = vmul.f32 %v6722, %v6740
  %v6761 = vmul.f32 %v6723, %v6740
  %v6762 = vmul.f32 %v6724, %v6740
  %v6763 = vmul.f32 %v6725, %v6740
  %v6764 = vmul.f32 %v6726, %v6740
  %v6765 = vmul.f32 %v6727, %v6740
  %v6766 = vmul.f32 %v6728, %v6740
  %v6767 = vmul.f32 %v6729, %v6740
  %v6768 = vmul.f32 %v6730, %v6740
  %v6769 = vmul.f32 %v6731, %v6740
  %v6770 = vmul.f32 %v6732, %v6740
  %v6771 = vmul.f32 %v6733, %v6740
  %v6772 = vmul.f32 %v6734, %v6740
  %v6773 = vmul.f32 %v6735, %v6740
  %v6774 = vmul.f32 %v6736, %v6740
  %v6775 = vmul.f32 %v6737, %v6740
  %v6776 = vmul.f32 %v6738, %v6740
  %v6778 = vlaneseq
  %v6779 = vshrl.u32 %v6778, 7
  %v6780 = vsub.s32 0, %v6779
  %v6781 = vrot.slane %v6578, %v6780
  %v6783 = vmul.f32 %v6741, %v6781
  %v6784 = vmul.f32 %v6742, %v6781
  %v6785 = vmul.f32 %v6743, %v6781
  %v6786 = vmul.f32 %v6744, %v6781
  %v6787 = vmul.f32 %v6745, %v6781
  %v6788 = vmul.f32 %v6746, %v6781
  %v6789 = vmul.f32 %v6747, %v6781
  %v6790 = vmul.f32 %v6748, %v6781
  %v6791 = vmul.f32 %v6749, %v6781
  %v6792 = vmul.f32 %v6750, %v6781
  %v6793 = vmul.f32 %v6751, %v6781
  %v6794 = vmul.f32 %v6752, %v6781
  %v6795 = vmul.f32 %v6753, %v6781
  %v6796 = vmul.f32 %v6754, %v6781
  %v6797 = vmul.f32 %v6755, %v6781
  %v6798 = vmul.f32 %v6756, %v6781
  %v6799 = vmul.f32 %v6757, %v6781
  %v6800 = vmul.f32 %v6758, %v6781
  %v6801 = vmul.f32 %v6759, %v6781
  %v6802 = vmul.f32 %v6760, %v6781
  %v6803 = vmul.f32 %v6761, %v6781
  %v6804 = vmul.f32 %v6762, %v6781
  %v6805 = vmul.f32 %v6763, %v6781
  %v6806 = vmul.f32 %v6764, %v6781
  %v6807 = vmul.f32 %v6765, %v6781
  %v6808 = vmul.f32 %v6766, %v6781
  %v6809 = vmul.f32 %v6767, %v6781
  %v6810 = vmul.f32 %v6768, %v6781
  %v6811 = vmul.f32 %v6769, %v6781
  %v6812 = vmul.f32 %v6770, %v6781
  %v6813 = vmul.f32 %v6771, %v6781
  %v6814 = vmul.f32 %v6772, %v6781
  %v6815 = vmul.f32 %v6773, %v6781
  %v6816 = vmul.f32 %v6774, %v6781
  %v6817 = vmul.f32 %v6775, %v6781
  %v6818 = vmul.f32 %v6776, %v6781
  %v6820 = vlaneseq
  %v6821 = vshrl.u32 %v6820, 7
  %v6822 = vsub.s32 0, %v6821
  %v6823 = vrot.slane %v6579, %v6822
  %v6825 = vadd.f32 %v6783, %v6823
  %v6826 = vadd.f32 %v6784, %v6823
  %v6827 = vadd.f32 %v6785, %v6823
  %v6828 = vadd.f32 %v6786, %v6823
  %v6829 = vadd.f32 %v6787, %v6823
  %v6830 = vadd.f32 %v6788, %v6823
  %v6831 = vadd.f32 %v6789, %v6823
  %v6832 = vadd.f32 %v6790, %v6823
  %v6833 = vadd.f32 %v6791, %v6823
  %v6834 = vadd.f32 %v6792, %v6823
  %v6835 = vadd.f32 %v6793, %v6823
  %v6836 = vadd.f32 %v6794, %v6823
  %v6837 = vadd.f32 %v6795, %v6823
  %v6838 = vadd.f32 %v6796, %v6823
  %v6839 = vadd.f32 %v6797, %v6823
  %v6840 = vadd.f32 %v6798, %v6823
  %v6841 = vadd.f32 %v6799, %v6823
  %v6842 = vadd.f32 %v6800, %v6823
  %v6843 = vadd.f32 %v6801, %v6823
  %v6844 = vadd.f32 %v6802, %v6823
  %v6845 = vadd.f32 %v6803, %v6823
  %v6846 = vadd.f32 %v6804, %v6823
  %v6847 = vadd.f32 %v6805, %v6823
  %v6848 = vadd.f32 %v6806, %v6823
  %v6849 = vadd.f32 %v6807, %v6823
  %v6850 = vadd.f32 %v6808, %v6823
  %v6851 = vadd.f32 %v6809, %v6823
  %v6852 = vadd.f32 %v6810, %v6823
  %v6853 = vadd.f32 %v6811, %v6823
  %v6854 = vadd.f32 %v6812, %v6823
  %v6855 = vadd.f32 %v6813, %v6823
  %v6856 = vadd.f32 %v6814, %v6823
  %v6857 = vadd.f32 %v6815, %v6823
  %v6858 = vadd.f32 %v6816, %v6823
  %v6859 = vadd.f32 %v6817, %v6823
  %v6860 = vadd.f32 %v6818, %v6823
  %vm6861 = vcmp.gt.f32.partialorder %v6825, 0.0
  %vm6862 = vcmp.gt.f32.partialorder %v6826, 0.0
  %vm6863 = vcmp.gt.f32.partialorder %v6827, 0.0
  %vm6864 = vcmp.gt.f32.partialorder %v6828, 0.0
  %vm6865 = vcmp.gt.f32.partialorder %v6829, 0.0
  %vm6866 = vcmp.gt.f32.partialorder %v6830, 0.0
  %vm6867 = vcmp.gt.f32.partialorder %v6831, 0.0
  %vm6868 = vcmp.gt.f32.partialorder %v6832, 0.0
  %vm6869 = vcmp.gt.f32.partialorder %v6833, 0.0
  %vm6870 = vcmp.gt.f32.partialorder %v6834, 0.0
  %vm6871 = vcmp.gt.f32.partialorder %v6835, 0.0
  %vm6872 = vcmp.gt.f32.partialorder %v6836, 0.0
  %vm6873 = vcmp.gt.f32.partialorder %v6837, 0.0
  %vm6874 = vcmp.gt.f32.partialorder %v6838, 0.0
  %vm6875 = vcmp.gt.f32.partialorder %v6839, 0.0
  %vm6876 = vcmp.gt.f32.partialorder %v6840, 0.0
  %vm6877 = vcmp.gt.f32.partialorder %v6841, 0.0
  %vm6878 = vcmp.gt.f32.partialorder %v6842, 0.0
  %vm6879 = vcmp.gt.f32.partialorder %v6843, 0.0
  %vm6880 = vcmp.gt.f32.partialorder %v6844, 0.0
  %vm6881 = vcmp.gt.f32.partialorder %v6845, 0.0
  %vm6882 = vcmp.gt.f32.partialorder %v6846, 0.0
  %vm6883 = vcmp.gt.f32.partialorder %v6847, 0.0
  %vm6884 = vcmp.gt.f32.partialorder %v6848, 0.0
  %vm6885 = vcmp.gt.f32.partialorder %v6849, 0.0
  %vm6886 = vcmp.gt.f32.partialorder %v6850, 0.0
  %vm6887 = vcmp.gt.f32.partialorder %v6851, 0.0
  %vm6888 = vcmp.gt.f32.partialorder %v6852, 0.0
  %vm6889 = vcmp.gt.f32.partialorder %v6853, 0.0
  %vm6890 = vcmp.gt.f32.partialorder %v6854, 0.0
  %vm6891 = vcmp.gt.f32.partialorder %v6855, 0.0
  %vm6892 = vcmp.gt.f32.partialorder %v6856, 0.0
  %vm6893 = vcmp.gt.f32.partialorder %v6857, 0.0
  %vm6894 = vcmp.gt.f32.partialorder %v6858, 0.0
  %vm6895 = vcmp.gt.f32.partialorder %v6859, 0.0
  %vm6896 = vcmp.gt.f32.partialorder %v6860, 0.0
  %v6897 = vmul.f32 %v6825, 0.2
  %v6898 = vmul.f32 %v6826, 0.2
  %v6899 = vmul.f32 %v6827, 0.2
  %v6900 = vmul.f32 %v6828, 0.2
  %v6901 = vmul.f32 %v6829, 0.2
  %v6902 = vmul.f32 %v6830, 0.2
  %v6903 = vmul.f32 %v6831, 0.2
  %v6904 = vmul.f32 %v6832, 0.2
  %v6905 = vmul.f32 %v6833, 0.2
  %v6906 = vmul.f32 %v6834, 0.2
  %v6907 = vmul.f32 %v6835, 0.2
  %v6908 = vmul.f32 %v6836, 0.2
  %v6909 = vmul.f32 %v6837, 0.2
  %v6910 = vmul.f32 %v6838, 0.2
  %v6911 = vmul.f32 %v6839, 0.2
  %v6912 = vmul.f32 %v6840, 0.2
  %v6913 = vmul.f32 %v6841, 0.2
  %v6914 = vmul.f32 %v6842, 0.2
  %v6915 = vmul.f32 %v6843, 0.2
  %v6916 = vmul.f32 %v6844, 0.2
  %v6917 = vmul.f32 %v6845, 0.2
  %v6918 = vmul.f32 %v6846, 0.2
  %v6919 = vmul.f32 %v6847, 0.2
  %v6920 = vmul.f32 %v6848, 0.2
  %v6921 = vmul.f32 %v6849, 0.2
  %v6922 = vmul.f32 %v6850, 0.2
  %v6923 = vmul.f32 %v6851, 0.2
  %v6924 = vmul.f32 %v6852, 0.2
  %v6925 = vmul.f32 %v6853, 0.2
  %v6926 = vmul.f32 %v6854, 0.2
  %v6927 = vmul.f32 %v6855, 0.2
  %v6928 = vmul.f32 %v6856, 0.2
  %v6929 = vmul.f32 %v6857, 0.2
  %v6930 = vmul.f32 %v6858, 0.2
  %v6931 = vmul.f32 %v6859, 0.2
  %v6932 = vmul.f32 %v6860, 0.2
  %v6933 = vsel %vm6861, %v6825, %v6897
  %v6934 = vsel %vm6862, %v6826, %v6898
  %v6935 = vsel %vm6863, %v6827, %v6899
  %v6936 = vsel %vm6864, %v6828, %v6900
  %v6937 = vsel %vm6865, %v6829, %v6901
  %v6938 = vsel %vm6866, %v6830, %v6902
  %v6939 = vsel %vm6867, %v6831, %v6903
  %v6940 = vsel %vm6868, %v6832, %v6904
  %v6941 = vsel %vm6869, %v6833, %v6905
  %v6942 = vsel %vm6870, %v6834, %v6906
  %v6943 = vsel %vm6871, %v6835, %v6907
  %v6944 = vsel %vm6872, %v6836, %v6908
  %v6945 = vsel %vm6873, %v6837, %v6909
  %v6946 = vsel %vm6874, %v6838, %v6910
  %v6947 = vsel %vm6875, %v6839, %v6911
  %v6948 = vsel %vm6876, %v6840, %v6912
  %v6949 = vsel %vm6877, %v6841, %v6913
  %v6950 = vsel %vm6878, %v6842, %v6914
  %v6951 = vsel %vm6879, %v6843, %v6915
  %v6952 = vsel %vm6880, %v6844, %v6916
  %v6953 = vsel %vm6881, %v6845, %v6917
  %v6954 = vsel %vm6882, %v6846, %v6918
  %v6955 = vsel %vm6883, %v6847, %v6919
  %v6956 = vsel %vm6884, %v6848, %v6920
  %v6957 = vsel %vm6885, %v6849, %v6921
  %v6958 = vsel %vm6886, %v6850, %v6922
  %v6959 = vsel %vm6887, %v6851, %v6923
  %v6960 = vsel %vm6888, %v6852, %v6924
  %v6961 = vsel %vm6889, %v6853, %v6925
  %v6962 = vsel %vm6890, %v6854, %v6926
  %v6963 = vsel %vm6891, %v6855, %v6927
  %v6964 = vsel %vm6892, %v6856, %v6928
  %v6965 = vsel %vm6893, %v6857, %v6929
  %v6966 = vsel %vm6894, %v6858, %v6930
  %v6967 = vsel %vm6895, %v6859, %v6931
  %v6968 = vsel %vm6896, %v6860, %v6932
  %v6969 = vpack.c.bf16 %v6934, %v6933
  %v6970 = vpack.c.bf16 %v6936, %v6935
  %v6971 = vpack.c.bf16 %v6938, %v6937
  %v6972 = vpack.c.bf16 %v6940, %v6939
  %v6973 = vpack.c.bf16 %v6941, %v6941
  %v6974 = vpack.c.bf16 %v6943, %v6942
  %v6975 = vpack.c.bf16 %v6945, %v6944
  %v6976 = vpack.c.bf16 %v6947, %v6946
  %v6977 = vpack.c.bf16 %v6949, %v6948
  %v6978 = vpack.c.bf16 %v6950, %v6950
  %v6979 = vpack.c.bf16 %v6952, %v6951
  %v6980 = vpack.c.bf16 %v6954, %v6953
  %v6981 = vpack.c.bf16 %v6956, %v6955
  %v6982 = vpack.c.bf16 %v6958, %v6957
  %v6983 = vpack.c.bf16 %v6959, %v6959
  %v6984 = vpack.c.bf16 %v6961, %v6960
  %v6985 = vpack.c.bf16 %v6963, %v6962
  %v6986 = vpack.c.bf16 %v6965, %v6964
  %v6987 = vpack.c.bf16 %v6967, %v6966
  %v6988 = vpack.c.bf16 %v6968, %v6968
  %v6989 = vld [vmem:[%s5] sm:$0xf]
  %v6990 = vld [vmem:[%s5 + $0x4] sm:$0xf]
  %v6991 = vld [vmem:[%s5 + $0x8] sm:$0xf]
  %v6992 = vld [vmem:[%s5 + $0xc] sm:$0xf]
  %v6993 = vld [vmem:[%s5 + $0x10] sm:$0xf]
  %v6994 = vld [vmem:[%s5 + $0x14] sm:$0xf]
  %v6995 = vld [vmem:[%s5 + $0x18] sm:$0xf]
  %v6996 = vld [vmem:[%s5 + $0x1c] sm:$0xf]
  %v6997 = vld [vmem:[%s5 + $0x20] sm:$0xf]
  %v6998 = vld [vmem:[%s5 + $0x24] sm:$0xf]
  %v6999 = vld [vmem:[%s5 + $0x28] sm:$0xf]
  %v7000 = vld [vmem:[%s5 + $0x2c] sm:$0xf]
  %v7001 = vld [vmem:[%s5 + $0x30] sm:$0xf]
  %v7002 = vld [vmem:[%s5 + $0x34] sm:$0xf]
  %v7003 = vld [vmem:[%s5 + $0x38] sm:$0xf]
  %v7004 = vld [vmem:[%s5 + $0x3c] sm:$0xf]
  %v7005 = vld [vmem:[%s5 + $0x40] sm:$0xf]
  %v7006 = vld [vmem:[%s5 + $0x44] sm:$0xf]
  %v7007 = vld [vmem:[%s5 + $0x48] sm:$0xf]
  %v7008 = vld [vmem:[%s5 + $0x4c] sm:$0xf]
  %v7009 = vld [vmem:[%s5 + $0x50] sm:$0xf]
  %v7010 = vld [vmem:[%s5 + $0x54] sm:$0xf]
  %v7011 = vld [vmem:[%s5 + $0x58] sm:$0xf]
  %v7012 = vld [vmem:[%s5 + $0x5c] sm:$0xf]
  %v7013 = vld [vmem:[%s5 + $0x60] sm:$0xf]
  %v7014 = vld [vmem:[%s5 + $0x64] sm:$0xf]
  %v7015 = vld [vmem:[%s5 + $0x68] sm:$0xf]
  %v7016 = vld [vmem:[%s5 + $0x6c] sm:$0xf]
  %v7017 = vld [vmem:[%s5 + $0x70] sm:$0xf]
  %v7018 = vld [vmem:[%s5 + $0x74] sm:$0xf]
  %v7019 = vld [vmem:[%s5 + $0x78] sm:$0xf]
  %v7020 = vld [vmem:[%s5 + $0x7c] sm:$0xf]
  %v7021 = vld [vmem:[%s5 + $0x80] sm:$0xf]
  %v7022 = vld [vmem:[%s5 + $0x84] sm:$0xf]
  %v7023 = vld [vmem:[%s5 + $0x88] sm:$0xf]
  %v7024 = vld [vmem:[%s5 + $0x8c] sm:$0xf]
  %v7025 = vld [vmem:[%s5 + $0x90] sm:$0xf]
  %v7026 = vld [vmem:[%s5 + $0x94] sm:$0xf]
  %v7027 = vld [vmem:[%s5 + $0x98] sm:$0xf]
  %v7028 = vld [vmem:[%s5 + $0x9c] sm:$0xf]
  %v7029 = vld [vmem:[%s5 + $0xa0] sm:$0xf]
  %v7030 = vld [vmem:[%s5 + $0xa4] sm:$0xf]
  %v7031 = vld [vmem:[%s5 + $0xa8] sm:$0xf]
  %v7032 = vld [vmem:[%s5 + $0xac] sm:$0xf]
  %v7033 = vld [vmem:[%s5 + $0xb0] sm:$0xf]
  %v7034 = vld [vmem:[%s5 + $0xb4] sm:$0xf]
  %v7035 = vld [vmem:[%s5 + $0xb8] sm:$0xf]
  %v7036 = vld [vmem:[%s5 + $0xbc] sm:$0xf]
  %v7037 = vld [vmem:[%s5 + $0xc0] sm:$0xf]
  %v7038 = vld [vmem:[%s5 + $0xc4] sm:$0xf]
  %v7039 = vld [vmem:[%s5 + $0xc8] sm:$0xf]
  %v7040 = vld [vmem:[%s5 + $0xcc] sm:$0xf]
  %v7041 = vld [vmem:[%s5 + $0xd0] sm:$0xf]
  %v7042 = vld [vmem:[%s5 + $0xd4] sm:$0xf]
  %v7043 = vld [vmem:[%s5 + $0xd8] sm:$0xf]
  %v7044 = vld [vmem:[%s5 + $0xdc] sm:$0xf]
  %v7045 = vld [vmem:[%s5 + $0xe0] sm:$0xf]
  %v7046 = vld [vmem:[%s5 + $0xe4] sm:$0xf]
  %v7047 = vld [vmem:[%s5 + $0xe8] sm:$0xf]
  %v7048 = vld [vmem:[%s5 + $0xec] sm:$0xf]
  %v7049 = vld [vmem:[%s5 + $0xf0] sm:$0xf]
  %v7050 = vld [vmem:[%s5 + $0xf4] sm:$0xf]
  %v7051 = vld [vmem:[%s5 + $0xf8] sm:$0xf]
  %v7052 = vld [vmem:[%s5 + $0xfc] sm:$0xf]
  %v7117 = vunpack.c.l.b16 %v6989
  %v7118 = vunpack.c.l.b16 %v6990
  %v7119 = vunpack.c.l.b16 %v6991
  %v7120 = vunpack.c.l.b16 %v6992
  %v7121 = vunpack.c.l.b16 %v6993
  %v7122 = vunpack.c.l.b16 %v6994
  %v7123 = vunpack.c.l.b16 %v6995
  %v7124 = vunpack.c.l.b16 %v6996
  %v7125 = vunpack.c.l.b16 %v6997
  %v7126 = vunpack.c.l.b16 %v6998
  %v7127 = vunpack.c.l.b16 %v6999
  %v7128 = vunpack.c.l.b16 %v7000
  %v7129 = vunpack.c.l.b16 %v7001
  %v7130 = vunpack.c.l.b16 %v7002
  %v7131 = vunpack.c.l.b16 %v7003
  %v7132 = vunpack.c.l.b16 %v7004
  %v7133 = vunpack.c.l.b16 %v7005
  %v7134 = vunpack.c.l.b16 %v7006
  %v7135 = vunpack.c.l.b16 %v7007
  %v7136 = vunpack.c.l.b16 %v7008
  %v7137 = vunpack.c.l.b16 %v7009
  %v7138 = vunpack.c.l.b16 %v7010
  %v7139 = vunpack.c.l.b16 %v7011
  %v7140 = vunpack.c.l.b16 %v7012
  %v7141 = vunpack.c.l.b16 %v7013
  %v7142 = vunpack.c.l.b16 %v7014
  %v7143 = vunpack.c.l.b16 %v7015
  %v7144 = vunpack.c.l.b16 %v7016
  %v7145 = vunpack.c.l.b16 %v7017
  %v7146 = vunpack.c.l.b16 %v7018
  %v7147 = vunpack.c.l.b16 %v7019
  %v7148 = vunpack.c.l.b16 %v7020
  %v7149 = vunpack.c.l.b16 %v7021
  %v7150 = vunpack.c.l.b16 %v7022
  %v7151 = vunpack.c.l.b16 %v7023
  %v7152 = vunpack.c.l.b16 %v7024
  %v7153 = vunpack.c.l.b16 %v7025
  %v7154 = vunpack.c.l.b16 %v7026
  %v7155 = vunpack.c.l.b16 %v7027
  %v7156 = vunpack.c.l.b16 %v7028
  %v7157 = vunpack.c.l.b16 %v7029
  %v7158 = vunpack.c.l.b16 %v7030
  %v7159 = vunpack.c.l.b16 %v7031
  %v7160 = vunpack.c.l.b16 %v7032
  %v7161 = vunpack.c.l.b16 %v7033
  %v7162 = vunpack.c.l.b16 %v7034
  %v7163 = vunpack.c.l.b16 %v7035
  %v7164 = vunpack.c.l.b16 %v7036
  %v7165 = vunpack.c.l.b16 %v7037
  %v7166 = vunpack.c.l.b16 %v7038
  %v7167 = vunpack.c.l.b16 %v7039
  %v7168 = vunpack.c.l.b16 %v7040
  %v7169 = vunpack.c.l.b16 %v7041
  %v7170 = vunpack.c.l.b16 %v7042
  %v7171 = vunpack.c.l.b16 %v7043
  %v7172 = vunpack.c.l.b16 %v7044
  %v7173 = vunpack.c.l.b16 %v7045
  %v7174 = vunpack.c.l.b16 %v7046
  %v7175 = vunpack.c.l.b16 %v7047
  %v7176 = vunpack.c.l.b16 %v7048
  %v7177 = vunpack.c.l.b16 %v7049
  %v7178 = vunpack.c.l.b16 %v7050
  %v7179 = vunpack.c.l.b16 %v7051
  %v7180 = vunpack.c.l.b16 %v7052
  %v7181 = vpack.c.b16 %v7118, %v7117
  %v7182 = vpack.c.b16 %v7120, %v7119
  %v7183 = vpack.c.b16 %v7122, %v7121
  %v7184 = vpack.c.b16 %v7124, %v7123
  %v7185 = vpack.c.b16 %v7126, %v7125
  %v7186 = vpack.c.b16 %v7128, %v7127
  %v7187 = vpack.c.b16 %v7130, %v7129
  %v7188 = vpack.c.b16 %v7132, %v7131
  %v7189 = vpack.c.b16 %v7134, %v7133
  %v7190 = vpack.c.b16 %v7136, %v7135
  %v7191 = vpack.c.b16 %v7138, %v7137
  %v7192 = vpack.c.b16 %v7140, %v7139
  %v7193 = vpack.c.b16 %v7142, %v7141
  %v7194 = vpack.c.b16 %v7144, %v7143
  %v7195 = vpack.c.b16 %v7146, %v7145
  %v7196 = vpack.c.b16 %v7148, %v7147
  %v7197 = vpack.c.b16 %v7150, %v7149
  %v7198 = vpack.c.b16 %v7152, %v7151
  %v7199 = vpack.c.b16 %v7154, %v7153
  %v7200 = vpack.c.b16 %v7156, %v7155
  %v7201 = vpack.c.b16 %v7158, %v7157
  %v7202 = vpack.c.b16 %v7160, %v7159
  %v7203 = vpack.c.b16 %v7162, %v7161
  %v7204 = vpack.c.b16 %v7164, %v7163
  %v7205 = vpack.c.b16 %v7166, %v7165
  %v7206 = vpack.c.b16 %v7168, %v7167
  %v7207 = vpack.c.b16 %v7170, %v7169
  %v7208 = vpack.c.b16 %v7172, %v7171
  %v7209 = vpack.c.b16 %v7174, %v7173
  %v7210 = vpack.c.b16 %v7176, %v7175
  %v7211 = vpack.c.b16 %v7178, %v7177
  %v7212 = vpack.c.b16 %v7180, %v7179
  %7245 = vmatprep.subr.bf16.mxu0 0
  %7246 = vmatpush1.bf16.msra.mxu0 %v7181
  %7247 = vmatprep.subr.bf16.mxu0 0
  %7248 = vmatpush1.bf16.msra.mxu0 %v7182
  %7249 = vmatprep.subr.bf16.mxu0 0
  %7250 = vmatpush1.bf16.msra.mxu0 %v7183
  %7251 = vmatprep.subr.bf16.mxu0 0
  %7252 = vmatpush1.bf16.msra.mxu0 %v7184
  %7253 = vmatprep.subr.bf16.mxu0 0
  %7254 = vmatpush1.bf16.msra.mxu0 %v7185
  %7255 = vmatprep.subr.bf16.mxu0 0
  %7256 = vmatpush1.bf16.msra.mxu0 %v7186
  %7257 = vmatprep.subr.bf16.mxu0 0
  %7258 = vmatpush1.bf16.msra.mxu0 %v7187
  %7259 = vmatprep.subr.bf16.mxu0 0
  %7260 = vmatpush1.bf16.msra.mxu0 %v7188
  %7261 = vmatprep.subr.bf16.mxu0 0
  %7262 = vmatpush1.bf16.msra.mxu0 %v7189
  %7263 = vmatprep.subr.bf16.mxu0 0
  %7264 = vmatpush1.bf16.msra.mxu0 %v7190
  %7265 = vmatprep.subr.bf16.mxu0 0
  %7266 = vmatpush1.bf16.msra.mxu0 %v7191
  %7267 = vmatprep.subr.bf16.mxu0 0
  %7268 = vmatpush1.bf16.msra.mxu0 %v7192
  %7269 = vmatprep.subr.bf16.mxu0 0
  %7270 = vmatpush1.bf16.msra.mxu0 %v7193
  %7271 = vmatprep.subr.bf16.mxu0 0
  %7272 = vmatpush1.bf16.msra.mxu0 %v7194
  %7273 = vmatprep.subr.bf16.mxu0 0
  %7274 = vmatpush1.bf16.msra.mxu0 %v7195
  %7275 = vmatprep.subr.bf16.mxu0 0
  %7276 = vmatpush1.bf16.msra.mxu0 %v7196
  %7277 = vmatprep.mubr.bf16.mxu0 %v6974
  %7278 = vmatmul.mubr.bf16.gmra.mrb[0].mxu0 %v6969
  %v7279 = vpop.f32.mrb[0].mxu0
  %v7280 = vadd.f32 0.0, %v7279
  %v7281 = vpop.f32.mrb[0].mxu0
  %v7282 = vpop.f32.mrb[0].mxu0
  %v7283 = vadd.f32 0.0, %v7282
  %v7284 = vpop.f32.mrb[0].mxu0
  %7285 = vmatprep.mubr.bf16.mxu0 %v6975
  %7286 = vmatmul.mubr.bf16.gmra.mrb[0].mxu0 %v6970
  %v7287 = vpop.f32.mrb[0].mxu0
  %v7288 = vadd.f32 0.0, %v7287
  %v7289 = vpop.f32.mrb[0].mxu0
  %v7290 = vpop.f32.mrb[0].mxu0
  %v7291 = vadd.f32 0.0, %v7290
  %v7292 = vpop.f32.mrb[0].mxu0
  %7293 = vmatprep.mubr.bf16.mxu0 %v6976
  %7294 = vmatmul.mubr.bf16.gmra.mrb[0].mxu0 %v6971
  %v7295 = vpop.f32.mrb[0].mxu0
  %v7296 = vadd.f32 0.0, %v7295
  %v7297 = vpop.f32.mrb[0].mxu0
  %v7298 = vpop.f32.mrb[0].mxu0
  %v7299 = vadd.f32 0.0, %v7298
  %v7300 = vpop.f32.mrb[0].mxu0
  %7301 = vmatprep.mubr.bf16.mxu0 %v6977
  %7302 = vmatmul.mubr.bf16.gmra.mrb[0].mxu0 %v6972
  %v7303 = vpop.f32.mrb[0].mxu0
  %v7304 = vadd.f32 0.0, %v7303
  %v7305 = vpop.f32.mrb[0].mxu0
  %v7306 = vpop.f32.mrb[0].mxu0
  %v7307 = vadd.f32 0.0, %v7306
  %v7308 = vpop.f32.mrb[0].mxu0
  %7309 = vmatprep.mubr.bf16.mxu0 %v6978
  %7310 = vmatmul.mubr.bf16.gmra.mrb[0].mxu0 %v6973
  %v7311 = vpop.f32.mrb[0].mxu0
  %v7312 = vadd.f32 0.0, %v7311
  %v7313 = vpop.f32.mrb[0].mxu0
  %v7314 = vpop.f32.mrb[0].mxu0
  %v7315 = vpop.f32.mrb[0].mxu0
  %7316 = vdwg.mxu0
  %7317 = vmatprep.subr.bf16.mxu0 0
  %7318 = vmatpush1.bf16.msra.mxu0 %v7197
  %7319 = vmatprep.subr.bf16.mxu0 0
  %7320 = vmatpush1.bf16.msra.mxu0 %v7198
  %7321 = vmatprep.subr.bf16.mxu0 0
  %7322 = vmatpush1.bf16.msra.mxu0 %v7199
  %7323 = vmatprep.subr.bf16.mxu0 0
  %7324 = vmatpush1.bf16.msra.mxu0 %v7200
  %7325 = vmatprep.subr.bf16.mxu0 0
  %7326 = vmatpush1.bf16.msra.mxu0 %v7201
  %7327 = vmatprep.subr.bf16.mxu0 0
  %7328 = vmatpush1.bf16.msra.mxu0 %v7202
  %7329 = vmatprep.subr.bf16.mxu0 0
  %7330 = vmatpush1.bf16.msra.mxu0 %v7203
  %7331 = vmatprep.subr.bf16.mxu0 0
  %7332 = vmatpush1.bf16.msra.mxu0 %v7204
  %7333 = vmatprep.subr.bf16.mxu0 0
  %7334 = vmatpush1.bf16.msra.mxu0 %v7205
  %7335 = vmatprep.subr.bf16.mxu0 0
  %7336 = vmatpush1.bf16.msra.mxu0 %v7206
  %7337 = vmatprep.subr.bf16.mxu0 0
  %7338 = vmatpush1.bf16.msra.mxu0 %v7207
  %7339 = vmatprep.subr.bf16.mxu0 0
  %7340 = vmatpush1.bf16.msra.mxu0 %v7208
  %7341 = vmatprep.subr.bf16.mxu0 0
  %7342 = vmatpush1.bf16.msra.mxu0 %v7209
  %7343 = vmatprep.subr.bf16.mxu0 0
  %7344 = vmatpush1.bf16.msra.mxu0 %v7210
  %7345 = vmatprep.subr.bf16.mxu0 0
  %7346 = vmatpush1.bf16.msra.mxu0 %v7211
  %7347 = vmatprep.subr.bf16.mxu0 0
  %7348 = vmatpush1.bf16.msra.mxu0 %v7212
  %7349 = vmatprep.mubr.bf16.mxu0 %v6984
  %7350 = vmatmul.mubr.bf16.gmra.mrb[0].mxu0 %v6979
  %v7351 = vpop.f32.mrb[0].mxu0
  %v7352 = vadd.f32 %v7280, %v7351
  %v7353 = vpop.f32.mrb[0].mxu0
  %v7354 = vpop.f32.mrb[0].mxu0
  %v7355 = vadd.f32 %v7283, %v7354
  %v7356 = vpop.f32.mrb[0].mxu0
  %7357 = vmatprep.mubr.bf16.mxu0 %v6985
  %7358 = vmatmul.mubr.bf16.gmra.mrb[0].mxu0 %v6980
  %v7359 = vpop.f32.mrb[0].mxu0
  %v7360 = vadd.f32 %v7288, %v7359
  %v7361 = vpop.f32.mrb[0].mxu0
  %v7362 = vpop.f32.mrb[0].mxu0
  %v7363 = vadd.f32 %v7291, %v7362
  %v7364 = vpop.f32.mrb[0].mxu0
  %7365 = vmatprep.mubr.bf16.mxu0 %v6986
  %7366 = vmatmul.mubr.bf16.gmra.mrb[0].mxu0 %v6981
  %v7367 = vpop.f32.mrb[0].mxu0
  %v7368 = vadd.f32 %v7296, %v7367
  %v7369 = vpop.f32.mrb[0].mxu0
  %v7370 = vpop.f32.mrb[0].mxu0
  %v7371 = vadd.f32 %v7299, %v7370
  %v7372 = vpop.f32.mrb[0].mxu0
  %7373 = vmatprep.mubr.bf16.mxu0 %v6987
  %7374 = vmatmul.mubr.bf16.gmra.mrb[0].mxu0 %v6982
  %v7375 = vpop.f32.mrb[0].mxu0
  %v7376 = vadd.f32 %v7304, %v7375
  %v7377 = vpop.f32.mrb[0].mxu0
  %v7378 = vpop.f32.mrb[0].mxu0
  %v7379 = vadd.f32 %v7307, %v7378
  %v7380 = vpop.f32.mrb[0].mxu0
  %7381 = vmatprep.mubr.bf16.mxu0 %v6988
  %7382 = vmatmul.mubr.bf16.gmra.mrb[0].mxu0 %v6983
  %v7383 = vpop.f32.mrb[0].mxu0
  %v7384 = vadd.f32 %v7312, %v7383
  %v7385 = vpop.f32.mrb[0].mxu0
  %v7386 = vpop.f32.mrb[0].mxu0
  %v7387 = vpop.f32.mrb[0].mxu0
  %7388 = vdwg.mxu0
  %v7389 = vld [vmem:[%s6] sm:$0x1]
  %v7390 = vld [vmem:[%s7] sm:$0x1]
  %v7391 = vadd.f32 %v7352, %v7355
  %v7392 = vadd.f32 %v7391, %v7360
  %v7393 = vadd.f32 %v7392, %v7363
  %v7394 = vadd.f32 %v7393, %v7368
  %v7395 = vadd.f32 %v7394, %v7371
  %v7396 = vadd.f32 %v7395, %v7376
  %v7397 = vadd.f32 %v7396, %v7379
  %v7398 = vadd.f32 %v7397, %v7384
  %v7399 = vrot.slane %v7398, 4
  %v7400 = vadd.f32 %v7398, %v7399
  %v7401 = vrot.slane %v7400, 2
  %v7402 = vadd.f32 %v7400, %v7401
  %v7403 = vrot.slane %v7402, 1
  %v7404 = vadd.f32 %v7402, %v7403
  %v7405 = vmul.f32 %v7352, %v7352
  %v7406 = vmul.f32 %v7355, %v7355
  %v7407 = vmul.f32 %v7360, %v7360
  %v7408 = vmul.f32 %v7363, %v7363
  %v7409 = vmul.f32 %v7368, %v7368
  %v7410 = vmul.f32 %v7371, %v7371
  %v7411 = vmul.f32 %v7376, %v7376
  %v7412 = vmul.f32 %v7379, %v7379
  %v7413 = vmul.f32 %v7384, %v7384
  %v7414 = vadd.f32 %v7405, %v7406
  %v7415 = vadd.f32 %v7414, %v7407
  %v7416 = vadd.f32 %v7415, %v7408
  %v7417 = vadd.f32 %v7416, %v7409
  %v7418 = vadd.f32 %v7417, %v7410
  %v7419 = vadd.f32 %v7418, %v7411
  %v7420 = vadd.f32 %v7419, %v7412
  %v7421 = vadd.f32 %v7420, %v7413
  %v7422 = vrot.slane %v7421, 4
  %v7423 = vadd.f32 %v7421, %v7422
  %v7424 = vrot.slane %v7423, 2
  %v7425 = vadd.f32 %v7423, %v7424
  %v7426 = vrot.slane %v7425, 1
  %v7427 = vadd.f32 %v7425, %v7426
  %v7428 = vmul.f32 %v7404, 0.013888889
  %v7429 = vmul.f32 %v7427, 0.013888889
  %v7430 = vmul.f32 %v7428, %v7428
  %v7431 = vsub.f32 %v7429, %v7430
  %v7432 = vmax.f32 %v7431, 0.0
  %v7433 = vsub.f32 %v7352, %v7428
  %v7434 = vsub.f32 %v7355, %v7428
  %v7435 = vsub.f32 %v7360, %v7428
  %v7436 = vsub.f32 %v7363, %v7428
  %v7437 = vsub.f32 %v7368, %v7428
  %v7438 = vsub.f32 %v7371, %v7428
  %v7439 = vsub.f32 %v7376, %v7428
  %v7440 = vsub.f32 %v7379, %v7428
  %v7441 = vsub.f32 %v7384, %v7428
  %v7442 = vadd.f32 %v7432, 1e-05
  %v7443 = vrsqrt.pop %v7442
  %v7444 = vmul.f32 %v7433, %v7443
  %v7445 = vmul.f32 %v7434, %v7443
  %v7446 = vmul.f32 %v7435, %v7443
  %v7447 = vmul.f32 %v7436, %v7443
  %v7448 = vmul.f32 %v7437, %v7443
  %v7449 = vmul.f32 %v7438, %v7443
  %v7450 = vmul.f32 %v7439, %v7443
  %v7451 = vmul.f32 %v7440, %v7443
  %v7452 = vmul.f32 %v7441, %v7443
  %v7454 = vlaneseq
  %v7455 = vshrl.u32 %v7454, 7
  %v7456 = vsub.s32 0, %v7455
  %v7457 = vrot.slane %v7389, %v7456
  %v7459 = vmul.f32 %v7444, %v7457
  %v7460 = vmul.f32 %v7445, %v7457
  %v7461 = vmul.f32 %v7446, %v7457
  %v7462 = vmul.f32 %v7447, %v7457
  %v7463 = vmul.f32 %v7448, %v7457
  %v7464 = vmul.f32 %v7449, %v7457
  %v7465 = vmul.f32 %v7450, %v7457
  %v7466 = vmul.f32 %v7451, %v7457
  %v7467 = vmul.f32 %v7452, %v7457
  %v7469 = vlaneseq
  %v7470 = vshrl.u32 %v7469, 7
  %v7471 = vsub.s32 0, %v7470
  %v7472 = vrot.slane %v7390, %v7471
  %v7474 = vadd.f32 %v7459, %v7472
  %v7475 = vadd.f32 %v7460, %v7472
  %v7476 = vadd.f32 %v7461, %v7472
  %v7477 = vadd.f32 %v7462, %v7472
  %v7478 = vadd.f32 %v7463, %v7472
  %v7479 = vadd.f32 %v7464, %v7472
  %v7480 = vadd.f32 %v7465, %v7472
  %v7481 = vadd.f32 %v7466, %v7472
  %v7482 = vadd.f32 %v7467, %v7472
  %vm7483 = vcmp.gt.f32.partialorder %v7474, 0.0
  %vm7484 = vcmp.gt.f32.partialorder %v7475, 0.0
  %vm7485 = vcmp.gt.f32.partialorder %v7476, 0.0
  %vm7486 = vcmp.gt.f32.partialorder %v7477, 0.0
  %vm7487 = vcmp.gt.f32.partialorder %v7478, 0.0
  %vm7488 = vcmp.gt.f32.partialorder %v7479, 0.0
  %vm7489 = vcmp.gt.f32.partialorder %v7480, 0.0
  %vm7490 = vcmp.gt.f32.partialorder %v7481, 0.0
  %vm7491 = vcmp.gt.f32.partialorder %v7482, 0.0
  %v7492 = vmul.f32 %v7474, 0.2
  %v7493 = vmul.f32 %v7475, 0.2
  %v7494 = vmul.f32 %v7476, 0.2
  %v7495 = vmul.f32 %v7477, 0.2
  %v7496 = vmul.f32 %v7478, 0.2
  %v7497 = vmul.f32 %v7479, 0.2
  %v7498 = vmul.f32 %v7480, 0.2
  %v7499 = vmul.f32 %v7481, 0.2
  %v7500 = vmul.f32 %v7482, 0.2
  %v7501 = vsel %vm7483, %v7474, %v7492
  %v7502 = vsel %vm7484, %v7475, %v7493
  %v7503 = vsel %vm7485, %v7476, %v7494
  %v7504 = vsel %vm7486, %v7477, %v7495
  %v7505 = vsel %vm7487, %v7478, %v7496
  %v7506 = vsel %vm7488, %v7479, %v7497
  %v7507 = vsel %vm7489, %v7480, %v7498
  %v7508 = vsel %vm7490, %v7481, %v7499
  %v7509 = vsel %vm7491, %v7482, %v7500
  %v7510 = vpack.c.bf16 %v7502, %v7501
  %v7511 = vpack.c.bf16 %v7504, %v7503
  %v7512 = vpack.c.bf16 %v7506, %v7505
  %v7513 = vpack.c.bf16 %v7508, %v7507
  %v7514 = vpack.c.bf16 %v7509, %v7509
  %s7515 = smul.u32 4, 64
  %s7516 = smul.u32 %s7515, 2
  %s7517 = sshll.u32 %s7516, 4
  %7518 = dma.done [#allocation4], %s7517
  %v7519 = vld [vmem:[%s8] sm:$0xf]
  %v7520 = vld [vmem:[%s8 + $0x4] sm:$0xf]
  %v7521 = vld [vmem:[%s8 + $0x8] sm:$0xf]
  %v7522 = vld [vmem:[%s8 + $0xc] sm:$0xf]
  %v7523 = vld [vmem:[%s8 + $0x10] sm:$0xf]
  %v7524 = vld [vmem:[%s8 + $0x14] sm:$0xf]
  %v7525 = vld [vmem:[%s8 + $0x18] sm:$0x1]
  %v7533 = vunpack.c.l.b16 %v7519
  %v7534 = vunpack.c.l.b16 %v7520
  %v7535 = vunpack.c.l.b16 %v7521
  %v7536 = vunpack.c.l.b16 %v7522
  %v7537 = vunpack.c.l.b16 %v7523
  %v7538 = vunpack.c.l.b16 %v7524
  %v7539 = vunpack.c.l.b16 %v7525
  %v7540 = vpack.c.b16 %v7534, %v7533
  %v7541 = vpack.c.b16 %v7536, %v7535
  %v7542 = vpack.c.b16 %v7538, %v7537
  %v7543 = vpack.c.b16 %v7539, %v7539
  %vm7544 = vcmask 588800
  %v7546 = vsel %vm7544, %v7540, 0
  %v7549 = vsel %vm7544, %v7541, 0
  %v7552 = vsel %vm7544, %v7542, 0
  %v7555 = vsel %vm7544, %v7543, 0
  %vm7557 = vcmask 1043456
  %v7559 = vsel %vm7557, %v7514, 0
  %7561 = vmatprep.subr.bf16.mxu0 0
  %7562 = vmatpush1.bf16.msra.mxu0 %v7510
  %7563 = vmatprep.subr.bf16.mxu0 0
  %7564 = vmatpush1.bf16.msra.mxu0 %v7511
  %7565 = vmatprep.subr.bf16.mxu0 0
  %7566 = vmatpush1.bf16.msra.mxu0 %v7512
  %7567 = vmatprep.subr.bf16.mxu0 0
  %7568 = vmatpush1.bf16.msra.mxu0 %v7513
  %7569 = vmatprep.subr.bf16.mxu0 0
  %7570 = vmatpush1.bf16.msra.mxu0 %v7559
  %7571 = vmatprep.subr.bf16.mxu0 0
  %7572 = vmatpush1.bf16.msra.mxu0 0
  %7573 = vmatprep.subr.bf16.mxu0 0
  %7574 = vmatpush1.bf16.msra.mxu0 0
  %7575 = vmatprep.subr.bf16.mxu0 0
  %7576 = vmatpush1.bf16.msra.mxu0 0
  %7577 = vmatprep.subr.bf16.mxu0 0
  %7578 = vmatpush1.bf16.msra.mxu0 0
  %7579 = vmatprep.subr.bf16.mxu0 0
  %7580 = vmatpush1.bf16.msra.mxu0 0
  %7581 = vmatprep.subr.bf16.mxu0 0
  %7582 = vmatpush1.bf16.msra.mxu0 0
  %7583 = vmatprep.subr.bf16.mxu0 0
  %7584 = vmatpush1.bf16.msra.mxu0 0
  %7585 = vmatprep.subr.bf16.mxu0 0
  %7586 = vmatpush1.bf16.msra.mxu0 0
  %7587 = vmatprep.subr.bf16.mxu0 0
  %7588 = vmatpush1.bf16.msra.mxu0 0
  %7589 = vmatprep.subr.bf16.mxu0 0
  %7590 = vmatpush1.bf16.msra.mxu0 0
  %7591 = vmatprep.subr.bf16.mxu0 0
  %7592 = vmatpush1.bf16.msra.mxu0 0
  %7593 = vmatprep.mubr.bf16.mxu0 0
  %7594 = vmatmul.mubr.bf16.gmra.mrb[0].mxu0 %v7546
  %v7595 = vpop.f32.mrb[0].mxu0
  %v7596 = vadd.f32 0.0, %v7595
  %v7597 = vpop.f32.mrb[0].mxu0
  %v7598 = vpop.f32.mrb[0].mxu0
  %v7599 = vadd.f32 0.0, %v7598
  %v7600 = vpop.f32.mrb[0].mxu0
  %7601 = vmatprep.mubr.bf16.mxu0 0
  %7602 = vmatmul.mubr.bf16.gmra.mrb[0].mxu0 %v7549
  %v7603 = vpop.f32.mrb[0].mxu0
  %v7604 = vadd.f32 0.0, %v7603
  %v7605 = vpop.f32.mrb[0].mxu0
  %v7606 = vpop.f32.mrb[0].mxu0
  %v7607 = vadd.f32 0.0, %v7606
  %v7608 = vpop.f32.mrb[0].mxu0
  %7609 = vmatprep.mubr.bf16.mxu0 0
  %7610 = vmatmul.mubr.bf16.gmra.mrb[0].mxu0 %v7552
  %v7611 = vpop.f32.mrb[0].mxu0
  %v7612 = vadd.f32 0.0, %v7611
  %v7613 = vpop.f32.mrb[0].mxu0
  %v7614 = vpop.f32.mrb[0].mxu0
  %v7615 = vadd.f32 0.0, %v7614
  %v7616 = vpop.f32.mrb[0].mxu0
  %7617 = vmatprep.mubr.bf16.mxu0 0
  %7618 = vmatmul.mubr.bf16.gmra.mrb[0].mxu0 %v7555
  %v7619 = vpop.f32.mrb[0].mxu0
  %v7620 = vadd.f32 0.0, %v7619
  %v7621 = vpop.f32.mrb[0].mxu0
  %v7622 = vpop.f32.mrb[0].mxu0
  %v7623 = vpop.f32.mrb[0].mxu0
  %7624 = vdwg.mxu0
  %v7625 = vpack.c.bf16 %v7599, %v7596
  %v7626 = vpack.c.bf16 %v7607, %v7604
  %v7627 = vpack.c.bf16 %v7615, %v7612
  %v7628 = vpack.c.bf16 %v7620, %v7620
  %s7629 = scalar_lea.vmem %s8, 28
  %v7630 = vld [vmem:[%s7629] sm:$0xf]
  %v7631 = vld [vmem:[%s7629 + $0x4] sm:$0xf]
  %v7632 = vld [vmem:[%s7629 + $0x8] sm:$0xf]
  %v7633 = vld [vmem:[%s7629 + $0xc] sm:$0xf]
  %v7634 = vld [vmem:[%s7629 + $0x10] sm:$0xf]
  %v7635 = vld [vmem:[%s7629 + $0x14] sm:$0xf]
  %v7636 = vld [vmem:[%s7629 + $0x18] sm:$0x1]
  %v7644 = vunpack.c.l.b16 %v7630
  %v7645 = vunpack.c.l.b16 %v7631
  %v7646 = vunpack.c.l.b16 %v7632
  %v7647 = vunpack.c.l.b16 %v7633
  %v7648 = vunpack.c.l.b16 %v7634
  %v7649 = vunpack.c.l.b16 %v7635
  %v7650 = vunpack.c.l.b16 %v7636
  %v7651 = vpack.c.b16 %v7645, %v7644
  %v7652 = vpack.c.b16 %v7647, %v7646
  %v7653 = vpack.c.b16 %v7649, %v7648
  %v7654 = vpack.c.b16 %v7650, %v7650
  %v7656 = vsel %vm7544, %v7651, 0
  %v7659 = vsel %vm7544, %v7652, 0
  %v7662 = vsel %vm7544, %v7653, 0
  %v7665 = vsel %vm7544, %v7654, 0
  %7667 = vmatprep.subr.bf16.mxu0 0
  %7668 = vmatpush1.bf16.msra.mxu0 %v7510
  %7669 = vmatprep.subr.bf16.mxu0 0
  %7670 = vmatpush1.bf16.msra.mxu0 %v7511
  %7671 = vmatprep.subr.bf16.mxu0 0
  %7672 = vmatpush1.bf16.msra.mxu0 %v7512
  %7673 = vmatprep.subr.bf16.mxu0 0
  %7674 = vmatpush1.bf16.msra.mxu0 %v7513
  %7675 = vmatprep.subr.bf16.mxu0 0
  %7676 = vmatpush1.bf16.msra.mxu0 %v7559
  %7677 = vmatprep.subr.bf16.mxu0 0
  %7678 = vmatpush1.bf16.msra.mxu0 0
  %7679 = vmatprep.subr.bf16.mxu0 0
  %7680 = vmatpush1.bf16.msra.mxu0 0
  %7681 = vmatprep.subr.bf16.mxu0 0
  %7682 = vmatpush1.bf16.msra.mxu0 0
  %7683 = vmatprep.subr.bf16.mxu0 0
  %7684 = vmatpush1.bf16.msra.mxu0 0
  %7685 = vmatprep.subr.bf16.mxu0 0
  %7686 = vmatpush1.bf16.msra.mxu0 0
  %7687 = vmatprep.subr.bf16.mxu0 0
  %7688 = vmatpush1.bf16.msra.mxu0 0
  %7689 = vmatprep.subr.bf16.mxu0 0
  %7690 = vmatpush1.bf16.msra.mxu0 0
  %7691 = vmatprep.subr.bf16.mxu0 0
  %7692 = vmatpush1.bf16.msra.mxu0 0
  %7693 = vmatprep.subr.bf16.mxu0 0
  %7694 = vmatpush1.bf16.msra.mxu0 0
  %7695 = vmatprep.subr.bf16.mxu0 0
  %7696 = vmatpush1.bf16.msra.mxu0 0
  %7697 = vmatprep.subr.bf16.mxu0 0
  %7698 = vmatpush1.bf16.msra.mxu0 0
  %7699 = vmatprep.mubr.bf16.mxu0 0
  %7700 = vmatmul.mubr.bf16.gmra.mrb[0].mxu0 %v7656
  %v7701 = vpop.f32.mrb[0].mxu0
  %v7702 = vadd.f32 0.0, %v7701
  %v7703 = vpop.f32.mrb[0].mxu0
  %v7704 = vpop.f32.mrb[0].mxu0
  %v7705 = vadd.f32 0.0, %v7704
  %v7706 = vpop.f32.mrb[0].mxu0
  %7707 = vmatprep.mubr.bf16.mxu0 0
  %7708 = vmatmul.mubr.bf16.gmra.mrb[0].mxu0 %v7659
  %v7709 = vpop.f32.mrb[0].mxu0
  %v7710 = vadd.f32 0.0, %v7709
  %v7711 = vpop.f32.mrb[0].mxu0
  %v7712 = vpop.f32.mrb[0].mxu0
  %v7713 = vadd.f32 0.0, %v7712
  %v7714 = vpop.f32.mrb[0].mxu0
  %7715 = vmatprep.mubr.bf16.mxu0 0
  %7716 = vmatmul.mubr.bf16.gmra.mrb[0].mxu0 %v7662
  %v7717 = vpop.f32.mrb[0].mxu0
  %v7718 = vadd.f32 0.0, %v7717
  %v7719 = vpop.f32.mrb[0].mxu0
  %v7720 = vpop.f32.mrb[0].mxu0
  %v7721 = vadd.f32 0.0, %v7720
  %v7722 = vpop.f32.mrb[0].mxu0
  %7723 = vmatprep.mubr.bf16.mxu0 0
  %7724 = vmatmul.mubr.bf16.gmra.mrb[0].mxu0 %v7665
  %v7725 = vpop.f32.mrb[0].mxu0
  %v7726 = vadd.f32 0.0, %v7725
  %v7727 = vpop.f32.mrb[0].mxu0
  %v7728 = vpop.f32.mrb[0].mxu0
  %v7729 = vpop.f32.mrb[0].mxu0
  %7730 = vdwg.mxu0
  %v7731 = vpack.c.bf16 %v7705, %v7702
  %v7732 = vpack.c.bf16 %v7713, %v7710
  %v7733 = vpack.c.bf16 %v7721, %v7718
  %v7734 = vpack.c.bf16 %v7726, %v7726
  %s7735 = scalar_lea.vmem %s8, 56
  %v7736 = vld [vmem:[%s7735] sm:$0xf]
  %v7737 = vld [vmem:[%s7735 + $0x4] sm:$0xf]
  %v7738 = vld [vmem:[%s7735 + $0x8] sm:$0xf]
  %v7739 = vld [vmem:[%s7735 + $0xc] sm:$0xf]
  %v7740 = vld [vmem:[%s7735 + $0x10] sm:$0xf]
  %v7741 = vld [vmem:[%s7735 + $0x14] sm:$0xf]
  %v7742 = vld [vmem:[%s7735 + $0x18] sm:$0x1]
  %v7750 = vunpack.c.l.b16 %v7736
  %v7751 = vunpack.c.l.b16 %v7737
  %v7752 = vunpack.c.l.b16 %v7738
  %v7753 = vunpack.c.l.b16 %v7739
  %v7754 = vunpack.c.l.b16 %v7740
  %v7755 = vunpack.c.l.b16 %v7741
  %v7756 = vunpack.c.l.b16 %v7742
  %v7757 = vpack.c.b16 %v7751, %v7750
  %v7758 = vpack.c.b16 %v7753, %v7752
  %v7759 = vpack.c.b16 %v7755, %v7754
  %v7760 = vpack.c.b16 %v7756, %v7756
  %v7762 = vsel %vm7544, %v7757, 0
  %v7765 = vsel %vm7544, %v7758, 0
  %v7768 = vsel %vm7544, %v7759, 0
  %v7771 = vsel %vm7544, %v7760, 0
  %7773 = vmatprep.subr.bf16.mxu0 0
  %7774 = vmatpush1.bf16.msra.mxu0 %v7510
  %7775 = vmatprep.subr.bf16.mxu0 0
  %7776 = vmatpush1.bf16.msra.mxu0 %v7511
  %7777 = vmatprep.subr.bf16.mxu0 0
  %7778 = vmatpush1.bf16.msra.mxu0 %v7512
  %7779 = vmatprep.subr.bf16.mxu0 0
  %7780 = vmatpush1.bf16.msra.mxu0 %v7513
  %7781 = vmatprep.subr.bf16.mxu0 0
  %7782 = vmatpush1.bf16.msra.mxu0 %v7559
  %7783 = vmatprep.subr.bf16.mxu0 0
  %7784 = vmatpush1.bf16.msra.mxu0 0
  %7785 = vmatprep.subr.bf16.mxu0 0
  %7786 = vmatpush1.bf16.msra.mxu0 0
  %7787 = vmatprep.subr.bf16.mxu0 0
  %7788 = vmatpush1.bf16.msra.mxu0 0
  %7789 = vmatprep.subr.bf16.mxu0 0
  %7790 = vmatpush1.bf16.msra.mxu0 0
  %7791 = vmatprep.subr.bf16.mxu0 0
  %7792 = vmatpush1.bf16.msra.mxu0 0
  %7793 = vmatprep.subr.bf16.mxu0 0
  %7794 = vmatpush1.bf16.msra.mxu0 0
  %7795 = vmatprep.subr.bf16.mxu0 0
  %7796 = vmatpush1.bf16.msra.mxu0 0
  %7797 = vmatprep.subr.bf16.mxu0 0
  %7798 = vmatpush1.bf16.msra.mxu0 0
  %7799 = vmatprep.subr.bf16.mxu0 0
  %7800 = vmatpush1.bf16.msra.mxu0 0
  %7801 = vmatprep.subr.bf16.mxu0 0
  %7802 = vmatpush1.bf16.msra.mxu0 0
  %7803 = vmatprep.subr.bf16.mxu0 0
  %7804 = vmatpush1.bf16.msra.mxu0 0
  %7805 = vmatprep.mubr.bf16.mxu0 0
  %7806 = vmatmul.mubr.bf16.gmra.mrb[0].mxu0 %v7762
  %v7807 = vpop.f32.mrb[0].mxu0
  %v7808 = vadd.f32 0.0, %v7807
  %v7809 = vpop.f32.mrb[0].mxu0
  %v7810 = vpop.f32.mrb[0].mxu0
  %v7811 = vadd.f32 0.0, %v7810
  %v7812 = vpop.f32.mrb[0].mxu0
  %7813 = vmatprep.mubr.bf16.mxu0 0
  %7814 = vmatmul.mubr.bf16.gmra.mrb[0].mxu0 %v7765
  %v7815 = vpop.f32.mrb[0].mxu0
  %v7816 = vadd.f32 0.0, %v7815
  %v7817 = vpop.f32.mrb[0].mxu0
  %v7818 = vpop.f32.mrb[0].mxu0
  %v7819 = vadd.f32 0.0, %v7818
  %v7820 = vpop.f32.mrb[0].mxu0
  %7821 = vmatprep.mubr.bf16.mxu0 0
  %7822 = vmatmul.mubr.bf16.gmra.mrb[0].mxu0 %v7768
  %v7823 = vpop.f32.mrb[0].mxu0
  %v7824 = vadd.f32 0.0, %v7823
  %v7825 = vpop.f32.mrb[0].mxu0
  %v7826 = vpop.f32.mrb[0].mxu0
  %v7827 = vadd.f32 0.0, %v7826
  %v7828 = vpop.f32.mrb[0].mxu0
  %7829 = vmatprep.mubr.bf16.mxu0 0
  %7830 = vmatmul.mubr.bf16.gmra.mrb[0].mxu0 %v7771
  %v7831 = vpop.f32.mrb[0].mxu0
  %v7832 = vadd.f32 0.0, %v7831
  %v7833 = vpop.f32.mrb[0].mxu0
  %v7834 = vpop.f32.mrb[0].mxu0
  %v7835 = vpop.f32.mrb[0].mxu0
  %7836 = vdwg.mxu0
  %v7837 = vpack.c.bf16 %v7811, %v7808
  %v7838 = vpack.c.bf16 %v7819, %v7816
  %v7839 = vpack.c.bf16 %v7827, %v7824
  %v7840 = vpack.c.bf16 %v7832, %v7832
  %s7841 = scalar_lea.vmem %s8, 84
  %v7842 = vld [vmem:[%s7841] sm:$0xf]
  %v7843 = vld [vmem:[%s7841 + $0x4] sm:$0xf]
  %v7844 = vld [vmem:[%s7841 + $0x8] sm:$0xf]
  %v7845 = vld [vmem:[%s7841 + $0xc] sm:$0xf]
  %v7846 = vld [vmem:[%s7841 + $0x10] sm:$0xf]
  %v7847 = vld [vmem:[%s7841 + $0x14] sm:$0xf]
  %v7848 = vld [vmem:[%s7841 + $0x18] sm:$0x1]
  %v7856 = vunpack.c.l.b16 %v7842
  %v7857 = vunpack.c.l.b16 %v7843
  %v7858 = vunpack.c.l.b16 %v7844
  %v7859 = vunpack.c.l.b16 %v7845
  %v7860 = vunpack.c.l.b16 %v7846
  %v7861 = vunpack.c.l.b16 %v7847
  %v7862 = vunpack.c.l.b16 %v7848
  %v7863 = vpack.c.b16 %v7857, %v7856
  %v7864 = vpack.c.b16 %v7859, %v7858
  %v7865 = vpack.c.b16 %v7861, %v7860
  %v7866 = vpack.c.b16 %v7862, %v7862
  %v7868 = vsel %vm7544, %v7863, 0
  %v7871 = vsel %vm7544, %v7864, 0
  %v7874 = vsel %vm7544, %v7865, 0
  %v7877 = vsel %vm7544, %v7866, 0
  %7879 = vmatprep.subr.bf16.mxu0 0
  %7880 = vmatpush1.bf16.msra.mxu0 %v7510
  %7881 = vmatprep.subr.bf16.mxu0 0
  %7882 = vmatpush1.bf16.msra.mxu0 %v7511
  %7883 = vmatprep.subr.bf16.mxu0 0
  %7884 = vmatpush1.bf16.msra.mxu0 %v7512
  %7885 = vmatprep.subr.bf16.mxu0 0
  %7886 = vmatpush1.bf16.msra.mxu0 %v7513
  %7887 = vmatprep.subr.bf16.mxu0 0
  %7888 = vmatpush1.bf16.msra.mxu0 %v7559
  %7889 = vmatprep.subr.bf16.mxu0 0
  %7890 = vmatpush1.bf16.msra.mxu0 0
  %7891 = vmatprep.subr.bf16.mxu0 0
  %7892 = vmatpush1.bf16.msra.mxu0 0
  %7893 = vmatprep.subr.bf16.mxu0 0
  %7894 = vmatpush1.bf16.msra.mxu0 0
  %7895 = vmatprep.subr.bf16.mxu0 0
  %7896 = vmatpush1.bf16.msra.mxu0 0
  %7897 = vmatprep.subr.bf16.mxu0 0
  %7898 = vmatpush1.bf16.msra.mxu0 0
  %7899 = vmatprep.subr.bf16.mxu0 0
  %7900 = vmatpush1.bf16.msra.mxu0 0
  %7901 = vmatprep.subr.bf16.mxu0 0
  %7902 = vmatpush1.bf16.msra.mxu0 0
  %7903 = vmatprep.subr.bf16.mxu0 0
  %7904 = vmatpush1.bf16.msra.mxu0 0
  %7905 = vmatprep.subr.bf16.mxu0 0
  %7906 = vmatpush1.bf16.msra.mxu0 0
  %7907 = vmatprep.subr.bf16.mxu0 0
  %7908 = vmatpush1.bf16.msra.mxu0 0
  %7909 = vmatprep.subr.bf16.mxu0 0
  %7910 = vmatpush1.bf16.msra.mxu0 0
  %7911 = vmatprep.mubr.bf16.mxu0 0
  %7912 = vmatmul.mubr.bf16.gmra.mrb[0].mxu0 %v7868
  %v7913 = vpop.f32.mrb[0].mxu0
  %v7914 = vadd.f32 0.0, %v7913
  %v7915 = vpop.f32.mrb[0].mxu0
  %v7916 = vpop.f32.mrb[0].mxu0
  %v7917 = vadd.f32 0.0, %v7916
  %v7918 = vpop.f32.mrb[0].mxu0
  %7919 = vmatprep.mubr.bf16.mxu0 0
  %7920 = vmatmul.mubr.bf16.gmra.mrb[0].mxu0 %v7871
  %v7921 = vpop.f32.mrb[0].mxu0
  %v7922 = vadd.f32 0.0, %v7921
  %v7923 = vpop.f32.mrb[0].mxu0
  %v7924 = vpop.f32.mrb[0].mxu0
  %v7925 = vadd.f32 0.0, %v7924
  %v7926 = vpop.f32.mrb[0].mxu0
  %7927 = vmatprep.mubr.bf16.mxu0 0
  %7928 = vmatmul.mubr.bf16.gmra.mrb[0].mxu0 %v7874
  %v7929 = vpop.f32.mrb[0].mxu0
  %v7930 = vadd.f32 0.0, %v7929
  %v7931 = vpop.f32.mrb[0].mxu0
  %v7932 = vpop.f32.mrb[0].mxu0
  %v7933 = vadd.f32 0.0, %v7932
  %v7934 = vpop.f32.mrb[0].mxu0
  %7935 = vmatprep.mubr.bf16.mxu0 0
  %7936 = vmatmul.mubr.bf16.gmra.mrb[0].mxu0 %v7877
  %v7937 = vpop.f32.mrb[0].mxu0
  %v7938 = vadd.f32 0.0, %v7937
  %v7939 = vpop.f32.mrb[0].mxu0
  %v7940 = vpop.f32.mrb[0].mxu0
  %v7941 = vpop.f32.mrb[0].mxu0
  %7942 = vdwg.mxu0
  %v7943 = vpack.c.bf16 %v7917, %v7914
  %v7944 = vpack.c.bf16 %v7925, %v7922
  %v7945 = vpack.c.bf16 %v7933, %v7930
  %v7946 = vpack.c.bf16 %v7938, %v7938
  %v7947 = vld [vmem:[#allocation2] sm:$0xff]
  %v7948 = vld [vmem:[#allocation2 + $0x8] sm:$0xff]
  %v7949 = vld [vmem:[#allocation2 + $0x10] sm:$0xff]
  %v7950 = vld [vmem:[#allocation2 + $0x18] sm:$0xff]
  %v7951 = vld [vmem:[#allocation2 + $0x20] sm:$0xff]
  %v7952 = vld [vmem:[#allocation2 + $0x28] sm:$0xff]
  %v7953 = vld [vmem:[#allocation2 + $0x30] sm:$0xff]
  %v7954 = vld [vmem:[#allocation2 + $0x38] sm:$0xff]
  %v7955 = vld [vmem:[#allocation2 + $0x40] sm:$0xff]
  %v7956 = vld [vmem:[#allocation2 + $0x48] sm:$0xff]
  %v7957 = vld [vmem:[#allocation2 + $0x50] sm:$0xff]
  %v7958 = vld [vmem:[#allocation2 + $0x58] sm:$0xff]
  %v7959 = vld [vmem:[#allocation2 + $0x60] sm:$0xff]
  %v7960 = vld [vmem:[#allocation2 + $0x68] sm:$0xff]
  %v7961 = vld [vmem:[#allocation2 + $0x70] sm:$0xff]
  %v7962 = vld [vmem:[#allocation2 + $0x78] sm:$0xff]
  %v7963 = vld [vmem:[#allocation2 + $0x80] sm:$0xff]
  %v7964 = vld [vmem:[#allocation2 + $0x88] sm:$0xff]
  %v7965 = vld [vmem:[#allocation2 + $0x90] sm:$0xff]
  %v7966 = vld [vmem:[#allocation2 + $0x98] sm:$0xff]
  %v7967 = vld [vmem:[#allocation2 + $0xa0] sm:$0xff]
  %v7968 = vld [vmem:[#allocation2 + $0xa8] sm:$0xff]
  %v7969 = vld [vmem:[#allocation2 + $0xb0] sm:$0xff]
  %v7970 = vld [vmem:[#allocation2 + $0xb8] sm:$0xff]
  %v7971 = vld [vmem:[#allocation2 + $0xc0] sm:$0xff]
  %v7972 = vld [vmem:[#allocation2 + $0xc8] sm:$0xff]
  %v7973 = vld [vmem:[#allocation2 + $0xd0] sm:$0xff]
  %v7974 = vld [vmem:[#allocation2 + $0xd8] sm:$0xff]
  %v7975 = vld [vmem:[#allocation2 + $0xe0] sm:$0xff]
  %v7976 = vld [vmem:[#allocation2 + $0xe8] sm:$0xff]
  %v7977 = vld [vmem:[#allocation2 + $0xf0] sm:$0xff]
  %v7978 = vld [vmem:[#allocation2 + $0xf8] sm:$0xff]
  %v7979 = vld [vmem:[#allocation2 + $0x100] sm:$0xff]
  %v7980 = vld [vmem:[#allocation2 + $0x108] sm:$0xff]
  %v7981 = vld [vmem:[#allocation2 + $0x110] sm:$0xff]
  %v7982 = vld [vmem:[#allocation2 + $0x118] sm:$0xff]
  %v7983 = vld [vmem:[#allocation2 + $0x120] sm:$0xff]
  %v7984 = vld [vmem:[#allocation2 + $0x128] sm:$0xff]
  %v7985 = vld [vmem:[#allocation2 + $0x130] sm:$0xff]
  %v7986 = vld [vmem:[#allocation2 + $0x138] sm:$0xff]
  %v7987 = vld [vmem:[#allocation2 + $0x140] sm:$0xff]
  %v7988 = vld [vmem:[#allocation2 + $0x148] sm:$0xff]
  %v7989 = vld [vmem:[#allocation2 + $0x150] sm:$0xff]
  %v7990 = vld [vmem:[#allocation2 + $0x158] sm:$0xff]
  %v7991 = vld [vmem:[#allocation2 + $0x160] sm:$0xff]
  %v7992 = vld [vmem:[#allocation2 + $0x168] sm:$0xff]
  %v7993 = vld [vmem:[#allocation2 + $0x170] sm:$0xff]
  %v7994 = vld [vmem:[#allocation2 + $0x178] sm:$0xff]
  %v7995 = vld [vmem:[#allocation2 + $0x180] sm:$0xff]
  %v7996 = vld [vmem:[#allocation2 + $0x188] sm:$0xff]
  %v7997 = vld [vmem:[#allocation2 + $0x190] sm:$0xff]
  %v7998 = vld [vmem:[#allocation2 + $0x198] sm:$0xff]
  %v7999 = vld [vmem:[#allocation2 + $0x1a0] sm:$0xff]
  %v8000 = vld [vmem:[#allocation2 + $0x1a8] sm:$0xff]
  %v8001 = vld [vmem:[#allocation2 + $0x1b0] sm:$0xff]
  %v8002 = vld [vmem:[#allocation2 + $0x1b8] sm:$0xff]
  %v8003 = vld [vmem:[#allocation2 + $0x1c0] sm:$0xff]
  %v8004 = vld [vmem:[#allocation2 + $0x1c8] sm:$0xff]
  %v8005 = vld [vmem:[#allocation2 + $0x1d0] sm:$0xff]
  %v8006 = vld [vmem:[#allocation2 + $0x1d8] sm:$0xff]
  %v8007 = vld [vmem:[#allocation2 + $0x1e0] sm:$0xff]
  %v8008 = vld [vmem:[#allocation2 + $0x1e8] sm:$0xff]
  %v8009 = vld [vmem:[#allocation2 + $0x1f0] sm:$0xff]
  %v8010 = vld [vmem:[#allocation2 + $0x1f8] sm:$0xff]
  %8011 = vmatprep.subr.bf16.mxu0 %v7948
  %8012 = vmatpush1.bf16.msra.mxu0 %v7947
  %8013 = vmatprep.subr.bf16.mxu0 %v7950
  %8014 = vmatpush1.bf16.msra.mxu0 %v7949
  %8015 = vmatprep.subr.bf16.mxu0 %v7952
  %8016 = vmatpush1.bf16.msra.mxu0 %v7951
  %8017 = vmatprep.subr.bf16.mxu0 %v7954
  %8018 = vmatpush1.bf16.msra.mxu0 %v7953
  %8019 = vmatprep.subr.bf16.mxu0 %v7956
  %8020 = vmatpush1.bf16.msra.mxu0 %v7955
  %8021 = vmatprep.subr.bf16.mxu0 %v7958
  %8022 = vmatpush1.bf16.msra.mxu0 %v7957
  %8023 = vmatprep.subr.bf16.mxu0 %v7960
  %8024 = vmatpush1.bf16.msra.mxu0 %v7959
  %8025 = vmatprep.subr.bf16.mxu0 %v7962
  %8026 = vmatpush1.bf16.msra.mxu0 %v7961
  %8027 = vmatprep.subr.bf16.mxu0 %v7964
  %8028 = vmatpush1.bf16.msra.mxu0 %v7963
  %8029 = vmatprep.subr.bf16.mxu0 %v7966
  %8030 = vmatpush1.bf16.msra.mxu0 %v7965
  %8031 = vmatprep.subr.bf16.mxu0 %v7968
  %8032 = vmatpush1.bf16.msra.mxu0 %v7967
  %8033 = vmatprep.subr.bf16.mxu0 %v7970
  %8034 = vmatpush1.bf16.msra.mxu0 %v7969
  %8035 = vmatprep.subr.bf16.mxu0 %v7972
  %8036 = vmatpush1.bf16.msra.mxu0 %v7971
  %8037 = vmatprep.subr.bf16.mxu0 %v7974
  %8038 = vmatpush1.bf16.msra.mxu0 %v7973
  %8039 = vmatprep.subr.bf16.mxu0 %v7976
  %8040 = vmatpush1.bf16.msra.mxu0 %v7975
  %8041 = vmatprep.subr.bf16.mxu0 %v7978
  %8042 = vmatpush1.bf16.msra.mxu0 %v7977
  %8043 = vmatprep.mubr.bf16.mxu0 %v7731
  %8044 = vmatmul.mubr.bf16.gmra.mrb[0].mxu0 %v7625
  %v8045 = vpop.f32.mrb[0].mxu0
  %v8046 = vadd.f32 0.0, %v8045
  %v8047 = vpop.f32.mrb[0].mxu0
  %v8048 = vadd.f32 0.0, %v8047
  %v8049 = vpop.f32.mrb[0].mxu0
  %v8050 = vadd.f32 0.0, %v8049
  %v8051 = vpop.f32.mrb[0].mxu0
  %v8052 = vadd.f32 0.0, %v8051
  %8053 = vmatprep.mubr.bf16.mxu0 %v7732
  %8054 = vmatmul.mubr.bf16.gmra.mrb[0].mxu0 %v7626
  %v8055 = vpop.f32.mrb[0].mxu0
  %v8056 = vadd.f32 0.0, %v8055
  %v8057 = vpop.f32.mrb[0].mxu0
  %v8058 = vadd.f32 0.0, %v8057
  %v8059 = vpop.f32.mrb[0].mxu0
  %v8060 = vadd.f32 0.0, %v8059
  %v8061 = vpop.f32.mrb[0].mxu0
  %v8062 = vadd.f32 0.0, %v8061
  %8063 = vmatprep.mubr.bf16.mxu0 %v7733
  %8064 = vmatmul.mubr.bf16.gmra.mrb[0].mxu0 %v7627
  %v8065 = vpop.f32.mrb[0].mxu0
  %v8066 = vadd.f32 0.0, %v8065
  %v8067 = vpop.f32.mrb[0].mxu0
  %v8068 = vadd.f32 0.0, %v8067
  %v8069 = vpop.f32.mrb[0].mxu0
  %v8070 = vadd.f32 0.0, %v8069
  %v8071 = vpop.f32.mrb[0].mxu0
  %v8072 = vadd.f32 0.0, %v8071
  %8073 = vmatprep.mubr.bf16.mxu0 %v7734
  %8074 = vmatmul.mubr.bf16.gmra.mrb[0].mxu0 %v7628
  %v8075 = vpop.f32.mrb[0].mxu0
  %v8076 = vadd.f32 0.0, %v8075
  %v8077 = vpop.f32.mrb[0].mxu0
  %v8078 = vadd.f32 0.0, %v8077
  %v8079 = vpop.f32.mrb[0].mxu0
  %v8080 = vpop.f32.mrb[0].mxu0
  %8081 = vdwg.mxu0
  %8082 = vmatprep.subr.bf16.mxu0 %v7980
  %8083 = vmatpush1.bf16.msra.mxu0 %v7979
  %8084 = vmatprep.subr.bf16.mxu0 %v7982
  %8085 = vmatpush1.bf16.msra.mxu0 %v7981
  %8086 = vmatprep.subr.bf16.mxu0 %v7984
  %8087 = vmatpush1.bf16.msra.mxu0 %v7983
  %8088 = vmatprep.subr.bf16.mxu0 %v7986
  %8089 = vmatpush1.bf16.msra.mxu0 %v7985
  %8090 = vmatprep.subr.bf16.mxu0 %v7988
  %8091 = vmatpush1.bf16.msra.mxu0 %v7987
  %8092 = vmatprep.subr.bf16.mxu0 %v7990
  %8093 = vmatpush1.bf16.msra.mxu0 %v7989
  %8094 = vmatprep.subr.bf16.mxu0 %v7992
  %8095 = vmatpush1.bf16.msra.mxu0 %v7991
  %8096 = vmatprep.subr.bf16.mxu0 %v7994
  %8097 = vmatpush1.bf16.msra.mxu0 %v7993
  %8098 = vmatprep.subr.bf16.mxu0 %v7996
  %8099 = vmatpush1.bf16.msra.mxu0 %v7995
  %8100 = vmatprep.subr.bf16.mxu0 %v7998
  %8101 = vmatpush1.bf16.msra.mxu0 %v7997
  %8102 = vmatprep.subr.bf16.mxu0 %v8000
  %8103 = vmatpush1.bf16.msra.mxu0 %v7999
  %8104 = vmatprep.subr.bf16.mxu0 %v8002
  %8105 = vmatpush1.bf16.msra.mxu0 %v8001
  %8106 = vmatprep.subr.bf16.mxu0 %v8004
  %8107 = vmatpush1.bf16.msra.mxu0 %v8003
  %8108 = vmatprep.subr.bf16.mxu0 %v8006
  %8109 = vmatpush1.bf16.msra.mxu0 %v8005
  %8110 = vmatprep.subr.bf16.mxu0 %v8008
  %8111 = vmatpush1.bf16.msra.mxu0 %v8007
  %8112 = vmatprep.subr.bf16.mxu0 %v8010
  %8113 = vmatpush1.bf16.msra.mxu0 %v8009
  %8114 = vmatprep.mubr.bf16.mxu0 %v7943
  %8115 = vmatmul.mubr.bf16.gmra.mrb[0].mxu0 %v7837
  %v8116 = vpop.f32.mrb[0].mxu0
  %v8117 = vadd.f32 %v8046, %v8116
  %v8118 = vpop.f32.mrb[0].mxu0
  %v8119 = vadd.f32 %v8048, %v8118
  %v8120 = vpop.f32.mrb[0].mxu0
  %v8121 = vadd.f32 %v8050, %v8120
  %v8122 = vpop.f32.mrb[0].mxu0
  %v8123 = vadd.f32 %v8052, %v8122
  %8124 = vmatprep.mubr.bf16.mxu0 %v7944
  %8125 = vmatmul.mubr.bf16.gmra.mrb[0].mxu0 %v7838
  %v8126 = vpop.f32.mrb[0].mxu0
  %v8127 = vadd.f32 %v8056, %v8126
  %v8128 = vpop.f32.mrb[0].mxu0
  %v8129 = vadd.f32 %v8058, %v8128
  %v8130 = vpop.f32.mrb[0].mxu0
  %v8131 = vadd.f32 %v8060, %v8130
  %v8132 = vpop.f32.mrb[0].mxu0
  %v8133 = vadd.f32 %v8062, %v8132
  %8134 = vmatprep.mubr.bf16.mxu0 %v7945
  %8135 = vmatmul.mubr.bf16.gmra.mrb[0].mxu0 %v7839
  %v8136 = vpop.f32.mrb[0].mxu0
  %v8137 = vadd.f32 %v8066, %v8136
  %v8138 = vpop.f32.mrb[0].mxu0
  %v8139 = vadd.f32 %v8068, %v8138
  %v8140 = vpop.f32.mrb[0].mxu0
  %v8141 = vadd.f32 %v8070, %v8140
  %v8142 = vpop.f32.mrb[0].mxu0
  %v8143 = vadd.f32 %v8072, %v8142
  %8144 = vmatprep.mubr.bf16.mxu0 %v7946
  %8145 = vmatmul.mubr.bf16.gmra.mrb[0].mxu0 %v7840
  %v8146 = vpop.f32.mrb[0].mxu0
  %v8147 = vadd.f32 %v8076, %v8146
  %v8148 = vpop.f32.mrb[0].mxu0
  %v8149 = vadd.f32 %v8078, %v8148
  %v8150 = vpop.f32.mrb[0].mxu0
  %v8151 = vpop.f32.mrb[0].mxu0
  %8152 = vdwg.mxu0
  %v8153 = vld [vmem:[%s10] sm:$0x3]
  %v8154 = vld [vmem:[%s11] sm:$0x3]
  %v8155 = vadd.f32 %v8117, %v8121
  %v8156 = vadd.f32 %v8155, %v8127
  %v8157 = vadd.f32 %v8156, %v8131
  %v8158 = vadd.f32 %v8157, %v8137
  %v8159 = vadd.f32 %v8158, %v8141
  %vm8160 = vcmask 1041408
  %v8161 = vsel %vm8160, %v8147, 0.0
  %v8162 = vadd.f32 %v8159, %v8161
  %v8163 = vrot.slane %v8162, 4
  %v8164 = vadd.f32 %v8162, %v8163
  %v8165 = vrot.slane %v8164, 2
  %v8166 = vadd.f32 %v8164, %v8165
  %v8167 = vrot.slane %v8166, 1
  %v8168 = vadd.f32 %v8166, %v8167
  %v8169 = vadd.f32 %v8119, %v8123
  %v8170 = vadd.f32 %v8169, %v8129
  %v8171 = vadd.f32 %v8170, %v8133
  %v8172 = vadd.f32 %v8171, %v8139
  %v8173 = vadd.f32 %v8172, %v8143
  %v8174 = vsel %vm8160, %v8149, 0.0
  %v8175 = vadd.f32 %v8173, %v8174
  %v8176 = vrot.slane %v8175, 4
  %v8177 = vadd.f32 %v8175, %v8176
  %v8178 = vrot.slane %v8177, 2
  %v8179 = vadd.f32 %v8177, %v8178
  %v8180 = vrot.slane %v8179, 1
  %v8181 = vadd.f32 %v8179, %v8180
  %v8182 = vmul.f32 %v8117, %v8117
  %v8183 = vmul.f32 %v8119, %v8119
  %v8184 = vmul.f32 %v8121, %v8121
  %v8185 = vmul.f32 %v8123, %v8123
  %v8186 = vmul.f32 %v8127, %v8127
  %v8187 = vmul.f32 %v8129, %v8129
  %v8188 = vmul.f32 %v8131, %v8131
  %v8189 = vmul.f32 %v8133, %v8133
  %v8190 = vmul.f32 %v8137, %v8137
  %v8191 = vmul.f32 %v8139, %v8139
  %v8192 = vmul.f32 %v8141, %v8141
  %v8193 = vmul.f32 %v8143, %v8143
  %v8194 = vmul.f32 %v8147, %v8147
  %v8195 = vmul.f32 %v8149, %v8149
  %v8196 = vadd.f32 %v8182, %v8184
  %v8197 = vadd.f32 %v8196, %v8186
  %v8198 = vadd.f32 %v8197, %v8188
  %v8199 = vadd.f32 %v8198, %v8190
  %v8200 = vadd.f32 %v8199, %v8192
  %v8201 = vsel %vm8160, %v8194, 0.0
  %v8202 = vadd.f32 %v8200, %v8201
  %v8203 = vrot.slane %v8202, 4
  %v8204 = vadd.f32 %v8202, %v8203
  %v8205 = vrot.slane %v8204, 2
  %v8206 = vadd.f32 %v8204, %v8205
  %v8207 = vrot.slane %v8206, 1
  %v8208 = vadd.f32 %v8206, %v8207
  %v8209 = vadd.f32 %v8183, %v8185
  %v8210 = vadd.f32 %v8209, %v8187
  %v8211 = vadd.f32 %v8210, %v8189
  %v8212 = vadd.f32 %v8211, %v8191
  %v8213 = vadd.f32 %v8212, %v8193
  %v8214 = vsel %vm8160, %v8195, 0.0
  %v8215 = vadd.f32 %v8213, %v8214
  %v8216 = vrot.slane %v8215, 4
  %v8217 = vadd.f32 %v8215, %v8216
  %v8218 = vrot.slane %v8217, 2
  %v8219 = vadd.f32 %v8217, %v8218
  %v8220 = vrot.slane %v8219, 1
  %v8221 = vadd.f32 %v8219, %v8220
  %v8222 = vmul.f32 %v8168, 0.02
  %v8223 = vmul.f32 %v8181, 0.02
  %v8224 = vmul.f32 %v8208, 0.02
  %v8225 = vmul.f32 %v8221, 0.02
  %v8226 = vmul.f32 %v8222, %v8222
  %v8227 = vmul.f32 %v8223, %v8223
  %v8228 = vsub.f32 %v8224, %v8226
  %v8229 = vsub.f32 %v8225, %v8227
  %v8230 = vmax.f32 %v8228, 0.0
  %v8231 = vmax.f32 %v8229, 0.0
  %v8232 = vsub.f32 %v8117, %v8222
  %v8233 = vsub.f32 %v8119, %v8223
  %v8234 = vsub.f32 %v8121, %v8222
  %v8235 = vsub.f32 %v8123, %v8223
  %v8236 = vsub.f32 %v8127, %v8222
  %v8237 = vsub.f32 %v8129, %v8223
  %v8238 = vsub.f32 %v8131, %v8222
  %v8239 = vsub.f32 %v8133, %v8223
  %v8240 = vadd.f32 %v8230, 1e-05
  %v8241 = vadd.f32 %v8231, 1e-05
  %v8242 = vrsqrt.pop %v8240
  %v8243 = vrsqrt.pop %v8241
  %v8244 = vmul.f32 %v8232, %v8242
  %v8245 = vmul.f32 %v8233, %v8243
  %v8246 = vmul.f32 %v8234, %v8242
  %v8247 = vmul.f32 %v8235, %v8243
  %v8248 = vmul.f32 %v8236, %v8242
  %v8249 = vmul.f32 %v8237, %v8243
  %v8250 = vmul.f32 %v8238, %v8242
  %v8251 = vmul.f32 %v8239, %v8243
  %v8253 = vlaneseq
  %v8254 = vshrl.u32 %v8253, 7
  %v8255 = vsub.s32 0, %v8254
  %v8256 = vrot.slane %v8153, %v8255
  %v8257 = vlaneseq
  %v8258 = vshrl.u32 %v8257, 7
  %v8259 = vsub.s32 1, %v8258
  %v8260 = vrot.slane %v8153, %v8259
  %v8263 = vmul.f32 %v8244, %v8256
  %v8264 = vmul.f32 %v8245, %v8260
  %v8265 = vmul.f32 %v8246, %v8256
  %v8266 = vmul.f32 %v8247, %v8260
  %v8267 = vmul.f32 %v8248, %v8256
  %v8268 = vmul.f32 %v8249, %v8260
  %v8269 = vmul.f32 %v8250, %v8256
  %v8270 = vmul.f32 %v8251, %v8260
  %v8272 = vlaneseq
  %v8273 = vshrl.u32 %v8272, 7
  %v8274 = vsub.s32 0, %v8273
  %v8275 = vrot.slane %v8154, %v8274
  %v8276 = vlaneseq
  %v8277 = vshrl.u32 %v8276, 7
  %v8278 = vsub.s32 1, %v8277
  %v8279 = vrot.slane %v8154, %v8278
  %v8282 = vadd.f32 %v8263, %v8275
  %v8283 = vadd.f32 %v8264, %v8279
  %v8284 = vadd.f32 %v8265, %v8275
  %v8285 = vadd.f32 %v8266, %v8279
  %v8286 = vadd.f32 %v8267, %v8275
  %v8287 = vadd.f32 %v8268, %v8279
  %v8288 = vadd.f32 %v8269, %v8275
  %v8289 = vadd.f32 %v8270, %v8279
  %vm8290 = vcmp.gt.f32.partialorder %v8282, 0.0
  %vm8291 = vcmp.gt.f32.partialorder %v8283, 0.0
  %vm8292 = vcmp.gt.f32.partialorder %v8284, 0.0
  %vm8293 = vcmp.gt.f32.partialorder %v8285, 0.0
  %vm8294 = vcmp.gt.f32.partialorder %v8286, 0.0
  %vm8295 = vcmp.gt.f32.partialorder %v8287, 0.0
  %vm8296 = vcmp.gt.f32.partialorder %v8288, 0.0
  %vm8297 = vcmp.gt.f32.partialorder %v8289, 0.0
  %v8298 = vmul.f32 %v8282, 0.2
  %v8299 = vmul.f32 %v8283, 0.2
  %v8300 = vmul.f32 %v8284, 0.2
  %v8301 = vmul.f32 %v8285, 0.2
  %v8302 = vmul.f32 %v8286, 0.2
  %v8303 = vmul.f32 %v8287, 0.2
  %v8304 = vmul.f32 %v8288, 0.2
  %v8305 = vmul.f32 %v8289, 0.2
  %v8306 = vsel %vm8290, %v8282, %v8298
  %v8307 = vsel %vm8291, %v8283, %v8299
  %v8308 = vsel %vm8292, %v8284, %v8300
  %v8309 = vsel %vm8293, %v8285, %v8301
  %v8310 = vsel %vm8294, %v8286, %v8302
  %v8311 = vsel %vm8295, %v8287, %v8303
  %v8312 = vsel %vm8296, %v8288, %v8304
  %v8313 = vsel %vm8297, %v8289, %v8305
  %s8314 = smul.u32 4, 128
  %s8315 = smul.u32 %s8314, 4
  %s8316 = sshll.u32 %s8315, 4
  %8317 = dma.done %s607, %s8316
  %v8318 = vpack.c.bf16 %v8306, %v8306
  %v8319 = vpack.c.bf16 %v8307, %v8307
  %v8320 = vpack.c.bf16 %v8308, %v8308
  %v8321 = vpack.c.bf16 %v8309, %v8309
  %v8322 = vpack.c.bf16 %v8310, %v8310
  %v8323 = vpack.c.bf16 %v8311, %v8311
  %v8324 = vpack.c.bf16 %v8312, %v8312
  %v8325 = vpack.c.bf16 %v8313, %v8313
  %v8326 = vld [vmem:[#allocation3] sm:$0xff]
  %v8327 = vld [vmem:[#allocation3 + $0x8] sm:$0xff]
  %v8328 = vld [vmem:[#allocation3 + $0x10] sm:$0xff]
  %v8329 = vld [vmem:[#allocation3 + $0x18] sm:$0xff]
  %v8330 = vld [vmem:[#allocation3 + $0x20] sm:$0xff]
  %v8331 = vld [vmem:[#allocation3 + $0x28] sm:$0xff]
  %v8332 = vld [vmem:[#allocation3 + $0x30] sm:$0xff]
  %v8333 = vld [vmem:[#allocation3 + $0x38] sm:$0xff]
  %v8334 = vld [vmem:[#allocation3 + $0x40] sm:$0xff]
  %v8335 = vld [vmem:[#allocation3 + $0x48] sm:$0xff]
  %v8336 = vld [vmem:[#allocation3 + $0x50] sm:$0xff]
  %v8337 = vld [vmem:[#allocation3 + $0x58] sm:$0xff]
  %v8338 = vld [vmem:[#allocation3 + $0x60] sm:$0xff]
  %v8339 = vld [vmem:[#allocation3 + $0x68] sm:$0xff]
  %v8340 = vld [vmem:[#allocation3 + $0x70] sm:$0xff]
  %v8341 = vld [vmem:[#allocation3 + $0x78] sm:$0xff]
  %v8342 = vld [vmem:[#allocation3 + $0x80] sm:$0xff]
  %v8343 = vld [vmem:[#allocation3 + $0x88] sm:$0xff]
  %v8344 = vld [vmem:[#allocation3 + $0x90] sm:$0xff]
  %v8345 = vld [vmem:[#allocation3 + $0x98] sm:$0xff]
  %v8346 = vld [vmem:[#allocation3 + $0xa0] sm:$0xff]
  %v8347 = vld [vmem:[#allocation3 + $0xa8] sm:$0xff]
  %v8348 = vld [vmem:[#allocation3 + $0xb0] sm:$0xff]
  %v8349 = vld [vmem:[#allocation3 + $0xb8] sm:$0xff]
  %v8350 = vld [vmem:[#allocation3 + $0xc0] sm:$0xff]
  %v8351 = vld [vmem:[#allocation3 + $0xc8] sm:$0xff]
  %v8352 = vld [vmem:[#allocation3 + $0xd0] sm:$0xff]
  %v8353 = vld [vmem:[#allocation3 + $0xd8] sm:$0xff]
  %v8354 = vld [vmem:[#allocation3 + $0xe0] sm:$0xff]
  %v8355 = vld [vmem:[#allocation3 + $0xe8] sm:$0xff]
  %v8356 = vld [vmem:[#allocation3 + $0xf0] sm:$0xff]
  %v8357 = vld [vmem:[#allocation3 + $0xf8] sm:$0xff]
  %v8358 = vld [vmem:[#allocation3 + $0x100] sm:$0xff]
  %v8359 = vld [vmem:[#allocation3 + $0x108] sm:$0xff]
  %v8360 = vld [vmem:[#allocation3 + $0x110] sm:$0xff]
  %v8361 = vld [vmem:[#allocation3 + $0x118] sm:$0xff]
  %v8362 = vld [vmem:[#allocation3 + $0x120] sm:$0xff]
  %v8363 = vld [vmem:[#allocation3 + $0x128] sm:$0xff]
  %v8364 = vld [vmem:[#allocation3 + $0x130] sm:$0xff]
  %v8365 = vld [vmem:[#allocation3 + $0x138] sm:$0xff]
  %v8366 = vld [vmem:[#allocation3 + $0x140] sm:$0xff]
  %v8367 = vld [vmem:[#allocation3 + $0x148] sm:$0xff]
  %v8368 = vld [vmem:[#allocation3 + $0x150] sm:$0xff]
  %v8369 = vld [vmem:[#allocation3 + $0x158] sm:$0xff]
  %v8370 = vld [vmem:[#allocation3 + $0x160] sm:$0xff]
  %v8371 = vld [vmem:[#allocation3 + $0x168] sm:$0xff]
  %v8372 = vld [vmem:[#allocation3 + $0x170] sm:$0xff]
  %v8373 = vld [vmem:[#allocation3 + $0x178] sm:$0xff]
  %v8374 = vld [vmem:[#allocation3 + $0x180] sm:$0xff]
  %v8375 = vld [vmem:[#allocation3 + $0x188] sm:$0xff]
  %v8376 = vld [vmem:[#allocation3 + $0x190] sm:$0xff]
  %v8377 = vld [vmem:[#allocation3 + $0x198] sm:$0xff]
  %v8378 = vld [vmem:[#allocation3 + $0x1a0] sm:$0xff]
  %v8379 = vld [vmem:[#allocation3 + $0x1a8] sm:$0xff]
  %v8380 = vld [vmem:[#allocation3 + $0x1b0] sm:$0xff]
  %v8381 = vld [vmem:[#allocation3 + $0x1b8] sm:$0xff]
  %v8382 = vld [vmem:[#allocation3 + $0x1c0] sm:$0xff]
  %v8383 = vld [vmem:[#allocation3 + $0x1c8] sm:$0xff]
  %v8384 = vld [vmem:[#allocation3 + $0x1d0] sm:$0xff]
  %v8385 = vld [vmem:[#allocation3 + $0x1d8] sm:$0xff]
  %v8386 = vld [vmem:[#allocation3 + $0x1e0] sm:$0xff]
  %v8387 = vld [vmem:[#allocation3 + $0x1e8] sm:$0xff]
  %v8388 = vld [vmem:[#allocation3 + $0x1f0] sm:$0xff]
  %v8389 = vld [vmem:[#allocation3 + $0x1f8] sm:$0xff]
  %v8390 = vld [vmem:[#allocation3 + $0x200] sm:$0xff]
  %v8391 = vld [vmem:[#allocation3 + $0x208] sm:$0xff]
  %v8392 = vld [vmem:[#allocation3 + $0x210] sm:$0xff]
  %v8393 = vld [vmem:[#allocation3 + $0x218] sm:$0xff]
  %v8394 = vld [vmem:[#allocation3 + $0x220] sm:$0xff]
  %v8395 = vld [vmem:[#allocation3 + $0x228] sm:$0xff]
  %v8396 = vld [vmem:[#allocation3 + $0x230] sm:$0xff]
  %v8397 = vld [vmem:[#allocation3 + $0x238] sm:$0xff]
  %v8398 = vld [vmem:[#allocation3 + $0x240] sm:$0xff]
  %v8399 = vld [vmem:[#allocation3 + $0x248] sm:$0xff]
  %v8400 = vld [vmem:[#allocation3 + $0x250] sm:$0xff]
  %v8401 = vld [vmem:[#allocation3 + $0x258] sm:$0xff]
  %v8402 = vld [vmem:[#allocation3 + $0x260] sm:$0xff]
  %v8403 = vld [vmem:[#allocation3 + $0x268] sm:$0xff]
  %v8404 = vld [vmem:[#allocation3 + $0x270] sm:$0xff]
  %v8405 = vld [vmem:[#allocation3 + $0x278] sm:$0xff]
  %v8406 = vld [vmem:[#allocation3 + $0x280] sm:$0xff]
  %v8407 = vld [vmem:[#allocation3 + $0x288] sm:$0xff]
  %v8408 = vld [vmem:[#allocation3 + $0x290] sm:$0xff]
  %v8409 = vld [vmem:[#allocation3 + $0x298] sm:$0xff]
  %v8410 = vld [vmem:[#allocation3 + $0x2a0] sm:$0xff]
  %v8411 = vld [vmem:[#allocation3 + $0x2a8] sm:$0xff]
  %v8412 = vld [vmem:[#allocation3 + $0x2b0] sm:$0xff]
  %v8413 = vld [vmem:[#allocation3 + $0x2b8] sm:$0xff]
  %v8414 = vld [vmem:[#allocation3 + $0x2c0] sm:$0xff]
  %v8415 = vld [vmem:[#allocation3 + $0x2c8] sm:$0xff]
  %v8416 = vld [vmem:[#allocation3 + $0x2d0] sm:$0xff]
  %v8417 = vld [vmem:[#allocation3 + $0x2d8] sm:$0xff]
  %v8418 = vld [vmem:[#allocation3 + $0x2e0] sm:$0xff]
  %v8419 = vld [vmem:[#allocation3 + $0x2e8] sm:$0xff]
  %v8420 = vld [vmem:[#allocation3 + $0x2f0] sm:$0xff]
  %v8421 = vld [vmem:[#allocation3 + $0x2f8] sm:$0xff]
  %v8422 = vld [vmem:[#allocation3 + $0x300] sm:$0xff]
  %v8423 = vld [vmem:[#allocation3 + $0x308] sm:$0xff]
  %v8424 = vld [vmem:[#allocation3 + $0x310] sm:$0xff]
  %v8425 = vld [vmem:[#allocation3 + $0x318] sm:$0xff]
  %v8426 = vld [vmem:[#allocation3 + $0x320] sm:$0xff]
  %v8427 = vld [vmem:[#allocation3 + $0x328] sm:$0xff]
  %v8428 = vld [vmem:[#allocation3 + $0x330] sm:$0xff]
  %v8429 = vld [vmem:[#allocation3 + $0x338] sm:$0xff]
  %v8430 = vld [vmem:[#allocation3 + $0x340] sm:$0xff]
  %v8431 = vld [vmem:[#allocation3 + $0x348] sm:$0xff]
  %v8432 = vld [vmem:[#allocation3 + $0x350] sm:$0xff]
  %v8433 = vld [vmem:[#allocation3 + $0x358] sm:$0xff]
  %v8434 = vld [vmem:[#allocation3 + $0x360] sm:$0xff]
  %v8435 = vld [vmem:[#allocation3 + $0x368] sm:$0xff]
  %v8436 = vld [vmem:[#allocation3 + $0x370] sm:$0xff]
  %v8437 = vld [vmem:[#allocation3 + $0x378] sm:$0xff]
  %v8438 = vld [vmem:[#allocation3 + $0x380] sm:$0xff]
  %v8439 = vld [vmem:[#allocation3 + $0x388] sm:$0xff]
  %v8440 = vld [vmem:[#allocation3 + $0x390] sm:$0xff]
  %v8441 = vld [vmem:[#allocation3 + $0x398] sm:$0xff]
  %v8442 = vld [vmem:[#allocation3 + $0x3a0] sm:$0xff]
  %v8443 = vld [vmem:[#allocation3 + $0x3a8] sm:$0xff]
  %v8444 = vld [vmem:[#allocation3 + $0x3b0] sm:$0xff]
  %v8445 = vld [vmem:[#allocation3 + $0x3b8] sm:$0xff]
  %v8446 = vld [vmem:[#allocation3 + $0x3c0] sm:$0xff]
  %v8447 = vld [vmem:[#allocation3 + $0x3c8] sm:$0xff]
  %v8448 = vld [vmem:[#allocation3 + $0x3d0] sm:$0xff]
  %v8449 = vld [vmem:[#allocation3 + $0x3d8] sm:$0xff]
  %v8450 = vld [vmem:[#allocation3 + $0x3e0] sm:$0xff]
  %v8451 = vld [vmem:[#allocation3 + $0x3e8] sm:$0xff]
  %v8452 = vld [vmem:[#allocation3 + $0x3f0] sm:$0xff]
  %v8453 = vld [vmem:[#allocation3 + $0x3f8] sm:$0xff]
  %v8454 = vld [vmem:[#allocation3 + $0x400] sm:$0xff]
  %v8455 = vld [vmem:[#allocation3 + $0x408] sm:$0xff]
  %v8456 = vld [vmem:[#allocation3 + $0x410] sm:$0xff]
  %v8457 = vld [vmem:[#allocation3 + $0x418] sm:$0xff]
  %v8458 = vld [vmem:[#allocation3 + $0x420] sm:$0xff]
  %v8459 = vld [vmem:[#allocation3 + $0x428] sm:$0xff]
  %v8460 = vld [vmem:[#allocation3 + $0x430] sm:$0xff]
  %v8461 = vld [vmem:[#allocation3 + $0x438] sm:$0xff]
  %v8462 = vld [vmem:[#allocation3 + $0x440] sm:$0xff]
  %v8463 = vld [vmem:[#allocation3 + $0x448] sm:$0xff]
  %v8464 = vld [vmem:[#allocation3 + $0x450] sm:$0xff]
  %v8465 = vld [vmem:[#allocation3 + $0x458] sm:$0xff]
  %v8466 = vld [vmem:[#allocation3 + $0x460] sm:$0xff]
  %v8467 = vld [vmem:[#allocation3 + $0x468] sm:$0xff]
  %v8468 = vld [vmem:[#allocation3 + $0x470] sm:$0xff]
  %v8469 = vld [vmem:[#allocation3 + $0x478] sm:$0xff]
  %v8470 = vld [vmem:[#allocation3 + $0x480] sm:$0xff]
  %v8471 = vld [vmem:[#allocation3 + $0x488] sm:$0xff]
  %v8472 = vld [vmem:[#allocation3 + $0x490] sm:$0xff]
  %v8473 = vld [vmem:[#allocation3 + $0x498] sm:$0xff]
  %v8474 = vld [vmem:[#allocation3 + $0x4a0] sm:$0xff]
  %v8475 = vld [vmem:[#allocation3 + $0x4a8] sm:$0xff]
  %v8476 = vld [vmem:[#allocation3 + $0x4b0] sm:$0xff]
  %v8477 = vld [vmem:[#allocation3 + $0x4b8] sm:$0xff]
  %v8478 = vld [vmem:[#allocation3 + $0x4c0] sm:$0xff]
  %v8479 = vld [vmem:[#allocation3 + $0x4c8] sm:$0xff]
  %v8480 = vld [vmem:[#allocation3 + $0x4d0] sm:$0xff]
  %v8481 = vld [vmem:[#allocation3 + $0x4d8] sm:$0xff]
  %v8482 = vld [vmem:[#allocation3 + $0x4e0] sm:$0xff]
  %v8483 = vld [vmem:[#allocation3 + $0x4e8] sm:$0xff]
  %v8484 = vld [vmem:[#allocation3 + $0x4f0] sm:$0xff]
  %v8485 = vld [vmem:[#allocation3 + $0x4f8] sm:$0xff]
  %v8486 = vld [vmem:[#allocation3 + $0x500] sm:$0xff]
  %v8487 = vld [vmem:[#allocation3 + $0x508] sm:$0xff]
  %v8488 = vld [vmem:[#allocation3 + $0x510] sm:$0xff]
  %v8489 = vld [vmem:[#allocation3 + $0x518] sm:$0xff]
  %v8490 = vld [vmem:[#allocation3 + $0x520] sm:$0xff]
  %v8491 = vld [vmem:[#allocation3 + $0x528] sm:$0xff]
  %v8492 = vld [vmem:[#allocation3 + $0x530] sm:$0xff]
  %v8493 = vld [vmem:[#allocation3 + $0x538] sm:$0xff]
  %v8494 = vld [vmem:[#allocation3 + $0x540] sm:$0xff]
  %v8495 = vld [vmem:[#allocation3 + $0x548] sm:$0xff]
  %v8496 = vld [vmem:[#allocation3 + $0x550] sm:$0xff]
  %v8497 = vld [vmem:[#allocation3 + $0x558] sm:$0xff]
  %v8498 = vld [vmem:[#allocation3 + $0x560] sm:$0xff]
  %v8499 = vld [vmem:[#allocation3 + $0x568] sm:$0xff]
  %v8500 = vld [vmem:[#allocation3 + $0x570] sm:$0xff]
  %v8501 = vld [vmem:[#allocation3 + $0x578] sm:$0xff]
  %v8502 = vld [vmem:[#allocation3 + $0x580] sm:$0xff]
  %v8503 = vld [vmem:[#allocation3 + $0x588] sm:$0xff]
  %v8504 = vld [vmem:[#allocation3 + $0x590] sm:$0xff]
  %v8505 = vld [vmem:[#allocation3 + $0x598] sm:$0xff]
  %v8506 = vld [vmem:[#allocation3 + $0x5a0] sm:$0xff]
  %v8507 = vld [vmem:[#allocation3 + $0x5a8] sm:$0xff]
  %v8508 = vld [vmem:[#allocation3 + $0x5b0] sm:$0xff]
  %v8509 = vld [vmem:[#allocation3 + $0x5b8] sm:$0xff]
  %v8510 = vld [vmem:[#allocation3 + $0x5c0] sm:$0xff]
  %v8511 = vld [vmem:[#allocation3 + $0x5c8] sm:$0xff]
  %v8512 = vld [vmem:[#allocation3 + $0x5d0] sm:$0xff]
  %v8513 = vld [vmem:[#allocation3 + $0x5d8] sm:$0xff]
  %v8514 = vld [vmem:[#allocation3 + $0x5e0] sm:$0xff]
  %v8515 = vld [vmem:[#allocation3 + $0x5e8] sm:$0xff]
  %v8516 = vld [vmem:[#allocation3 + $0x5f0] sm:$0xff]
  %v8517 = vld [vmem:[#allocation3 + $0x5f8] sm:$0xff]
  %v8518 = vld [vmem:[#allocation3 + $0x600] sm:$0xff]
  %v8519 = vld [vmem:[#allocation3 + $0x608] sm:$0xff]
  %v8520 = vld [vmem:[#allocation3 + $0x610] sm:$0xff]
  %v8521 = vld [vmem:[#allocation3 + $0x618] sm:$0xff]
  %v8522 = vld [vmem:[#allocation3 + $0x620] sm:$0xff]
  %v8523 = vld [vmem:[#allocation3 + $0x628] sm:$0xff]
  %v8524 = vld [vmem:[#allocation3 + $0x630] sm:$0xff]
  %v8525 = vld [vmem:[#allocation3 + $0x638] sm:$0xff]
  %v8526 = vld [vmem:[#allocation3 + $0x640] sm:$0xff]
  %v8527 = vld [vmem:[#allocation3 + $0x648] sm:$0xff]
  %v8528 = vld [vmem:[#allocation3 + $0x650] sm:$0xff]
  %v8529 = vld [vmem:[#allocation3 + $0x658] sm:$0xff]
  %v8530 = vld [vmem:[#allocation3 + $0x660] sm:$0xff]
  %v8531 = vld [vmem:[#allocation3 + $0x668] sm:$0xff]
  %v8532 = vld [vmem:[#allocation3 + $0x670] sm:$0xff]
  %v8533 = vld [vmem:[#allocation3 + $0x678] sm:$0xff]
  %v8534 = vld [vmem:[#allocation3 + $0x680] sm:$0xff]
  %v8535 = vld [vmem:[#allocation3 + $0x688] sm:$0xff]
  %v8536 = vld [vmem:[#allocation3 + $0x690] sm:$0xff]
  %v8537 = vld [vmem:[#allocation3 + $0x698] sm:$0xff]
  %v8538 = vld [vmem:[#allocation3 + $0x6a0] sm:$0xff]
  %v8539 = vld [vmem:[#allocation3 + $0x6a8] sm:$0xff]
  %v8540 = vld [vmem:[#allocation3 + $0x6b0] sm:$0xff]
  %v8541 = vld [vmem:[#allocation3 + $0x6b8] sm:$0xff]
  %v8542 = vld [vmem:[#allocation3 + $0x6c0] sm:$0xff]
  %v8543 = vld [vmem:[#allocation3 + $0x6c8] sm:$0xff]
  %v8544 = vld [vmem:[#allocation3 + $0x6d0] sm:$0xff]
  %v8545 = vld [vmem:[#allocation3 + $0x6d8] sm:$0xff]
  %v8546 = vld [vmem:[#allocation3 + $0x6e0] sm:$0xff]
  %v8547 = vld [vmem:[#allocation3 + $0x6e8] sm:$0xff]
  %v8548 = vld [vmem:[#allocation3 + $0x6f0] sm:$0xff]
  %v8549 = vld [vmem:[#allocation3 + $0x6f8] sm:$0xff]
  %v8550 = vld [vmem:[#allocation3 + $0x700] sm:$0xff]
  %v8551 = vld [vmem:[#allocation3 + $0x708] sm:$0xff]
  %v8552 = vld [vmem:[#allocation3 + $0x710] sm:$0xff]
  %v8553 = vld [vmem:[#allocation3 + $0x718] sm:$0xff]
  %v8554 = vld [vmem:[#allocation3 + $0x720] sm:$0xff]
  %v8555 = vld [vmem:[#allocation3 + $0x728] sm:$0xff]
  %v8556 = vld [vmem:[#allocation3 + $0x730] sm:$0xff]
  %v8557 = vld [vmem:[#allocation3 + $0x738] sm:$0xff]
  %v8558 = vld [vmem:[#allocation3 + $0x740] sm:$0xff]
  %v8559 = vld [vmem:[#allocation3 + $0x748] sm:$0xff]
  %v8560 = vld [vmem:[#allocation3 + $0x750] sm:$0xff]
  %v8561 = vld [vmem:[#allocation3 + $0x758] sm:$0xff]
  %v8562 = vld [vmem:[#allocation3 + $0x760] sm:$0xff]
  %v8563 = vld [vmem:[#allocation3 + $0x768] sm:$0xff]
  %v8564 = vld [vmem:[#allocation3 + $0x770] sm:$0xff]
  %v8565 = vld [vmem:[#allocation3 + $0x778] sm:$0xff]
  %v8566 = vld [vmem:[#allocation3 + $0x780] sm:$0xff]
  %v8567 = vld [vmem:[#allocation3 + $0x788] sm:$0xff]
  %v8568 = vld [vmem:[#allocation3 + $0x790] sm:$0xff]
  %v8569 = vld [vmem:[#allocation3 + $0x798] sm:$0xff]
  %v8570 = vld [vmem:[#allocation3 + $0x7a0] sm:$0xff]
  %v8571 = vld [vmem:[#allocation3 + $0x7a8] sm:$0xff]
  %v8572 = vld [vmem:[#allocation3 + $0x7b0] sm:$0xff]
  %v8573 = vld [vmem:[#allocation3 + $0x7b8] sm:$0xff]
  %v8574 = vld [vmem:[#allocation3 + $0x7c0] sm:$0xff]
  %v8575 = vld [vmem:[#allocation3 + $0x7c8] sm:$0xff]
  %v8576 = vld [vmem:[#allocation3 + $0x7d0] sm:$0xff]
  %v8577 = vld [vmem:[#allocation3 + $0x7d8] sm:$0xff]
  %v8578 = vld [vmem:[#allocation3 + $0x7e0] sm:$0xff]
  %v8579 = vld [vmem:[#allocation3 + $0x7e8] sm:$0xff]
  %v8580 = vld [vmem:[#allocation3 + $0x7f0] sm:$0xff]
  %v8581 = vld [vmem:[#allocation3 + $0x7f8] sm:$0xff]
  %8582 = vmatprep.subr.bf16.mxu0 %v8327
  %8583 = vmatpush1.bf16.msra.mxu0 %v8326
  %8584 = vmatprep.subr.bf16.mxu0 %v8331
  %8585 = vmatpush1.bf16.msra.mxu0 %v8330
  %8586 = vmatprep.subr.bf16.mxu0 %v8335
  %8587 = vmatpush1.bf16.msra.mxu0 %v8334
  %8588 = vmatprep.subr.bf16.mxu0 %v8339
  %8589 = vmatpush1.bf16.msra.mxu0 %v8338
  %8590 = vmatprep.subr.bf16.mxu0 %v8343
  %8591 = vmatpush1.bf16.msra.mxu0 %v8342
  %8592 = vmatprep.subr.bf16.mxu0 %v8347
  %8593 = vmatpush1.bf16.msra.mxu0 %v8346
  %8594 = vmatprep.subr.bf16.mxu0 %v8351
  %8595 = vmatpush1.bf16.msra.mxu0 %v8350
  %8596 = vmatprep.subr.bf16.mxu0 %v8355
  %8597 = vmatpush1.bf16.msra.mxu0 %v8354
  %8598 = vmatprep.subr.bf16.mxu0 %v8359
  %8599 = vmatpush1.bf16.msra.mxu0 %v8358
  %8600 = vmatprep.subr.bf16.mxu0 %v8363
  %8601 = vmatpush1.bf16.msra.mxu0 %v8362
  %8602 = vmatprep.subr.bf16.mxu0 %v8367
  %8603 = vmatpush1.bf16.msra.mxu0 %v8366
  %8604 = vmatprep.subr.bf16.mxu0 %v8371
  %8605 = vmatpush1.bf16.msra.mxu0 %v8370
  %8606 = vmatprep.subr.bf16.mxu0 %v8375
  %8607 = vmatpush1.bf16.msra.mxu0 %v8374
  %8608 = vmatprep.subr.bf16.mxu0 %v8379
  %8609 = vmatpush1.bf16.msra.mxu0 %v8378
  %8610 = vmatprep.subr.bf16.mxu0 %v8383
  %8611 = vmatpush1.bf16.msra.mxu0 %v8382
  %8612 = vmatprep.subr.bf16.mxu0 %v8387
  %8613 = vmatpush1.bf16.msra.mxu0 %v8386
  %8614 = vmatprep.mubr.bf16.mxu0 %v8319
  %8615 = vmatmul.mubr.bf16.gmra.mrb[0].mxu0 %v8318
  %v8616 = vpop.f32.mrb[0].mxu0
  %v8617 = vadd.f32 0.0, %v8616
  %v8618 = vpop.f32.mrb[0].mxu0
  %v8619 = vadd.f32 0.0, %v8618
  %v8620 = vpop.f32.mrb[0].mxu0
  %v8621 = vpop.f32.mrb[0].mxu0
  %8622 = vdwg.mxu0
  %8623 = vmatprep.subr.bf16.mxu0 %v8391
  %8624 = vmatpush1.bf16.msra.mxu0 %v8390
  %8625 = vmatprep.subr.bf16.mxu0 %v8395
  %8626 = vmatpush1.bf16.msra.mxu0 %v8394
  %8627 = vmatprep.subr.bf16.mxu0 %v8399
  %8628 = vmatpush1.bf16.msra.mxu0 %v8398
  %8629 = vmatprep.subr.bf16.mxu0 %v8403
  %8630 = vmatpush1.bf16.msra.mxu0 %v8402
  %8631 = vmatprep.subr.bf16.mxu0 %v8407
  %8632 = vmatpush1.bf16.msra.mxu0 %v8406
  %8633 = vmatprep.subr.bf16.mxu0 %v8411
  %8634 = vmatpush1.bf16.msra.mxu0 %v8410
  %8635 = vmatprep.subr.bf16.mxu0 %v8415
  %8636 = vmatpush1.bf16.msra.mxu0 %v8414
  %8637 = vmatprep.subr.bf16.mxu0 %v8419
  %8638 = vmatpush1.bf16.msra.mxu0 %v8418
  %8639 = vmatprep.subr.bf16.mxu0 %v8423
  %8640 = vmatpush1.bf16.msra.mxu0 %v8422
  %8641 = vmatprep.subr.bf16.mxu0 %v8427
  %8642 = vmatpush1.bf16.msra.mxu0 %v8426
  %8643 = vmatprep.subr.bf16.mxu0 %v8431
  %8644 = vmatpush1.bf16.msra.mxu0 %v8430
  %8645 = vmatprep.subr.bf16.mxu0 %v8435
  %8646 = vmatpush1.bf16.msra.mxu0 %v8434
  %8647 = vmatprep.subr.bf16.mxu0 %v8439
  %8648 = vmatpush1.bf16.msra.mxu0 %v8438
  %8649 = vmatprep.subr.bf16.mxu0 %v8443
  %8650 = vmatpush1.bf16.msra.mxu0 %v8442
  %8651 = vmatprep.subr.bf16.mxu0 %v8447
  %8652 = vmatpush1.bf16.msra.mxu0 %v8446
  %8653 = vmatprep.subr.bf16.mxu0 %v8451
  %8654 = vmatpush1.bf16.msra.mxu0 %v8450
  %8655 = vmatprep.mubr.bf16.mxu0 %v8321
  %8656 = vmatmul.mubr.bf16.gmra.mrb[0].mxu0 %v8320
  %v8657 = vpop.f32.mrb[0].mxu0
  %v8658 = vadd.f32 %v8617, %v8657
  %v8659 = vpop.f32.mrb[0].mxu0
  %v8660 = vadd.f32 %v8619, %v8659
  %v8661 = vpop.f32.mrb[0].mxu0
  %v8662 = vpop.f32.mrb[0].mxu0
  %8663 = vdwg.mxu0
  %8664 = vmatprep.subr.bf16.mxu0 %v8455
  %8665 = vmatpush1.bf16.msra.mxu0 %v8454
  %8666 = vmatprep.subr.bf16.mxu0 %v8459
  %8667 = vmatpush1.bf16.msra.mxu0 %v8458
  %8668 = vmatprep.subr.bf16.mxu0 %v8463
  %8669 = vmatpush1.bf16.msra.mxu0 %v8462
  %8670 = vmatprep.subr.bf16.mxu0 %v8467
  %8671 = vmatpush1.bf16.msra.mxu0 %v8466
  %8672 = vmatprep.subr.bf16.mxu0 %v8471
  %8673 = vmatpush1.bf16.msra.mxu0 %v8470
  %8674 = vmatprep.subr.bf16.mxu0 %v8475
  %8675 = vmatpush1.bf16.msra.mxu0 %v8474
  %8676 = vmatprep.subr.bf16.mxu0 %v8479
  %8677 = vmatpush1.bf16.msra.mxu0 %v8478
  %8678 = vmatprep.subr.bf16.mxu0 %v8483
  %8679 = vmatpush1.bf16.msra.mxu0 %v8482
  %8680 = vmatprep.subr.bf16.mxu0 %v8487
  %8681 = vmatpush1.bf16.msra.mxu0 %v8486
  %8682 = vmatprep.subr.bf16.mxu0 %v8491
  %8683 = vmatpush1.bf16.msra.mxu0 %v8490
  %8684 = vmatprep.subr.bf16.mxu0 %v8495
  %8685 = vmatpush1.bf16.msra.mxu0 %v8494
  %8686 = vmatprep.subr.bf16.mxu0 %v8499
  %8687 = vmatpush1.bf16.msra.mxu0 %v8498
  %8688 = vmatprep.subr.bf16.mxu0 %v8503
  %8689 = vmatpush1.bf16.msra.mxu0 %v8502
  %8690 = vmatprep.subr.bf16.mxu0 %v8507
  %8691 = vmatpush1.bf16.msra.mxu0 %v8506
  %8692 = vmatprep.subr.bf16.mxu0 %v8511
  %8693 = vmatpush1.bf16.msra.mxu0 %v8510
  %8694 = vmatprep.subr.bf16.mxu0 %v8515
  %8695 = vmatpush1.bf16.msra.mxu0 %v8514
  %8696 = vmatprep.mubr.bf16.mxu0 %v8323
  %8697 = vmatmul.mubr.bf16.gmra.mrb[0].mxu0 %v8322
  %v8698 = vpop.f32.mrb[0].mxu0
  %v8699 = vadd.f32 %v8658, %v8698
  %v8700 = vpop.f32.mrb[0].mxu0
  %v8701 = vadd.f32 %v8660, %v8700
  %v8702 = vpop.f32.mrb[0].mxu0
  %v8703 = vpop.f32.mrb[0].mxu0
  %8704 = vdwg.mxu0
  %8705 = vmatprep.subr.bf16.mxu0 %v8519
  %8706 = vmatpush1.bf16.msra.mxu0 %v8518
  %8707 = vmatprep.subr.bf16.mxu0 %v8523
  %8708 = vmatpush1.bf16.msra.mxu0 %v8522
  %8709 = vmatprep.subr.bf16.mxu0 %v8527
  %8710 = vmatpush1.bf16.msra.mxu0 %v8526
  %8711 = vmatprep.subr.bf16.mxu0 %v8531
  %8712 = vmatpush1.bf16.msra.mxu0 %v8530
  %8713 = vmatprep.subr.bf16.mxu0 %v8535
  %8714 = vmatpush1.bf16.msra.mxu0 %v8534
  %8715 = vmatprep.subr.bf16.mxu0 %v8539
  %8716 = vmatpush1.bf16.msra.mxu0 %v8538
  %8717 = vmatprep.subr.bf16.mxu0 %v8543
  %8718 = vmatpush1.bf16.msra.mxu0 %v8542
  %8719 = vmatprep.subr.bf16.mxu0 %v8547
  %8720 = vmatpush1.bf16.msra.mxu0 %v8546
  %8721 = vmatprep.subr.bf16.mxu0 %v8551
  %8722 = vmatpush1.bf16.msra.mxu0 %v8550
  %8723 = vmatprep.subr.bf16.mxu0 %v8555
  %8724 = vmatpush1.bf16.msra.mxu0 %v8554
  %8725 = vmatprep.subr.bf16.mxu0 %v8559
  %8726 = vmatpush1.bf16.msra.mxu0 %v8558
  %8727 = vmatprep.subr.bf16.mxu0 %v8563
  %8728 = vmatpush1.bf16.msra.mxu0 %v8562
  %8729 = vmatprep.subr.bf16.mxu0 %v8567
  %8730 = vmatpush1.bf16.msra.mxu0 %v8566
  %8731 = vmatprep.subr.bf16.mxu0 %v8571
  %8732 = vmatpush1.bf16.msra.mxu0 %v8570
  %8733 = vmatprep.subr.bf16.mxu0 %v8575
  %8734 = vmatpush1.bf16.msra.mxu0 %v8574
  %8735 = vmatprep.subr.bf16.mxu0 %v8579
  %8736 = vmatpush1.bf16.msra.mxu0 %v8578
  %8737 = vmatprep.mubr.bf16.mxu0 %v8325
  %8738 = vmatmul.mubr.bf16.gmra.mrb[0].mxu0 %v8324
  %v8739 = vpop.f32.mrb[0].mxu0
  %v8740 = vadd.f32 %v8699, %v8739
  %v8741 = vpop.f32.mrb[0].mxu0
  %v8742 = vadd.f32 %v8701, %v8741
  %v8743 = vpop.f32.mrb[0].mxu0
  %v8744 = vpop.f32.mrb[0].mxu0
  %8745 = vdwg.mxu0
  %8746 = vmatprep.subr.bf16.mxu0 %v8329
  %8747 = vmatpush1.bf16.msra.mxu0 %v8328
  %8748 = vmatprep.subr.bf16.mxu0 %v8333
  %8749 = vmatpush1.bf16.msra.mxu0 %v8332
  %8750 = vmatprep.subr.bf16.mxu0 %v8337
  %8751 = vmatpush1.bf16.msra.mxu0 %v8336
  %8752 = vmatprep.subr.bf16.mxu0 %v8341
  %8753 = vmatpush1.bf16.msra.mxu0 %v8340
  %8754 = vmatprep.subr.bf16.mxu0 %v8345
  %8755 = vmatpush1.bf16.msra.mxu0 %v8344
  %8756 = vmatprep.subr.bf16.mxu0 %v8349
  %8757 = vmatpush1.bf16.msra.mxu0 %v8348
  %8758 = vmatprep.subr.bf16.mxu0 %v8353
  %8759 = vmatpush1.bf16.msra.mxu0 %v8352
  %8760 = vmatprep.subr.bf16.mxu0 %v8357
  %8761 = vmatpush1.bf16.msra.mxu0 %v8356
  %8762 = vmatprep.subr.bf16.mxu0 %v8361
  %8763 = vmatpush1.bf16.msra.mxu0 %v8360
  %8764 = vmatprep.subr.bf16.mxu0 %v8365
  %8765 = vmatpush1.bf16.msra.mxu0 %v8364
  %8766 = vmatprep.subr.bf16.mxu0 %v8369
  %8767 = vmatpush1.bf16.msra.mxu0 %v8368
  %8768 = vmatprep.subr.bf16.mxu0 %v8373
  %8769 = vmatpush1.bf16.msra.mxu0 %v8372
  %8770 = vmatprep.subr.bf16.mxu0 %v8377
  %8771 = vmatpush1.bf16.msra.mxu0 %v8376
  %8772 = vmatprep.subr.bf16.mxu0 %v8381
  %8773 = vmatpush1.bf16.msra.mxu0 %v8380
  %8774 = vmatprep.subr.bf16.mxu0 %v8385
  %8775 = vmatpush1.bf16.msra.mxu0 %v8384
  %8776 = vmatprep.subr.bf16.mxu0 %v8389
  %8777 = vmatpush1.bf16.msra.mxu0 %v8388
  %8778 = vmatprep.mubr.bf16.mxu0 %v8319
  %8779 = vmatmul.mubr.bf16.gmra.mrb[0].mxu0 %v8318
  %v8780 = vpop.f32.mrb[0].mxu0
  %v8781 = vadd.f32 0.0, %v8780
  %v8782 = vpop.f32.mrb[0].mxu0
  %v8783 = vadd.f32 0.0, %v8782
  %v8784 = vpop.f32.mrb[0].mxu0
  %v8785 = vpop.f32.mrb[0].mxu0
  %8786 = vdwg.mxu0
  %8787 = vmatprep.subr.bf16.mxu0 %v8393
  %8788 = vmatpush1.bf16.msra.mxu0 %v8392
  %8789 = vmatprep.subr.bf16.mxu0 %v8397
  %8790 = vmatpush1.bf16.msra.mxu0 %v8396
  %8791 = vmatprep.subr.bf16.mxu0 %v8401
  %8792 = vmatpush1.bf16.msra.mxu0 %v8400
  %8793 = vmatprep.subr.bf16.mxu0 %v8405
  %8794 = vmatpush1.bf16.msra.mxu0 %v8404
  %8795 = vmatprep.subr.bf16.mxu0 %v8409
  %8796 = vmatpush1.bf16.msra.mxu0 %v8408
  %8797 = vmatprep.subr.bf16.mxu0 %v8413
  %8798 = vmatpush1.bf16.msra.mxu0 %v8412
  %8799 = vmatprep.subr.bf16.mxu0 %v8417
  %8800 = vmatpush1.bf16.msra.mxu0 %v8416
  %8801 = vmatprep.subr.bf16.mxu0 %v8421
  %8802 = vmatpush1.bf16.msra.mxu0 %v8420
  %8803 = vmatprep.subr.bf16.mxu0 %v8425
  %8804 = vmatpush1.bf16.msra.mxu0 %v8424
  %8805 = vmatprep.subr.bf16.mxu0 %v8429
  %8806 = vmatpush1.bf16.msra.mxu0 %v8428
  %8807 = vmatprep.subr.bf16.mxu0 %v8433
  %8808 = vmatpush1.bf16.msra.mxu0 %v8432
  %8809 = vmatprep.subr.bf16.mxu0 %v8437
  %8810 = vmatpush1.bf16.msra.mxu0 %v8436
  %8811 = vmatprep.subr.bf16.mxu0 %v8441
  %8812 = vmatpush1.bf16.msra.mxu0 %v8440
  %8813 = vmatprep.subr.bf16.mxu0 %v8445
  %8814 = vmatpush1.bf16.msra.mxu0 %v8444
  %8815 = vmatprep.subr.bf16.mxu0 %v8449
  %8816 = vmatpush1.bf16.msra.mxu0 %v8448
  %8817 = vmatprep.subr.bf16.mxu0 %v8453
  %8818 = vmatpush1.bf16.msra.mxu0 %v8452
  %8819 = vmatprep.mubr.bf16.mxu0 %v8321
  %8820 = vmatmul.mubr.bf16.gmra.mrb[0].mxu0 %v8320
  %v8821 = vpop.f32.mrb[0].mxu0
  %v8822 = vadd.f32 %v8781, %v8821
  %v8823 = vpop.f32.mrb[0].mxu0
  %v8824 = vadd.f32 %v8783, %v8823
  %v8825 = vpop.f32.mrb[0].mxu0
  %v8826 = vpop.f32.mrb[0].mxu0
  %8827 = vdwg.mxu0
  %8828 = vmatprep.subr.bf16.mxu0 %v8457
  %8829 = vmatpush1.bf16.msra.mxu0 %v8456
  %8830 = vmatprep.subr.bf16.mxu0 %v8461
  %8831 = vmatpush1.bf16.msra.mxu0 %v8460
  %8832 = vmatprep.subr.bf16.mxu0 %v8465
  %8833 = vmatpush1.bf16.msra.mxu0 %v8464
  %8834 = vmatprep.subr.bf16.mxu0 %v8469
  %8835 = vmatpush1.bf16.msra.mxu0 %v8468
  %8836 = vmatprep.subr.bf16.mxu0 %v8473
  %8837 = vmatpush1.bf16.msra.mxu0 %v8472
  %8838 = vmatprep.subr.bf16.mxu0 %v8477
  %8839 = vmatpush1.bf16.msra.mxu0 %v8476
  %8840 = vmatprep.subr.bf16.mxu0 %v8481
  %8841 = vmatpush1.bf16.msra.mxu0 %v8480
  %8842 = vmatprep.subr.bf16.mxu0 %v8485
  %8843 = vmatpush1.bf16.msra.mxu0 %v8484
  %8844 = vmatprep.subr.bf16.mxu0 %v8489
  %8845 = vmatpush1.bf16.msra.mxu0 %v8488
  %8846 = vmatprep.subr.bf16.mxu0 %v8493
  %8847 = vmatpush1.bf16.msra.mxu0 %v8492
  %8848 = vmatprep.subr.bf16.mxu0 %v8497
  %8849 = vmatpush1.bf16.msra.mxu0 %v8496
  %8850 = vmatprep.subr.bf16.mxu0 %v8501
  %8851 = vmatpush1.bf16.msra.mxu0 %v8500
  %8852 = vmatprep.subr.bf16.mxu0 %v8505
  %8853 = vmatpush1.bf16.msra.mxu0 %v8504
  %8854 = vmatprep.subr.bf16.mxu0 %v8509
  %8855 = vmatpush1.bf16.msra.mxu0 %v8508
  %8856 = vmatprep.subr.bf16.mxu0 %v8513
  %8857 = vmatpush1.bf16.msra.mxu0 %v8512
  %8858 = vmatprep.subr.bf16.mxu0 %v8517
  %8859 = vmatpush1.bf16.msra.mxu0 %v8516
  %8860 = vmatprep.mubr.bf16.mxu0 %v8323
  %8861 = vmatmul.mubr.bf16.gmra.mrb[0].mxu0 %v8322
  %v8862 = vpop.f32.mrb[0].mxu0
  %v8863 = vadd.f32 %v8822, %v8862
  %v8864 = vpop.f32.mrb[0].mxu0
  %v8865 = vadd.f32 %v8824, %v8864
  %v8866 = vpop.f32.mrb[0].mxu0
  %v8867 = vpop.f32.mrb[0].mxu0
  %8868 = vdwg.mxu0
  %8869 = vmatprep.subr.bf16.mxu0 %v8521
  %8870 = vmatpush1.bf16.msra.mxu0 %v8520
  %8871 = vmatprep.subr.bf16.mxu0 %v8525
  %8872 = vmatpush1.bf16.msra.mxu0 %v8524
  %8873 = vmatprep.subr.bf16.mxu0 %v8529
  %8874 = vmatpush1.bf16.msra.mxu0 %v8528
  %8875 = vmatprep.subr.bf16.mxu0 %v8533
  %8876 = vmatpush1.bf16.msra.mxu0 %v8532
  %8877 = vmatprep.subr.bf16.mxu0 %v8537
  %8878 = vmatpush1.bf16.msra.mxu0 %v8536
  %8879 = vmatprep.subr.bf16.mxu0 %v8541
  %8880 = vmatpush1.bf16.msra.mxu0 %v8540
  %8881 = vmatprep.subr.bf16.mxu0 %v8545
  %8882 = vmatpush1.bf16.msra.mxu0 %v8544
  %8883 = vmatprep.subr.bf16.mxu0 %v8549
  %8884 = vmatpush1.bf16.msra.mxu0 %v8548
  %8885 = vmatprep.subr.bf16.mxu0 %v8553
  %8886 = vmatpush1.bf16.msra.mxu0 %v8552
  %8887 = vmatprep.subr.bf16.mxu0 %v8557
  %8888 = vmatpush1.bf16.msra.mxu0 %v8556
  %8889 = vmatprep.subr.bf16.mxu0 %v8561
  %8890 = vmatpush1.bf16.msra.mxu0 %v8560
  %8891 = vmatprep.subr.bf16.mxu0 %v8565
  %8892 = vmatpush1.bf16.msra.mxu0 %v8564
  %8893 = vmatprep.subr.bf16.mxu0 %v8569
  %8894 = vmatpush1.bf16.msra.mxu0 %v8568
  %8895 = vmatprep.subr.bf16.mxu0 %v8573
  %8896 = vmatpush1.bf16.msra.mxu0 %v8572
  %8897 = vmatprep.subr.bf16.mxu0 %v8577
  %8898 = vmatpush1.bf16.msra.mxu0 %v8576
  %8899 = vmatprep.subr.bf16.mxu0 %v8581
  %8900 = vmatpush1.bf16.msra.mxu0 %v8580
  %8901 = vmatprep.mubr.bf16.mxu0 %v8325
  %8902 = vmatmul.mubr.bf16.gmra.mrb[0].mxu0 %v8324
  %v8903 = vpop.f32.mrb[0].mxu0
  %v8904 = vadd.f32 %v8863, %v8903
  %v8905 = vpop.f32.mrb[0].mxu0
  %v8906 = vadd.f32 %v8865, %v8905
  %v8907 = vpop.f32.mrb[0].mxu0
  %v8908 = vpop.f32.mrb[0].mxu0
  %8909 = vdwg.mxu0
  %v8910 = vld [vmem:[%s13] sm:$0xf]
  %v8911 = vld [vmem:[%s14] sm:$0xf]
  %v8912 = vrot.slane %v8740, 4
  %v8913 = vadd.f32 %v8740, %v8912
  %v8914 = vrot.slane %v8913, 2
  %v8915 = vadd.f32 %v8913, %v8914
  %v8916 = vrot.slane %v8915, 1
  %v8917 = vadd.f32 %v8915, %v8916
  %v8918 = vrot.slane %v8742, 4
  %v8919 = vadd.f32 %v8742, %v8918
  %v8920 = vrot.slane %v8919, 2
  %v8921 = vadd.f32 %v8919, %v8920
  %v8922 = vrot.slane %v8921, 1
  %v8923 = vadd.f32 %v8921, %v8922
  %v8924 = vrot.slane %v8904, 4
  %v8925 = vadd.f32 %v8904, %v8924
  %v8926 = vrot.slane %v8925, 2
  %v8927 = vadd.f32 %v8925, %v8926
  %v8928 = vrot.slane %v8927, 1
  %v8929 = vadd.f32 %v8927, %v8928
  %v8930 = vrot.slane %v8906, 4
  %v8931 = vadd.f32 %v8906, %v8930
  %v8932 = vrot.slane %v8931, 2
  %v8933 = vadd.f32 %v8931, %v8932
  %v8934 = vrot.slane %v8933, 1
  %v8935 = vadd.f32 %v8933, %v8934
  %v8936 = vmul.f32 %v8740, %v8740
  %v8937 = vmul.f32 %v8742, %v8742
  %v8938 = vmul.f32 %v8904, %v8904
  %v8939 = vmul.f32 %v8906, %v8906
  %v8940 = vrot.slane %v8936, 4
  %v8941 = vadd.f32 %v8936, %v8940
  %v8942 = vrot.slane %v8941, 2
  %v8943 = vadd.f32 %v8941, %v8942
  %v8944 = vrot.slane %v8943, 1
  %v8945 = vadd.f32 %v8943, %v8944
  %v8946 = vrot.slane %v8937, 4
  %v8947 = vadd.f32 %v8937, %v8946
  %v8948 = vrot.slane %v8947, 2
  %v8949 = vadd.f32 %v8947, %v8948
  %v8950 = vrot.slane %v8949, 1
  %v8951 = vadd.f32 %v8949, %v8950
  %v8952 = vrot.slane %v8938, 4
  %v8953 = vadd.f32 %v8938, %v8952
  %v8954 = vrot.slane %v8953, 2
  %v8955 = vadd.f32 %v8953, %v8954
  %v8956 = vrot.slane %v8955, 1
  %v8957 = vadd.f32 %v8955, %v8956
  %v8958 = vrot.slane %v8939, 4
  %v8959 = vadd.f32 %v8939, %v8958
  %v8960 = vrot.slane %v8959, 2
  %v8961 = vadd.f32 %v8959, %v8960
  %v8962 = vrot.slane %v8961, 1
  %v8963 = vadd.f32 %v8961, %v8962
  %v8964 = vmul.f32 %v8917, 0.125
  %v8965 = vmul.f32 %v8923, 0.125
  %v8966 = vmul.f32 %v8929, 0.125
  %v8967 = vmul.f32 %v8935, 0.125
  %v8968 = vmul.f32 %v8945, 0.125
  %v8969 = vmul.f32 %v8951, 0.125
  %v8970 = vmul.f32 %v8957, 0.125
  %v8971 = vmul.f32 %v8963, 0.125
  %v8972 = vmul.f32 %v8964, %v8964
  %v8973 = vmul.f32 %v8965, %v8965
  %v8974 = vmul.f32 %v8966, %v8966
  %v8975 = vmul.f32 %v8967, %v8967
  %v8976 = vsub.f32 %v8968, %v8972
  %v8977 = vsub.f32 %v8969, %v8973
  %v8978 = vsub.f32 %v8970, %v8974
  %v8979 = vsub.f32 %v8971, %v8975
  %v8980 = vmax.f32 %v8976, 0.0
  %v8981 = vmax.f32 %v8977, 0.0
  %v8982 = vmax.f32 %v8978, 0.0
  %v8983 = vmax.f32 %v8979, 0.0
  %v8984 = vsub.f32 %v8740, %v8964
  %v8985 = vsub.f32 %v8742, %v8965
  %v8986 = vsub.f32 %v8904, %v8966
  %v8987 = vsub.f32 %v8906, %v8967
  %v8988 = vadd.f32 %v8980, 1e-05
  %v8989 = vadd.f32 %v8981, 1e-05
  %v8990 = vadd.f32 %v8982, 1e-05
  %v8991 = vadd.f32 %v8983, 1e-05
  %v8992 = vrsqrt.pop %v8988
  %v8993 = vrsqrt.pop %v8989
  %v8994 = vrsqrt.pop %v8990
  %v8995 = vrsqrt.pop %v8991
  %v8996 = vmul.f32 %v8984, %v8992
  %v8997 = vmul.f32 %v8985, %v8993
  %v8998 = vmul.f32 %v8986, %v8994
  %v8999 = vmul.f32 %v8987, %v8995
  %v9001 = vlaneseq
  %v9002 = vshrl.u32 %v9001, 7
  %v9003 = vsub.s32 0, %v9002
  %v9004 = vrot.slane %v8910, %v9003
  %v9005 = vlaneseq
  %v9006 = vshrl.u32 %v9005, 7
  %v9007 = vsub.s32 1, %v9006
  %v9008 = vrot.slane %v8910, %v9007
  %v9009 = vlaneseq
  %v9010 = vshrl.u32 %v9009, 7
  %v9011 = vsub.s32 2, %v9010
  %v9012 = vrot.slane %v8910, %v9011
  %v9013 = vlaneseq
  %v9014 = vshrl.u32 %v9013, 7
  %v9015 = vsub.s32 3, %v9014
  %v9016 = vrot.slane %v8910, %v9015
  %v9021 = vmul.f32 %v8996, %v9004
  %v9022 = vmul.f32 %v8997, %v9008
  %v9023 = vmul.f32 %v8998, %v9012
  %v9024 = vmul.f32 %v8999, %v9016
  %v9026 = vlaneseq
  %v9027 = vshrl.u32 %v9026, 7
  %v9028 = vsub.s32 0, %v9027
  %v9029 = vrot.slane %v8911, %v9028
  %v9030 = vlaneseq
  %v9031 = vshrl.u32 %v9030, 7
  %v9032 = vsub.s32 1, %v9031
  %v9033 = vrot.slane %v8911, %v9032
  %v9034 = vlaneseq
  %v9035 = vshrl.u32 %v9034, 7
  %v9036 = vsub.s32 2, %v9035
  %v9037 = vrot.slane %v8911, %v9036
  %v9038 = vlaneseq
  %v9039 = vshrl.u32 %v9038, 7
  %v9040 = vsub.s32 3, %v9039
  %v9041 = vrot.slane %v8911, %v9040
  %v9046 = vadd.f32 %v9021, %v9029
  %v9047 = vadd.f32 %v9022, %v9033
  %v9048 = vadd.f32 %v9023, %v9037
  %v9049 = vadd.f32 %v9024, %v9041
  %vm9050 = vcmp.gt.f32.partialorder %v9046, 0.0
  %vm9051 = vcmp.gt.f32.partialorder %v9047, 0.0
  %vm9052 = vcmp.gt.f32.partialorder %v9048, 0.0
  %vm9053 = vcmp.gt.f32.partialorder %v9049, 0.0
  %v9054 = vmul.f32 %v9046, 0.2
  %v9055 = vmul.f32 %v9047, 0.2
  %v9056 = vmul.f32 %v9048, 0.2
  %v9057 = vmul.f32 %v9049, 0.2
  %v9058 = vsel %vm9050, %v9046, %v9054
  %v9059 = vsel %vm9051, %v9047, %v9055
  %v9060 = vsel %vm9052, %v9048, %v9056
  %v9061 = vsel %vm9053, %v9049, %v9057
  %9062 = vst [vmem:[%s15] sm:$0xff] %v9058
  %9063 = vst [vmem:[%s15 + $0x8] sm:$0xff] %v9059
  %9064 = vst [vmem:[%s15 + $0x10] sm:$0xff] %v9060
  %9065 = vst [vmem:[%s15 + $0x18] sm:$0xff] %v9061
  // Predicated region
  $region139: #{discriminator_forward.1} parent=0 // pred_check
    _
  $region140: #{discriminator_forward.1} parent=0 // pred_check_branch
    %9067 = sbr.rel (0) target = $region142
  $region141: #{discriminator_forward.1} parent=0 // pred_region
    _
  $region142: #{discriminator_forward.1} parent=0 // pred_fallthru
    _
  // Predicated region
  $region143: #{discriminator_forward.1} parent=0 // pred_check
    _
  $region144: #{discriminator_forward.1} parent=0 // pred_check_branch
    %9069 = sbr.rel (0) target = $region146
  $region145: #{discriminator_forward.1} parent=0 // pred_region
    _
  $region146: #{discriminator_forward.1} parent=0 // pred_fallthru
    _
  %9070 = vsyncmov [#allocation4]
  %s9071 = vpop.sfrf %9070
  %p9072 = scmp.eq.s32.totalorder %s9071, 0
  %p9073 = pneg %p9072
  %9075 = shalt.err (%p9073)
  %s9076 = scalar_lea.sflag [#allocation4], 1
  %9077 = vsyncmov %s9076
  %s9078 = vpop.sfrf %9077
  %p9079 = scmp.eq.s32.totalorder %s9078, 0
  %p9080 = pneg %p9079
  %9082 = shalt.err (%p9080)

</llo_original>
